<compile_context>
chip_gen: v7x
topology: tpu7x:2x2x1
jax: 0.10.0
libtpu: 0.0.40
codegen_flags: <defaults>
</compile_context>

<pallas_src>
import functools

import jax
import jax.numpy as jnp
from jax import lax
from jax.experimental import pallas as pl
from jax.experimental.pallas import tpu as pltpu


# ----------------------------- Pallas kernel --------------------------------

def _waterfall_kernel(x_ref, wr_ref, br_ref, w0_ref, b0_ref, w1_ref, b1_ref,
                      w2_ref, b2_ref, wf_ref, bf_ref, o_ref,
                      xpad_ref, cat_ref, *, H, W, mid, cin, fuse_relu):
    M = H * W
    K3 = 3 * mid
    wdt = wf_ref.dtype            # MXU compute dtype (f32 or bf16)

    # --- per-step halo zeroing (cheap: 2 rows + 2 single columns). The conv
    # stores never touch these cells, and every interior cell is overwritten
    # before it is read, so no full-scratch clear is needed. Kept per-step
    # (not program_id==0) so it is correct when the batch axis is split
    # across TensorCores.
    zrow = jnp.zeros((1, xpad_ref.shape[1], K3), jnp.float32)
    xpad_ref[0:1] = zrow                          # top pad row (ky=0 taps)
    xpad_ref[H + 1:H + 2] = zrow                  # bottom pad row (ky=2 taps)
    zcol = jnp.zeros((H, 1, K3), jnp.float32)
    xpad_ref[1:H + 1, 8:9, :] = zcol              # left pad col for kx=0 block
    xpad_ref[1:H + 1, 7 + W:8 + W, :] = zcol      # right pad col for kx=2 block

    def conv3(v, w_ref, b_ref):
        """3x3 'same' conv + folded-BN bias + ReLU -> (H*W, mid) f32.

        Channel block kx of the padded scratch holds the input shifted by
        (kx-1) columns, so one aligned read per ky yields a lane-dense
        (H*W, 3*mid) im2col slab and the conv is 3 K=3*mid MXU matmuls.
        """
        for kx in range(3):
            xpad_ref[1:H + 1, 9 - kx:9 - kx + W, kx * mid:(kx + 1) * mid] = v
        acc = None
        for ky in range(3):
            slab = xpad_ref[ky:ky + H, 8:8 + W, :].reshape(M, K3).astype(wdt)
            part = jnp.dot(slab, w_ref[ky], preferred_element_type=jnp.float32)
            acc = part if acc is None else acc + part   # clean MXU-acc chain
        return jnp.maximum(acc + b_ref[...], 0.0)

    # Root input: lane-pad Cin -> mid with exact zeros inside the kernel (the
    # HBM read stays Cin channels wide; the zero-padded root-weight rows only
    # ever multiply these exact zeros).
    v = x_ref[0]
    if cin < mid:
        v = jnp.concatenate([v, jnp.zeros((H, W, mid - cin), v.dtype)], axis=-1)

    # Waterfall of conv blocks.  Each branch output is written straight into
    # its lane block of the (H*W, 4*mid) concat scratch, so the channel concat
    # never materializes and the fusion 1x1 is a single K=4*mid matmul.
    blocks = ((wr_ref, br_ref), (w0_ref, b0_ref), (w1_ref, b1_ref),
              (w2_ref, b2_ref))
    for k, (w_ref, b_ref) in enumerate(blocks):
        y = conv3(v, w_ref, b_ref)                          # (H*W, mid) f32
        cat_ref[:, k * mid:(k + 1) * mid] = y.astype(cat_ref.dtype)
        v = y.reshape(H, W, mid)                            # next conv's input

    # Fusion 1x1 conv: one lane-dense (H*W, 128) @ (128, cout) matmul.
    yf = jnp.dot(cat_ref[...], wf_ref[...], preferred_element_type=jnp.float32)
    yf = yf + bf_ref[...]
    if fuse_relu:
        yf = jnp.maximum(yf, 0.0)
    o_ref[0] = yf.reshape(H, W, -1).astype(o_ref.dtype)


# ----------------------------- Wrapper ---------------------------------------

def _fold_bn(gamma, beta, mean, var, eps=1e-5):
    scale = gamma / jnp.sqrt(var + eps)
    return scale, beta - mean * scale


def _pack_conv3_weight(w9, mid):
    """(9, ci, co) tap-major (ky*3+kx) -> (3, 3*mid, co), zero-padding ci->mid."""
    _, ci, co = w9.shape
    w = w9.reshape(3, 3, ci, co)
    if ci < mid:
        w = jnp.pad(w, ((0, 0), (0, 0), (0, mid - ci), (0, 0)))
    return w.reshape(3, 3 * mid, co)


def conv_waterfall_forward(x_nchw, params, *, with_relu=False,
                           compute_dtype=jnp.float32):
    """ConvWaterFall forward. x_nchw: (N, Cin, H, W) -> (N, Cout, H, W)."""
    N, Cin, H, W = x_nchw.shape
    mid = params['root']['w'].shape[-1]
    cout = params['fusion']['w'].shape[-1]
    assert W % 8 == 0, "W must be a multiple of the f32 sublane tile (8)"
    assert Cin <= mid, "input channels are lane-packed into the mid-wide scratch"

    # NCHW -> NHWC (channels on lanes in the kernel).  If producer/consumer are
    # already NHWC, drop both transposes at the API boundary (each is a full
    # HBM round trip that can dominate this small fused kernel end-to-end).
    x = jnp.transpose(x_nchw, (0, 2, 3, 1)).astype(jnp.float32)

    cd = compute_dtype                      # bf16 on v6e/v7x if desired
    w3 = [_pack_conv3_weight(params[k]['w'], mid).astype(cd)
          for k in ('root', 'b0', 'b1', 'b2')]
    wf = params['fusion']['w'].reshape(4 * mid, cout).astype(cd)
    biases = [params[k]['b'].reshape(1, -1).astype(jnp.float32)
              for k in ('root', 'b0', 'b1', 'b2', 'fusion')]

    w_spec3 = pl.BlockSpec((3, 3 * mid, mid), lambda n: (0, 0, 0))

    def b_spec(c):
        return pl.BlockSpec((1, c), lambda n: (0, 0))

    out_nhwc = pl.pallas_call(
        functools.partial(_waterfall_kernel, H=H, W=W, mid=mid, cin=Cin,
                          fuse_relu=with_relu),
        out_shape=jax.ShapeDtypeStruct((N, H, W, cout), jnp.float32),
        grid_spec=pltpu.PrefetchScalarGridSpec(
            num_scalar_prefetch=0,
            grid=(N,),
            in_specs=[
                pl.BlockSpec((1, H, W, Cin), lambda n: (n, 0, 0, 0)),   # x
                w_spec3, b_spec(mid),                                   # root
                w_spec3, b_spec(mid),                                   # block_0
                w_spec3, b_spec(mid),                                   # block_1
                w_spec3, b_spec(mid),                                   # block_2
                pl.BlockSpec((4 * mid, cout), lambda n: (0, 0)),        # fuse w
                b_spec(cout),                                           # fuse b
            ],
            out_specs=pl.BlockSpec((1, H, W, cout), lambda n: (n, 0, 0, 0)),
            scratch_shapes=[
                # kx-replicated zero-bordered padded image: block kx holds the
                # image shifted by (kx-1) columns; interior starts at
                # (row 1, col 8) so every per-ky tap read is aligned.
                pltpu.VMEM((H + 2, W + 16, 3 * mid), jnp.float32),
                # branch-concat buffer: LHS of the single K=4*mid fusion matmul.
                pltpu.VMEM((H * W, 4 * mid), cd),
            ]),
        compiler_params=pltpu.CompilerParams(
            dimension_semantics=("parallel",)),
    )(x, w3[0], biases[0], w3[1], biases[1], w3[2], biases[2], w3[3],
      biases[3], wf, biases[4])
    # TODO(synk): for production H/W add an H-band grid axis with a 2-row
    # recompute halo (and raise vmem_limit_bytes) so blocks fit v7x's 64 MiB
    # VMEM / v6e's 32 MiB scoped default and v7x's 2 TCs get a parallel axis.
    return jnp.transpose(out_nhwc, (0, 3, 1, 2))     # NHWC -> NCHW


# ----------------------------- Parameters ------------------------------------

def init_params(key, cin, mid, cout):
    keys = iter(jax.random.split(key, 32))

    def bn(c):
        gamma = 1.0 + 0.1 * jax.random.normal(next(keys), (c,), jnp.float32)
        beta = 0.1 * jax.random.normal(next(keys), (c,), jnp.float32)
        mean = 0.1 * jax.random.normal(next(keys), (c,), jnp.float32)
        var = 0.5 + jnp.abs(0.5 * jax.random.normal(next(keys), (c,), jnp.float32))
        return _fold_bn(gamma, beta, mean, var)

    def conv(taps, ci, co):
        std = (2.0 / (taps * ci)) ** 0.5
        w = std * jax.random.normal(next(keys), (taps, ci, co), jnp.float32)
        scale, bias = bn(co)
        # Fold the BN scale into the conv weight (per output channel).
        return dict(w=w * scale[None, None, :], b=bias)

    return dict(root=conv(9, cin, mid),
                b0=conv(9, mid, mid),
                b1=conv(9, mid, mid),
                b2=conv(9, mid, mid),
                fusion=conv(4, mid, cout))   # 4 slices of the (4*mid, cout) 1x1


# ----------------------------- Pure-JAX reference ----------------------------

def reference_forward(x_nchw, params, *, with_relu=False):
    x = jnp.transpose(x_nchw, (0, 2, 3, 1))

    def conv3x3(v, p):
        ci, co = p['w'].shape[1], p['w'].shape[2]
        k = p['w'].reshape(3, 3, ci, co)             # HWIO
        y = lax.conv_general_dilated(
            v, k, window_strides=(1, 1), padding=((1, 1), (1, 1)),
            dimension_numbers=('NHWC', 'HWIO', 'NHWC'))
        return jnp.maximum(y + p['b'], 0.0)

    x_root = conv3x3(x, params['root'])
    x0 = conv3x3(x_root, params['b0'])
    x1 = conv3x3(x0, params['b1'])
    x2 = conv3x3(x1, params['b2'])
    x3 = jnp.concatenate([x_root, x0, x1, x2], axis=-1)
    wf = params['fusion']['w']
    y = jnp.einsum('nhwc,cd->nhwd', x3, wf.reshape(-1, wf.shape[-1]))
    y = y + params['fusion']['b']
    if with_relu:
        y = jnp.maximum(y, 0.0)
    return jnp.transpose(y, (0, 3, 1, 2))


# ----------------------------- Main -------------------------------------------

if __name__ == "__main__":
    key = jax.random.PRNGKey(0)
    kx, kp = jax.random.split(key)
    N, Cin, H, W = 2, 4, 16, 16
    mid, cout = 32, 32

    x = jax.random.normal(kx, (N, Cin, H, W), jnp.float32)
    params = init_params(kp, Cin, mid, cout)

    # f32 path, module default (no fusion ReLU): exact check vs XLA reference.
    y = jax.block_until_ready(conv_waterfall_forward(x, params, with_relu=False))
    y_ref = reference_forward(x, params, with_relu=False)
    assert y.shape == (N, cout, H, W), y.shape
    err = float(jnp.max(jnp.abs(y - y_ref)))
    assert jnp.allclose(y, y_ref, rtol=1e-4, atol=1e-4), err

    # with_relu=True fusion path.
    y_r = jax.block_until_ready(conv_waterfall_forward(x, params, with_relu=True))
    y_r_ref = reference_forward(x, params, with_relu=True)
    err_r = float(jnp.max(jnp.abs(y_r - y_r_ref)))
    assert jnp.allclose(y_r, y_r_ref, rtol=1e-4, atol=1e-4), err_r

    # bf16 MXU path (v6e / v7x): f32 accumulation, relative-error check.
    y_bf = jax.block_until_ready(
        conv_waterfall_forward(x, params, with_relu=False,
                               compute_dtype=jnp.bfloat16))
    assert bool(jnp.all(jnp.isfinite(y_bf)))
    rel = float(jnp.max(jnp.abs(y_bf - y_ref)) / jnp.max(jnp.abs(y_ref)))
    assert rel < 0.05, rel

    print("KERNEL_OK")
</pallas_src>

<mosaic_0001>
module attributes {stable_mosaic.version = 11 : i64} {
  func.func @_waterfall_kernel(%arg0: i32, %arg1: memref<1x16x16x4xf32, #tpu.memory_space<vmem>>, %arg2: memref<3x96x32xf32, #tpu.memory_space<vmem>>, %arg3: memref<1x32xf32, #tpu.memory_space<vmem>>, %arg4: memref<3x96x32xf32, #tpu.memory_space<vmem>>, %arg5: memref<1x32xf32, #tpu.memory_space<vmem>>, %arg6: memref<3x96x32xf32, #tpu.memory_space<vmem>>, %arg7: memref<1x32xf32, #tpu.memory_space<vmem>>, %arg8: memref<3x96x32xf32, #tpu.memory_space<vmem>>, %arg9: memref<1x32xf32, #tpu.memory_space<vmem>>, %arg10: memref<128x32xf32, #tpu.memory_space<vmem>>, %arg11: memref<1x32xf32, #tpu.memory_space<vmem>>, %arg12: memref<1x16x16x32xf32, #tpu.memory_space<vmem>>, %arg13: memref<18x32x96xf32, #tpu.memory_space<vmem>>, %arg14: memref<256x128xf32, #tpu.memory_space<vmem>>) attributes {dimension_semantics = [#tpu.dimension_semantics<parallel>], iteration_bounds = array<i64: 2>, scalar_prefetch = 0 : i64, scratch_operands = 2 : i64, tpu.core_type = #tpu.core_type<tc>, window_params = [{transform_indices = @transform_0, window_bounds = array<i64: 1, 16, 16, 4>}, {pipeline_mode = #tpu.pipeline_mode<synchronous>, transform_indices = @transform_1, window_bounds = array<i64: 3, 96, 32>}, {pipeline_mode = #tpu.pipeline_mode<synchronous>, transform_indices = @transform_2, window_bounds = array<i64: 1, 32>}, {pipeline_mode = #tpu.pipeline_mode<synchronous>, transform_indices = @transform_3, window_bounds = array<i64: 3, 96, 32>}, {pipeline_mode = #tpu.pipeline_mode<synchronous>, transform_indices = @transform_4, window_bounds = array<i64: 1, 32>}, {pipeline_mode = #tpu.pipeline_mode<synchronous>, transform_indices = @transform_5, window_bounds = array<i64: 3, 96, 32>}, {pipeline_mode = #tpu.pipeline_mode<synchronous>, transform_indices = @transform_6, window_bounds = array<i64: 1, 32>}, {pipeline_mode = #tpu.pipeline_mode<synchronous>, transform_indices = @transform_7, window_bounds = array<i64: 3, 96, 32>}, {pipeline_mode = #tpu.pipeline_mode<synchronous>, transform_indices = @transform_8, window_bounds = array<i64: 1, 32>}, {pipeline_mode = #tpu.pipeline_mode<synchronous>, transform_indices = @transform_9, window_bounds = array<i64: 128, 32>}, {pipeline_mode = #tpu.pipeline_mode<synchronous>, transform_indices = @transform_10, window_bounds = array<i64: 1, 32>}, {transform_indices = @transform_11, window_bounds = array<i64: 1, 16, 16, 32>}]} {
    %cst = arith.constant 0.000000e+00 : f32
    %0 = vector.broadcast %cst : f32 to vector<1x32x96xf32>
    %c0 = arith.constant 0 : index
    %c0_0 = arith.constant 0 : index
    %c0_1 = arith.constant 0 : index
    %1 = vector.load %arg13[%c0, %c0_0, %c0_1] : memref<18x32x96xf32, #tpu.memory_space<vmem>>, vector<1x32x96xf32>
    tpu.vector_store %arg13[%c0, %c0_0, %c0_1], %0 {strides = array<i32>} : memref<18x32x96xf32, #tpu.memory_space<vmem>>, vector<1x32x96xf32>,
    %c17 = arith.constant 17 : index
    %c0_2 = arith.constant 0 : index
    %c0_3 = arith.constant 0 : index
    %2 = vector.load %arg13[%c17, %c0_2, %c0_3] : memref<18x32x96xf32, #tpu.memory_space<vmem>>, vector<1x32x96xf32>
    tpu.vector_store %arg13[%c17, %c0_2, %c0_3], %0 {strides = array<i32>} : memref<18x32x96xf32, #tpu.memory_space<vmem>>, vector<1x32x96xf32>,
    %cst_4 = arith.constant 0.000000e+00 : f32
    %3 = vector.broadcast %cst_4 : f32 to vector<16x1x96xf32>
    %c1 = arith.constant 1 : index
    %c8 = arith.constant 8 : index
    %c0_5 = arith.constant 0 : index
    %4 = vector.load %arg13[%c1, %c8, %c0_5] : memref<18x32x96xf32, #tpu.memory_space<vmem>>, vector<16x1x96xf32>
    tpu.vector_store %arg13[%c1, %c8, %c0_5], %3 {strides = array<i32>} : memref<18x32x96xf32, #tpu.memory_space<vmem>>, vector<16x1x96xf32>,
    %c1_6 = arith.constant 1 : index
    %c23 = arith.constant 23 : index
    %c0_7 = arith.constant 0 : index
    %5 = vector.load %arg13[%c1_6, %c23, %c0_7] : memref<18x32x96xf32, #tpu.memory_space<vmem>>, vector<16x1x96xf32>
    tpu.vector_store %arg13[%c1_6, %c23, %c0_7], %3 {strides = array<i32>} : memref<18x32x96xf32, #tpu.memory_space<vmem>>, vector<16x1x96xf32>,
    %c0_8 = arith.constant 0 : index
    %c0_9 = arith.constant 0 : index
    %c0_10 = arith.constant 0 : index
    %c0_11 = arith.constant 0 : index
    %6 = vector.load %arg1[%c0_8, %c0_9, %c0_10, %c0_11] : memref<1x16x16x4xf32, #tpu.memory_space<vmem>>, vector<1x16x16x4xf32>
    %7 = vector.shape_cast %6 : vector<1x16x16x4xf32> to vector<16x16x4xf32>
    %cst_12 = arith.constant 0.000000e+00 : f32
    %8 = vector.broadcast %cst_12 : f32 to vector<16x16x28xf32>
    %9 = tpu.concatenate %7, %8 in 2 : vector<16x16x4xf32>, vector<16x16x28xf32> -> vector<16x16x32xf32>
    %c1_13 = arith.constant 1 : index
    %c9 = arith.constant 9 : index
    %c0_14 = arith.constant 0 : index
    %10 = vector.load %arg13[%c1_13, %c9, %c0_14] : memref<18x32x96xf32, #tpu.memory_space<vmem>>, vector<16x16x32xf32>
    tpu.vector_store %arg13[%c1_13, %c9, %c0_14], %9 {strides = array<i32>} : memref<18x32x96xf32, #tpu.memory_space<vmem>>, vector<16x16x32xf32>,
    %c1_15 = arith.constant 1 : index
    %c8_16 = arith.constant 8 : index
    %c32 = arith.constant 32 : index
    %11 = vector.load %arg13[%c1_15, %c8_16, %c32] : memref<18x32x96xf32, #tpu.memory_space<vmem>>, vector<16x16x32xf32>
    tpu.vector_store %arg13[%c1_15, %c8_16, %c32], %9 {strides = array<i32>} : memref<18x32x96xf32, #tpu.memory_space<vmem>>, vector<16x16x32xf32>,
    %c1_17 = arith.constant 1 : index
    %c7 = arith.constant 7 : index
    %c64 = arith.constant 64 : index
    %12 = vector.load %arg13[%c1_17, %c7, %c64] : memref<18x32x96xf32, #tpu.memory_space<vmem>>, vector<16x16x32xf32>
    tpu.vector_store %arg13[%c1_17, %c7, %c64], %9 {strides = array<i32>} : memref<18x32x96xf32, #tpu.memory_space<vmem>>, vector<16x16x32xf32>,
    %c0_18 = arith.constant 0 : index
    %c8_19 = arith.constant 8 : index
    %c0_20 = arith.constant 0 : index
    %13 = vector.load %arg13[%c0_18, %c8_19, %c0_20] : memref<18x32x96xf32, #tpu.memory_space<vmem>>, vector<16x16x96xf32>
    %14 = vector.shape_cast %13 : vector<16x16x96xf32> to vector<256x96xf32>
    %c0_21 = arith.constant 0 : index
    %c0_22 = arith.constant 0 : index
    %c0_23 = arith.constant 0 : index
    %15 = vector.load %arg2[%c0_21, %c0_22, %c0_23] : memref<3x96x32xf32, #tpu.memory_space<vmem>>, vector<1x96x32xf32>
    %16 = vector.shape_cast %15 : vector<1x96x32xf32> to vector<96x32xf32>
    %cst_24 = arith.constant dense<0.000000e+00> : vector<256x32xf32>
    %17 = tpu.matmul %14, %16, %cst_24 {dimension_numbers = #tpu.dot_dimension_numbers<[1], [0], [0], [1], [0, 0, 1, 1], [], []>} : vector<256x96xf32>, vector<96x32xf32>, vector<256x32xf32> -> vector<256x32xf32>
    %c1_25 = arith.constant 1 : index
    %c8_26 = arith.constant 8 : index
    %c0_27 = arith.constant 0 : index
    %18 = vector.load %arg13[%c1_25, %c8_26, %c0_27] : memref<18x32x96xf32, #tpu.memory_space<vmem>>, vector<16x16x96xf32>
    %19 = vector.shape_cast %18 : vector<16x16x96xf32> to vector<256x96xf32>
    %c1_28 = arith.constant 1 : index
    %c0_29 = arith.constant 0 : index
    %c0_30 = arith.constant 0 : index
    %20 = vector.load %arg2[%c1_28, %c0_29, %c0_30] : memref<3x96x32xf32, #tpu.memory_space<vmem>>, vector<1x96x32xf32>
    %21 = vector.shape_cast %20 : vector<1x96x32xf32> to vector<96x32xf32>
    %cst_31 = arith.constant dense<0.000000e+00> : vector<256x32xf32>
    %22 = tpu.matmul %19, %21, %cst_31 {dimension_numbers = #tpu.dot_dimension_numbers<[1], [0], [0], [1], [0, 0, 1, 1], [], []>} : vector<256x96xf32>, vector<96x32xf32>, vector<256x32xf32> -> vector<256x32xf32>
    %23 = arith.addf %17, %22 : vector<256x32xf32>
    %c2 = arith.constant 2 : index
    %c8_32 = arith.constant 8 : index
    %c0_33 = arith.constant 0 : index
    %24 = vector.load %arg13[%c2, %c8_32, %c0_33] : memref<18x32x96xf32, #tpu.memory_space<vmem>>, vector<16x16x96xf32>
    %25 = vector.shape_cast %24 : vector<16x16x96xf32> to vector<256x96xf32>
    %c2_34 = arith.constant 2 : index
    %c0_35 = arith.constant 0 : index
    %c0_36 = arith.constant 0 : index
    %26 = vector.load %arg2[%c2_34, %c0_35, %c0_36] : memref<3x96x32xf32, #tpu.memory_space<vmem>>, vector<1x96x32xf32>
    %27 = vector.shape_cast %26 : vector<1x96x32xf32> to vector<96x32xf32>
    %cst_37 = arith.constant dense<0.000000e+00> : vector<256x32xf32>
    %28 = tpu.matmul %25, %27, %cst_37 {dimension_numbers = #tpu.dot_dimension_numbers<[1], [0], [0], [1], [0, 0, 1, 1], [], []>} : vector<256x96xf32>, vector<96x32xf32>, vector<256x32xf32> -> vector<256x32xf32>
    %29 = arith.addf %23, %28 : vector<256x32xf32>
    %c0_38 = arith.constant 0 : index
    %c0_39 = arith.constant 0 : index
    %30 = vector.load %arg3[%c0_38, %c0_39] : memref<1x32xf32, #tpu.memory_space<vmem>>, vector<1x32xf32>
    %31 = vector.broadcast %30 : vector<1x32xf32> to vector<256x32xf32>
    %32 = arith.addf %29, %31 : vector<256x32xf32>
    %cst_40 = arith.constant 0.000000e+00 : f32
    %33 = vector.broadcast %cst_40 : f32 to vector<256x32xf32>
    %34 = arith.maximumf %32, %33 : vector<256x32xf32>
    %c0_41 = arith.constant 0 : index
    %c0_42 = arith.constant 0 : index
    %35 = vector.load %arg14[%c0_41, %c0_42] : memref<256x128xf32, #tpu.memory_space<vmem>>, vector<256x32xf32>
    tpu.vector_store %arg14[%c0_41, %c0_42], %34 {strides = array<i32>} : memref<256x128xf32, #tpu.memory_space<vmem>>, vector<256x32xf32>,
    %36 = vector.shape_cast %34 : vector<256x32xf32> to vector<16x16x32xf32>
    %c1_43 = arith.constant 1 : index
    %c9_44 = arith.constant 9 : index
    %c0_45 = arith.constant 0 : index
    %37 = vector.load %arg13[%c1_43, %c9_44, %c0_45] : memref<18x32x96xf32, #tpu.memory_space<vmem>>, vector<16x16x32xf32>
    tpu.vector_store %arg13[%c1_43, %c9_44, %c0_45], %36 {strides = array<i32>} : memref<18x32x96xf32, #tpu.memory_space<vmem>>, vector<16x16x32xf32>,
    %c1_46 = arith.constant 1 : index
    %c8_47 = arith.constant 8 : index
    %c32_48 = arith.constant 32 : index
    %38 = vector.load %arg13[%c1_46, %c8_47, %c32_48] : memref<18x32x96xf32, #tpu.memory_space<vmem>>, vector<16x16x32xf32>
    tpu.vector_store %arg13[%c1_46, %c8_47, %c32_48], %36 {strides = array<i32>} : memref<18x32x96xf32, #tpu.memory_space<vmem>>, vector<16x16x32xf32>,
    %c1_49 = arith.constant 1 : index
    %c7_50 = arith.constant 7 : index
    %c64_51 = arith.constant 64 : index
    %39 = vector.load %arg13[%c1_49, %c7_50, %c64_51] : memref<18x32x96xf32, #tpu.memory_space<vmem>>, vector<16x16x32xf32>
    tpu.vector_store %arg13[%c1_49, %c7_50, %c64_51], %36 {strides = array<i32>} : memref<18x32x96xf32, #tpu.memory_space<vmem>>, vector<16x16x32xf32>,
    %c0_52 = arith.constant 0 : index
    %c8_53 = arith.constant 8 : index
    %c0_54 = arith.constant 0 : index
    %40 = vector.load %arg13[%c0_52, %c8_53, %c0_54] : memref<18x32x96xf32, #tpu.memory_space<vmem>>, vector<16x16x96xf32>
    %41 = vector.shape_cast %40 : vector<16x16x96xf32> to vector<256x96xf32>
    %c0_55 = arith.constant 0 : index
    %c0_56 = arith.constant 0 : index
    %c0_57 = arith.constant 0 : index
    %42 = vector.load %arg4[%c0_55, %c0_56, %c0_57] : memref<3x96x32xf32, #tpu.memory_space<vmem>>, vector<1x96x32xf32>
    %43 = vector.shape_cast %42 : vector<1x96x32xf32> to vector<96x32xf32>
    %cst_58 = arith.constant dense<0.000000e+00> : vector<256x32xf32>
    %44 = tpu.matmul %41, %43, %cst_58 {dimension_numbers = #tpu.dot_dimension_numbers<[1], [0], [0], [1], [0, 0, 1, 1], [], []>} : vector<256x96xf32>, vector<96x32xf32>, vector<256x32xf32> -> vector<256x32xf32>
    %c1_59 = arith.constant 1 : index
    %c8_60 = arith.constant 8 : index
    %c0_61 = arith.constant 0 : index
    %45 = vector.load %arg13[%c1_59, %c8_60, %c0_61] : memref<18x32x96xf32, #tpu.memory_space<vmem>>, vector<16x16x96xf32>
    %46 = vector.shape_cast %45 : vector<16x16x96xf32> to vector<256x96xf32>
    %c1_62 = arith.constant 1 : index
    %c0_63 = arith.constant 0 : index
    %c0_64 = arith.constant 0 : index
    %47 = vector.load %arg4[%c1_62, %c0_63, %c0_64] : memref<3x96x32xf32, #tpu.memory_space<vmem>>, vector<1x96x32xf32>
    %48 = vector.shape_cast %47 : vector<1x96x32xf32> to vector<96x32xf32>
    %cst_65 = arith.constant dense<0.000000e+00> : vector<256x32xf32>
    %49 = tpu.matmul %46, %48, %cst_65 {dimension_numbers = #tpu.dot_dimension_numbers<[1], [0], [0], [1], [0, 0, 1, 1], [], []>} : vector<256x96xf32>, vector<96x32xf32>, vector<256x32xf32> -> vector<256x32xf32>
    %50 = arith.addf %44, %49 : vector<256x32xf32>
    %c2_66 = arith.constant 2 : index
    %c8_67 = arith.constant 8 : index
    %c0_68 = arith.constant 0 : index
    %51 = vector.load %arg13[%c2_66, %c8_67, %c0_68] : memref<18x32x96xf32, #tpu.memory_space<vmem>>, vector<16x16x96xf32>
    %52 = vector.shape_cast %51 : vector<16x16x96xf32> to vector<256x96xf32>
    %c2_69 = arith.constant 2 : index
    %c0_70 = arith.constant 0 : index
    %c0_71 = arith.constant 0 : index
    %53 = vector.load %arg4[%c2_69, %c0_70, %c0_71] : memref<3x96x32xf32, #tpu.memory_space<vmem>>, vector<1x96x32xf32>
    %54 = vector.shape_cast %53 : vector<1x96x32xf32> to vector<96x32xf32>
    %cst_72 = arith.constant dense<0.000000e+00> : vector<256x32xf32>
    %55 = tpu.matmul %52, %54, %cst_72 {dimension_numbers = #tpu.dot_dimension_numbers<[1], [0], [0], [1], [0, 0, 1, 1], [], []>} : vector<256x96xf32>, vector<96x32xf32>, vector<256x32xf32> -> vector<256x32xf32>
    %56 = arith.addf %50, %55 : vector<256x32xf32>
    %c0_73 = arith.constant 0 : index
    %c0_74 = arith.constant 0 : index
    %57 = vector.load %arg5[%c0_73, %c0_74] : memref<1x32xf32, #tpu.memory_space<vmem>>, vector<1x32xf32>
    %58 = vector.broadcast %57 : vector<1x32xf32> to vector<256x32xf32>
    %59 = arith.addf %56, %58 : vector<256x32xf32>
    %cst_75 = arith.constant 0.000000e+00 : f32
    %60 = vector.broadcast %cst_75 : f32 to vector<256x32xf32>
    %61 = arith.maximumf %59, %60 : vector<256x32xf32>
    %c0_76 = arith.constant 0 : index
    %c32_77 = arith.constant 32 : index
    %62 = vector.load %arg14[%c0_76, %c32_77] : memref<256x128xf32, #tpu.memory_space<vmem>>, vector<256x32xf32>
    tpu.vector_store %arg14[%c0_76, %c32_77], %61 {strides = array<i32>} : memref<256x128xf32, #tpu.memory_space<vmem>>, vector<256x32xf32>,
    %63 = vector.shape_cast %61 : vector<256x32xf32> to vector<16x16x32xf32>
    %c1_78 = arith.constant 1 : index
    %c9_79 = arith.constant 9 : index
    %c0_80 = arith.constant 0 : index
    %64 = vector.load %arg13[%c1_78, %c9_79, %c0_80] : memref<18x32x96xf32, #tpu.memory_space<vmem>>, vector<16x16x32xf32>
    tpu.vector_store %arg13[%c1_78, %c9_79, %c0_80], %63 {strides = array<i32>} : memref<18x32x96xf32, #tpu.memory_space<vmem>>, vector<16x16x32xf32>,
    %c1_81 = arith.constant 1 : index
    %c8_82 = arith.constant 8 : index
    %c32_83 = arith.constant 32 : index
    %65 = vector.load %arg13[%c1_81, %c8_82, %c32_83] : memref<18x32x96xf32, #tpu.memory_space<vmem>>, vector<16x16x32xf32>
    tpu.vector_store %arg13[%c1_81, %c8_82, %c32_83], %63 {strides = array<i32>} : memref<18x32x96xf32, #tpu.memory_space<vmem>>, vector<16x16x32xf32>,
    %c1_84 = arith.constant 1 : index
    %c7_85 = arith.constant 7 : index
    %c64_86 = arith.constant 64 : index
    %66 = vector.load %arg13[%c1_84, %c7_85, %c64_86] : memref<18x32x96xf32, #tpu.memory_space<vmem>>, vector<16x16x32xf32>
    tpu.vector_store %arg13[%c1_84, %c7_85, %c64_86], %63 {strides = array<i32>} : memref<18x32x96xf32, #tpu.memory_space<vmem>>, vector<16x16x32xf32>,
    %c0_87 = arith.constant 0 : index
    %c8_88 = arith.constant 8 : index
    %c0_89 = arith.constant 0 : index
    %67 = vector.load %arg13[%c0_87, %c8_88, %c0_89] : memref<18x32x96xf32, #tpu.memory_space<vmem>>, vector<16x16x96xf32>
    %68 = vector.shape_cast %67 : vector<16x16x96xf32> to vector<256x96xf32>
    %c0_90 = arith.constant 0 : index
    %c0_91 = arith.constant 0 : index
    %c0_92 = arith.constant 0 : index
    %69 = vector.load %arg6[%c0_90, %c0_91, %c0_92] : memref<3x96x32xf32, #tpu.memory_space<vmem>>, vector<1x96x32xf32>
    %70 = vector.shape_cast %69 : vector<1x96x32xf32> to vector<96x32xf32>
    %cst_93 = arith.constant dense<0.000000e+00> : vector<256x32xf32>
    %71 = tpu.matmul %68, %70, %cst_93 {dimension_numbers = #tpu.dot_dimension_numbers<[1], [0], [0], [1], [0, 0, 1, 1], [], []>} : vector<256x96xf32>, vector<96x32xf32>, vector<256x32xf32> -> vector<256x32xf32>
    %c1_94 = arith.constant 1 : index
    %c8_95 = arith.constant 8 : index
    %c0_96 = arith.constant 0 : index
    %72 = vector.load %arg13[%c1_94, %c8_95, %c0_96] : memref<18x32x96xf32, #tpu.memory_space<vmem>>, vector<16x16x96xf32>
    %73 = vector.shape_cast %72 : vector<16x16x96xf32> to vector<256x96xf32>
    %c1_97 = arith.constant 1 : index
    %c0_98 = arith.constant 0 : index
    %c0_99 = arith.constant 0 : index
    %74 = vector.load %arg6[%c1_97, %c0_98, %c0_99] : memref<3x96x32xf32, #tpu.memory_space<vmem>>, vector<1x96x32xf32>
    %75 = vector.shape_cast %74 : vector<1x96x32xf32> to vector<96x32xf32>
    %cst_100 = arith.constant dense<0.000000e+00> : vector<256x32xf32>
    %76 = tpu.matmul %73, %75, %cst_100 {dimension_numbers = #tpu.dot_dimension_numbers<[1], [0], [0], [1], [0, 0, 1, 1], [], []>} : vector<256x96xf32>, vector<96x32xf32>, vector<256x32xf32> -> vector<256x32xf32>
    %77 = arith.addf %71, %76 : vector<256x32xf32>
    %c2_101 = arith.constant 2 : index
    %c8_102 = arith.constant 8 : index
    %c0_103 = arith.constant 0 : index
    %78 = vector.load %arg13[%c2_101, %c8_102, %c0_103] : memref<18x32x96xf32, #tpu.memory_space<vmem>>, vector<16x16x96xf32>
    %79 = vector.shape_cast %78 : vector<16x16x96xf32> to vector<256x96xf32>
    %c2_104 = arith.constant 2 : index
    %c0_105 = arith.constant 0 : index
    %c0_106 = arith.constant 0 : index
    %80 = vector.load %arg6[%c2_104, %c0_105, %c0_106] : memref<3x96x32xf32, #tpu.memory_space<vmem>>, vector<1x96x32xf32>
    %81 = vector.shape_cast %80 : vector<1x96x32xf32> to vector<96x32xf32>
    %cst_107 = arith.constant dense<0.000000e+00> : vector<256x32xf32>
    %82 = tpu.matmul %79, %81, %cst_107 {dimension_numbers = #tpu.dot_dimension_numbers<[1], [0], [0], [1], [0, 0, 1, 1], [], []>} : vector<256x96xf32>, vector<96x32xf32>, vector<256x32xf32> -> vector<256x32xf32>
    %83 = arith.addf %77, %82 : vector<256x32xf32>
    %c0_108 = arith.constant 0 : index
    %c0_109 = arith.constant 0 : index
    %84 = vector.load %arg7[%c0_108, %c0_109] : memref<1x32xf32, #tpu.memory_space<vmem>>, vector<1x32xf32>
    %85 = vector.broadcast %84 : vector<1x32xf32> to vector<256x32xf32>
    %86 = arith.addf %83, %85 : vector<256x32xf32>
    %cst_110 = arith.constant 0.000000e+00 : f32
    %87 = vector.broadcast %cst_110 : f32 to vector<256x32xf32>
    %88 = arith.maximumf %86, %87 : vector<256x32xf32>
    %c0_111 = arith.constant 0 : index
    %c64_112 = arith.constant 64 : index
    %89 = vector.load %arg14[%c0_111, %c64_112] : memref<256x128xf32, #tpu.memory_space<vmem>>, vector<256x32xf32>
    tpu.vector_store %arg14[%c0_111, %c64_112], %88 {strides = array<i32>} : memref<256x128xf32, #tpu.memory_space<vmem>>, vector<256x32xf32>,
    %90 = vector.shape_cast %88 : vector<256x32xf32> to vector<16x16x32xf32>
    %c1_113 = arith.constant 1 : index
    %c9_114 = arith.constant 9 : index
    %c0_115 = arith.constant 0 : index
    %91 = vector.load %arg13[%c1_113, %c9_114, %c0_115] : memref<18x32x96xf32, #tpu.memory_space<vmem>>, vector<16x16x32xf32>
    tpu.vector_store %arg13[%c1_113, %c9_114, %c0_115], %90 {strides = array<i32>} : memref<18x32x96xf32, #tpu.memory_space<vmem>>, vector<16x16x32xf32>,
    %c1_116 = arith.constant 1 : index
    %c8_117 = arith.constant 8 : index
    %c32_118 = arith.constant 32 : index
    %92 = vector.load %arg13[%c1_116, %c8_117, %c32_118] : memref<18x32x96xf32, #tpu.memory_space<vmem>>, vector<16x16x32xf32>
    tpu.vector_store %arg13[%c1_116, %c8_117, %c32_118], %90 {strides = array<i32>} : memref<18x32x96xf32, #tpu.memory_space<vmem>>, vector<16x16x32xf32>,
    %c1_119 = arith.constant 1 : index
    %c7_120 = arith.constant 7 : index
    %c64_121 = arith.constant 64 : index
    %93 = vector.load %arg13[%c1_119, %c7_120, %c64_121] : memref<18x32x96xf32, #tpu.memory_space<vmem>>, vector<16x16x32xf32>
    tpu.vector_store %arg13[%c1_119, %c7_120, %c64_121], %90 {strides = array<i32>} : memref<18x32x96xf32, #tpu.memory_space<vmem>>, vector<16x16x32xf32>,
    %c0_122 = arith.constant 0 : index
    %c8_123 = arith.constant 8 : index
    %c0_124 = arith.constant 0 : index
    %94 = vector.load %arg13[%c0_122, %c8_123, %c0_124] : memref<18x32x96xf32, #tpu.memory_space<vmem>>, vector<16x16x96xf32>
    %95 = vector.shape_cast %94 : vector<16x16x96xf32> to vector<256x96xf32>
    %c0_125 = arith.constant 0 : index
    %c0_126 = arith.constant 0 : index
    %c0_127 = arith.constant 0 : index
    %96 = vector.load %arg8[%c0_125, %c0_126, %c0_127] : memref<3x96x32xf32, #tpu.memory_space<vmem>>, vector<1x96x32xf32>
    %97 = vector.shape_cast %96 : vector<1x96x32xf32> to vector<96x32xf32>
    %cst_128 = arith.constant dense<0.000000e+00> : vector<256x32xf32>
    %98 = tpu.matmul %95, %97, %cst_128 {dimension_numbers = #tpu.dot_dimension_numbers<[1], [0], [0], [1], [0, 0, 1, 1], [], []>} : vector<256x96xf32>, vector<96x32xf32>, vector<256x32xf32> -> vector<256x32xf32>
    %c1_129 = arith.constant 1 : index
    %c8_130 = arith.constant 8 : index
    %c0_131 = arith.constant 0 : index
    %99 = vector.load %arg13[%c1_129, %c8_130, %c0_131] : memref<18x32x96xf32, #tpu.memory_space<vmem>>, vector<16x16x96xf32>
    %100 = vector.shape_cast %99 : vector<16x16x96xf32> to vector<256x96xf32>
    %c1_132 = arith.constant 1 : index
    %c0_133 = arith.constant 0 : index
    %c0_134 = arith.constant 0 : index
    %101 = vector.load %arg8[%c1_132, %c0_133, %c0_134] : memref<3x96x32xf32, #tpu.memory_space<vmem>>, vector<1x96x32xf32>
    %102 = vector.shape_cast %101 : vector<1x96x32xf32> to vector<96x32xf32>
    %cst_135 = arith.constant dense<0.000000e+00> : vector<256x32xf32>
    %103 = tpu.matmul %100, %102, %cst_135 {dimension_numbers = #tpu.dot_dimension_numbers<[1], [0], [0], [1], [0, 0, 1, 1], [], []>} : vector<256x96xf32>, vector<96x32xf32>, vector<256x32xf32> -> vector<256x32xf32>
    %104 = arith.addf %98, %103 : vector<256x32xf32>
    %c2_136 = arith.constant 2 : index
    %c8_137 = arith.constant 8 : index
    %c0_138 = arith.constant 0 : index
    %105 = vector.load %arg13[%c2_136, %c8_137, %c0_138] : memref<18x32x96xf32, #tpu.memory_space<vmem>>, vector<16x16x96xf32>
    %106 = vector.shape_cast %105 : vector<16x16x96xf32> to vector<256x96xf32>
    %c2_139 = arith.constant 2 : index
    %c0_140 = arith.constant 0 : index
    %c0_141 = arith.constant 0 : index
    %107 = vector.load %arg8[%c2_139, %c0_140, %c0_141] : memref<3x96x32xf32, #tpu.memory_space<vmem>>, vector<1x96x32xf32>
    %108 = vector.shape_cast %107 : vector<1x96x32xf32> to vector<96x32xf32>
    %cst_142 = arith.constant dense<0.000000e+00> : vector<256x32xf32>
    %109 = tpu.matmul %106, %108, %cst_142 {dimension_numbers = #tpu.dot_dimension_numbers<[1], [0], [0], [1], [0, 0, 1, 1], [], []>} : vector<256x96xf32>, vector<96x32xf32>, vector<256x32xf32> -> vector<256x32xf32>
    %110 = arith.addf %104, %109 : vector<256x32xf32>
    %c0_143 = arith.constant 0 : index
    %c0_144 = arith.constant 0 : index
    %111 = vector.load %arg9[%c0_143, %c0_144] : memref<1x32xf32, #tpu.memory_space<vmem>>, vector<1x32xf32>
    %112 = vector.broadcast %111 : vector<1x32xf32> to vector<256x32xf32>
    %113 = arith.addf %110, %112 : vector<256x32xf32>
    %cst_145 = arith.constant 0.000000e+00 : f32
    %114 = vector.broadcast %cst_145 : f32 to vector<256x32xf32>
    %115 = arith.maximumf %113, %114 : vector<256x32xf32>
    %c0_146 = arith.constant 0 : index
    %c96 = arith.constant 96 : index
    %116 = vector.load %arg14[%c0_146, %c96] : memref<256x128xf32, #tpu.memory_space<vmem>>, vector<256x32xf32>
    tpu.vector_store %arg14[%c0_146, %c96], %115 {strides = array<i32>} : memref<256x128xf32, #tpu.memory_space<vmem>>, vector<256x32xf32>,
    %c0_147 = arith.constant 0 : index
    %c0_148 = arith.constant 0 : index
    %117 = vector.load %arg14[%c0_147, %c0_148] : memref<256x128xf32, #tpu.memory_space<vmem>>, vector<256x128xf32>
    %c0_149 = arith.constant 0 : index
    %c0_150 = arith.constant 0 : index
    %118 = vector.load %arg10[%c0_149, %c0_150] : memref<128x32xf32, #tpu.memory_space<vmem>>, vector<128x32xf32>
    %cst_151 = arith.constant dense<0.000000e+00> : vector<256x32xf32>
    %119 = tpu.matmul %117, %118, %cst_151 {dimension_numbers = #tpu.dot_dimension_numbers<[1], [0], [0], [1], [0, 0, 1, 1], [], []>} : vector<256x128xf32>, vector<128x32xf32>, vector<256x32xf32> -> vector<256x32xf32>
    %c0_152 = arith.constant 0 : index
    %c0_153 = arith.constant 0 : index
    %120 = vector.load %arg11[%c0_152, %c0_153] : memref<1x32xf32, #tpu.memory_space<vmem>>, vector<1x32xf32>
    %121 = vector.broadcast %120 : vector<1x32xf32> to vector<256x32xf32>
    %122 = arith.addf %119, %121 : vector<256x32xf32>
    %123 = vector.shape_cast %122 : vector<256x32xf32> to vector<16x16x32xf32>
    %c0_154 = arith.constant 0 : index
    %c0_155 = arith.constant 0 : index
    %c0_156 = arith.constant 0 : index
    %c0_157 = arith.constant 0 : index
    %124 = vector.load %arg12[%c0_154, %c0_155, %c0_156, %c0_157] : memref<1x16x16x32xf32, #tpu.memory_space<vmem>>, vector<1x16x16x32xf32>
    %125 = vector.shape_cast %124 : vector<1x16x16x32xf32> to vector<16x16x32xf32>
    %126 = vector.shape_cast %123 : vector<16x16x32xf32> to vector<1x16x16x32xf32>
    tpu.vector_store %arg12[%c0_154, %c0_155, %c0_156, %c0_157], %126 {strides = array<i32>} : memref<1x16x16x32xf32, #tpu.memory_space<vmem>>, vector<1x16x16x32xf32>,
    return
  }
  func.func @transform_0(%arg0: i32) -> (i32, i32, i32, i32) {
    %c0_i32 = arith.constant 0 : i32
    %c0_i32_0 = arith.constant 0 : i32
    %c0_i32_1 = arith.constant 0 : i32
    %c0_i32_2 = arith.constant 0 : i32
    return %arg0, %c0_i32, %c0_i32_0, %c0_i32_1 : i32, i32, i32, i32
  }
  func.func @transform_1(%arg0: i32) -> (i32, i32, i32) {
    %c0_i32 = arith.constant 0 : i32
    %c0_i32_0 = arith.constant 0 : i32
    %c0_i32_1 = arith.constant 0 : i32
    %c0_i32_2 = arith.constant 0 : i32
    return %c0_i32, %c0_i32_0, %c0_i32_1 : i32, i32, i32
  }
  func.func @transform_2(%arg0: i32) -> (i32, i32) {
    %c0_i32 = arith.constant 0 : i32
    %c0_i32_0 = arith.constant 0 : i32
    %c0_i32_1 = arith.constant 0 : i32
    return %c0_i32, %c0_i32_0 : i32, i32
  }
  func.func @transform_3(%arg0: i32) -> (i32, i32, i32) {
    %c0_i32 = arith.constant 0 : i32
    %c0_i32_0 = arith.constant 0 : i32
    %c0_i32_1 = arith.constant 0 : i32
    %c0_i32_2 = arith.constant 0 : i32
    return %c0_i32, %c0_i32_0, %c0_i32_1 : i32, i32, i32
  }
  func.func @transform_4(%arg0: i32) -> (i32, i32) {
    %c0_i32 = arith.constant 0 : i32
    %c0_i32_0 = arith.constant 0 : i32
    %c0_i32_1 = arith.constant 0 : i32
    return %c0_i32, %c0_i32_0 : i32, i32
  }
  func.func @transform_5(%arg0: i32) -> (i32, i32, i32) {
    %c0_i32 = arith.constant 0 : i32
    %c0_i32_0 = arith.constant 0 : i32
    %c0_i32_1 = arith.constant 0 : i32
    %c0_i32_2 = arith.constant 0 : i32
    return %c0_i32, %c0_i32_0, %c0_i32_1 : i32, i32, i32
  }
  func.func @transform_6(%arg0: i32) -> (i32, i32) {
    %c0_i32 = arith.constant 0 : i32
    %c0_i32_0 = arith.constant 0 : i32
    %c0_i32_1 = arith.constant 0 : i32
    return %c0_i32, %c0_i32_0 : i32, i32
  }
  func.func @transform_7(%arg0: i32) -> (i32, i32, i32) {
    %c0_i32 = arith.constant 0 : i32
    %c0_i32_0 = arith.constant 0 : i32
    %c0_i32_1 = arith.constant 0 : i32
    %c0_i32_2 = arith.constant 0 : i32
    return %c0_i32, %c0_i32_0, %c0_i32_1 : i32, i32, i32
  }
  func.func @transform_8(%arg0: i32) -> (i32, i32) {
    %c0_i32 = arith.constant 0 : i32
    %c0_i32_0 = arith.constant 0 : i32
    %c0_i32_1 = arith.constant 0 : i32
    return %c0_i32, %c0_i32_0 : i32, i32
  }
  func.func @transform_9(%arg0: i32) -> (i32, i32) {
    %c0_i32 = arith.constant 0 : i32
    %c0_i32_0 = arith.constant 0 : i32
    %c0_i32_1 = arith.constant 0 : i32
    return %c0_i32, %c0_i32_0 : i32, i32
  }
  func.func @transform_10(%arg0: i32) -> (i32, i32) {
    %c0_i32 = arith.constant 0 : i32
    %c0_i32_0 = arith.constant 0 : i32
    %c0_i32_1 = arith.constant 0 : i32
    return %c0_i32, %c0_i32_0 : i32, i32
  }
  func.func @transform_11(%arg0: i32) -> (i32, i32, i32, i32) {
    %c0_i32 = arith.constant 0 : i32
    %c0_i32_0 = arith.constant 0 : i32
    %c0_i32_1 = arith.constant 0 : i32
    %c0_i32_2 = arith.constant 0 : i32
    return %arg0, %c0_i32, %c0_i32_0, %c0_i32_1 : i32, i32, i32, i32
  }
}

</mosaic_0001>

<llo_original>
// kernel: tpu_custom_call.1
$region0: #{tpu_custom_call.1}
  #allocation0 [shape = 'u32[]', space=smem, size = 0x4, offset = 0x4, fixed_abs, tag = 'smem constant byte address 0x4 - core index']
  #allocation1 [shape = 'u32[144,128]{1,0:T(1,128)}', space=vmem, size = 0x12000, scoped, tag = 'internal scratch']
  #allocation2 [shape = 'f32[18,32,96]{2,1,0:T(8,128)}', space=vmem, size = 0x48000, scoped, tag = 'scratch operand']
  #allocation3 [shape = 'f32[256,128]{1,0:T(8,128)}', space=vmem, size = 0x20000, scoped, tag = 'scratch operand']
  %s0 = inlined_call_operand.vmem [shape: f32[2,16,16,4], index: 0, kind: input, shape index: {}]
  %s1 = inlined_call_operand.vmem [shape: f32[3,96,32], index: 1, kind: input, shape index: {}]
  %s2 = inlined_call_operand.vmem [shape: f32[1,32], index: 2, kind: input, shape index: {}]
  %s3 = inlined_call_operand.vmem [shape: f32[3,96,32], index: 3, kind: input, shape index: {}]
  %s4 = inlined_call_operand.vmem [shape: f32[1,32], index: 4, kind: input, shape index: {}]
  %s5 = inlined_call_operand.vmem [shape: f32[3,96,32], index: 5, kind: input, shape index: {}]
  %s6 = inlined_call_operand.vmem [shape: f32[1,32], index: 6, kind: input, shape index: {}]
  %s7 = inlined_call_operand.vmem [shape: f32[3,96,32], index: 7, kind: input, shape index: {}]
  %s8 = inlined_call_operand.vmem [shape: f32[1,32], index: 8, kind: input, shape index: {}]
  %s9 = inlined_call_operand.vmem [shape: f32[128,32], index: 9, kind: input, shape index: {}]
  %s10 = inlined_call_operand.vmem [shape: f32[1,32], index: 10, kind: input, shape index: {}]
  %s11 = inlined_call_operand.hbm [shape: f32[2,16,16,32], index: 11, kind: output, shape index: {}]
  %s12 = sld [smem:[#allocation0]]
  $region77: #{tpu_custom_call.1} parent=0
    _
  %s14 = ssub.s32 1, %s12
  %s15 = scalar_select 0, %s14, %s12
  $region1: #{tpu_custom_call.1} parent=0
    #allocation4 [shape = 'u8[262144]{0}', space=vmem, size = 0x40000, scoped, tag = 'output window, operand 0']
    #allocation5 [shape = 's32[2]{0}', space=sflag, size = 0x8, scoped, tag = 'scoped memory for tpu_custom_call.1']
    %16 = vsyncpa [#allocation5], 0
    %s17 = scalar_lea.sflag [#allocation5], 1
    %18 = vsyncpa %s17, 0
    loop: start=0, step=1, limit=4
    $region2: #{tpu_custom_call.1} parent=1 // loop_pre_header
      _
    $region3: #{tpu_custom_call.1} parent=1 // loop_header
      %s20 = sphi 0, %s24
      %p21 = scmp.ge.s32.totalorder %s20, 4
      %s30 = sphi 0, %s32
      %s33 = sphi 0, %s30
      %s34 = sphi 0, %s33
      %s50 = sphi 0, %s34
      %s54 = sphi 0, %s54
      %s56 = sphi 0, %s54
      %s57 = sphi 0, %s56
      %s71 = sphi 0, %s57
      %s75 = sphi 0, %s75
      %s77 = sphi 0, %s75
      %s78 = sphi 0, %s77
      %s92 = sphi 0, %s78
      %s96 = sphi 0, %s96
      %s98 = sphi 0, %s96
      %s99 = sphi 0, %s98
      %s113 = sphi 0, %s99
      %s117 = sphi 0, %s117
      %s119 = sphi 0, %s117
      %s120 = sphi 0, %s119
      %s134 = sphi 0, %s120
      %s138 = sphi 0, %s138
      %s140 = sphi 0, %s138
      %s141 = sphi 0, %s140
      %s155 = sphi 0, %s141
      %s159 = sphi 0, %s159
      %s161 = sphi 0, %s159
      %s162 = sphi 0, %s161
      %s176 = sphi 0, %s162
      %s180 = sphi 0, %s180
      %s182 = sphi 0, %s180
      %s183 = sphi 0, %s182
      %s197 = sphi 0, %s183
      %s201 = sphi 0, %s201
      %s203 = sphi 0, %s201
      %s204 = sphi 0, %s203
      %s218 = sphi 0, %s204
      %s222 = sphi 0, %s222
      %s224 = sphi 0, %s222
      %s225 = sphi 0, %s224
      %s239 = sphi 0, %s225
      %s243 = sphi 0, %s243
      %s245 = sphi 0, %s243
      %s246 = sphi 0, %s245
      %s260 = sphi 0, %s246
      %s266 = sphi 0, %s268
      %s269 = sphi 0, %s266
      %s270 = sphi 0, %s269
      %s286 = sphi 0, %s270
    $region4: #{tpu_custom_call.1} parent=1 // loop_header_branch
      %23 = sbr.rel (%p21) target = $region8
    $region5: #{tpu_custom_call.1} parent=1 // loop_body
      %s25 = ssub.s32 %s20, 1
      %s26 = ssub.s32 %s20, 2
      %s27 = sadd.s32 %s20, 1
      %s28 = ssub.s32 %s20, %s27
      %p29 = scmp.eq.s32.totalorder %s28, 0
      %s31 = sadd.s32 %s30, 1
      %s32 = scalar_select %p29, %s30, %s31
      %p35 = pneg %p29
      %p36 = scmp.eq.s32.totalorder %s20, 1
      %p37 = por %p35, %p36
      %p38 = scmp.ne.s32.totalorder %s30, %s33
      %p39 = scmp.eq.s32.totalorder %s20, 0
      %p40 = por %p38, %p39
      %p41 = scmp.ne.s32.totalorder %s30, %s33
      %p42 = scmp.eq.s32.totalorder %s25, 1
      %p43 = por %p41, %p42
      %p44 = scmp.ne.s32.totalorder %s33, %s34
      %p45 = scmp.eq.s32.totalorder %s25, 0
      %p46 = por %p44, %p45
      %p47 = scmp.ne.s32.totalorder %s33, %s34
      %p48 = scmp.eq.s32.totalorder %s26, 1
      %p49 = por %p47, %p48
      %p51 = scmp.ne.s32.totalorder %s34, %s50
      %p52 = scmp.eq.s32.totalorder %s26, 0
      %p53 = por %p51, %p52
      %s55 = sadd.s32 %s54, 1
      %p58 = scmp.eq.s32.totalorder %s20, 1
      %p59 = scmp.ne.s32.totalorder %s54, %s56
      %p60 = scmp.eq.s32.totalorder %s20, 0
      %p61 = por %p59, %p60
      %p62 = scmp.ne.s32.totalorder %s54, %s56
      %p63 = scmp.eq.s32.totalorder %s25, 1
      %p64 = por %p62, %p63
      %p65 = scmp.ne.s32.totalorder %s56, %s57
      %p66 = scmp.eq.s32.totalorder %s25, 0
      %p67 = por %p65, %p66
      %p68 = scmp.ne.s32.totalorder %s56, %s57
      %p69 = scmp.eq.s32.totalorder %s26, 1
      %p70 = por %p68, %p69
      %p72 = scmp.ne.s32.totalorder %s57, %s71
      %p73 = scmp.eq.s32.totalorder %s26, 0
      %p74 = por %p72, %p73
      %s76 = sadd.s32 %s75, 1
      %p79 = scmp.eq.s32.totalorder %s20, 1
      %p80 = scmp.ne.s32.totalorder %s75, %s77
      %p81 = scmp.eq.s32.totalorder %s20, 0
      %p82 = por %p80, %p81
      %p83 = scmp.ne.s32.totalorder %s75, %s77
      %p84 = scmp.eq.s32.totalorder %s25, 1
      %p85 = por %p83, %p84
      %p86 = scmp.ne.s32.totalorder %s77, %s78
      %p87 = scmp.eq.s32.totalorder %s25, 0
      %p88 = por %p86, %p87
      %p89 = scmp.ne.s32.totalorder %s77, %s78
      %p90 = scmp.eq.s32.totalorder %s26, 1
      %p91 = por %p89, %p90
      %p93 = scmp.ne.s32.totalorder %s78, %s92
      %p94 = scmp.eq.s32.totalorder %s26, 0
      %p95 = por %p93, %p94
      %s97 = sadd.s32 %s96, 1
      %p100 = scmp.eq.s32.totalorder %s20, 1
      %p101 = scmp.ne.s32.totalorder %s96, %s98
      %p102 = scmp.eq.s32.totalorder %s20, 0
      %p103 = por %p101, %p102
      %p104 = scmp.ne.s32.totalorder %s96, %s98
      %p105 = scmp.eq.s32.totalorder %s25, 1
      %p106 = por %p104, %p105
      %p107 = scmp.ne.s32.totalorder %s98, %s99
      %p108 = scmp.eq.s32.totalorder %s25, 0
      %p109 = por %p107, %p108
      %p110 = scmp.ne.s32.totalorder %s98, %s99
      %p111 = scmp.eq.s32.totalorder %s26, 1
      %p112 = por %p110, %p111
      %p114 = scmp.ne.s32.totalorder %s99, %s113
      %p115 = scmp.eq.s32.totalorder %s26, 0
      %p116 = por %p114, %p115
      %s118 = sadd.s32 %s117, 1
      %p121 = scmp.eq.s32.totalorder %s20, 1
      %p122 = scmp.ne.s32.totalorder %s117, %s119
      %p123 = scmp.eq.s32.totalorder %s20, 0
      %p124 = por %p122, %p123
      %p125 = scmp.ne.s32.totalorder %s117, %s119
      %p126 = scmp.eq.s32.totalorder %s25, 1
      %p127 = por %p125, %p126
      %p128 = scmp.ne.s32.totalorder %s119, %s120
      %p129 = scmp.eq.s32.totalorder %s25, 0
      %p130 = por %p128, %p129
      %p131 = scmp.ne.s32.totalorder %s119, %s120
      %p132 = scmp.eq.s32.totalorder %s26, 1
      %p133 = por %p131, %p132
      %p135 = scmp.ne.s32.totalorder %s120, %s134
      %p136 = scmp.eq.s32.totalorder %s26, 0
      %p137 = por %p135, %p136
      %s139 = sadd.s32 %s138, 1
      %p142 = scmp.eq.s32.totalorder %s20, 1
      %p143 = scmp.ne.s32.totalorder %s138, %s140
      %p144 = scmp.eq.s32.totalorder %s20, 0
      %p145 = por %p143, %p144
      %p146 = scmp.ne.s32.totalorder %s138, %s140
      %p147 = scmp.eq.s32.totalorder %s25, 1
      %p148 = por %p146, %p147
      %p149 = scmp.ne.s32.totalorder %s140, %s141
      %p150 = scmp.eq.s32.totalorder %s25, 0
      %p151 = por %p149, %p150
      %p152 = scmp.ne.s32.totalorder %s140, %s141
      %p153 = scmp.eq.s32.totalorder %s26, 1
      %p154 = por %p152, %p153
      %p156 = scmp.ne.s32.totalorder %s141, %s155
      %p157 = scmp.eq.s32.totalorder %s26, 0
      %p158 = por %p156, %p157
      %s160 = sadd.s32 %s159, 1
      %p163 = scmp.eq.s32.totalorder %s20, 1
      %p164 = scmp.ne.s32.totalorder %s159, %s161
      %p165 = scmp.eq.s32.totalorder %s20, 0
      %p166 = por %p164, %p165
      %p167 = scmp.ne.s32.totalorder %s159, %s161
      %p168 = scmp.eq.s32.totalorder %s25, 1
      %p169 = por %p167, %p168
      %p170 = scmp.ne.s32.totalorder %s161, %s162
      %p171 = scmp.eq.s32.totalorder %s25, 0
      %p172 = por %p170, %p171
      %p173 = scmp.ne.s32.totalorder %s161, %s162
      %p174 = scmp.eq.s32.totalorder %s26, 1
      %p175 = por %p173, %p174
      %p177 = scmp.ne.s32.totalorder %s162, %s176
      %p178 = scmp.eq.s32.totalorder %s26, 0
      %p179 = por %p177, %p178
      %s181 = sadd.s32 %s180, 1
      %p184 = scmp.eq.s32.totalorder %s20, 1
      %p185 = scmp.ne.s32.totalorder %s180, %s182
      %p186 = scmp.eq.s32.totalorder %s20, 0
      %p187 = por %p185, %p186
      %p188 = scmp.ne.s32.totalorder %s180, %s182
      %p189 = scmp.eq.s32.totalorder %s25, 1
      %p190 = por %p188, %p189
      %p191 = scmp.ne.s32.totalorder %s182, %s183
      %p192 = scmp.eq.s32.totalorder %s25, 0
      %p193 = por %p191, %p192
      %p194 = scmp.ne.s32.totalorder %s182, %s183
      %p195 = scmp.eq.s32.totalorder %s26, 1
      %p196 = por %p194, %p195
      %p198 = scmp.ne.s32.totalorder %s183, %s197
      %p199 = scmp.eq.s32.totalorder %s26, 0
      %p200 = por %p198, %p199
      %s202 = sadd.s32 %s201, 1
      %p205 = scmp.eq.s32.totalorder %s20, 1
      %p206 = scmp.ne.s32.totalorder %s201, %s203
      %p207 = scmp.eq.s32.totalorder %s20, 0
      %p208 = por %p206, %p207
      %p209 = scmp.ne.s32.totalorder %s201, %s203
      %p210 = scmp.eq.s32.totalorder %s25, 1
      %p211 = por %p209, %p210
      %p212 = scmp.ne.s32.totalorder %s203, %s204
      %p213 = scmp.eq.s32.totalorder %s25, 0
      %p214 = por %p212, %p213
      %p215 = scmp.ne.s32.totalorder %s203, %s204
      %p216 = scmp.eq.s32.totalorder %s26, 1
      %p217 = por %p215, %p216
      %p219 = scmp.ne.s32.totalorder %s204, %s218
      %p220 = scmp.eq.s32.totalorder %s26, 0
      %p221 = por %p219, %p220
      %s223 = sadd.s32 %s222, 1
      %p226 = scmp.eq.s32.totalorder %s20, 1
      %p227 = scmp.ne.s32.totalorder %s222, %s224
      %p228 = scmp.eq.s32.totalorder %s20, 0
      %p229 = por %p227, %p228
      %p230 = scmp.ne.s32.totalorder %s222, %s224
      %p231 = scmp.eq.s32.totalorder %s25, 1
      %p232 = por %p230, %p231
      %p233 = scmp.ne.s32.totalorder %s224, %s225
      %p234 = scmp.eq.s32.totalorder %s25, 0
      %p235 = por %p233, %p234
      %p236 = scmp.ne.s32.totalorder %s224, %s225
      %p237 = scmp.eq.s32.totalorder %s26, 1
      %p238 = por %p236, %p237
      %p240 = scmp.ne.s32.totalorder %s225, %s239
      %p241 = scmp.eq.s32.totalorder %s26, 0
      %p242 = por %p240, %p241
      %s244 = sadd.s32 %s243, 1
      %p247 = scmp.eq.s32.totalorder %s20, 1
      %p248 = scmp.ne.s32.totalorder %s243, %s245
      %p249 = scmp.eq.s32.totalorder %s20, 0
      %p250 = por %p248, %p249
      %p251 = scmp.ne.s32.totalorder %s243, %s245
      %p252 = scmp.eq.s32.totalorder %s25, 1
      %p253 = por %p251, %p252
      %p254 = scmp.ne.s32.totalorder %s245, %s246
      %p255 = scmp.eq.s32.totalorder %s25, 0
      %p256 = por %p254, %p255
      %p257 = scmp.ne.s32.totalorder %s245, %s246
      %p258 = scmp.eq.s32.totalorder %s26, 1
      %p259 = por %p257, %p258
      %p261 = scmp.ne.s32.totalorder %s246, %s260
      %p262 = scmp.eq.s32.totalorder %s26, 0
      %p263 = por %p261, %p262
      %s264 = ssub.s32 %s20, %s27
      %p265 = scmp.eq.s32.totalorder %s264, 0
      %s267 = sadd.s32 %s266, 1
      %s268 = scalar_select %p265, %s266, %s267
      %p271 = pneg %p265
      %p272 = scmp.eq.s32.totalorder %s20, 1
      %p273 = por %p271, %p272
      %p274 = scmp.ne.s32.totalorder %s266, %s269
      %p275 = scmp.eq.s32.totalorder %s20, 0
      %p276 = por %p274, %p275
      %p277 = scmp.ne.s32.totalorder %s266, %s269
      %p278 = scmp.eq.s32.totalorder %s25, 1
      %p279 = por %p277, %p278
      %p280 = scmp.ne.s32.totalorder %s269, %s270
      %p281 = scmp.eq.s32.totalorder %s25, 0
      %p282 = por %p280, %p281
      %p283 = scmp.ne.s32.totalorder %s269, %s270
      %p284 = scmp.eq.s32.totalorder %s26, 1
      %p285 = por %p283, %p284
      %p287 = scmp.ne.s32.totalorder %s270, %s286
      %p288 = scmp.eq.s32.totalorder %s26, 0
      %p289 = por %p287, %p288
      %p290 = scmp.le.s32.totalorder 1, %s20
      %p291 = scmp.lt.s32.totalorder %s20, 3
      %p292 = pnand %p290, %p291
      %p293 = pneg %p292
      // Predicated region
      $region9: #{tpu_custom_call.1} parent=5 // pred_check
        _
      $region10: #{tpu_custom_call.1} parent=5 // pred_check_branch
        %295 = sbr.rel (%p292) target = $region12
      $region11: #{tpu_custom_call.1} parent=5 // pred_region
        %s296 = ssub.s32 %s20, 1
        // Predicated region
        $region13: #{tpu_custom_call.1} parent=11 // pred_check
          %p297 = pneg %p67
        $region14: #{tpu_custom_call.1} parent=11 // pred_check_branch
          %299 = sbr.rel (%p297) target = $region16
        $region15: #{tpu_custom_call.1} parent=11 // pred_region
          _
        $region16: #{tpu_custom_call.1} parent=11 // pred_fallthru
          _
        // Predicated region
        $region17: #{tpu_custom_call.1} parent=11 // pred_check
          %p300 = pneg %p88
        $region18: #{tpu_custom_call.1} parent=11 // pred_check_branch
          %302 = sbr.rel (%p300) target = $region20
        $region19: #{tpu_custom_call.1} parent=11 // pred_region
          _
        $region20: #{tpu_custom_call.1} parent=11 // pred_fallthru
          _
        // Predicated region
        $region21: #{tpu_custom_call.1} parent=11 // pred_check
          %p303 = pneg %p109
        $region22: #{tpu_custom_call.1} parent=11 // pred_check_branch
          %305 = sbr.rel (%p303) target = $region24
        $region23: #{tpu_custom_call.1} parent=11 // pred_region
          _
        $region24: #{tpu_custom_call.1} parent=11 // pred_fallthru
          _
        // Predicated region
        $region25: #{tpu_custom_call.1} parent=11 // pred_check
          %p306 = pneg %p130
        $region26: #{tpu_custom_call.1} parent=11 // pred_check_branch
          %308 = sbr.rel (%p306) target = $region28
        $region27: #{tpu_custom_call.1} parent=11 // pred_region
          _
        $region28: #{tpu_custom_call.1} parent=11 // pred_fallthru
          _
        // Predicated region
        $region29: #{tpu_custom_call.1} parent=11 // pred_check
          %p309 = pneg %p151
        $region30: #{tpu_custom_call.1} parent=11 // pred_check_branch
          %311 = sbr.rel (%p309) target = $region32
        $region31: #{tpu_custom_call.1} parent=11 // pred_region
          _
        $region32: #{tpu_custom_call.1} parent=11 // pred_fallthru
          _
        // Predicated region
        $region33: #{tpu_custom_call.1} parent=11 // pred_check
          %p312 = pneg %p172
        $region34: #{tpu_custom_call.1} parent=11 // pred_check_branch
          %314 = sbr.rel (%p312) target = $region36
        $region35: #{tpu_custom_call.1} parent=11 // pred_region
          _
        $region36: #{tpu_custom_call.1} parent=11 // pred_fallthru
          _
        // Predicated region
        $region37: #{tpu_custom_call.1} parent=11 // pred_check
          %p315 = pneg %p193
        $region38: #{tpu_custom_call.1} parent=11 // pred_check_branch
          %317 = sbr.rel (%p315) target = $region40
        $region39: #{tpu_custom_call.1} parent=11 // pred_region
          _
        $region40: #{tpu_custom_call.1} parent=11 // pred_fallthru
          _
        // Predicated region
        $region41: #{tpu_custom_call.1} parent=11 // pred_check
          %p318 = pneg %p214
        $region42: #{tpu_custom_call.1} parent=11 // pred_check_branch
          %320 = sbr.rel (%p318) target = $region44
        $region43: #{tpu_custom_call.1} parent=11 // pred_region
          _
        $region44: #{tpu_custom_call.1} parent=11 // pred_fallthru
          _
        // Predicated region
        $region45: #{tpu_custom_call.1} parent=11 // pred_check
          %p321 = pneg %p235
        $region46: #{tpu_custom_call.1} parent=11 // pred_check_branch
          %323 = sbr.rel (%p321) target = $region48
        $region47: #{tpu_custom_call.1} parent=11 // pred_region
          _
        $region48: #{tpu_custom_call.1} parent=11 // pred_fallthru
          _
        // Predicated region
        $region49: #{tpu_custom_call.1} parent=11 // pred_check
          %p324 = pneg %p256
        $region50: #{tpu_custom_call.1} parent=11 // pred_check_branch
          %326 = sbr.rel (%p324) target = $region52
        $region51: #{tpu_custom_call.1} parent=11 // pred_region
          _
        $region52: #{tpu_custom_call.1} parent=11 // pred_fallthru
          _
      $region12: #{tpu_custom_call.1} parent=5 // pred_fallthru
        _
      %p327 = scmp.lt.s32.totalorder %s20, 2
      // Predicated region
      $region53: #{tpu_custom_call.1} parent=5 // pred_check
        %p328 = pneg %p327
      $region54: #{tpu_custom_call.1} parent=5 // pred_check_branch
        %330 = sbr.rel (%p328) target = $region56
      $region55: #{tpu_custom_call.1} parent=5 // pred_region
        // Predicated region
        $region57: #{tpu_custom_call.1} parent=55 // pred_check
          %p331 = pneg %p40
        $region58: #{tpu_custom_call.1} parent=55 // pred_check_branch
          %333 = sbr.rel (%p331) target = $region60
        $region59: #{tpu_custom_call.1} parent=55 // pred_region
          %p334 = scmp.lt.s32.totalorder %s20, 1
          %s335 = scalar_select %p334, %s20, 1
          %s336 = smul.addr %s335, 32
          %s337 = smul.addr %s336, 8
          %s338 = scalar_lea.vmem %s0, %s337
        $region60: #{tpu_custom_call.1} parent=55 // pred_fallthru
          _
      $region56: #{tpu_custom_call.1} parent=5 // pred_fallthru
        _
      %p339 = scmp.le.s32.totalorder 1, %s20
      %p340 = scmp.lt.s32.totalorder %s20, 3
      %p341 = pnand %p339, %p340
      %p342 = pneg %p341
      // Predicated region
      $region61: #{tpu_custom_call.1} parent=5 // pred_check
        _
      $region62: #{tpu_custom_call.1} parent=5 // pred_check_branch
        %344 = sbr.rel (%p341) target = $region64
      $region63: #{tpu_custom_call.1} parent=5 // pred_region
        %s345 = ssub.s32 %s20, 1
        %p346 = scmp.lt.s32.totalorder %s25, 1
        %s347 = scalar_select %p346, %s25, 1
        %s348 = smul.addr %s347, 32
        %s349 = smul.addr %s348, 8
        %s350 = scalar_lea.vmem %s0, %s349
        %p351 = pneg %p46
        %p352 = pneg %p43
        %p353 = pneg %p67
        %p354 = pneg %p64
        %p355 = pneg %p88
        %p356 = pneg %p85
        %p357 = pneg %p109
        %p358 = pneg %p106
        %p359 = pneg %p130
        %p360 = pneg %p127
        %p361 = pneg %p151
        %p362 = pneg %p148
        %p363 = pneg %p172
        %p364 = pneg %p169
        %p365 = pneg %p193
        %p366 = pneg %p190
        %p367 = pneg %p214
        %p368 = pneg %p211
        %p369 = pneg %p235
        %p370 = pneg %p232
        %p371 = pneg %p256
        %p372 = pneg %p253
        %p373 = pneg %p282
        %p374 = pneg %p279
        %s375 = sand.u32 %s269, 1
        %s376 = scalar_lea.sflag [#allocation5], %s375
        %s377 = sand.u32 %s269, 1
        %s378 = smul.addr %s377, 256
        %s379 = scalar_lea.vmem [#allocation4], %s378
        %p380 = scmp.lt.s32.totalorder %s25, 1
        %s381 = scalar_select %p380, %s25, 1
        %s382 = smul.addr %s381, 32
        %s383 = smul.addr %s382, 8
        %s384 = scalar_lea.vmem %s0, %s383
        %vm385 = vcmask 785408
        %386 = vst.msk [vmem:[#allocation2] sm:$0xff] %vm385, 0.0
        %387 = vst.msk [vmem:[#allocation2 + $0x8] sm:$0xff] %vm385, 0.0
        %388 = vst.msk [vmem:[#allocation2 + $0x10] sm:$0xff] %vm385, 0.0
        %389 = vst.msk [vmem:[#allocation2 + $0x18] sm:$0xff] %vm385, 0.0
        %s390 = scalar_lea.vmem [#allocation2], 544
        %391 = vst.msk [vmem:[%s390] sm:$0xff] %vm385, 0.0
        %392 = vst.msk [vmem:[%s390 + $0x8] sm:$0xff] %vm385, 0.0
        %393 = vst.msk [vmem:[%s390 + $0x10] sm:$0xff] %vm385, 0.0
        %394 = vst.msk [vmem:[%s390 + $0x18] sm:$0xff] %vm385, 0.0
        %s395 = scalar_lea.vmem [#allocation2], 32
        %vm396 = vcmask 778240
        %397 = vst.msk [vmem:[%s395 + $0x8] sm:$0x1] %vm396, 0.0
        %398 = vst.msk [vmem:[%s395 + $0x28] sm:$0x1] %vm396, 0.0
        %399 = vst.msk [vmem:[%s395 + $0x48] sm:$0x1] %vm396, 0.0
        %400 = vst.msk [vmem:[%s395 + $0x68] sm:$0x1] %vm396, 0.0
        %401 = vst.msk [vmem:[%s395 + $0x88] sm:$0x1] %vm396, 0.0
        %402 = vst.msk [vmem:[%s395 + $0xa8] sm:$0x1] %vm396, 0.0
        %403 = vst.msk [vmem:[%s395 + $0xc8] sm:$0x1] %vm396, 0.0
        %404 = vst.msk [vmem:[%s395 + $0xe8] sm:$0x1] %vm396, 0.0
        %405 = vst.msk [vmem:[%s395 + $0x108] sm:$0x1] %vm396, 0.0
        %406 = vst.msk [vmem:[%s395 + $0x128] sm:$0x1] %vm396, 0.0
        %407 = vst.msk [vmem:[%s395 + $0x148] sm:$0x1] %vm396, 0.0
        %408 = vst.msk [vmem:[%s395 + $0x168] sm:$0x1] %vm396, 0.0
        %409 = vst.msk [vmem:[%s395 + $0x188] sm:$0x1] %vm396, 0.0
        %410 = vst.msk [vmem:[%s395 + $0x1a8] sm:$0x1] %vm396, 0.0
        %411 = vst.msk [vmem:[%s395 + $0x1c8] sm:$0x1] %vm396, 0.0
        %412 = vst.msk [vmem:[%s395 + $0x1e8] sm:$0x1] %vm396, 0.0
        %413 = vst.msk [vmem:[%s395 + $0x17] sm:$0x1] %vm396, 0.0
        %414 = vst.msk [vmem:[%s395 + $0x37] sm:$0x1] %vm396, 0.0
        %415 = vst.msk [vmem:[%s395 + $0x57] sm:$0x1] %vm396, 0.0
        %416 = vst.msk [vmem:[%s395 + $0x77] sm:$0x1] %vm396, 0.0
        %417 = vst.msk [vmem:[%s395 + $0x97] sm:$0x1] %vm396, 0.0
        %418 = vst.msk [vmem:[%s395 + $0xb7] sm:$0x1] %vm396, 0.0
        %419 = vst.msk [vmem:[%s395 + $0xd7] sm:$0x1] %vm396, 0.0
        %420 = vst.msk [vmem:[%s395 + $0xf7] sm:$0x1] %vm396, 0.0
        %421 = vst.msk [vmem:[%s395 + $0x117] sm:$0x1] %vm396, 0.0
        %422 = vst.msk [vmem:[%s395 + $0x137] sm:$0x1] %vm396, 0.0
        %423 = vst.msk [vmem:[%s395 + $0x157] sm:$0x1] %vm396, 0.0
        %424 = vst.msk [vmem:[%s395 + $0x177] sm:$0x1] %vm396, 0.0
        %425 = vst.msk [vmem:[%s395 + $0x197] sm:$0x1] %vm396, 0.0
        %426 = vst.msk [vmem:[%s395 + $0x1b7] sm:$0x1] %vm396, 0.0
        %427 = vst.msk [vmem:[%s395 + $0x1d7] sm:$0x1] %vm396, 0.0
        %428 = vst.msk [vmem:[%s395 + $0x1f7] sm:$0x1] %vm396, 0.0
        %v429 = vld [vmem:[%s384] sm:$0xff]
        %v430 = vld [vmem:[%s384 + $0x8] sm:$0xff]
        %v431 = vld [vmem:[%s384 + $0x10] sm:$0xff]
        %v432 = vld [vmem:[%s384 + $0x18] sm:$0xff]
        %v433 = vld [vmem:[%s384 + $0x20] sm:$0xff]
        %v434 = vld [vmem:[%s384 + $0x28] sm:$0xff]
        %v435 = vld [vmem:[%s384 + $0x30] sm:$0xff]
        %v436 = vld [vmem:[%s384 + $0x38] sm:$0xff]
        %v437 = vld [vmem:[%s384 + $0x40] sm:$0xff]
        %v438 = vld [vmem:[%s384 + $0x48] sm:$0xff]
        %v439 = vld [vmem:[%s384 + $0x50] sm:$0xff]
        %v440 = vld [vmem:[%s384 + $0x58] sm:$0xff]
        %v441 = vld [vmem:[%s384 + $0x60] sm:$0xff]
        %v442 = vld [vmem:[%s384 + $0x68] sm:$0xff]
        %v443 = vld [vmem:[%s384 + $0x70] sm:$0xff]
        %v444 = vld [vmem:[%s384 + $0x78] sm:$0xff]
        %v445 = vld [vmem:[%s384 + $0x80] sm:$0xff]
        %v446 = vld [vmem:[%s384 + $0x88] sm:$0xff]
        %v447 = vld [vmem:[%s384 + $0x90] sm:$0xff]
        %v448 = vld [vmem:[%s384 + $0x98] sm:$0xff]
        %v449 = vld [vmem:[%s384 + $0xa0] sm:$0xff]
        %v450 = vld [vmem:[%s384 + $0xa8] sm:$0xff]
        %v451 = vld [vmem:[%s384 + $0xb0] sm:$0xff]
        %v452 = vld [vmem:[%s384 + $0xb8] sm:$0xff]
        %v453 = vld [vmem:[%s384 + $0xc0] sm:$0xff]
        %v454 = vld [vmem:[%s384 + $0xc8] sm:$0xff]
        %v455 = vld [vmem:[%s384 + $0xd0] sm:$0xff]
        %v456 = vld [vmem:[%s384 + $0xd8] sm:$0xff]
        %v457 = vld [vmem:[%s384 + $0xe0] sm:$0xff]
        %v458 = vld [vmem:[%s384 + $0xe8] sm:$0xff]
        %v459 = vld [vmem:[%s384 + $0xf0] sm:$0xff]
        %v460 = vld [vmem:[%s384 + $0xf8] sm:$0xff]
        %vm461 = vcmask 31744
        %v462 = vsel %vm461, %v429, 0.0
        %v463 = vsel %vm461, %v430, 0.0
        %v464 = vsel %vm461, %v431, 0.0
        %v465 = vsel %vm461, %v432, 0.0
        %v466 = vsel %vm461, %v433, 0.0
        %v467 = vsel %vm461, %v434, 0.0
        %v468 = vsel %vm461, %v435, 0.0
        %v469 = vsel %vm461, %v436, 0.0
        %v470 = vsel %vm461, %v437, 0.0
        %v471 = vsel %vm461, %v438, 0.0
        %v472 = vsel %vm461, %v439, 0.0
        %v473 = vsel %vm461, %v440, 0.0
        %v474 = vsel %vm461, %v441, 0.0
        %v475 = vsel %vm461, %v442, 0.0
        %v476 = vsel %vm461, %v443, 0.0
        %v477 = vsel %vm461, %v444, 0.0
        %v478 = vsel %vm461, %v445, 0.0
        %v479 = vsel %vm461, %v446, 0.0
        %v480 = vsel %vm461, %v447, 0.0
        %v481 = vsel %vm461, %v448, 0.0
        %v482 = vsel %vm461, %v449, 0.0
        %v483 = vsel %vm461, %v450, 0.0
        %v484 = vsel %vm461, %v451, 0.0
        %v485 = vsel %vm461, %v452, 0.0
        %v486 = vsel %vm461, %v453, 0.0
        %v487 = vsel %vm461, %v454, 0.0
        %v488 = vsel %vm461, %v455, 0.0
        %v489 = vsel %vm461, %v456, 0.0
        %v490 = vsel %vm461, %v457, 0.0
        %v491 = vsel %vm461, %v458, 0.0
        %v492 = vsel %vm461, %v459, 0.0
        %v493 = vsel %vm461, %v460, 0.0
        %vm494 = vcmask 261120
        %495 = vst.msk [vmem:[%s395 + $0x9] sm:$0xff] %vm494, %v462
        %496 = vst.msk [vmem:[%s395 + $0x11] sm:$0xff] %vm494, %v463
        %497 = vst.msk [vmem:[%s395 + $0x29] sm:$0xff] %vm494, %v464
        %498 = vst.msk [vmem:[%s395 + $0x31] sm:$0xff] %vm494, %v465
        %499 = vst.msk [vmem:[%s395 + $0x49] sm:$0xff] %vm494, %v466
        %500 = vst.msk [vmem:[%s395 + $0x51] sm:$0xff] %vm494, %v467
        %501 = vst.msk [vmem:[%s395 + $0x69] sm:$0xff] %vm494, %v468
        %502 = vst.msk [vmem:[%s395 + $0x71] sm:$0xff] %vm494, %v469
        %503 = vst.msk [vmem:[%s395 + $0x89] sm:$0xff] %vm494, %v470
        %504 = vst.msk [vmem:[%s395 + $0x91] sm:$0xff] %vm494, %v471
        %505 = vst.msk [vmem:[%s395 + $0xa9] sm:$0xff] %vm494, %v472
        %506 = vst.msk [vmem:[%s395 + $0xb1] sm:$0xff] %vm494, %v473
        %507 = vst.msk [vmem:[%s395 + $0xc9] sm:$0xff] %vm494, %v474
        %508 = vst.msk [vmem:[%s395 + $0xd1] sm:$0xff] %vm494, %v475
        %509 = vst.msk [vmem:[%s395 + $0xe9] sm:$0xff] %vm494, %v476
        %510 = vst.msk [vmem:[%s395 + $0xf1] sm:$0xff] %vm494, %v477
        %511 = vst.msk [vmem:[%s395 + $0x109] sm:$0xff] %vm494, %v478
        %512 = vst.msk [vmem:[%s395 + $0x111] sm:$0xff] %vm494, %v479
        %513 = vst.msk [vmem:[%s395 + $0x129] sm:$0xff] %vm494, %v480
        %514 = vst.msk [vmem:[%s395 + $0x131] sm:$0xff] %vm494, %v481
        %515 = vst.msk [vmem:[%s395 + $0x149] sm:$0xff] %vm494, %v482
        %516 = vst.msk [vmem:[%s395 + $0x151] sm:$0xff] %vm494, %v483
        %517 = vst.msk [vmem:[%s395 + $0x169] sm:$0xff] %vm494, %v484
        %518 = vst.msk [vmem:[%s395 + $0x171] sm:$0xff] %vm494, %v485
        %519 = vst.msk [vmem:[%s395 + $0x189] sm:$0xff] %vm494, %v486
        %520 = vst.msk [vmem:[%s395 + $0x191] sm:$0xff] %vm494, %v487
        %521 = vst.msk [vmem:[%s395 + $0x1a9] sm:$0xff] %vm494, %v488
        %522 = vst.msk [vmem:[%s395 + $0x1b1] sm:$0xff] %vm494, %v489
        %523 = vst.msk [vmem:[%s395 + $0x1c9] sm:$0xff] %vm494, %v490
        %524 = vst.msk [vmem:[%s395 + $0x1d1] sm:$0xff] %vm494, %v491
        %525 = vst.msk [vmem:[%s395 + $0x1e9] sm:$0xff] %vm494, %v492
        %526 = vst.msk [vmem:[%s395 + $0x1f1] sm:$0xff] %vm494, %v493
        %559 = vrot.lane.b32.xlu0 %v462, 32
        %v560 = vpop.permute.xlu0 %559
        %561 = vrot.lane.b32.xlu0 %v463, 32
        %v562 = vpop.permute.xlu0 %561
        %563 = vrot.lane.b32.xlu0 %v464, 32
        %v564 = vpop.permute.xlu0 %563
        %565 = vrot.lane.b32.xlu0 %v465, 32
        %v566 = vpop.permute.xlu0 %565
        %567 = vrot.lane.b32.xlu0 %v466, 32
        %v568 = vpop.permute.xlu0 %567
        %569 = vrot.lane.b32.xlu0 %v467, 32
        %v570 = vpop.permute.xlu0 %569
        %571 = vrot.lane.b32.xlu0 %v468, 32
        %v572 = vpop.permute.xlu0 %571
        %573 = vrot.lane.b32.xlu0 %v469, 32
        %v574 = vpop.permute.xlu0 %573
        %575 = vrot.lane.b32.xlu0 %v470, 32
        %v576 = vpop.permute.xlu0 %575
        %577 = vrot.lane.b32.xlu0 %v471, 32
        %v578 = vpop.permute.xlu0 %577
        %579 = vrot.lane.b32.xlu0 %v472, 32
        %v580 = vpop.permute.xlu0 %579
        %581 = vrot.lane.b32.xlu0 %v473, 32
        %v582 = vpop.permute.xlu0 %581
        %583 = vrot.lane.b32.xlu0 %v474, 32
        %v584 = vpop.permute.xlu0 %583
        %585 = vrot.lane.b32.xlu0 %v475, 32
        %v586 = vpop.permute.xlu0 %585
        %587 = vrot.lane.b32.xlu0 %v476, 32
        %v588 = vpop.permute.xlu0 %587
        %589 = vrot.lane.b32.xlu0 %v477, 32
        %v590 = vpop.permute.xlu0 %589
        %591 = vrot.lane.b32.xlu0 %v478, 32
        %v592 = vpop.permute.xlu0 %591
        %593 = vrot.lane.b32.xlu0 %v479, 32
        %v594 = vpop.permute.xlu0 %593
        %595 = vrot.lane.b32.xlu0 %v480, 32
        %v596 = vpop.permute.xlu0 %595
        %597 = vrot.lane.b32.xlu0 %v481, 32
        %v598 = vpop.permute.xlu0 %597
        %599 = vrot.lane.b32.xlu0 %v482, 32
        %v600 = vpop.permute.xlu0 %599
        %601 = vrot.lane.b32.xlu0 %v483, 32
        %v602 = vpop.permute.xlu0 %601
        %603 = vrot.lane.b32.xlu0 %v484, 32
        %v604 = vpop.permute.xlu0 %603
        %605 = vrot.lane.b32.xlu0 %v485, 32
        %v606 = vpop.permute.xlu0 %605
        %607 = vrot.lane.b32.xlu0 %v486, 32
        %v608 = vpop.permute.xlu0 %607
        %609 = vrot.lane.b32.xlu0 %v487, 32
        %v610 = vpop.permute.xlu0 %609
        %611 = vrot.lane.b32.xlu0 %v488, 32
        %v612 = vpop.permute.xlu0 %611
        %613 = vrot.lane.b32.xlu0 %v489, 32
        %v614 = vpop.permute.xlu0 %613
        %615 = vrot.lane.b32.xlu0 %v490, 32
        %v616 = vpop.permute.xlu0 %615
        %617 = vrot.lane.b32.xlu0 %v491, 32
        %v618 = vpop.permute.xlu0 %617
        %619 = vrot.lane.b32.xlu0 %v492, 32
        %v620 = vpop.permute.xlu0 %619
        %621 = vrot.lane.b32.xlu0 %v493, 32
        %v622 = vpop.permute.xlu0 %621
        %vm655 = vcmask 523520
        %656 = vst.msk [vmem:[%s395 + $0x8] sm:$0xff] %vm655, %v560
        %657 = vst.msk [vmem:[%s395 + $0x10] sm:$0xff] %vm655, %v562
        %658 = vst.msk [vmem:[%s395 + $0x28] sm:$0xff] %vm655, %v564
        %659 = vst.msk [vmem:[%s395 + $0x30] sm:$0xff] %vm655, %v566
        %660 = vst.msk [vmem:[%s395 + $0x48] sm:$0xff] %vm655, %v568
        %661 = vst.msk [vmem:[%s395 + $0x50] sm:$0xff] %vm655, %v570
        %662 = vst.msk [vmem:[%s395 + $0x68] sm:$0xff] %vm655, %v572
        %663 = vst.msk [vmem:[%s395 + $0x70] sm:$0xff] %vm655, %v574
        %664 = vst.msk [vmem:[%s395 + $0x88] sm:$0xff] %vm655, %v576
        %665 = vst.msk [vmem:[%s395 + $0x90] sm:$0xff] %vm655, %v578
        %666 = vst.msk [vmem:[%s395 + $0xa8] sm:$0xff] %vm655, %v580
        %667 = vst.msk [vmem:[%s395 + $0xb0] sm:$0xff] %vm655, %v582
        %668 = vst.msk [vmem:[%s395 + $0xc8] sm:$0xff] %vm655, %v584
        %669 = vst.msk [vmem:[%s395 + $0xd0] sm:$0xff] %vm655, %v586
        %670 = vst.msk [vmem:[%s395 + $0xe8] sm:$0xff] %vm655, %v588
        %671 = vst.msk [vmem:[%s395 + $0xf0] sm:$0xff] %vm655, %v590
        %672 = vst.msk [vmem:[%s395 + $0x108] sm:$0xff] %vm655, %v592
        %673 = vst.msk [vmem:[%s395 + $0x110] sm:$0xff] %vm655, %v594
        %674 = vst.msk [vmem:[%s395 + $0x128] sm:$0xff] %vm655, %v596
        %675 = vst.msk [vmem:[%s395 + $0x130] sm:$0xff] %vm655, %v598
        %676 = vst.msk [vmem:[%s395 + $0x148] sm:$0xff] %vm655, %v600
        %677 = vst.msk [vmem:[%s395 + $0x150] sm:$0xff] %vm655, %v602
        %678 = vst.msk [vmem:[%s395 + $0x168] sm:$0xff] %vm655, %v604
        %679 = vst.msk [vmem:[%s395 + $0x170] sm:$0xff] %vm655, %v606
        %680 = vst.msk [vmem:[%s395 + $0x188] sm:$0xff] %vm655, %v608
        %681 = vst.msk [vmem:[%s395 + $0x190] sm:$0xff] %vm655, %v610
        %682 = vst.msk [vmem:[%s395 + $0x1a8] sm:$0xff] %vm655, %v612
        %683 = vst.msk [vmem:[%s395 + $0x1b0] sm:$0xff] %vm655, %v614
        %684 = vst.msk [vmem:[%s395 + $0x1c8] sm:$0xff] %vm655, %v616
        %685 = vst.msk [vmem:[%s395 + $0x1d0] sm:$0xff] %vm655, %v618
        %686 = vst.msk [vmem:[%s395 + $0x1e8] sm:$0xff] %vm655, %v620
        %687 = vst.msk [vmem:[%s395 + $0x1f0] sm:$0xff] %vm655, %v622
        %688 = vrot.lane.b32.xlu0 %v462, 64
        %v689 = vpop.permute.xlu0 %688
        %690 = vrot.lane.b32.xlu0 %v463, 64
        %v691 = vpop.permute.xlu0 %690
        %692 = vrot.lane.b32.xlu0 %v464, 64
        %v693 = vpop.permute.xlu0 %692
        %694 = vrot.lane.b32.xlu0 %v465, 64
        %v695 = vpop.permute.xlu0 %694
        %696 = vrot.lane.b32.xlu0 %v466, 64
        %v697 = vpop.permute.xlu0 %696
        %698 = vrot.lane.b32.xlu0 %v467, 64
        %v699 = vpop.permute.xlu0 %698
        %700 = vrot.lane.b32.xlu0 %v468, 64
        %v701 = vpop.permute.xlu0 %700
        %702 = vrot.lane.b32.xlu0 %v469, 64
        %v703 = vpop.permute.xlu0 %702
        %704 = vrot.lane.b32.xlu0 %v470, 64
        %v705 = vpop.permute.xlu0 %704
        %706 = vrot.lane.b32.xlu0 %v471, 64
        %v707 = vpop.permute.xlu0 %706
        %708 = vrot.lane.b32.xlu0 %v472, 64
        %v709 = vpop.permute.xlu0 %708
        %710 = vrot.lane.b32.xlu0 %v473, 64
        %v711 = vpop.permute.xlu0 %710
        %712 = vrot.lane.b32.xlu0 %v474, 64
        %v713 = vpop.permute.xlu0 %712
        %714 = vrot.lane.b32.xlu0 %v475, 64
        %v715 = vpop.permute.xlu0 %714
        %716 = vrot.lane.b32.xlu0 %v476, 64
        %v717 = vpop.permute.xlu0 %716
        %718 = vrot.lane.b32.xlu0 %v477, 64
        %v719 = vpop.permute.xlu0 %718
        %720 = vrot.lane.b32.xlu0 %v478, 64
        %v721 = vpop.permute.xlu0 %720
        %722 = vrot.lane.b32.xlu0 %v479, 64
        %v723 = vpop.permute.xlu0 %722
        %724 = vrot.lane.b32.xlu0 %v480, 64
        %v725 = vpop.permute.xlu0 %724
        %726 = vrot.lane.b32.xlu0 %v481, 64
        %v727 = vpop.permute.xlu0 %726
        %728 = vrot.lane.b32.xlu0 %v482, 64
        %v729 = vpop.permute.xlu0 %728
        %730 = vrot.lane.b32.xlu0 %v483, 64
        %v731 = vpop.permute.xlu0 %730
        %732 = vrot.lane.b32.xlu0 %v484, 64
        %v733 = vpop.permute.xlu0 %732
        %734 = vrot.lane.b32.xlu0 %v485, 64
        %v735 = vpop.permute.xlu0 %734
        %736 = vrot.lane.b32.xlu0 %v486, 64
        %v737 = vpop.permute.xlu0 %736
        %738 = vrot.lane.b32.xlu0 %v487, 64
        %v739 = vpop.permute.xlu0 %738
        %740 = vrot.lane.b32.xlu0 %v488, 64
        %v741 = vpop.permute.xlu0 %740
        %742 = vrot.lane.b32.xlu0 %v489, 64
        %v743 = vpop.permute.xlu0 %742
        %744 = vrot.lane.b32.xlu0 %v490, 64
        %v745 = vpop.permute.xlu0 %744
        %746 = vrot.lane.b32.xlu0 %v491, 64
        %v747 = vpop.permute.xlu0 %746
        %748 = vrot.lane.b32.xlu0 %v492, 64
        %v749 = vpop.permute.xlu0 %748
        %750 = vrot.lane.b32.xlu0 %v493, 64
        %v751 = vpop.permute.xlu0 %750
        %vm784 = vcmask 785920
        %785 = vst.msk [vmem:[%s395 + $0x7] sm:$0xff] %vm784, %v689
        %786 = vst.msk [vmem:[%s395 + $0xf] sm:$0xff] %vm784, %v691
        %787 = vst.msk [vmem:[%s395 + $0x27] sm:$0xff] %vm784, %v693
        %788 = vst.msk [vmem:[%s395 + $0x2f] sm:$0xff] %vm784, %v695
        %789 = vst.msk [vmem:[%s395 + $0x47] sm:$0xff] %vm784, %v697
        %790 = vst.msk [vmem:[%s395 + $0x4f] sm:$0xff] %vm784, %v699
        %791 = vst.msk [vmem:[%s395 + $0x67] sm:$0xff] %vm784, %v701
        %792 = vst.msk [vmem:[%s395 + $0x6f] sm:$0xff] %vm784, %v703
        %793 = vst.msk [vmem:[%s395 + $0x87] sm:$0xff] %vm784, %v705
        %794 = vst.msk [vmem:[%s395 + $0x8f] sm:$0xff] %vm784, %v707
        %795 = vst.msk [vmem:[%s395 + $0xa7] sm:$0xff] %vm784, %v709
        %796 = vst.msk [vmem:[%s395 + $0xaf] sm:$0xff] %vm784, %v711
        %797 = vst.msk [vmem:[%s395 + $0xc7] sm:$0xff] %vm784, %v713
        %798 = vst.msk [vmem:[%s395 + $0xcf] sm:$0xff] %vm784, %v715
        %799 = vst.msk [vmem:[%s395 + $0xe7] sm:$0xff] %vm784, %v717
        %800 = vst.msk [vmem:[%s395 + $0xef] sm:$0xff] %vm784, %v719
        %801 = vst.msk [vmem:[%s395 + $0x107] sm:$0xff] %vm784, %v721
        %802 = vst.msk [vmem:[%s395 + $0x10f] sm:$0xff] %vm784, %v723
        %803 = vst.msk [vmem:[%s395 + $0x127] sm:$0xff] %vm784, %v725
        %804 = vst.msk [vmem:[%s395 + $0x12f] sm:$0xff] %vm784, %v727
        %805 = vst.msk [vmem:[%s395 + $0x147] sm:$0xff] %vm784, %v729
        %806 = vst.msk [vmem:[%s395 + $0x14f] sm:$0xff] %vm784, %v731
        %807 = vst.msk [vmem:[%s395 + $0x167] sm:$0xff] %vm784, %v733
        %808 = vst.msk [vmem:[%s395 + $0x16f] sm:$0xff] %vm784, %v735
        %809 = vst.msk [vmem:[%s395 + $0x187] sm:$0xff] %vm784, %v737
        %810 = vst.msk [vmem:[%s395 + $0x18f] sm:$0xff] %vm784, %v739
        %811 = vst.msk [vmem:[%s395 + $0x1a7] sm:$0xff] %vm784, %v741
        %812 = vst.msk [vmem:[%s395 + $0x1af] sm:$0xff] %vm784, %v743
        %813 = vst.msk [vmem:[%s395 + $0x1c7] sm:$0xff] %vm784, %v745
        %814 = vst.msk [vmem:[%s395 + $0x1cf] sm:$0xff] %vm784, %v747
        %815 = vst.msk [vmem:[%s395 + $0x1e7] sm:$0xff] %vm784, %v749
        %816 = vst.msk [vmem:[%s395 + $0x1ef] sm:$0xff] %vm784, %v751
        %v817 = vld [vmem:[#allocation2 + $0x8] sm:$0xff]
        %v818 = vld [vmem:[#allocation2 + $0x10] sm:$0xff]
        %v819 = vld [vmem:[#allocation2 + $0x28] sm:$0xff]
        %v820 = vld [vmem:[#allocation2 + $0x30] sm:$0xff]
        %v821 = vld [vmem:[#allocation2 + $0x48] sm:$0xff]
        %v822 = vld [vmem:[#allocation2 + $0x50] sm:$0xff]
        %v823 = vld [vmem:[#allocation2 + $0x68] sm:$0xff]
        %v824 = vld [vmem:[#allocation2 + $0x70] sm:$0xff]
        %v825 = vld [vmem:[#allocation2 + $0x88] sm:$0xff]
        %v826 = vld [vmem:[#allocation2 + $0x90] sm:$0xff]
        %v827 = vld [vmem:[#allocation2 + $0xa8] sm:$0xff]
        %v828 = vld [vmem:[#allocation2 + $0xb0] sm:$0xff]
        %v829 = vld [vmem:[#allocation2 + $0xc8] sm:$0xff]
        %v830 = vld [vmem:[#allocation2 + $0xd0] sm:$0xff]
        %v831 = vld [vmem:[#allocation2 + $0xe8] sm:$0xff]
        %v832 = vld [vmem:[#allocation2 + $0xf0] sm:$0xff]
        %v833 = vld [vmem:[#allocation2 + $0x108] sm:$0xff]
        %v834 = vld [vmem:[#allocation2 + $0x110] sm:$0xff]
        %v835 = vld [vmem:[#allocation2 + $0x128] sm:$0xff]
        %v836 = vld [vmem:[#allocation2 + $0x130] sm:$0xff]
        %v837 = vld [vmem:[#allocation2 + $0x148] sm:$0xff]
        %v838 = vld [vmem:[#allocation2 + $0x150] sm:$0xff]
        %v839 = vld [vmem:[#allocation2 + $0x168] sm:$0xff]
        %v840 = vld [vmem:[#allocation2 + $0x170] sm:$0xff]
        %v841 = vld [vmem:[#allocation2 + $0x188] sm:$0xff]
        %v842 = vld [vmem:[#allocation2 + $0x190] sm:$0xff]
        %v843 = vld [vmem:[#allocation2 + $0x1a8] sm:$0xff]
        %v844 = vld [vmem:[#allocation2 + $0x1b0] sm:$0xff]
        %v845 = vld [vmem:[#allocation2 + $0x1c8] sm:$0xff]
        %v846 = vld [vmem:[#allocation2 + $0x1d0] sm:$0xff]
        %v847 = vld [vmem:[#allocation2 + $0x1e8] sm:$0xff]
        %v848 = vld [vmem:[#allocation2 + $0x1f0] sm:$0xff]
        %v849 = vld [vmem:[%s1] sm:$0xff]
        %v850 = vld [vmem:[%s1 + $0x8] sm:$0xff]
        %v851 = vld [vmem:[%s1 + $0x10] sm:$0xff]
        %v852 = vld [vmem:[%s1 + $0x18] sm:$0xff]
        %v853 = vld [vmem:[%s1 + $0x20] sm:$0xff]
        %v854 = vld [vmem:[%s1 + $0x28] sm:$0xff]
        %v855 = vld [vmem:[%s1 + $0x30] sm:$0xff]
        %v856 = vld [vmem:[%s1 + $0x38] sm:$0xff]
        %v857 = vld [vmem:[%s1 + $0x40] sm:$0xff]
        %v858 = vld [vmem:[%s1 + $0x48] sm:$0xff]
        %v859 = vld [vmem:[%s1 + $0x50] sm:$0xff]
        %v860 = vld [vmem:[%s1 + $0x58] sm:$0xff]
        %v861 = vld [vmem:[%s395 + $0x8] sm:$0xff]
        %v862 = vld [vmem:[%s395 + $0x10] sm:$0xff]
        %v863 = vld [vmem:[%s395 + $0x28] sm:$0xff]
        %v864 = vld [vmem:[%s395 + $0x30] sm:$0xff]
        %v865 = vld [vmem:[%s395 + $0x48] sm:$0xff]
        %v866 = vld [vmem:[%s395 + $0x50] sm:$0xff]
        %v867 = vld [vmem:[%s395 + $0x68] sm:$0xff]
        %v868 = vld [vmem:[%s395 + $0x70] sm:$0xff]
        %v869 = vld [vmem:[%s395 + $0x88] sm:$0xff]
        %v870 = vld [vmem:[%s395 + $0x90] sm:$0xff]
        %v871 = vld [vmem:[%s395 + $0xa8] sm:$0xff]
        %v872 = vld [vmem:[%s395 + $0xb0] sm:$0xff]
        %v873 = vld [vmem:[%s395 + $0xc8] sm:$0xff]
        %v874 = vld [vmem:[%s395 + $0xd0] sm:$0xff]
        %v875 = vld [vmem:[%s395 + $0xe8] sm:$0xff]
        %v876 = vld [vmem:[%s395 + $0xf0] sm:$0xff]
        %v877 = vld [vmem:[%s395 + $0x108] sm:$0xff]
        %v878 = vld [vmem:[%s395 + $0x110] sm:$0xff]
        %v879 = vld [vmem:[%s395 + $0x128] sm:$0xff]
        %v880 = vld [vmem:[%s395 + $0x130] sm:$0xff]
        %v881 = vld [vmem:[%s395 + $0x148] sm:$0xff]
        %v882 = vld [vmem:[%s395 + $0x150] sm:$0xff]
        %v883 = vld [vmem:[%s395 + $0x168] sm:$0xff]
        %v884 = vld [vmem:[%s395 + $0x170] sm:$0xff]
        %v885 = vld [vmem:[%s395 + $0x188] sm:$0xff]
        %v886 = vld [vmem:[%s395 + $0x190] sm:$0xff]
        %v887 = vld [vmem:[%s395 + $0x1a8] sm:$0xff]
        %v888 = vld [vmem:[%s395 + $0x1b0] sm:$0xff]
        %v889 = vld [vmem:[%s395 + $0x1c8] sm:$0xff]
        %v890 = vld [vmem:[%s395 + $0x1d0] sm:$0xff]
        %v891 = vld [vmem:[%s395 + $0x1e8] sm:$0xff]
        %v892 = vld [vmem:[%s395 + $0x1f0] sm:$0xff]
        %s893 = scalar_lea.vmem %s1, 96
        %v894 = vld [vmem:[%s893] sm:$0xff]
        %v895 = vld [vmem:[%s893 + $0x8] sm:$0xff]
        %v896 = vld [vmem:[%s893 + $0x10] sm:$0xff]
        %v897 = vld [vmem:[%s893 + $0x18] sm:$0xff]
        %v898 = vld [vmem:[%s893 + $0x20] sm:$0xff]
        %v899 = vld [vmem:[%s893 + $0x28] sm:$0xff]
        %v900 = vld [vmem:[%s893 + $0x30] sm:$0xff]
        %v901 = vld [vmem:[%s893 + $0x38] sm:$0xff]
        %v902 = vld [vmem:[%s893 + $0x40] sm:$0xff]
        %v903 = vld [vmem:[%s893 + $0x48] sm:$0xff]
        %v904 = vld [vmem:[%s893 + $0x50] sm:$0xff]
        %v905 = vld [vmem:[%s893 + $0x58] sm:$0xff]
        %v907 = vsel %vm385, %v861, 0
        %v910 = vsel %vm385, %v862, 0
        %v913 = vsel %vm385, %v863, 0
        %v916 = vsel %vm385, %v864, 0
        %v919 = vsel %vm385, %v865, 0
        %v922 = vsel %vm385, %v866, 0
        %v925 = vsel %vm385, %v867, 0
        %v928 = vsel %vm385, %v868, 0
        %v931 = vsel %vm385, %v869, 0
        %v934 = vsel %vm385, %v870, 0
        %v937 = vsel %vm385, %v871, 0
        %v940 = vsel %vm385, %v872, 0
        %v943 = vsel %vm385, %v873, 0
        %v946 = vsel %vm385, %v874, 0
        %v949 = vsel %vm385, %v875, 0
        %v952 = vsel %vm385, %v876, 0
        %v955 = vsel %vm385, %v877, 0
        %v958 = vsel %vm385, %v878, 0
        %v961 = vsel %vm385, %v879, 0
        %v964 = vsel %vm385, %v880, 0
        %v967 = vsel %vm385, %v881, 0
        %v970 = vsel %vm385, %v882, 0
        %v973 = vsel %vm385, %v883, 0
        %v976 = vsel %vm385, %v884, 0
        %v979 = vsel %vm385, %v885, 0
        %v982 = vsel %vm385, %v886, 0
        %v985 = vsel %vm385, %v887, 0
        %v988 = vsel %vm385, %v888, 0
        %v991 = vsel %vm385, %v889, 0
        %v994 = vsel %vm385, %v890, 0
        %v997 = vsel %vm385, %v891, 0
        %v1000 = vsel %vm385, %v892, 0
        %1002 = vmatprep.subr.mxu0 0.0
        %1003 = vmatpush1.msra.mxu0 %v894
        %1004 = vmatprep.subr.mxu0 0.0
        %1005 = vmatpush1.msra.mxu0 %v895
        %1006 = vmatprep.subr.mxu0 0.0
        %1007 = vmatpush1.msra.mxu0 %v896
        %1008 = vmatprep.subr.mxu0 0.0
        %1009 = vmatpush1.msra.mxu0 %v897
        %1010 = vmatprep.subr.mxu0 0.0
        %1011 = vmatpush1.msra.mxu0 %v898
        %1012 = vmatprep.subr.mxu0 0.0
        %1013 = vmatpush1.msra.mxu0 %v899
        %1014 = vmatprep.subr.mxu0 0.0
        %1015 = vmatpush1.msra.mxu0 %v900
        %1016 = vmatprep.subr.mxu0 0.0
        %1017 = vmatpush1.msra.mxu0 %v901
        %1018 = vmatprep.subr.mxu0 0.0
        %1019 = vmatpush1.msra.mxu0 %v902
        %1020 = vmatprep.subr.mxu0 0.0
        %1021 = vmatpush1.msra.mxu0 %v903
        %1022 = vmatprep.subr.mxu0 0.0
        %1023 = vmatpush1.msra.mxu0 %v904
        %1024 = vmatprep.subr.mxu0 0.0
        %1025 = vmatpush1.msra.mxu0 %v905
        %1026 = vmatprep.subr.mxu0 0.0
        %1027 = vmatpush1.msra.mxu0 0.0
        %1028 = vmatprep.subr.mxu0 0.0
        %1029 = vmatpush1.msra.mxu0 0.0
        %1030 = vmatprep.subr.mxu0 0.0
        %1031 = vmatpush1.msra.mxu0 0.0
        %1032 = vmatprep.subr.mxu0 0.0
        %1033 = vmatpush1.msra.mxu0 0.0
        %1034 = vmatprep.subr.mxu0 0.0
        %1035 = vmatpush1.msra.mxu0 0.0
        %1036 = vmatprep.subr.mxu0 0.0
        %1037 = vmatpush1.msra.mxu0 0.0
        %1038 = vmatprep.subr.mxu0 0.0
        %1039 = vmatpush1.msra.mxu0 0.0
        %1040 = vmatprep.subr.mxu0 0.0
        %1041 = vmatpush1.msra.mxu0 0.0
        %1042 = vmatprep.subr.mxu0 0.0
        %1043 = vmatpush1.msra.mxu0 0.0
        %1044 = vmatprep.subr.mxu0 0.0
        %1045 = vmatpush1.msra.mxu0 0.0
        %1046 = vmatprep.subr.mxu0 0.0
        %1047 = vmatpush1.msra.mxu0 0.0
        %1048 = vmatprep.subr.mxu0 0.0
        %1049 = vmatpush1.msra.mxu0 0.0
        %1050 = vmatprep.subr.mxu0 0.0
        %1051 = vmatpush1.msra.mxu0 0.0
        %1052 = vmatprep.subr.mxu0 0.0
        %1053 = vmatpush1.msra.mxu0 0.0
        %1054 = vmatprep.subr.mxu0 0.0
        %1055 = vmatpush1.msra.mxu0 0.0
        %1056 = vmatprep.subr.mxu0 0.0
        %1057 = vmatpush1.msra.mxu0 0.0
        %1058 = vmatprep.subr.mxu0 0.0
        %1059 = vmatpush1.msra.mxu0 0.0
        %1060 = vmatprep.subr.mxu0 0.0
        %1061 = vmatpush1.msra.mxu0 0.0
        %1062 = vmatprep.subr.mxu0 0.0
        %1063 = vmatpush1.msra.mxu0 0.0
        %1064 = vmatprep.subr.mxu0 0.0
        %1065 = vmatpush1.msra.mxu0 0.0
        %1066 = vmatprep.mubr.f32.mxu0 0.0
        %1067 = vmatmul.mubr.f32.gmra.mrb[0].mxu0 %v907
        %v1068 = vpop.f32.mrb[0].mxu0
        %v1069 = vadd.f32 0.0, %v1068
        %v1070 = vpop.f32.mrb[0].mxu0
        %1071 = vmatprep.mubr.f32.mxu0 0.0
        %1072 = vmatmul.mubr.f32.gmra.mrb[0].mxu0 %v910
        %v1073 = vpop.f32.mrb[0].mxu0
        %v1074 = vadd.f32 0.0, %v1073
        %v1075 = vpop.f32.mrb[0].mxu0
        %1076 = vmatprep.mubr.f32.mxu0 0.0
        %1077 = vmatmul.mubr.f32.gmra.mrb[0].mxu0 %v913
        %v1078 = vpop.f32.mrb[0].mxu0
        %v1079 = vadd.f32 0.0, %v1078
        %v1080 = vpop.f32.mrb[0].mxu0
        %1081 = vmatprep.mubr.f32.mxu0 0.0
        %1082 = vmatmul.mubr.f32.gmra.mrb[0].mxu0 %v916
        %v1083 = vpop.f32.mrb[0].mxu0
        %v1084 = vadd.f32 0.0, %v1083
        %v1085 = vpop.f32.mrb[0].mxu0
        %1086 = vmatprep.mubr.f32.mxu0 0.0
        %1087 = vmatmul.mubr.f32.gmra.mrb[0].mxu0 %v919
        %v1088 = vpop.f32.mrb[0].mxu0
        %v1089 = vadd.f32 0.0, %v1088
        %v1090 = vpop.f32.mrb[0].mxu0
        %1091 = vmatprep.mubr.f32.mxu0 0.0
        %1092 = vmatmul.mubr.f32.gmra.mrb[0].mxu0 %v922
        %v1093 = vpop.f32.mrb[0].mxu0
        %v1094 = vadd.f32 0.0, %v1093
        %v1095 = vpop.f32.mrb[0].mxu0
        %1096 = vmatprep.mubr.f32.mxu0 0.0
        %1097 = vmatmul.mubr.f32.gmra.mrb[0].mxu0 %v925
        %v1098 = vpop.f32.mrb[0].mxu0
        %v1099 = vadd.f32 0.0, %v1098
        %v1100 = vpop.f32.mrb[0].mxu0
        %1101 = vmatprep.mubr.f32.mxu0 0.0
        %1102 = vmatmul.mubr.f32.gmra.mrb[0].mxu0 %v928
        %v1103 = vpop.f32.mrb[0].mxu0
        %v1104 = vadd.f32 0.0, %v1103
        %v1105 = vpop.f32.mrb[0].mxu0
        %1106 = vmatprep.mubr.f32.mxu0 0.0
        %1107 = vmatmul.mubr.f32.gmra.mrb[0].mxu0 %v931
        %v1108 = vpop.f32.mrb[0].mxu0
        %v1109 = vadd.f32 0.0, %v1108
        %v1110 = vpop.f32.mrb[0].mxu0
        %1111 = vmatprep.mubr.f32.mxu0 0.0
        %1112 = vmatmul.mubr.f32.gmra.mrb[0].mxu0 %v934
        %v1113 = vpop.f32.mrb[0].mxu0
        %v1114 = vadd.f32 0.0, %v1113
        %v1115 = vpop.f32.mrb[0].mxu0
        %1116 = vmatprep.mubr.f32.mxu0 0.0
        %1117 = vmatmul.mubr.f32.gmra.mrb[0].mxu0 %v937
        %v1118 = vpop.f32.mrb[0].mxu0
        %v1119 = vadd.f32 0.0, %v1118
        %v1120 = vpop.f32.mrb[0].mxu0
        %1121 = vmatprep.mubr.f32.mxu0 0.0
        %1122 = vmatmul.mubr.f32.gmra.mrb[0].mxu0 %v940
        %v1123 = vpop.f32.mrb[0].mxu0
        %v1124 = vadd.f32 0.0, %v1123
        %v1125 = vpop.f32.mrb[0].mxu0
        %1126 = vmatprep.mubr.f32.mxu0 0.0
        %1127 = vmatmul.mubr.f32.gmra.mrb[0].mxu0 %v943
        %v1128 = vpop.f32.mrb[0].mxu0
        %v1129 = vadd.f32 0.0, %v1128
        %v1130 = vpop.f32.mrb[0].mxu0
        %1131 = vmatprep.mubr.f32.mxu0 0.0
        %1132 = vmatmul.mubr.f32.gmra.mrb[0].mxu0 %v946
        %v1133 = vpop.f32.mrb[0].mxu0
        %v1134 = vadd.f32 0.0, %v1133
        %v1135 = vpop.f32.mrb[0].mxu0
        %1136 = vmatprep.mubr.f32.mxu0 0.0
        %1137 = vmatmul.mubr.f32.gmra.mrb[0].mxu0 %v949
        %v1138 = vpop.f32.mrb[0].mxu0
        %v1139 = vadd.f32 0.0, %v1138
        %v1140 = vpop.f32.mrb[0].mxu0
        %1141 = vmatprep.mubr.f32.mxu0 0.0
        %1142 = vmatmul.mubr.f32.gmra.mrb[0].mxu0 %v952
        %v1143 = vpop.f32.mrb[0].mxu0
        %v1144 = vadd.f32 0.0, %v1143
        %v1145 = vpop.f32.mrb[0].mxu0
        %1146 = vmatprep.mubr.f32.mxu0 0.0
        %1147 = vmatmul.mubr.f32.gmra.mrb[0].mxu0 %v955
        %v1148 = vpop.f32.mrb[0].mxu0
        %v1149 = vadd.f32 0.0, %v1148
        %v1150 = vpop.f32.mrb[0].mxu0
        %1151 = vmatprep.mubr.f32.mxu0 0.0
        %1152 = vmatmul.mubr.f32.gmra.mrb[0].mxu0 %v958
        %v1153 = vpop.f32.mrb[0].mxu0
        %v1154 = vadd.f32 0.0, %v1153
        %v1155 = vpop.f32.mrb[0].mxu0
        %1156 = vmatprep.mubr.f32.mxu0 0.0
        %1157 = vmatmul.mubr.f32.gmra.mrb[0].mxu0 %v961
        %v1158 = vpop.f32.mrb[0].mxu0
        %v1159 = vadd.f32 0.0, %v1158
        %v1160 = vpop.f32.mrb[0].mxu0
        %1161 = vmatprep.mubr.f32.mxu0 0.0
        %1162 = vmatmul.mubr.f32.gmra.mrb[0].mxu0 %v964
        %v1163 = vpop.f32.mrb[0].mxu0
        %v1164 = vadd.f32 0.0, %v1163
        %v1165 = vpop.f32.mrb[0].mxu0
        %1166 = vmatprep.mubr.f32.mxu0 0.0
        %1167 = vmatmul.mubr.f32.gmra.mrb[0].mxu0 %v967
        %v1168 = vpop.f32.mrb[0].mxu0
        %v1169 = vadd.f32 0.0, %v1168
        %v1170 = vpop.f32.mrb[0].mxu0
        %1171 = vmatprep.mubr.f32.mxu0 0.0
        %1172 = vmatmul.mubr.f32.gmra.mrb[0].mxu0 %v970
        %v1173 = vpop.f32.mrb[0].mxu0
        %v1174 = vadd.f32 0.0, %v1173
        %v1175 = vpop.f32.mrb[0].mxu0
        %1176 = vmatprep.mubr.f32.mxu0 0.0
        %1177 = vmatmul.mubr.f32.gmra.mrb[0].mxu0 %v973
        %v1178 = vpop.f32.mrb[0].mxu0
        %v1179 = vadd.f32 0.0, %v1178
        %v1180 = vpop.f32.mrb[0].mxu0
        %1181 = vmatprep.mubr.f32.mxu0 0.0
        %1182 = vmatmul.mubr.f32.gmra.mrb[0].mxu0 %v976
        %v1183 = vpop.f32.mrb[0].mxu0
        %v1184 = vadd.f32 0.0, %v1183
        %v1185 = vpop.f32.mrb[0].mxu0
        %1186 = vmatprep.mubr.f32.mxu0 0.0
        %1187 = vmatmul.mubr.f32.gmra.mrb[0].mxu0 %v979
        %v1188 = vpop.f32.mrb[0].mxu0
        %v1189 = vadd.f32 0.0, %v1188
        %v1190 = vpop.f32.mrb[0].mxu0
        %1191 = vmatprep.mubr.f32.mxu0 0.0
        %1192 = vmatmul.mubr.f32.gmra.mrb[0].mxu0 %v982
        %v1193 = vpop.f32.mrb[0].mxu0
        %v1194 = vadd.f32 0.0, %v1193
        %v1195 = vpop.f32.mrb[0].mxu0
        %1196 = vmatprep.mubr.f32.mxu0 0.0
        %1197 = vmatmul.mubr.f32.gmra.mrb[0].mxu0 %v985
        %v1198 = vpop.f32.mrb[0].mxu0
        %v1199 = vadd.f32 0.0, %v1198
        %v1200 = vpop.f32.mrb[0].mxu0
        %1201 = vmatprep.mubr.f32.mxu0 0.0
        %1202 = vmatmul.mubr.f32.gmra.mrb[0].mxu0 %v988
        %v1203 = vpop.f32.mrb[0].mxu0
        %v1204 = vadd.f32 0.0, %v1203
        %v1205 = vpop.f32.mrb[0].mxu0
        %1206 = vmatprep.mubr.f32.mxu0 0.0
        %1207 = vmatmul.mubr.f32.gmra.mrb[0].mxu0 %v991
        %v1208 = vpop.f32.mrb[0].mxu0
        %v1209 = vadd.f32 0.0, %v1208
        %v1210 = vpop.f32.mrb[0].mxu0
        %1211 = vmatprep.mubr.f32.mxu0 0.0
        %1212 = vmatmul.mubr.f32.gmra.mrb[0].mxu0 %v994
        %v1213 = vpop.f32.mrb[0].mxu0
        %v1214 = vadd.f32 0.0, %v1213
        %v1215 = vpop.f32.mrb[0].mxu0
        %1216 = vmatprep.mubr.f32.mxu0 0.0
        %1217 = vmatmul.mubr.f32.gmra.mrb[0].mxu0 %v997
        %v1218 = vpop.f32.mrb[0].mxu0
        %v1219 = vadd.f32 0.0, %v1218
        %v1220 = vpop.f32.mrb[0].mxu0
        %1221 = vmatprep.mubr.f32.mxu0 0.0
        %1222 = vmatmul.mubr.f32.gmra.mrb[0].mxu0 %v1000
        %v1223 = vpop.f32.mrb[0].mxu0
        %v1224 = vadd.f32 0.0, %v1223
        %v1225 = vpop.f32.mrb[0].mxu0
        %1226 = vdwg.mxu0
        %v1228 = vsel %vm385, %v817, 0
        %v1231 = vsel %vm385, %v818, 0
        %v1234 = vsel %vm385, %v819, 0
        %v1237 = vsel %vm385, %v820, 0
        %v1240 = vsel %vm385, %v821, 0
        %v1243 = vsel %vm385, %v822, 0
        %v1246 = vsel %vm385, %v823, 0
        %v1249 = vsel %vm385, %v824, 0
        %v1252 = vsel %vm385, %v825, 0
        %v1255 = vsel %vm385, %v826, 0
        %v1258 = vsel %vm385, %v827, 0
        %v1261 = vsel %vm385, %v828, 0
        %v1264 = vsel %vm385, %v829, 0
        %v1267 = vsel %vm385, %v830, 0
        %v1270 = vsel %vm385, %v831, 0
        %v1273 = vsel %vm385, %v832, 0
        %v1276 = vsel %vm385, %v833, 0
        %v1279 = vsel %vm385, %v834, 0
        %v1282 = vsel %vm385, %v835, 0
        %v1285 = vsel %vm385, %v836, 0
        %v1288 = vsel %vm385, %v837, 0
        %v1291 = vsel %vm385, %v838, 0
        %v1294 = vsel %vm385, %v839, 0
        %v1297 = vsel %vm385, %v840, 0
        %v1300 = vsel %vm385, %v841, 0
        %v1303 = vsel %vm385, %v842, 0
        %v1306 = vsel %vm385, %v843, 0
        %v1309 = vsel %vm385, %v844, 0
        %v1312 = vsel %vm385, %v845, 0
        %v1315 = vsel %vm385, %v846, 0
        %v1318 = vsel %vm385, %v847, 0
        %v1321 = vsel %vm385, %v848, 0
        %1323 = vmatprep.subr.mxu0 0.0
        %1324 = vmatpush1.msra.mxu0 %v849
        %1325 = vmatprep.subr.mxu0 0.0
        %1326 = vmatpush1.msra.mxu0 %v850
        %1327 = vmatprep.subr.mxu0 0.0
        %1328 = vmatpush1.msra.mxu0 %v851
        %1329 = vmatprep.subr.mxu0 0.0
        %1330 = vmatpush1.msra.mxu0 %v852
        %1331 = vmatprep.subr.mxu0 0.0
        %1332 = vmatpush1.msra.mxu0 %v853
        %1333 = vmatprep.subr.mxu0 0.0
        %1334 = vmatpush1.msra.mxu0 %v854
        %1335 = vmatprep.subr.mxu0 0.0
        %1336 = vmatpush1.msra.mxu0 %v855
        %1337 = vmatprep.subr.mxu0 0.0
        %1338 = vmatpush1.msra.mxu0 %v856
        %1339 = vmatprep.subr.mxu0 0.0
        %1340 = vmatpush1.msra.mxu0 %v857
        %1341 = vmatprep.subr.mxu0 0.0
        %1342 = vmatpush1.msra.mxu0 %v858
        %1343 = vmatprep.subr.mxu0 0.0
        %1344 = vmatpush1.msra.mxu0 %v859
        %1345 = vmatprep.subr.mxu0 0.0
        %1346 = vmatpush1.msra.mxu0 %v860
        %1347 = vmatprep.subr.mxu0 0.0
        %1348 = vmatpush1.msra.mxu0 0.0
        %1349 = vmatprep.subr.mxu0 0.0
        %1350 = vmatpush1.msra.mxu0 0.0
        %1351 = vmatprep.subr.mxu0 0.0
        %1352 = vmatpush1.msra.mxu0 0.0
        %1353 = vmatprep.subr.mxu0 0.0
        %1354 = vmatpush1.msra.mxu0 0.0
        %1355 = vmatprep.subr.mxu0 0.0
        %1356 = vmatpush1.msra.mxu0 0.0
        %1357 = vmatprep.subr.mxu0 0.0
        %1358 = vmatpush1.msra.mxu0 0.0
        %1359 = vmatprep.subr.mxu0 0.0
        %1360 = vmatpush1.msra.mxu0 0.0
        %1361 = vmatprep.subr.mxu0 0.0
        %1362 = vmatpush1.msra.mxu0 0.0
        %1363 = vmatprep.subr.mxu0 0.0
        %1364 = vmatpush1.msra.mxu0 0.0
        %1365 = vmatprep.subr.mxu0 0.0
        %1366 = vmatpush1.msra.mxu0 0.0
        %1367 = vmatprep.subr.mxu0 0.0
        %1368 = vmatpush1.msra.mxu0 0.0
        %1369 = vmatprep.subr.mxu0 0.0
        %1370 = vmatpush1.msra.mxu0 0.0
        %1371 = vmatprep.subr.mxu0 0.0
        %1372 = vmatpush1.msra.mxu0 0.0
        %1373 = vmatprep.subr.mxu0 0.0
        %1374 = vmatpush1.msra.mxu0 0.0
        %1375 = vmatprep.subr.mxu0 0.0
        %1376 = vmatpush1.msra.mxu0 0.0
        %1377 = vmatprep.subr.mxu0 0.0
        %1378 = vmatpush1.msra.mxu0 0.0
        %1379 = vmatprep.subr.mxu0 0.0
        %1380 = vmatpush1.msra.mxu0 0.0
        %1381 = vmatprep.subr.mxu0 0.0
        %1382 = vmatpush1.msra.mxu0 0.0
        %1383 = vmatprep.subr.mxu0 0.0
        %1384 = vmatpush1.msra.mxu0 0.0
        %1385 = vmatprep.subr.mxu0 0.0
        %1386 = vmatpush1.msra.mxu0 0.0
        %1387 = vmatprep.mubr.f32.mxu0 0.0
        %1388 = vmatmul.mubr.f32.gmra.mrb[0].mxu0 %v1228
        %v1389 = vpop.f32.mrb[0].mxu0
        %v1390 = vadd.f32 %v1069, %v1389
        %v1391 = vpop.f32.mrb[0].mxu0
        %1392 = vmatprep.mubr.f32.mxu0 0.0
        %1393 = vmatmul.mubr.f32.gmra.mrb[0].mxu0 %v1231
        %v1394 = vpop.f32.mrb[0].mxu0
        %v1395 = vadd.f32 %v1074, %v1394
        %v1396 = vpop.f32.mrb[0].mxu0
        %1397 = vmatprep.mubr.f32.mxu0 0.0
        %1398 = vmatmul.mubr.f32.gmra.mrb[0].mxu0 %v1234
        %v1399 = vpop.f32.mrb[0].mxu0
        %v1400 = vadd.f32 %v1079, %v1399
        %v1401 = vpop.f32.mrb[0].mxu0
        %1402 = vmatprep.mubr.f32.mxu0 0.0
        %1403 = vmatmul.mubr.f32.gmra.mrb[0].mxu0 %v1237
        %v1404 = vpop.f32.mrb[0].mxu0
        %v1405 = vadd.f32 %v1084, %v1404
        %v1406 = vpop.f32.mrb[0].mxu0
        %1407 = vmatprep.mubr.f32.mxu0 0.0
        %1408 = vmatmul.mubr.f32.gmra.mrb[0].mxu0 %v1240
        %v1409 = vpop.f32.mrb[0].mxu0
        %v1410 = vadd.f32 %v1089, %v1409
        %v1411 = vpop.f32.mrb[0].mxu0
        %1412 = vmatprep.mubr.f32.mxu0 0.0
        %1413 = vmatmul.mubr.f32.gmra.mrb[0].mxu0 %v1243
        %v1414 = vpop.f32.mrb[0].mxu0
        %v1415 = vadd.f32 %v1094, %v1414
        %v1416 = vpop.f32.mrb[0].mxu0
        %1417 = vmatprep.mubr.f32.mxu0 0.0
        %1418 = vmatmul.mubr.f32.gmra.mrb[0].mxu0 %v1246
        %v1419 = vpop.f32.mrb[0].mxu0
        %v1420 = vadd.f32 %v1099, %v1419
        %v1421 = vpop.f32.mrb[0].mxu0
        %1422 = vmatprep.mubr.f32.mxu0 0.0
        %1423 = vmatmul.mubr.f32.gmra.mrb[0].mxu0 %v1249
        %v1424 = vpop.f32.mrb[0].mxu0
        %v1425 = vadd.f32 %v1104, %v1424
        %v1426 = vpop.f32.mrb[0].mxu0
        %1427 = vmatprep.mubr.f32.mxu0 0.0
        %1428 = vmatmul.mubr.f32.gmra.mrb[0].mxu0 %v1252
        %v1429 = vpop.f32.mrb[0].mxu0
        %v1430 = vadd.f32 %v1109, %v1429
        %v1431 = vpop.f32.mrb[0].mxu0
        %1432 = vmatprep.mubr.f32.mxu0 0.0
        %1433 = vmatmul.mubr.f32.gmra.mrb[0].mxu0 %v1255
        %v1434 = vpop.f32.mrb[0].mxu0
        %v1435 = vadd.f32 %v1114, %v1434
        %v1436 = vpop.f32.mrb[0].mxu0
        %1437 = vmatprep.mubr.f32.mxu0 0.0
        %1438 = vmatmul.mubr.f32.gmra.mrb[0].mxu0 %v1258
        %v1439 = vpop.f32.mrb[0].mxu0
        %v1440 = vadd.f32 %v1119, %v1439
        %v1441 = vpop.f32.mrb[0].mxu0
        %1442 = vmatprep.mubr.f32.mxu0 0.0
        %1443 = vmatmul.mubr.f32.gmra.mrb[0].mxu0 %v1261
        %v1444 = vpop.f32.mrb[0].mxu0
        %v1445 = vadd.f32 %v1124, %v1444
        %v1446 = vpop.f32.mrb[0].mxu0
        %1447 = vmatprep.mubr.f32.mxu0 0.0
        %1448 = vmatmul.mubr.f32.gmra.mrb[0].mxu0 %v1264
        %v1449 = vpop.f32.mrb[0].mxu0
        %v1450 = vadd.f32 %v1129, %v1449
        %v1451 = vpop.f32.mrb[0].mxu0
        %1452 = vmatprep.mubr.f32.mxu0 0.0
        %1453 = vmatmul.mubr.f32.gmra.mrb[0].mxu0 %v1267
        %v1454 = vpop.f32.mrb[0].mxu0
        %v1455 = vadd.f32 %v1134, %v1454
        %v1456 = vpop.f32.mrb[0].mxu0
        %1457 = vmatprep.mubr.f32.mxu0 0.0
        %1458 = vmatmul.mubr.f32.gmra.mrb[0].mxu0 %v1270
        %v1459 = vpop.f32.mrb[0].mxu0
        %v1460 = vadd.f32 %v1139, %v1459
        %v1461 = vpop.f32.mrb[0].mxu0
        %1462 = vmatprep.mubr.f32.mxu0 0.0
        %1463 = vmatmul.mubr.f32.gmra.mrb[0].mxu0 %v1273
        %v1464 = vpop.f32.mrb[0].mxu0
        %v1465 = vadd.f32 %v1144, %v1464
        %v1466 = vpop.f32.mrb[0].mxu0
        %1467 = vmatprep.mubr.f32.mxu0 0.0
        %1468 = vmatmul.mubr.f32.gmra.mrb[0].mxu0 %v1276
        %v1469 = vpop.f32.mrb[0].mxu0
        %v1470 = vadd.f32 %v1149, %v1469
        %v1471 = vpop.f32.mrb[0].mxu0
        %1472 = vmatprep.mubr.f32.mxu0 0.0
        %1473 = vmatmul.mubr.f32.gmra.mrb[0].mxu0 %v1279
        %v1474 = vpop.f32.mrb[0].mxu0
        %v1475 = vadd.f32 %v1154, %v1474
        %v1476 = vpop.f32.mrb[0].mxu0
        %1477 = vmatprep.mubr.f32.mxu0 0.0
        %1478 = vmatmul.mubr.f32.gmra.mrb[0].mxu0 %v1282
        %v1479 = vpop.f32.mrb[0].mxu0
        %v1480 = vadd.f32 %v1159, %v1479
        %v1481 = vpop.f32.mrb[0].mxu0
        %1482 = vmatprep.mubr.f32.mxu0 0.0
        %1483 = vmatmul.mubr.f32.gmra.mrb[0].mxu0 %v1285
        %v1484 = vpop.f32.mrb[0].mxu0
        %v1485 = vadd.f32 %v1164, %v1484
        %v1486 = vpop.f32.mrb[0].mxu0
        %1487 = vmatprep.mubr.f32.mxu0 0.0
        %1488 = vmatmul.mubr.f32.gmra.mrb[0].mxu0 %v1288
        %v1489 = vpop.f32.mrb[0].mxu0
        %v1490 = vadd.f32 %v1169, %v1489
        %v1491 = vpop.f32.mrb[0].mxu0
        %1492 = vmatprep.mubr.f32.mxu0 0.0
        %1493 = vmatmul.mubr.f32.gmra.mrb[0].mxu0 %v1291
        %v1494 = vpop.f32.mrb[0].mxu0
        %v1495 = vadd.f32 %v1174, %v1494
        %v1496 = vpop.f32.mrb[0].mxu0
        %1497 = vmatprep.mubr.f32.mxu0 0.0
        %1498 = vmatmul.mubr.f32.gmra.mrb[0].mxu0 %v1294
        %v1499 = vpop.f32.mrb[0].mxu0
        %v1500 = vadd.f32 %v1179, %v1499
        %v1501 = vpop.f32.mrb[0].mxu0
        %1502 = vmatprep.mubr.f32.mxu0 0.0
        %1503 = vmatmul.mubr.f32.gmra.mrb[0].mxu0 %v1297
        %v1504 = vpop.f32.mrb[0].mxu0
        %v1505 = vadd.f32 %v1184, %v1504
        %v1506 = vpop.f32.mrb[0].mxu0
        %1507 = vmatprep.mubr.f32.mxu0 0.0
        %1508 = vmatmul.mubr.f32.gmra.mrb[0].mxu0 %v1300
        %v1509 = vpop.f32.mrb[0].mxu0
        %v1510 = vadd.f32 %v1189, %v1509
        %v1511 = vpop.f32.mrb[0].mxu0
        %1512 = vmatprep.mubr.f32.mxu0 0.0
        %1513 = vmatmul.mubr.f32.gmra.mrb[0].mxu0 %v1303
        %v1514 = vpop.f32.mrb[0].mxu0
        %v1515 = vadd.f32 %v1194, %v1514
        %v1516 = vpop.f32.mrb[0].mxu0
        %1517 = vmatprep.mubr.f32.mxu0 0.0
        %1518 = vmatmul.mubr.f32.gmra.mrb[0].mxu0 %v1306
        %v1519 = vpop.f32.mrb[0].mxu0
        %v1520 = vadd.f32 %v1199, %v1519
        %v1521 = vpop.f32.mrb[0].mxu0
        %1522 = vmatprep.mubr.f32.mxu0 0.0
        %1523 = vmatmul.mubr.f32.gmra.mrb[0].mxu0 %v1309
        %v1524 = vpop.f32.mrb[0].mxu0
        %v1525 = vadd.f32 %v1204, %v1524
        %v1526 = vpop.f32.mrb[0].mxu0
        %1527 = vmatprep.mubr.f32.mxu0 0.0
        %1528 = vmatmul.mubr.f32.gmra.mrb[0].mxu0 %v1312
        %v1529 = vpop.f32.mrb[0].mxu0
        %v1530 = vadd.f32 %v1209, %v1529
        %v1531 = vpop.f32.mrb[0].mxu0
        %1532 = vmatprep.mubr.f32.mxu0 0.0
        %1533 = vmatmul.mubr.f32.gmra.mrb[0].mxu0 %v1315
        %v1534 = vpop.f32.mrb[0].mxu0
        %v1535 = vadd.f32 %v1214, %v1534
        %v1536 = vpop.f32.mrb[0].mxu0
        %1537 = vmatprep.mubr.f32.mxu0 0.0
        %1538 = vmatmul.mubr.f32.gmra.mrb[0].mxu0 %v1318
        %v1539 = vpop.f32.mrb[0].mxu0
        %v1540 = vadd.f32 %v1219, %v1539
        %v1541 = vpop.f32.mrb[0].mxu0
        %1542 = vmatprep.mubr.f32.mxu0 0.0
        %1543 = vmatmul.mubr.f32.gmra.mrb[0].mxu0 %v1321
        %v1544 = vpop.f32.mrb[0].mxu0
        %v1545 = vadd.f32 %v1224, %v1544
        %v1546 = vpop.f32.mrb[0].mxu0
        %1547 = vdwg.mxu0
        %s1548 = scalar_lea.vmem [#allocation2], 64
        %v1549 = vld [vmem:[%s1548 + $0x8] sm:$0xff]
        %v1550 = vld [vmem:[%s1548 + $0x10] sm:$0xff]
        %v1551 = vld [vmem:[%s1548 + $0x28] sm:$0xff]
        %v1552 = vld [vmem:[%s1548 + $0x30] sm:$0xff]
        %v1553 = vld [vmem:[%s1548 + $0x48] sm:$0xff]
        %v1554 = vld [vmem:[%s1548 + $0x50] sm:$0xff]
        %v1555 = vld [vmem:[%s1548 + $0x68] sm:$0xff]
        %v1556 = vld [vmem:[%s1548 + $0x70] sm:$0xff]
        %v1557 = vld [vmem:[%s1548 + $0x88] sm:$0xff]
        %v1558 = vld [vmem:[%s1548 + $0x90] sm:$0xff]
        %v1559 = vld [vmem:[%s1548 + $0xa8] sm:$0xff]
        %v1560 = vld [vmem:[%s1548 + $0xb0] sm:$0xff]
        %v1561 = vld [vmem:[%s1548 + $0xc8] sm:$0xff]
        %v1562 = vld [vmem:[%s1548 + $0xd0] sm:$0xff]
        %v1563 = vld [vmem:[%s1548 + $0xe8] sm:$0xff]
        %v1564 = vld [vmem:[%s1548 + $0xf0] sm:$0xff]
        %v1565 = vld [vmem:[%s1548 + $0x108] sm:$0xff]
        %v1566 = vld [vmem:[%s1548 + $0x110] sm:$0xff]
        %v1567 = vld [vmem:[%s1548 + $0x128] sm:$0xff]
        %v1568 = vld [vmem:[%s1548 + $0x130] sm:$0xff]
        %v1569 = vld [vmem:[%s1548 + $0x148] sm:$0xff]
        %v1570 = vld [vmem:[%s1548 + $0x150] sm:$0xff]
        %v1571 = vld [vmem:[%s1548 + $0x168] sm:$0xff]
        %v1572 = vld [vmem:[%s1548 + $0x170] sm:$0xff]
        %v1573 = vld [vmem:[%s1548 + $0x188] sm:$0xff]
        %v1574 = vld [vmem:[%s1548 + $0x190] sm:$0xff]
        %v1575 = vld [vmem:[%s1548 + $0x1a8] sm:$0xff]
        %v1576 = vld [vmem:[%s1548 + $0x1b0] sm:$0xff]
        %v1577 = vld [vmem:[%s1548 + $0x1c8] sm:$0xff]
        %v1578 = vld [vmem:[%s1548 + $0x1d0] sm:$0xff]
        %v1579 = vld [vmem:[%s1548 + $0x1e8] sm:$0xff]
        %v1580 = vld [vmem:[%s1548 + $0x1f0] sm:$0xff]
        %s1581 = scalar_lea.vmem %s1, 192
        %v1582 = vld [vmem:[%s1581] sm:$0xff]
        %v1583 = vld [vmem:[%s1581 + $0x8] sm:$0xff]
        %v1584 = vld [vmem:[%s1581 + $0x10] sm:$0xff]
        %v1585 = vld [vmem:[%s1581 + $0x18] sm:$0xff]
        %v1586 = vld [vmem:[%s1581 + $0x20] sm:$0xff]
        %v1587 = vld [vmem:[%s1581 + $0x28] sm:$0xff]
        %v1588 = vld [vmem:[%s1581 + $0x30] sm:$0xff]
        %v1589 = vld [vmem:[%s1581 + $0x38] sm:$0xff]
        %v1590 = vld [vmem:[%s1581 + $0x40] sm:$0xff]
        %v1591 = vld [vmem:[%s1581 + $0x48] sm:$0xff]
        %v1592 = vld [vmem:[%s1581 + $0x50] sm:$0xff]
        %v1593 = vld [vmem:[%s1581 + $0x58] sm:$0xff]
        %v1595 = vsel %vm385, %v1549, 0
        %v1598 = vsel %vm385, %v1550, 0
        %v1601 = vsel %vm385, %v1551, 0
        %v1604 = vsel %vm385, %v1552, 0
        %v1607 = vsel %vm385, %v1553, 0
        %v1610 = vsel %vm385, %v1554, 0
        %v1613 = vsel %vm385, %v1555, 0
        %v1616 = vsel %vm385, %v1556, 0
        %v1619 = vsel %vm385, %v1557, 0
        %v1622 = vsel %vm385, %v1558, 0
        %v1625 = vsel %vm385, %v1559, 0
        %v1628 = vsel %vm385, %v1560, 0
        %v1631 = vsel %vm385, %v1561, 0
        %v1634 = vsel %vm385, %v1562, 0
        %v1637 = vsel %vm385, %v1563, 0
        %v1640 = vsel %vm385, %v1564, 0
        %v1643 = vsel %vm385, %v1565, 0
        %v1646 = vsel %vm385, %v1566, 0
        %v1649 = vsel %vm385, %v1567, 0
        %v1652 = vsel %vm385, %v1568, 0
        %v1655 = vsel %vm385, %v1569, 0
        %v1658 = vsel %vm385, %v1570, 0
        %v1661 = vsel %vm385, %v1571, 0
        %v1664 = vsel %vm385, %v1572, 0
        %v1667 = vsel %vm385, %v1573, 0
        %v1670 = vsel %vm385, %v1574, 0
        %v1673 = vsel %vm385, %v1575, 0
        %v1676 = vsel %vm385, %v1576, 0
        %v1679 = vsel %vm385, %v1577, 0
        %v1682 = vsel %vm385, %v1578, 0
        %v1685 = vsel %vm385, %v1579, 0
        %v1688 = vsel %vm385, %v1580, 0
        %1690 = vmatprep.subr.mxu0 0.0
        %1691 = vmatpush1.msra.mxu0 %v1582
        %1692 = vmatprep.subr.mxu0 0.0
        %1693 = vmatpush1.msra.mxu0 %v1583
        %1694 = vmatprep.subr.mxu0 0.0
        %1695 = vmatpush1.msra.mxu0 %v1584
        %1696 = vmatprep.subr.mxu0 0.0
        %1697 = vmatpush1.msra.mxu0 %v1585
        %1698 = vmatprep.subr.mxu0 0.0
        %1699 = vmatpush1.msra.mxu0 %v1586
        %1700 = vmatprep.subr.mxu0 0.0
        %1701 = vmatpush1.msra.mxu0 %v1587
        %1702 = vmatprep.subr.mxu0 0.0
        %1703 = vmatpush1.msra.mxu0 %v1588
        %1704 = vmatprep.subr.mxu0 0.0
        %1705 = vmatpush1.msra.mxu0 %v1589
        %1706 = vmatprep.subr.mxu0 0.0
        %1707 = vmatpush1.msra.mxu0 %v1590
        %1708 = vmatprep.subr.mxu0 0.0
        %1709 = vmatpush1.msra.mxu0 %v1591
        %1710 = vmatprep.subr.mxu0 0.0
        %1711 = vmatpush1.msra.mxu0 %v1592
        %1712 = vmatprep.subr.mxu0 0.0
        %1713 = vmatpush1.msra.mxu0 %v1593
        %1714 = vmatprep.subr.mxu0 0.0
        %1715 = vmatpush1.msra.mxu0 0.0
        %1716 = vmatprep.subr.mxu0 0.0
        %1717 = vmatpush1.msra.mxu0 0.0
        %1718 = vmatprep.subr.mxu0 0.0
        %1719 = vmatpush1.msra.mxu0 0.0
        %1720 = vmatprep.subr.mxu0 0.0
        %1721 = vmatpush1.msra.mxu0 0.0
        %1722 = vmatprep.subr.mxu0 0.0
        %1723 = vmatpush1.msra.mxu0 0.0
        %1724 = vmatprep.subr.mxu0 0.0
        %1725 = vmatpush1.msra.mxu0 0.0
        %1726 = vmatprep.subr.mxu0 0.0
        %1727 = vmatpush1.msra.mxu0 0.0
        %1728 = vmatprep.subr.mxu0 0.0
        %1729 = vmatpush1.msra.mxu0 0.0
        %1730 = vmatprep.subr.mxu0 0.0
        %1731 = vmatpush1.msra.mxu0 0.0
        %1732 = vmatprep.subr.mxu0 0.0
        %1733 = vmatpush1.msra.mxu0 0.0
        %1734 = vmatprep.subr.mxu0 0.0
        %1735 = vmatpush1.msra.mxu0 0.0
        %1736 = vmatprep.subr.mxu0 0.0
        %1737 = vmatpush1.msra.mxu0 0.0
        %1738 = vmatprep.subr.mxu0 0.0
        %1739 = vmatpush1.msra.mxu0 0.0
        %1740 = vmatprep.subr.mxu0 0.0
        %1741 = vmatpush1.msra.mxu0 0.0
        %1742 = vmatprep.subr.mxu0 0.0
        %1743 = vmatpush1.msra.mxu0 0.0
        %1744 = vmatprep.subr.mxu0 0.0
        %1745 = vmatpush1.msra.mxu0 0.0
        %1746 = vmatprep.subr.mxu0 0.0
        %1747 = vmatpush1.msra.mxu0 0.0
        %1748 = vmatprep.subr.mxu0 0.0
        %1749 = vmatpush1.msra.mxu0 0.0
        %1750 = vmatprep.subr.mxu0 0.0
        %1751 = vmatpush1.msra.mxu0 0.0
        %1752 = vmatprep.subr.mxu0 0.0
        %1753 = vmatpush1.msra.mxu0 0.0
        %1754 = vmatprep.mubr.f32.mxu0 0.0
        %1755 = vmatmul.mubr.f32.gmra.mrb[0].mxu0 %v1595
        %v1756 = vpop.f32.mrb[0].mxu0
        %v1757 = vadd.f32 0.0, %v1756
        %v1758 = vpop.f32.mrb[0].mxu0
        %1759 = vmatprep.mubr.f32.mxu0 0.0
        %1760 = vmatmul.mubr.f32.gmra.mrb[0].mxu0 %v1598
        %v1761 = vpop.f32.mrb[0].mxu0
        %v1762 = vadd.f32 0.0, %v1761
        %v1763 = vpop.f32.mrb[0].mxu0
        %1764 = vmatprep.mubr.f32.mxu0 0.0
        %1765 = vmatmul.mubr.f32.gmra.mrb[0].mxu0 %v1601
        %v1766 = vpop.f32.mrb[0].mxu0
        %v1767 = vadd.f32 0.0, %v1766
        %v1768 = vpop.f32.mrb[0].mxu0
        %1769 = vmatprep.mubr.f32.mxu0 0.0
        %1770 = vmatmul.mubr.f32.gmra.mrb[0].mxu0 %v1604
        %v1771 = vpop.f32.mrb[0].mxu0
        %v1772 = vadd.f32 0.0, %v1771
        %v1773 = vpop.f32.mrb[0].mxu0
        %1774 = vmatprep.mubr.f32.mxu0 0.0
        %1775 = vmatmul.mubr.f32.gmra.mrb[0].mxu0 %v1607
        %v1776 = vpop.f32.mrb[0].mxu0
        %v1777 = vadd.f32 0.0, %v1776
        %v1778 = vpop.f32.mrb[0].mxu0
        %1779 = vmatprep.mubr.f32.mxu0 0.0
        %1780 = vmatmul.mubr.f32.gmra.mrb[0].mxu0 %v1610
        %v1781 = vpop.f32.mrb[0].mxu0
        %v1782 = vadd.f32 0.0, %v1781
        %v1783 = vpop.f32.mrb[0].mxu0
        %1784 = vmatprep.mubr.f32.mxu0 0.0
        %1785 = vmatmul.mubr.f32.gmra.mrb[0].mxu0 %v1613
        %v1786 = vpop.f32.mrb[0].mxu0
        %v1787 = vadd.f32 0.0, %v1786
        %v1788 = vpop.f32.mrb[0].mxu0
        %1789 = vmatprep.mubr.f32.mxu0 0.0
        %1790 = vmatmul.mubr.f32.gmra.mrb[0].mxu0 %v1616
        %v1791 = vpop.f32.mrb[0].mxu0
        %v1792 = vadd.f32 0.0, %v1791
        %v1793 = vpop.f32.mrb[0].mxu0
        %1794 = vmatprep.mubr.f32.mxu0 0.0
        %1795 = vmatmul.mubr.f32.gmra.mrb[0].mxu0 %v1619
        %v1796 = vpop.f32.mrb[0].mxu0
        %v1797 = vadd.f32 0.0, %v1796
        %v1798 = vpop.f32.mrb[0].mxu0
        %1799 = vmatprep.mubr.f32.mxu0 0.0
        %1800 = vmatmul.mubr.f32.gmra.mrb[0].mxu0 %v1622
        %v1801 = vpop.f32.mrb[0].mxu0
        %v1802 = vadd.f32 0.0, %v1801
        %v1803 = vpop.f32.mrb[0].mxu0
        %1804 = vmatprep.mubr.f32.mxu0 0.0
        %1805 = vmatmul.mubr.f32.gmra.mrb[0].mxu0 %v1625
        %v1806 = vpop.f32.mrb[0].mxu0
        %v1807 = vadd.f32 0.0, %v1806
        %v1808 = vpop.f32.mrb[0].mxu0
        %1809 = vmatprep.mubr.f32.mxu0 0.0
        %1810 = vmatmul.mubr.f32.gmra.mrb[0].mxu0 %v1628
        %v1811 = vpop.f32.mrb[0].mxu0
        %v1812 = vadd.f32 0.0, %v1811
        %v1813 = vpop.f32.mrb[0].mxu0
        %1814 = vmatprep.mubr.f32.mxu0 0.0
        %1815 = vmatmul.mubr.f32.gmra.mrb[0].mxu0 %v1631
        %v1816 = vpop.f32.mrb[0].mxu0
        %v1817 = vadd.f32 0.0, %v1816
        %v1818 = vpop.f32.mrb[0].mxu0
        %1819 = vmatprep.mubr.f32.mxu0 0.0
        %1820 = vmatmul.mubr.f32.gmra.mrb[0].mxu0 %v1634
        %v1821 = vpop.f32.mrb[0].mxu0
        %v1822 = vadd.f32 0.0, %v1821
        %v1823 = vpop.f32.mrb[0].mxu0
        %1824 = vmatprep.mubr.f32.mxu0 0.0
        %1825 = vmatmul.mubr.f32.gmra.mrb[0].mxu0 %v1637
        %v1826 = vpop.f32.mrb[0].mxu0
        %v1827 = vadd.f32 0.0, %v1826
        %v1828 = vpop.f32.mrb[0].mxu0
        %1829 = vmatprep.mubr.f32.mxu0 0.0
        %1830 = vmatmul.mubr.f32.gmra.mrb[0].mxu0 %v1640
        %v1831 = vpop.f32.mrb[0].mxu0
        %v1832 = vadd.f32 0.0, %v1831
        %v1833 = vpop.f32.mrb[0].mxu0
        %1834 = vmatprep.mubr.f32.mxu0 0.0
        %1835 = vmatmul.mubr.f32.gmra.mrb[0].mxu0 %v1643
        %v1836 = vpop.f32.mrb[0].mxu0
        %v1837 = vadd.f32 0.0, %v1836
        %v1838 = vpop.f32.mrb[0].mxu0
        %1839 = vmatprep.mubr.f32.mxu0 0.0
        %1840 = vmatmul.mubr.f32.gmra.mrb[0].mxu0 %v1646
        %v1841 = vpop.f32.mrb[0].mxu0
        %v1842 = vadd.f32 0.0, %v1841
        %v1843 = vpop.f32.mrb[0].mxu0
        %1844 = vmatprep.mubr.f32.mxu0 0.0
        %1845 = vmatmul.mubr.f32.gmra.mrb[0].mxu0 %v1649
        %v1846 = vpop.f32.mrb[0].mxu0
        %v1847 = vadd.f32 0.0, %v1846
        %v1848 = vpop.f32.mrb[0].mxu0
        %1849 = vmatprep.mubr.f32.mxu0 0.0
        %1850 = vmatmul.mubr.f32.gmra.mrb[0].mxu0 %v1652
        %v1851 = vpop.f32.mrb[0].mxu0
        %v1852 = vadd.f32 0.0, %v1851
        %v1853 = vpop.f32.mrb[0].mxu0
        %1854 = vmatprep.mubr.f32.mxu0 0.0
        %1855 = vmatmul.mubr.f32.gmra.mrb[0].mxu0 %v1655
        %v1856 = vpop.f32.mrb[0].mxu0
        %v1857 = vadd.f32 0.0, %v1856
        %v1858 = vpop.f32.mrb[0].mxu0
        %1859 = vmatprep.mubr.f32.mxu0 0.0
        %1860 = vmatmul.mubr.f32.gmra.mrb[0].mxu0 %v1658
        %v1861 = vpop.f32.mrb[0].mxu0
        %v1862 = vadd.f32 0.0, %v1861
        %v1863 = vpop.f32.mrb[0].mxu0
        %1864 = vmatprep.mubr.f32.mxu0 0.0
        %1865 = vmatmul.mubr.f32.gmra.mrb[0].mxu0 %v1661
        %v1866 = vpop.f32.mrb[0].mxu0
        %v1867 = vadd.f32 0.0, %v1866
        %v1868 = vpop.f32.mrb[0].mxu0
        %1869 = vmatprep.mubr.f32.mxu0 0.0
        %1870 = vmatmul.mubr.f32.gmra.mrb[0].mxu0 %v1664
        %v1871 = vpop.f32.mrb[0].mxu0
        %v1872 = vadd.f32 0.0, %v1871
        %v1873 = vpop.f32.mrb[0].mxu0
        %1874 = vmatprep.mubr.f32.mxu0 0.0
        %1875 = vmatmul.mubr.f32.gmra.mrb[0].mxu0 %v1667
        %v1876 = vpop.f32.mrb[0].mxu0
        %v1877 = vadd.f32 0.0, %v1876
        %v1878 = vpop.f32.mrb[0].mxu0
        %1879 = vmatprep.mubr.f32.mxu0 0.0
        %1880 = vmatmul.mubr.f32.gmra.mrb[0].mxu0 %v1670
        %v1881 = vpop.f32.mrb[0].mxu0
        %v1882 = vadd.f32 0.0, %v1881
        %v1883 = vpop.f32.mrb[0].mxu0
        %1884 = vmatprep.mubr.f32.mxu0 0.0
        %1885 = vmatmul.mubr.f32.gmra.mrb[0].mxu0 %v1673
        %v1886 = vpop.f32.mrb[0].mxu0
        %v1887 = vadd.f32 0.0, %v1886
        %v1888 = vpop.f32.mrb[0].mxu0
        %1889 = vmatprep.mubr.f32.mxu0 0.0
        %1890 = vmatmul.mubr.f32.gmra.mrb[0].mxu0 %v1676
        %v1891 = vpop.f32.mrb[0].mxu0
        %v1892 = vadd.f32 0.0, %v1891
        %v1893 = vpop.f32.mrb[0].mxu0
        %1894 = vmatprep.mubr.f32.mxu0 0.0
        %1895 = vmatmul.mubr.f32.gmra.mrb[0].mxu0 %v1679
        %v1896 = vpop.f32.mrb[0].mxu0
        %v1897 = vadd.f32 0.0, %v1896
        %v1898 = vpop.f32.mrb[0].mxu0
        %1899 = vmatprep.mubr.f32.mxu0 0.0
        %1900 = vmatmul.mubr.f32.gmra.mrb[0].mxu0 %v1682
        %v1901 = vpop.f32.mrb[0].mxu0
        %v1902 = vadd.f32 0.0, %v1901
        %v1903 = vpop.f32.mrb[0].mxu0
        %1904 = vmatprep.mubr.f32.mxu0 0.0
        %1905 = vmatmul.mubr.f32.gmra.mrb[0].mxu0 %v1685
        %v1906 = vpop.f32.mrb[0].mxu0
        %v1907 = vadd.f32 0.0, %v1906
        %v1908 = vpop.f32.mrb[0].mxu0
        %1909 = vmatprep.mubr.f32.mxu0 0.0
        %1910 = vmatmul.mubr.f32.gmra.mrb[0].mxu0 %v1688
        %v1911 = vpop.f32.mrb[0].mxu0
        %v1912 = vadd.f32 0.0, %v1911
        %v1913 = vpop.f32.mrb[0].mxu0
        %1914 = vdwg.mxu0
        %v1915 = vadd.f32 %v1390, %v1757
        %v1916 = vadd.f32 %v1395, %v1762
        %v1917 = vadd.f32 %v1400, %v1767
        %v1918 = vadd.f32 %v1405, %v1772
        %v1919 = vadd.f32 %v1410, %v1777
        %v1920 = vadd.f32 %v1415, %v1782
        %v1921 = vadd.f32 %v1420, %v1787
        %v1922 = vadd.f32 %v1425, %v1792
        %v1923 = vadd.f32 %v1430, %v1797
        %v1924 = vadd.f32 %v1435, %v1802
        %v1925 = vadd.f32 %v1440, %v1807
        %v1926 = vadd.f32 %v1445, %v1812
        %v1927 = vadd.f32 %v1450, %v1817
        %v1928 = vadd.f32 %v1455, %v1822
        %v1929 = vadd.f32 %v1460, %v1827
        %v1930 = vadd.f32 %v1465, %v1832
        %v1931 = vadd.f32 %v1470, %v1837
        %v1932 = vadd.f32 %v1475, %v1842
        %v1933 = vadd.f32 %v1480, %v1847
        %v1934 = vadd.f32 %v1485, %v1852
        %v1935 = vadd.f32 %v1490, %v1857
        %v1936 = vadd.f32 %v1495, %v1862
        %v1937 = vadd.f32 %v1500, %v1867
        %v1938 = vadd.f32 %v1505, %v1872
        %v1939 = vadd.f32 %v1510, %v1877
        %v1940 = vadd.f32 %v1515, %v1882
        %v1941 = vadd.f32 %v1520, %v1887
        %v1942 = vadd.f32 %v1525, %v1892
        %v1943 = vadd.f32 %v1530, %v1897
        %v1944 = vadd.f32 %v1535, %v1902
        %v1945 = vadd.f32 %v1540, %v1907
        %v1946 = vadd.f32 %v1545, %v1912
        %v1947 = vld [vmem:[%s2] sm:$0x1]
        %v1949 = vlaneseq
        %v1950 = vshrl.u32 %v1949, 7
        %v1951 = vsub.s32 0, %v1950
        %v1952 = vrot.slane %v1947, %v1951
        %v1954 = vadd.f32 %v1915, %v1952
        %v1955 = vadd.f32 %v1916, %v1952
        %v1956 = vadd.f32 %v1917, %v1952
        %v1957 = vadd.f32 %v1918, %v1952
        %v1958 = vadd.f32 %v1919, %v1952
        %v1959 = vadd.f32 %v1920, %v1952
        %v1960 = vadd.f32 %v1921, %v1952
        %v1961 = vadd.f32 %v1922, %v1952
        %v1962 = vadd.f32 %v1923, %v1952
        %v1963 = vadd.f32 %v1924, %v1952
        %v1964 = vadd.f32 %v1925, %v1952
        %v1965 = vadd.f32 %v1926, %v1952
        %v1966 = vadd.f32 %v1927, %v1952
        %v1967 = vadd.f32 %v1928, %v1952
        %v1968 = vadd.f32 %v1929, %v1952
        %v1969 = vadd.f32 %v1930, %v1952
        %v1970 = vadd.f32 %v1931, %v1952
        %v1971 = vadd.f32 %v1932, %v1952
        %v1972 = vadd.f32 %v1933, %v1952
        %v1973 = vadd.f32 %v1934, %v1952
        %v1974 = vadd.f32 %v1935, %v1952
        %v1975 = vadd.f32 %v1936, %v1952
        %v1976 = vadd.f32 %v1937, %v1952
        %v1977 = vadd.f32 %v1938, %v1952
        %v1978 = vadd.f32 %v1939, %v1952
        %v1979 = vadd.f32 %v1940, %v1952
        %v1980 = vadd.f32 %v1941, %v1952
        %v1981 = vadd.f32 %v1942, %v1952
        %v1982 = vadd.f32 %v1943, %v1952
        %v1983 = vadd.f32 %v1944, %v1952
        %v1984 = vadd.f32 %v1945, %v1952
        %v1985 = vadd.f32 %v1946, %v1952
        %v1986 = vmax.f32 %v1954, 0.0
        %v1987 = vmax.f32 %v1955, 0.0
        %v1988 = vmax.f32 %v1956, 0.0
        %v1989 = vmax.f32 %v1957, 0.0
        %v1990 = vmax.f32 %v1958, 0.0
        %v1991 = vmax.f32 %v1959, 0.0
        %v1992 = vmax.f32 %v1960, 0.0
        %v1993 = vmax.f32 %v1961, 0.0
        %v1994 = vmax.f32 %v1962, 0.0
        %v1995 = vmax.f32 %v1963, 0.0
        %v1996 = vmax.f32 %v1964, 0.0
        %v1997 = vmax.f32 %v1965, 0.0
        %v1998 = vmax.f32 %v1966, 0.0
        %v1999 = vmax.f32 %v1967, 0.0
        %v2000 = vmax.f32 %v1968, 0.0
        %v2001 = vmax.f32 %v1969, 0.0
        %v2002 = vmax.f32 %v1970, 0.0
        %v2003 = vmax.f32 %v1971, 0.0
        %v2004 = vmax.f32 %v1972, 0.0
        %v2005 = vmax.f32 %v1973, 0.0
        %v2006 = vmax.f32 %v1974, 0.0
        %v2007 = vmax.f32 %v1975, 0.0
        %v2008 = vmax.f32 %v1976, 0.0
        %v2009 = vmax.f32 %v1977, 0.0
        %v2010 = vmax.f32 %v1978, 0.0
        %v2011 = vmax.f32 %v1979, 0.0
        %v2012 = vmax.f32 %v1980, 0.0
        %v2013 = vmax.f32 %v1981, 0.0
        %v2014 = vmax.f32 %v1982, 0.0
        %v2015 = vmax.f32 %v1983, 0.0
        %v2016 = vmax.f32 %v1984, 0.0
        %v2017 = vmax.f32 %v1985, 0.0
        %2018 = vst.msk [vmem:[#allocation3] sm:$0xff] %vm494, %v1986
        %2019 = vst.msk [vmem:[#allocation3 + $0x8] sm:$0xff] %vm494, %v1987
        %2020 = vst.msk [vmem:[#allocation3 + $0x10] sm:$0xff] %vm494, %v1988
        %2021 = vst.msk [vmem:[#allocation3 + $0x18] sm:$0xff] %vm494, %v1989
        %2022 = vst.msk [vmem:[#allocation3 + $0x20] sm:$0xff] %vm494, %v1990
        %2023 = vst.msk [vmem:[#allocation3 + $0x28] sm:$0xff] %vm494, %v1991
        %2024 = vst.msk [vmem:[#allocation3 + $0x30] sm:$0xff] %vm494, %v1992
        %2025 = vst.msk [vmem:[#allocation3 + $0x38] sm:$0xff] %vm494, %v1993
        %2026 = vst.msk [vmem:[#allocation3 + $0x40] sm:$0xff] %vm494, %v1994
        %2027 = vst.msk [vmem:[#allocation3 + $0x48] sm:$0xff] %vm494, %v1995
        %2028 = vst.msk [vmem:[#allocation3 + $0x50] sm:$0xff] %vm494, %v1996
        %2029 = vst.msk [vmem:[#allocation3 + $0x58] sm:$0xff] %vm494, %v1997
        %2030 = vst.msk [vmem:[#allocation3 + $0x60] sm:$0xff] %vm494, %v1998
        %2031 = vst.msk [vmem:[#allocation3 + $0x68] sm:$0xff] %vm494, %v1999
        %2032 = vst.msk [vmem:[#allocation3 + $0x70] sm:$0xff] %vm494, %v2000
        %2033 = vst.msk [vmem:[#allocation3 + $0x78] sm:$0xff] %vm494, %v2001
        %2034 = vst.msk [vmem:[#allocation3 + $0x80] sm:$0xff] %vm494, %v2002
        %2035 = vst.msk [vmem:[#allocation3 + $0x88] sm:$0xff] %vm494, %v2003
        %2036 = vst.msk [vmem:[#allocation3 + $0x90] sm:$0xff] %vm494, %v2004
        %2037 = vst.msk [vmem:[#allocation3 + $0x98] sm:$0xff] %vm494, %v2005
        %2038 = vst.msk [vmem:[#allocation3 + $0xa0] sm:$0xff] %vm494, %v2006
        %2039 = vst.msk [vmem:[#allocation3 + $0xa8] sm:$0xff] %vm494, %v2007
        %2040 = vst.msk [vmem:[#allocation3 + $0xb0] sm:$0xff] %vm494, %v2008
        %2041 = vst.msk [vmem:[#allocation3 + $0xb8] sm:$0xff] %vm494, %v2009
        %2042 = vst.msk [vmem:[#allocation3 + $0xc0] sm:$0xff] %vm494, %v2010
        %2043 = vst.msk [vmem:[#allocation3 + $0xc8] sm:$0xff] %vm494, %v2011
        %2044 = vst.msk [vmem:[#allocation3 + $0xd0] sm:$0xff] %vm494, %v2012
        %2045 = vst.msk [vmem:[#allocation3 + $0xd8] sm:$0xff] %vm494, %v2013
        %2046 = vst.msk [vmem:[#allocation3 + $0xe0] sm:$0xff] %vm494, %v2014
        %2047 = vst.msk [vmem:[#allocation3 + $0xe8] sm:$0xff] %vm494, %v2015
        %2048 = vst.msk [vmem:[#allocation3 + $0xf0] sm:$0xff] %vm494, %v2016
        %2049 = vst.msk [vmem:[#allocation3 + $0xf8] sm:$0xff] %vm494, %v2017
        %2050 = vst.msk [vmem:[%s395 + $0x9] sm:$0xff] %vm494, %v1986
        %2051 = vst.msk [vmem:[%s395 + $0x11] sm:$0xff] %vm494, %v1987
        %2052 = vst.msk [vmem:[%s395 + $0x29] sm:$0xff] %vm494, %v1988
        %2053 = vst.msk [vmem:[%s395 + $0x31] sm:$0xff] %vm494, %v1989
        %2054 = vst.msk [vmem:[%s395 + $0x49] sm:$0xff] %vm494, %v1990
        %2055 = vst.msk [vmem:[%s395 + $0x51] sm:$0xff] %vm494, %v1991
        %2056 = vst.msk [vmem:[%s395 + $0x69] sm:$0xff] %vm494, %v1992
        %2057 = vst.msk [vmem:[%s395 + $0x71] sm:$0xff] %vm494, %v1993
        %2058 = vst.msk [vmem:[%s395 + $0x89] sm:$0xff] %vm494, %v1994
        %2059 = vst.msk [vmem:[%s395 + $0x91] sm:$0xff] %vm494, %v1995
        %2060 = vst.msk [vmem:[%s395 + $0xa9] sm:$0xff] %vm494, %v1996
        %2061 = vst.msk [vmem:[%s395 + $0xb1] sm:$0xff] %vm494, %v1997
        %2062 = vst.msk [vmem:[%s395 + $0xc9] sm:$0xff] %vm494, %v1998
        %2063 = vst.msk [vmem:[%s395 + $0xd1] sm:$0xff] %vm494, %v1999
        %2064 = vst.msk [vmem:[%s395 + $0xe9] sm:$0xff] %vm494, %v2000
        %2065 = vst.msk [vmem:[%s395 + $0xf1] sm:$0xff] %vm494, %v2001
        %2066 = vst.msk [vmem:[%s395 + $0x109] sm:$0xff] %vm494, %v2002
        %2067 = vst.msk [vmem:[%s395 + $0x111] sm:$0xff] %vm494, %v2003
        %2068 = vst.msk [vmem:[%s395 + $0x129] sm:$0xff] %vm494, %v2004
        %2069 = vst.msk [vmem:[%s395 + $0x131] sm:$0xff] %vm494, %v2005
        %2070 = vst.msk [vmem:[%s395 + $0x149] sm:$0xff] %vm494, %v2006
        %2071 = vst.msk [vmem:[%s395 + $0x151] sm:$0xff] %vm494, %v2007
        %2072 = vst.msk [vmem:[%s395 + $0x169] sm:$0xff] %vm494, %v2008
        %2073 = vst.msk [vmem:[%s395 + $0x171] sm:$0xff] %vm494, %v2009
        %2074 = vst.msk [vmem:[%s395 + $0x189] sm:$0xff] %vm494, %v2010
        %2075 = vst.msk [vmem:[%s395 + $0x191] sm:$0xff] %vm494, %v2011
        %2076 = vst.msk [vmem:[%s395 + $0x1a9] sm:$0xff] %vm494, %v2012
        %2077 = vst.msk [vmem:[%s395 + $0x1b1] sm:$0xff] %vm494, %v2013
        %2078 = vst.msk [vmem:[%s395 + $0x1c9] sm:$0xff] %vm494, %v2014
        %2079 = vst.msk [vmem:[%s395 + $0x1d1] sm:$0xff] %vm494, %v2015
        %2080 = vst.msk [vmem:[%s395 + $0x1e9] sm:$0xff] %vm494, %v2016
        %2081 = vst.msk [vmem:[%s395 + $0x1f1] sm:$0xff] %vm494, %v2017
        %2114 = vrot.lane.b32.xlu0 %v1986, 32
        %v2115 = vpop.permute.xlu0 %2114
        %2116 = vrot.lane.b32.xlu0 %v1987, 32
        %v2117 = vpop.permute.xlu0 %2116
        %2118 = vrot.lane.b32.xlu0 %v1988, 32
        %v2119 = vpop.permute.xlu0 %2118
        %2120 = vrot.lane.b32.xlu0 %v1989, 32
        %v2121 = vpop.permute.xlu0 %2120
        %2122 = vrot.lane.b32.xlu0 %v1990, 32
        %v2123 = vpop.permute.xlu0 %2122
        %2124 = vrot.lane.b32.xlu0 %v1991, 32
        %v2125 = vpop.permute.xlu0 %2124
        %2126 = vrot.lane.b32.xlu0 %v1992, 32
        %v2127 = vpop.permute.xlu0 %2126
        %2128 = vrot.lane.b32.xlu0 %v1993, 32
        %v2129 = vpop.permute.xlu0 %2128
        %2130 = vrot.lane.b32.xlu0 %v1994, 32
        %v2131 = vpop.permute.xlu0 %2130
        %2132 = vrot.lane.b32.xlu0 %v1995, 32
        %v2133 = vpop.permute.xlu0 %2132
        %2134 = vrot.lane.b32.xlu0 %v1996, 32
        %v2135 = vpop.permute.xlu0 %2134
        %2136 = vrot.lane.b32.xlu0 %v1997, 32
        %v2137 = vpop.permute.xlu0 %2136
        %2138 = vrot.lane.b32.xlu0 %v1998, 32
        %v2139 = vpop.permute.xlu0 %2138
        %2140 = vrot.lane.b32.xlu0 %v1999, 32
        %v2141 = vpop.permute.xlu0 %2140
        %2142 = vrot.lane.b32.xlu0 %v2000, 32
        %v2143 = vpop.permute.xlu0 %2142
        %2144 = vrot.lane.b32.xlu0 %v2001, 32
        %v2145 = vpop.permute.xlu0 %2144
        %2146 = vrot.lane.b32.xlu0 %v2002, 32
        %v2147 = vpop.permute.xlu0 %2146
        %2148 = vrot.lane.b32.xlu0 %v2003, 32
        %v2149 = vpop.permute.xlu0 %2148
        %2150 = vrot.lane.b32.xlu0 %v2004, 32
        %v2151 = vpop.permute.xlu0 %2150
        %2152 = vrot.lane.b32.xlu0 %v2005, 32
        %v2153 = vpop.permute.xlu0 %2152
        %2154 = vrot.lane.b32.xlu0 %v2006, 32
        %v2155 = vpop.permute.xlu0 %2154
        %2156 = vrot.lane.b32.xlu0 %v2007, 32
        %v2157 = vpop.permute.xlu0 %2156
        %2158 = vrot.lane.b32.xlu0 %v2008, 32
        %v2159 = vpop.permute.xlu0 %2158
        %2160 = vrot.lane.b32.xlu0 %v2009, 32
        %v2161 = vpop.permute.xlu0 %2160
        %2162 = vrot.lane.b32.xlu0 %v2010, 32
        %v2163 = vpop.permute.xlu0 %2162
        %2164 = vrot.lane.b32.xlu0 %v2011, 32
        %v2165 = vpop.permute.xlu0 %2164
        %2166 = vrot.lane.b32.xlu0 %v2012, 32
        %v2167 = vpop.permute.xlu0 %2166
        %2168 = vrot.lane.b32.xlu0 %v2013, 32
        %v2169 = vpop.permute.xlu0 %2168
        %2170 = vrot.lane.b32.xlu0 %v2014, 32
        %v2171 = vpop.permute.xlu0 %2170
        %2172 = vrot.lane.b32.xlu0 %v2015, 32
        %v2173 = vpop.permute.xlu0 %2172
        %2174 = vrot.lane.b32.xlu0 %v2016, 32
        %v2175 = vpop.permute.xlu0 %2174
        %2176 = vrot.lane.b32.xlu0 %v2017, 32
        %v2177 = vpop.permute.xlu0 %2176
        %2210 = vst.msk [vmem:[%s395 + $0x8] sm:$0xff] %vm655, %v2115
        %2211 = vst.msk [vmem:[%s395 + $0x10] sm:$0xff] %vm655, %v2117
        %2212 = vst.msk [vmem:[%s395 + $0x28] sm:$0xff] %vm655, %v2119
        %2213 = vst.msk [vmem:[%s395 + $0x30] sm:$0xff] %vm655, %v2121
        %2214 = vst.msk [vmem:[%s395 + $0x48] sm:$0xff] %vm655, %v2123
        %2215 = vst.msk [vmem:[%s395 + $0x50] sm:$0xff] %vm655, %v2125
        %2216 = vst.msk [vmem:[%s395 + $0x68] sm:$0xff] %vm655, %v2127
        %2217 = vst.msk [vmem:[%s395 + $0x70] sm:$0xff] %vm655, %v2129
        %2218 = vst.msk [vmem:[%s395 + $0x88] sm:$0xff] %vm655, %v2131
        %2219 = vst.msk [vmem:[%s395 + $0x90] sm:$0xff] %vm655, %v2133
        %2220 = vst.msk [vmem:[%s395 + $0xa8] sm:$0xff] %vm655, %v2135
        %2221 = vst.msk [vmem:[%s395 + $0xb0] sm:$0xff] %vm655, %v2137
        %2222 = vst.msk [vmem:[%s395 + $0xc8] sm:$0xff] %vm655, %v2139
        %2223 = vst.msk [vmem:[%s395 + $0xd0] sm:$0xff] %vm655, %v2141
        %2224 = vst.msk [vmem:[%s395 + $0xe8] sm:$0xff] %vm655, %v2143
        %2225 = vst.msk [vmem:[%s395 + $0xf0] sm:$0xff] %vm655, %v2145
        %2226 = vst.msk [vmem:[%s395 + $0x108] sm:$0xff] %vm655, %v2147
        %2227 = vst.msk [vmem:[%s395 + $0x110] sm:$0xff] %vm655, %v2149
        %2228 = vst.msk [vmem:[%s395 + $0x128] sm:$0xff] %vm655, %v2151
        %2229 = vst.msk [vmem:[%s395 + $0x130] sm:$0xff] %vm655, %v2153
        %2230 = vst.msk [vmem:[%s395 + $0x148] sm:$0xff] %vm655, %v2155
        %2231 = vst.msk [vmem:[%s395 + $0x150] sm:$0xff] %vm655, %v2157
        %2232 = vst.msk [vmem:[%s395 + $0x168] sm:$0xff] %vm655, %v2159
        %2233 = vst.msk [vmem:[%s395 + $0x170] sm:$0xff] %vm655, %v2161
        %2234 = vst.msk [vmem:[%s395 + $0x188] sm:$0xff] %vm655, %v2163
        %2235 = vst.msk [vmem:[%s395 + $0x190] sm:$0xff] %vm655, %v2165
        %2236 = vst.msk [vmem:[%s395 + $0x1a8] sm:$0xff] %vm655, %v2167
        %2237 = vst.msk [vmem:[%s395 + $0x1b0] sm:$0xff] %vm655, %v2169
        %2238 = vst.msk [vmem:[%s395 + $0x1c8] sm:$0xff] %vm655, %v2171
        %2239 = vst.msk [vmem:[%s395 + $0x1d0] sm:$0xff] %vm655, %v2173
        %2240 = vst.msk [vmem:[%s395 + $0x1e8] sm:$0xff] %vm655, %v2175
        %2241 = vst.msk [vmem:[%s395 + $0x1f0] sm:$0xff] %vm655, %v2177
        %2242 = vrot.lane.b32.xlu0 %v1986, 64
        %v2243 = vpop.permute.xlu0 %2242
        %2244 = vrot.lane.b32.xlu0 %v1987, 64
        %v2245 = vpop.permute.xlu0 %2244
        %2246 = vrot.lane.b32.xlu0 %v1988, 64
        %v2247 = vpop.permute.xlu0 %2246
        %2248 = vrot.lane.b32.xlu0 %v1989, 64
        %v2249 = vpop.permute.xlu0 %2248
        %2250 = vrot.lane.b32.xlu0 %v1990, 64
        %v2251 = vpop.permute.xlu0 %2250
        %2252 = vrot.lane.b32.xlu0 %v1991, 64
        %v2253 = vpop.permute.xlu0 %2252
        %2254 = vrot.lane.b32.xlu0 %v1992, 64
        %v2255 = vpop.permute.xlu0 %2254
        %2256 = vrot.lane.b32.xlu0 %v1993, 64
        %v2257 = vpop.permute.xlu0 %2256
        %2258 = vrot.lane.b32.xlu0 %v1994, 64
        %v2259 = vpop.permute.xlu0 %2258
        %2260 = vrot.lane.b32.xlu0 %v1995, 64
        %v2261 = vpop.permute.xlu0 %2260
        %2262 = vrot.lane.b32.xlu0 %v1996, 64
        %v2263 = vpop.permute.xlu0 %2262
        %2264 = vrot.lane.b32.xlu0 %v1997, 64
        %v2265 = vpop.permute.xlu0 %2264
        %2266 = vrot.lane.b32.xlu0 %v1998, 64
        %v2267 = vpop.permute.xlu0 %2266
        %2268 = vrot.lane.b32.xlu0 %v1999, 64
        %v2269 = vpop.permute.xlu0 %2268
        %2270 = vrot.lane.b32.xlu0 %v2000, 64
        %v2271 = vpop.permute.xlu0 %2270
        %2272 = vrot.lane.b32.xlu0 %v2001, 64
        %v2273 = vpop.permute.xlu0 %2272
        %2274 = vrot.lane.b32.xlu0 %v2002, 64
        %v2275 = vpop.permute.xlu0 %2274
        %2276 = vrot.lane.b32.xlu0 %v2003, 64
        %v2277 = vpop.permute.xlu0 %2276
        %2278 = vrot.lane.b32.xlu0 %v2004, 64
        %v2279 = vpop.permute.xlu0 %2278
        %2280 = vrot.lane.b32.xlu0 %v2005, 64
        %v2281 = vpop.permute.xlu0 %2280
        %2282 = vrot.lane.b32.xlu0 %v2006, 64
        %v2283 = vpop.permute.xlu0 %2282
        %2284 = vrot.lane.b32.xlu0 %v2007, 64
        %v2285 = vpop.permute.xlu0 %2284
        %2286 = vrot.lane.b32.xlu0 %v2008, 64
        %v2287 = vpop.permute.xlu0 %2286
        %2288 = vrot.lane.b32.xlu0 %v2009, 64
        %v2289 = vpop.permute.xlu0 %2288
        %2290 = vrot.lane.b32.xlu0 %v2010, 64
        %v2291 = vpop.permute.xlu0 %2290
        %2292 = vrot.lane.b32.xlu0 %v2011, 64
        %v2293 = vpop.permute.xlu0 %2292
        %2294 = vrot.lane.b32.xlu0 %v2012, 64
        %v2295 = vpop.permute.xlu0 %2294
        %2296 = vrot.lane.b32.xlu0 %v2013, 64
        %v2297 = vpop.permute.xlu0 %2296
        %2298 = vrot.lane.b32.xlu0 %v2014, 64
        %v2299 = vpop.permute.xlu0 %2298
        %2300 = vrot.lane.b32.xlu0 %v2015, 64
        %v2301 = vpop.permute.xlu0 %2300
        %2302 = vrot.lane.b32.xlu0 %v2016, 64
        %v2303 = vpop.permute.xlu0 %2302
        %2304 = vrot.lane.b32.xlu0 %v2017, 64
        %v2305 = vpop.permute.xlu0 %2304
        %2338 = vst.msk [vmem:[%s395 + $0x7] sm:$0xff] %vm784, %v2243
        %2339 = vst.msk [vmem:[%s395 + $0xf] sm:$0xff] %vm784, %v2245
        %2340 = vst.msk [vmem:[%s395 + $0x27] sm:$0xff] %vm784, %v2247
        %2341 = vst.msk [vmem:[%s395 + $0x2f] sm:$0xff] %vm784, %v2249
        %2342 = vst.msk [vmem:[%s395 + $0x47] sm:$0xff] %vm784, %v2251
        %2343 = vst.msk [vmem:[%s395 + $0x4f] sm:$0xff] %vm784, %v2253
        %2344 = vst.msk [vmem:[%s395 + $0x67] sm:$0xff] %vm784, %v2255
        %2345 = vst.msk [vmem:[%s395 + $0x6f] sm:$0xff] %vm784, %v2257
        %2346 = vst.msk [vmem:[%s395 + $0x87] sm:$0xff] %vm784, %v2259
        %2347 = vst.msk [vmem:[%s395 + $0x8f] sm:$0xff] %vm784, %v2261
        %2348 = vst.msk [vmem:[%s395 + $0xa7] sm:$0xff] %vm784, %v2263
        %2349 = vst.msk [vmem:[%s395 + $0xaf] sm:$0xff] %vm784, %v2265
        %2350 = vst.msk [vmem:[%s395 + $0xc7] sm:$0xff] %vm784, %v2267
        %2351 = vst.msk [vmem:[%s395 + $0xcf] sm:$0xff] %vm784, %v2269
        %2352 = vst.msk [vmem:[%s395 + $0xe7] sm:$0xff] %vm784, %v2271
        %2353 = vst.msk [vmem:[%s395 + $0xef] sm:$0xff] %vm784, %v2273
        %2354 = vst.msk [vmem:[%s395 + $0x107] sm:$0xff] %vm784, %v2275
        %2355 = vst.msk [vmem:[%s395 + $0x10f] sm:$0xff] %vm784, %v2277
        %2356 = vst.msk [vmem:[%s395 + $0x127] sm:$0xff] %vm784, %v2279
        %2357 = vst.msk [vmem:[%s395 + $0x12f] sm:$0xff] %vm784, %v2281
        %2358 = vst.msk [vmem:[%s395 + $0x147] sm:$0xff] %vm784, %v2283
        %2359 = vst.msk [vmem:[%s395 + $0x14f] sm:$0xff] %vm784, %v2285
        %2360 = vst.msk [vmem:[%s395 + $0x167] sm:$0xff] %vm784, %v2287
        %2361 = vst.msk [vmem:[%s395 + $0x16f] sm:$0xff] %vm784, %v2289
        %2362 = vst.msk [vmem:[%s395 + $0x187] sm:$0xff] %vm784, %v2291
        %2363 = vst.msk [vmem:[%s395 + $0x18f] sm:$0xff] %vm784, %v2293
        %2364 = vst.msk [vmem:[%s395 + $0x1a7] sm:$0xff] %vm784, %v2295
        %2365 = vst.msk [vmem:[%s395 + $0x1af] sm:$0xff] %vm784, %v2297
        %2366 = vst.msk [vmem:[%s395 + $0x1c7] sm:$0xff] %vm784, %v2299
        %2367 = vst.msk [vmem:[%s395 + $0x1cf] sm:$0xff] %vm784, %v2301
        %2368 = vst.msk [vmem:[%s395 + $0x1e7] sm:$0xff] %vm784, %v2303
        %2369 = vst.msk [vmem:[%s395 + $0x1ef] sm:$0xff] %vm784, %v2305
        %v2370 = vld [vmem:[#allocation2 + $0x8] sm:$0xff]
        %v2371 = vld [vmem:[#allocation2 + $0x10] sm:$0xff]
        %v2372 = vld [vmem:[#allocation2 + $0x28] sm:$0xff]
        %v2373 = vld [vmem:[#allocation2 + $0x30] sm:$0xff]
        %v2374 = vld [vmem:[#allocation2 + $0x48] sm:$0xff]
        %v2375 = vld [vmem:[#allocation2 + $0x50] sm:$0xff]
        %v2376 = vld [vmem:[#allocation2 + $0x68] sm:$0xff]
        %v2377 = vld [vmem:[#allocation2 + $0x70] sm:$0xff]
        %v2378 = vld [vmem:[#allocation2 + $0x88] sm:$0xff]
        %v2379 = vld [vmem:[#allocation2 + $0x90] sm:$0xff]
        %v2380 = vld [vmem:[#allocation2 + $0xa8] sm:$0xff]
        %v2381 = vld [vmem:[#allocation2 + $0xb0] sm:$0xff]
        %v2382 = vld [vmem:[#allocation2 + $0xc8] sm:$0xff]
        %v2383 = vld [vmem:[#allocation2 + $0xd0] sm:$0xff]
        %v2384 = vld [vmem:[#allocation2 + $0xe8] sm:$0xff]
        %v2385 = vld [vmem:[#allocation2 + $0xf0] sm:$0xff]
        %v2386 = vld [vmem:[#allocation2 + $0x108] sm:$0xff]
        %v2387 = vld [vmem:[#allocation2 + $0x110] sm:$0xff]
        %v2388 = vld [vmem:[#allocation2 + $0x128] sm:$0xff]
        %v2389 = vld [vmem:[#allocation2 + $0x130] sm:$0xff]
        %v2390 = vld [vmem:[#allocation2 + $0x148] sm:$0xff]
        %v2391 = vld [vmem:[#allocation2 + $0x150] sm:$0xff]
        %v2392 = vld [vmem:[#allocation2 + $0x168] sm:$0xff]
        %v2393 = vld [vmem:[#allocation2 + $0x170] sm:$0xff]
        %v2394 = vld [vmem:[#allocation2 + $0x188] sm:$0xff]
        %v2395 = vld [vmem:[#allocation2 + $0x190] sm:$0xff]
        %v2396 = vld [vmem:[#allocation2 + $0x1a8] sm:$0xff]
        %v2397 = vld [vmem:[#allocation2 + $0x1b0] sm:$0xff]
        %v2398 = vld [vmem:[#allocation2 + $0x1c8] sm:$0xff]
        %v2399 = vld [vmem:[#allocation2 + $0x1d0] sm:$0xff]
        %v2400 = vld [vmem:[#allocation2 + $0x1e8] sm:$0xff]
        %v2401 = vld [vmem:[#allocation2 + $0x1f0] sm:$0xff]
        %v2402 = vld [vmem:[%s3] sm:$0xff]
        %v2403 = vld [vmem:[%s3 + $0x8] sm:$0xff]
        %v2404 = vld [vmem:[%s3 + $0x10] sm:$0xff]
        %v2405 = vld [vmem:[%s3 + $0x18] sm:$0xff]
        %v2406 = vld [vmem:[%s3 + $0x20] sm:$0xff]
        %v2407 = vld [vmem:[%s3 + $0x28] sm:$0xff]
        %v2408 = vld [vmem:[%s3 + $0x30] sm:$0xff]
        %v2409 = vld [vmem:[%s3 + $0x38] sm:$0xff]
        %v2410 = vld [vmem:[%s3 + $0x40] sm:$0xff]
        %v2411 = vld [vmem:[%s3 + $0x48] sm:$0xff]
        %v2412 = vld [vmem:[%s3 + $0x50] sm:$0xff]
        %v2413 = vld [vmem:[%s3 + $0x58] sm:$0xff]
        %v2414 = vld [vmem:[%s395 + $0x8] sm:$0xff]
        %v2415 = vld [vmem:[%s395 + $0x10] sm:$0xff]
        %v2416 = vld [vmem:[%s395 + $0x28] sm:$0xff]
        %v2417 = vld [vmem:[%s395 + $0x30] sm:$0xff]
        %v2418 = vld [vmem:[%s395 + $0x48] sm:$0xff]
        %v2419 = vld [vmem:[%s395 + $0x50] sm:$0xff]
        %v2420 = vld [vmem:[%s395 + $0x68] sm:$0xff]
        %v2421 = vld [vmem:[%s395 + $0x70] sm:$0xff]
        %v2422 = vld [vmem:[%s395 + $0x88] sm:$0xff]
        %v2423 = vld [vmem:[%s395 + $0x90] sm:$0xff]
        %v2424 = vld [vmem:[%s395 + $0xa8] sm:$0xff]
        %v2425 = vld [vmem:[%s395 + $0xb0] sm:$0xff]
        %v2426 = vld [vmem:[%s395 + $0xc8] sm:$0xff]
        %v2427 = vld [vmem:[%s395 + $0xd0] sm:$0xff]
        %v2428 = vld [vmem:[%s395 + $0xe8] sm:$0xff]
        %v2429 = vld [vmem:[%s395 + $0xf0] sm:$0xff]
        %v2430 = vld [vmem:[%s395 + $0x108] sm:$0xff]
        %v2431 = vld [vmem:[%s395 + $0x110] sm:$0xff]
        %v2432 = vld [vmem:[%s395 + $0x128] sm:$0xff]
        %v2433 = vld [vmem:[%s395 + $0x130] sm:$0xff]
        %v2434 = vld [vmem:[%s395 + $0x148] sm:$0xff]
        %v2435 = vld [vmem:[%s395 + $0x150] sm:$0xff]
        %v2436 = vld [vmem:[%s395 + $0x168] sm:$0xff]
        %v2437 = vld [vmem:[%s395 + $0x170] sm:$0xff]
        %v2438 = vld [vmem:[%s395 + $0x188] sm:$0xff]
        %v2439 = vld [vmem:[%s395 + $0x190] sm:$0xff]
        %v2440 = vld [vmem:[%s395 + $0x1a8] sm:$0xff]
        %v2441 = vld [vmem:[%s395 + $0x1b0] sm:$0xff]
        %v2442 = vld [vmem:[%s395 + $0x1c8] sm:$0xff]
        %v2443 = vld [vmem:[%s395 + $0x1d0] sm:$0xff]
        %v2444 = vld [vmem:[%s395 + $0x1e8] sm:$0xff]
        %v2445 = vld [vmem:[%s395 + $0x1f0] sm:$0xff]
        %s2446 = scalar_lea.vmem %s3, 96
        %v2447 = vld [vmem:[%s2446] sm:$0xff]
        %v2448 = vld [vmem:[%s2446 + $0x8] sm:$0xff]
        %v2449 = vld [vmem:[%s2446 + $0x10] sm:$0xff]
        %v2450 = vld [vmem:[%s2446 + $0x18] sm:$0xff]
        %v2451 = vld [vmem:[%s2446 + $0x20] sm:$0xff]
        %v2452 = vld [vmem:[%s2446 + $0x28] sm:$0xff]
        %v2453 = vld [vmem:[%s2446 + $0x30] sm:$0xff]
        %v2454 = vld [vmem:[%s2446 + $0x38] sm:$0xff]
        %v2455 = vld [vmem:[%s2446 + $0x40] sm:$0xff]
        %v2456 = vld [vmem:[%s2446 + $0x48] sm:$0xff]
        %v2457 = vld [vmem:[%s2446 + $0x50] sm:$0xff]
        %v2458 = vld [vmem:[%s2446 + $0x58] sm:$0xff]
        %v2460 = vsel %vm385, %v2414, 0
        %v2463 = vsel %vm385, %v2415, 0
        %v2466 = vsel %vm385, %v2416, 0
        %v2469 = vsel %vm385, %v2417, 0
        %v2472 = vsel %vm385, %v2418, 0
        %v2475 = vsel %vm385, %v2419, 0
        %v2478 = vsel %vm385, %v2420, 0
        %v2481 = vsel %vm385, %v2421, 0
        %v2484 = vsel %vm385, %v2422, 0
        %v2487 = vsel %vm385, %v2423, 0
        %v2490 = vsel %vm385, %v2424, 0
        %v2493 = vsel %vm385, %v2425, 0
        %v2496 = vsel %vm385, %v2426, 0
        %v2499 = vsel %vm385, %v2427, 0
        %v2502 = vsel %vm385, %v2428, 0
        %v2505 = vsel %vm385, %v2429, 0
        %v2508 = vsel %vm385, %v2430, 0
        %v2511 = vsel %vm385, %v2431, 0
        %v2514 = vsel %vm385, %v2432, 0
        %v2517 = vsel %vm385, %v2433, 0
        %v2520 = vsel %vm385, %v2434, 0
        %v2523 = vsel %vm385, %v2435, 0
        %v2526 = vsel %vm385, %v2436, 0
        %v2529 = vsel %vm385, %v2437, 0
        %v2532 = vsel %vm385, %v2438, 0
        %v2535 = vsel %vm385, %v2439, 0
        %v2538 = vsel %vm385, %v2440, 0
        %v2541 = vsel %vm385, %v2441, 0
        %v2544 = vsel %vm385, %v2442, 0
        %v2547 = vsel %vm385, %v2443, 0
        %v2550 = vsel %vm385, %v2444, 0
        %v2553 = vsel %vm385, %v2445, 0
        %2555 = vmatprep.subr.mxu0 0.0
        %2556 = vmatpush1.msra.mxu0 %v2447
        %2557 = vmatprep.subr.mxu0 0.0
        %2558 = vmatpush1.msra.mxu0 %v2448
        %2559 = vmatprep.subr.mxu0 0.0
        %2560 = vmatpush1.msra.mxu0 %v2449
        %2561 = vmatprep.subr.mxu0 0.0
        %2562 = vmatpush1.msra.mxu0 %v2450
        %2563 = vmatprep.subr.mxu0 0.0
        %2564 = vmatpush1.msra.mxu0 %v2451
        %2565 = vmatprep.subr.mxu0 0.0
        %2566 = vmatpush1.msra.mxu0 %v2452
        %2567 = vmatprep.subr.mxu0 0.0
        %2568 = vmatpush1.msra.mxu0 %v2453
        %2569 = vmatprep.subr.mxu0 0.0
        %2570 = vmatpush1.msra.mxu0 %v2454
        %2571 = vmatprep.subr.mxu0 0.0
        %2572 = vmatpush1.msra.mxu0 %v2455
        %2573 = vmatprep.subr.mxu0 0.0
        %2574 = vmatpush1.msra.mxu0 %v2456
        %2575 = vmatprep.subr.mxu0 0.0
        %2576 = vmatpush1.msra.mxu0 %v2457
        %2577 = vmatprep.subr.mxu0 0.0
        %2578 = vmatpush1.msra.mxu0 %v2458
        %2579 = vmatprep.subr.mxu0 0.0
        %2580 = vmatpush1.msra.mxu0 0.0
        %2581 = vmatprep.subr.mxu0 0.0
        %2582 = vmatpush1.msra.mxu0 0.0
        %2583 = vmatprep.subr.mxu0 0.0
        %2584 = vmatpush1.msra.mxu0 0.0
        %2585 = vmatprep.subr.mxu0 0.0
        %2586 = vmatpush1.msra.mxu0 0.0
        %2587 = vmatprep.subr.mxu0 0.0
        %2588 = vmatpush1.msra.mxu0 0.0
        %2589 = vmatprep.subr.mxu0 0.0
        %2590 = vmatpush1.msra.mxu0 0.0
        %2591 = vmatprep.subr.mxu0 0.0
        %2592 = vmatpush1.msra.mxu0 0.0
        %2593 = vmatprep.subr.mxu0 0.0
        %2594 = vmatpush1.msra.mxu0 0.0
        %2595 = vmatprep.subr.mxu0 0.0
        %2596 = vmatpush1.msra.mxu0 0.0
        %2597 = vmatprep.subr.mxu0 0.0
        %2598 = vmatpush1.msra.mxu0 0.0
        %2599 = vmatprep.subr.mxu0 0.0
        %2600 = vmatpush1.msra.mxu0 0.0
        %2601 = vmatprep.subr.mxu0 0.0
        %2602 = vmatpush1.msra.mxu0 0.0
        %2603 = vmatprep.subr.mxu0 0.0
        %2604 = vmatpush1.msra.mxu0 0.0
        %2605 = vmatprep.subr.mxu0 0.0
        %2606 = vmatpush1.msra.mxu0 0.0
        %2607 = vmatprep.subr.mxu0 0.0
        %2608 = vmatpush1.msra.mxu0 0.0
        %2609 = vmatprep.subr.mxu0 0.0
        %2610 = vmatpush1.msra.mxu0 0.0
        %2611 = vmatprep.subr.mxu0 0.0
        %2612 = vmatpush1.msra.mxu0 0.0
        %2613 = vmatprep.subr.mxu0 0.0
        %2614 = vmatpush1.msra.mxu0 0.0
        %2615 = vmatprep.subr.mxu0 0.0
        %2616 = vmatpush1.msra.mxu0 0.0
        %2617 = vmatprep.subr.mxu0 0.0
        %2618 = vmatpush1.msra.mxu0 0.0
        %2619 = vmatprep.mubr.f32.mxu0 0.0
        %2620 = vmatmul.mubr.f32.gmra.mrb[0].mxu0 %v2460
        %v2621 = vpop.f32.mrb[0].mxu0
        %v2622 = vadd.f32 0.0, %v2621
        %v2623 = vpop.f32.mrb[0].mxu0
        %2624 = vmatprep.mubr.f32.mxu0 0.0
        %2625 = vmatmul.mubr.f32.gmra.mrb[0].mxu0 %v2463
        %v2626 = vpop.f32.mrb[0].mxu0
        %v2627 = vadd.f32 0.0, %v2626
        %v2628 = vpop.f32.mrb[0].mxu0
        %2629 = vmatprep.mubr.f32.mxu0 0.0
        %2630 = vmatmul.mubr.f32.gmra.mrb[0].mxu0 %v2466
        %v2631 = vpop.f32.mrb[0].mxu0
        %v2632 = vadd.f32 0.0, %v2631
        %v2633 = vpop.f32.mrb[0].mxu0
        %2634 = vmatprep.mubr.f32.mxu0 0.0
        %2635 = vmatmul.mubr.f32.gmra.mrb[0].mxu0 %v2469
        %v2636 = vpop.f32.mrb[0].mxu0
        %v2637 = vadd.f32 0.0, %v2636
        %v2638 = vpop.f32.mrb[0].mxu0
        %2639 = vmatprep.mubr.f32.mxu0 0.0
        %2640 = vmatmul.mubr.f32.gmra.mrb[0].mxu0 %v2472
        %v2641 = vpop.f32.mrb[0].mxu0
        %v2642 = vadd.f32 0.0, %v2641
        %v2643 = vpop.f32.mrb[0].mxu0
        %2644 = vmatprep.mubr.f32.mxu0 0.0
        %2645 = vmatmul.mubr.f32.gmra.mrb[0].mxu0 %v2475
        %v2646 = vpop.f32.mrb[0].mxu0
        %v2647 = vadd.f32 0.0, %v2646
        %v2648 = vpop.f32.mrb[0].mxu0
        %2649 = vmatprep.mubr.f32.mxu0 0.0
        %2650 = vmatmul.mubr.f32.gmra.mrb[0].mxu0 %v2478
        %v2651 = vpop.f32.mrb[0].mxu0
        %v2652 = vadd.f32 0.0, %v2651
        %v2653 = vpop.f32.mrb[0].mxu0
        %2654 = vmatprep.mubr.f32.mxu0 0.0
        %2655 = vmatmul.mubr.f32.gmra.mrb[0].mxu0 %v2481
        %v2656 = vpop.f32.mrb[0].mxu0
        %v2657 = vadd.f32 0.0, %v2656
        %v2658 = vpop.f32.mrb[0].mxu0
        %2659 = vmatprep.mubr.f32.mxu0 0.0
        %2660 = vmatmul.mubr.f32.gmra.mrb[0].mxu0 %v2484
        %v2661 = vpop.f32.mrb[0].mxu0
        %v2662 = vadd.f32 0.0, %v2661
        %v2663 = vpop.f32.mrb[0].mxu0
        %2664 = vmatprep.mubr.f32.mxu0 0.0
        %2665 = vmatmul.mubr.f32.gmra.mrb[0].mxu0 %v2487
        %v2666 = vpop.f32.mrb[0].mxu0
        %v2667 = vadd.f32 0.0, %v2666
        %v2668 = vpop.f32.mrb[0].mxu0
        %2669 = vmatprep.mubr.f32.mxu0 0.0
        %2670 = vmatmul.mubr.f32.gmra.mrb[0].mxu0 %v2490
        %v2671 = vpop.f32.mrb[0].mxu0
        %v2672 = vadd.f32 0.0, %v2671
        %v2673 = vpop.f32.mrb[0].mxu0
        %2674 = vmatprep.mubr.f32.mxu0 0.0
        %2675 = vmatmul.mubr.f32.gmra.mrb[0].mxu0 %v2493
        %v2676 = vpop.f32.mrb[0].mxu0
        %v2677 = vadd.f32 0.0, %v2676
        %v2678 = vpop.f32.mrb[0].mxu0
        %2679 = vmatprep.mubr.f32.mxu0 0.0
        %2680 = vmatmul.mubr.f32.gmra.mrb[0].mxu0 %v2496
        %v2681 = vpop.f32.mrb[0].mxu0
        %v2682 = vadd.f32 0.0, %v2681
        %v2683 = vpop.f32.mrb[0].mxu0
        %2684 = vmatprep.mubr.f32.mxu0 0.0
        %2685 = vmatmul.mubr.f32.gmra.mrb[0].mxu0 %v2499
        %v2686 = vpop.f32.mrb[0].mxu0
        %v2687 = vadd.f32 0.0, %v2686
        %v2688 = vpop.f32.mrb[0].mxu0
        %2689 = vmatprep.mubr.f32.mxu0 0.0
        %2690 = vmatmul.mubr.f32.gmra.mrb[0].mxu0 %v2502
        %v2691 = vpop.f32.mrb[0].mxu0
        %v2692 = vadd.f32 0.0, %v2691
        %v2693 = vpop.f32.mrb[0].mxu0
        %2694 = vmatprep.mubr.f32.mxu0 0.0
        %2695 = vmatmul.mubr.f32.gmra.mrb[0].mxu0 %v2505
        %v2696 = vpop.f32.mrb[0].mxu0
        %v2697 = vadd.f32 0.0, %v2696
        %v2698 = vpop.f32.mrb[0].mxu0
        %2699 = vmatprep.mubr.f32.mxu0 0.0
        %2700 = vmatmul.mubr.f32.gmra.mrb[0].mxu0 %v2508
        %v2701 = vpop.f32.mrb[0].mxu0
        %v2702 = vadd.f32 0.0, %v2701
        %v2703 = vpop.f32.mrb[0].mxu0
        %2704 = vmatprep.mubr.f32.mxu0 0.0
        %2705 = vmatmul.mubr.f32.gmra.mrb[0].mxu0 %v2511
        %v2706 = vpop.f32.mrb[0].mxu0
        %v2707 = vadd.f32 0.0, %v2706
        %v2708 = vpop.f32.mrb[0].mxu0
        %2709 = vmatprep.mubr.f32.mxu0 0.0
        %2710 = vmatmul.mubr.f32.gmra.mrb[0].mxu0 %v2514
        %v2711 = vpop.f32.mrb[0].mxu0
        %v2712 = vadd.f32 0.0, %v2711
        %v2713 = vpop.f32.mrb[0].mxu0
        %2714 = vmatprep.mubr.f32.mxu0 0.0
        %2715 = vmatmul.mubr.f32.gmra.mrb[0].mxu0 %v2517
        %v2716 = vpop.f32.mrb[0].mxu0
        %v2717 = vadd.f32 0.0, %v2716
        %v2718 = vpop.f32.mrb[0].mxu0
        %2719 = vmatprep.mubr.f32.mxu0 0.0
        %2720 = vmatmul.mubr.f32.gmra.mrb[0].mxu0 %v2520
        %v2721 = vpop.f32.mrb[0].mxu0
        %v2722 = vadd.f32 0.0, %v2721
        %v2723 = vpop.f32.mrb[0].mxu0
        %2724 = vmatprep.mubr.f32.mxu0 0.0
        %2725 = vmatmul.mubr.f32.gmra.mrb[0].mxu0 %v2523
        %v2726 = vpop.f32.mrb[0].mxu0
        %v2727 = vadd.f32 0.0, %v2726
        %v2728 = vpop.f32.mrb[0].mxu0
        %2729 = vmatprep.mubr.f32.mxu0 0.0
        %2730 = vmatmul.mubr.f32.gmra.mrb[0].mxu0 %v2526
        %v2731 = vpop.f32.mrb[0].mxu0
        %v2732 = vadd.f32 0.0, %v2731
        %v2733 = vpop.f32.mrb[0].mxu0
        %2734 = vmatprep.mubr.f32.mxu0 0.0
        %2735 = vmatmul.mubr.f32.gmra.mrb[0].mxu0 %v2529
        %v2736 = vpop.f32.mrb[0].mxu0
        %v2737 = vadd.f32 0.0, %v2736
        %v2738 = vpop.f32.mrb[0].mxu0
        %2739 = vmatprep.mubr.f32.mxu0 0.0
        %2740 = vmatmul.mubr.f32.gmra.mrb[0].mxu0 %v2532
        %v2741 = vpop.f32.mrb[0].mxu0
        %v2742 = vadd.f32 0.0, %v2741
        %v2743 = vpop.f32.mrb[0].mxu0
        %2744 = vmatprep.mubr.f32.mxu0 0.0
        %2745 = vmatmul.mubr.f32.gmra.mrb[0].mxu0 %v2535
        %v2746 = vpop.f32.mrb[0].mxu0
        %v2747 = vadd.f32 0.0, %v2746
        %v2748 = vpop.f32.mrb[0].mxu0
        %2749 = vmatprep.mubr.f32.mxu0 0.0
        %2750 = vmatmul.mubr.f32.gmra.mrb[0].mxu0 %v2538
        %v2751 = vpop.f32.mrb[0].mxu0
        %v2752 = vadd.f32 0.0, %v2751
        %v2753 = vpop.f32.mrb[0].mxu0
        %2754 = vmatprep.mubr.f32.mxu0 0.0
        %2755 = vmatmul.mubr.f32.gmra.mrb[0].mxu0 %v2541
        %v2756 = vpop.f32.mrb[0].mxu0
        %v2757 = vadd.f32 0.0, %v2756
        %v2758 = vpop.f32.mrb[0].mxu0
        %2759 = vmatprep.mubr.f32.mxu0 0.0
        %2760 = vmatmul.mubr.f32.gmra.mrb[0].mxu0 %v2544
        %v2761 = vpop.f32.mrb[0].mxu0
        %v2762 = vadd.f32 0.0, %v2761
        %v2763 = vpop.f32.mrb[0].mxu0
        %2764 = vmatprep.mubr.f32.mxu0 0.0
        %2765 = vmatmul.mubr.f32.gmra.mrb[0].mxu0 %v2547
        %v2766 = vpop.f32.mrb[0].mxu0
        %v2767 = vadd.f32 0.0, %v2766
        %v2768 = vpop.f32.mrb[0].mxu0
        %2769 = vmatprep.mubr.f32.mxu0 0.0
        %2770 = vmatmul.mubr.f32.gmra.mrb[0].mxu0 %v2550
        %v2771 = vpop.f32.mrb[0].mxu0
        %v2772 = vadd.f32 0.0, %v2771
        %v2773 = vpop.f32.mrb[0].mxu0
        %2774 = vmatprep.mubr.f32.mxu0 0.0
        %2775 = vmatmul.mubr.f32.gmra.mrb[0].mxu0 %v2553
        %v2776 = vpop.f32.mrb[0].mxu0
        %v2777 = vadd.f32 0.0, %v2776
        %v2778 = vpop.f32.mrb[0].mxu0
        %2779 = vdwg.mxu0
        %v2781 = vsel %vm385, %v2370, 0
        %v2784 = vsel %vm385, %v2371, 0
        %v2787 = vsel %vm385, %v2372, 0
        %v2790 = vsel %vm385, %v2373, 0
        %v2793 = vsel %vm385, %v2374, 0
        %v2796 = vsel %vm385, %v2375, 0
        %v2799 = vsel %vm385, %v2376, 0
        %v2802 = vsel %vm385, %v2377, 0
        %v2805 = vsel %vm385, %v2378, 0
        %v2808 = vsel %vm385, %v2379, 0
        %v2811 = vsel %vm385, %v2380, 0
        %v2814 = vsel %vm385, %v2381, 0
        %v2817 = vsel %vm385, %v2382, 0
        %v2820 = vsel %vm385, %v2383, 0
        %v2823 = vsel %vm385, %v2384, 0
        %v2826 = vsel %vm385, %v2385, 0
        %v2829 = vsel %vm385, %v2386, 0
        %v2832 = vsel %vm385, %v2387, 0
        %v2835 = vsel %vm385, %v2388, 0
        %v2838 = vsel %vm385, %v2389, 0
        %v2841 = vsel %vm385, %v2390, 0
        %v2844 = vsel %vm385, %v2391, 0
        %v2847 = vsel %vm385, %v2392, 0
        %v2850 = vsel %vm385, %v2393, 0
        %v2853 = vsel %vm385, %v2394, 0
        %v2856 = vsel %vm385, %v2395, 0
        %v2859 = vsel %vm385, %v2396, 0
        %v2862 = vsel %vm385, %v2397, 0
        %v2865 = vsel %vm385, %v2398, 0
        %v2868 = vsel %vm385, %v2399, 0
        %v2871 = vsel %vm385, %v2400, 0
        %v2874 = vsel %vm385, %v2401, 0
        %2876 = vmatprep.subr.mxu0 0.0
        %2877 = vmatpush1.msra.mxu0 %v2402
        %2878 = vmatprep.subr.mxu0 0.0
        %2879 = vmatpush1.msra.mxu0 %v2403
        %2880 = vmatprep.subr.mxu0 0.0
        %2881 = vmatpush1.msra.mxu0 %v2404
        %2882 = vmatprep.subr.mxu0 0.0
        %2883 = vmatpush1.msra.mxu0 %v2405
        %2884 = vmatprep.subr.mxu0 0.0
        %2885 = vmatpush1.msra.mxu0 %v2406
        %2886 = vmatprep.subr.mxu0 0.0
        %2887 = vmatpush1.msra.mxu0 %v2407
        %2888 = vmatprep.subr.mxu0 0.0
        %2889 = vmatpush1.msra.mxu0 %v2408
        %2890 = vmatprep.subr.mxu0 0.0
        %2891 = vmatpush1.msra.mxu0 %v2409
        %2892 = vmatprep.subr.mxu0 0.0
        %2893 = vmatpush1.msra.mxu0 %v2410
        %2894 = vmatprep.subr.mxu0 0.0
        %2895 = vmatpush1.msra.mxu0 %v2411
        %2896 = vmatprep.subr.mxu0 0.0
        %2897 = vmatpush1.msra.mxu0 %v2412
        %2898 = vmatprep.subr.mxu0 0.0
        %2899 = vmatpush1.msra.mxu0 %v2413
        %2900 = vmatprep.subr.mxu0 0.0
        %2901 = vmatpush1.msra.mxu0 0.0
        %2902 = vmatprep.subr.mxu0 0.0
        %2903 = vmatpush1.msra.mxu0 0.0
        %2904 = vmatprep.subr.mxu0 0.0
        %2905 = vmatpush1.msra.mxu0 0.0
        %2906 = vmatprep.subr.mxu0 0.0
        %2907 = vmatpush1.msra.mxu0 0.0
        %2908 = vmatprep.subr.mxu0 0.0
        %2909 = vmatpush1.msra.mxu0 0.0
        %2910 = vmatprep.subr.mxu0 0.0
        %2911 = vmatpush1.msra.mxu0 0.0
        %2912 = vmatprep.subr.mxu0 0.0
        %2913 = vmatpush1.msra.mxu0 0.0
        %2914 = vmatprep.subr.mxu0 0.0
        %2915 = vmatpush1.msra.mxu0 0.0
        %2916 = vmatprep.subr.mxu0 0.0
        %2917 = vmatpush1.msra.mxu0 0.0
        %2918 = vmatprep.subr.mxu0 0.0
        %2919 = vmatpush1.msra.mxu0 0.0
        %2920 = vmatprep.subr.mxu0 0.0
        %2921 = vmatpush1.msra.mxu0 0.0
        %2922 = vmatprep.subr.mxu0 0.0
        %2923 = vmatpush1.msra.mxu0 0.0
        %2924 = vmatprep.subr.mxu0 0.0
        %2925 = vmatpush1.msra.mxu0 0.0
        %2926 = vmatprep.subr.mxu0 0.0
        %2927 = vmatpush1.msra.mxu0 0.0
        %2928 = vmatprep.subr.mxu0 0.0
        %2929 = vmatpush1.msra.mxu0 0.0
        %2930 = vmatprep.subr.mxu0 0.0
        %2931 = vmatpush1.msra.mxu0 0.0
        %2932 = vmatprep.subr.mxu0 0.0
        %2933 = vmatpush1.msra.mxu0 0.0
        %2934 = vmatprep.subr.mxu0 0.0
        %2935 = vmatpush1.msra.mxu0 0.0
        %2936 = vmatprep.subr.mxu0 0.0
        %2937 = vmatpush1.msra.mxu0 0.0
        %2938 = vmatprep.subr.mxu0 0.0
        %2939 = vmatpush1.msra.mxu0 0.0
        %2940 = vmatprep.mubr.f32.mxu0 0.0
        %2941 = vmatmul.mubr.f32.gmra.mrb[0].mxu0 %v2781
        %v2942 = vpop.f32.mrb[0].mxu0
        %v2943 = vadd.f32 %v2622, %v2942
        %v2944 = vpop.f32.mrb[0].mxu0
        %2945 = vmatprep.mubr.f32.mxu0 0.0
        %2946 = vmatmul.mubr.f32.gmra.mrb[0].mxu0 %v2784
        %v2947 = vpop.f32.mrb[0].mxu0
        %v2948 = vadd.f32 %v2627, %v2947
        %v2949 = vpop.f32.mrb[0].mxu0
        %2950 = vmatprep.mubr.f32.mxu0 0.0
        %2951 = vmatmul.mubr.f32.gmra.mrb[0].mxu0 %v2787
        %v2952 = vpop.f32.mrb[0].mxu0
        %v2953 = vadd.f32 %v2632, %v2952
        %v2954 = vpop.f32.mrb[0].mxu0
        %2955 = vmatprep.mubr.f32.mxu0 0.0
        %2956 = vmatmul.mubr.f32.gmra.mrb[0].mxu0 %v2790
        %v2957 = vpop.f32.mrb[0].mxu0
        %v2958 = vadd.f32 %v2637, %v2957
        %v2959 = vpop.f32.mrb[0].mxu0
        %2960 = vmatprep.mubr.f32.mxu0 0.0
        %2961 = vmatmul.mubr.f32.gmra.mrb[0].mxu0 %v2793
        %v2962 = vpop.f32.mrb[0].mxu0
        %v2963 = vadd.f32 %v2642, %v2962
        %v2964 = vpop.f32.mrb[0].mxu0
        %2965 = vmatprep.mubr.f32.mxu0 0.0
        %2966 = vmatmul.mubr.f32.gmra.mrb[0].mxu0 %v2796
        %v2967 = vpop.f32.mrb[0].mxu0
        %v2968 = vadd.f32 %v2647, %v2967
        %v2969 = vpop.f32.mrb[0].mxu0
        %2970 = vmatprep.mubr.f32.mxu0 0.0
        %2971 = vmatmul.mubr.f32.gmra.mrb[0].mxu0 %v2799
        %v2972 = vpop.f32.mrb[0].mxu0
        %v2973 = vadd.f32 %v2652, %v2972
        %v2974 = vpop.f32.mrb[0].mxu0
        %2975 = vmatprep.mubr.f32.mxu0 0.0
        %2976 = vmatmul.mubr.f32.gmra.mrb[0].mxu0 %v2802
        %v2977 = vpop.f32.mrb[0].mxu0
        %v2978 = vadd.f32 %v2657, %v2977
        %v2979 = vpop.f32.mrb[0].mxu0
        %2980 = vmatprep.mubr.f32.mxu0 0.0
        %2981 = vmatmul.mubr.f32.gmra.mrb[0].mxu0 %v2805
        %v2982 = vpop.f32.mrb[0].mxu0
        %v2983 = vadd.f32 %v2662, %v2982
        %v2984 = vpop.f32.mrb[0].mxu0
        %2985 = vmatprep.mubr.f32.mxu0 0.0
        %2986 = vmatmul.mubr.f32.gmra.mrb[0].mxu0 %v2808
        %v2987 = vpop.f32.mrb[0].mxu0
        %v2988 = vadd.f32 %v2667, %v2987
        %v2989 = vpop.f32.mrb[0].mxu0
        %2990 = vmatprep.mubr.f32.mxu0 0.0
        %2991 = vmatmul.mubr.f32.gmra.mrb[0].mxu0 %v2811
        %v2992 = vpop.f32.mrb[0].mxu0
        %v2993 = vadd.f32 %v2672, %v2992
        %v2994 = vpop.f32.mrb[0].mxu0
        %2995 = vmatprep.mubr.f32.mxu0 0.0
        %2996 = vmatmul.mubr.f32.gmra.mrb[0].mxu0 %v2814
        %v2997 = vpop.f32.mrb[0].mxu0
        %v2998 = vadd.f32 %v2677, %v2997
        %v2999 = vpop.f32.mrb[0].mxu0
        %3000 = vmatprep.mubr.f32.mxu0 0.0
        %3001 = vmatmul.mubr.f32.gmra.mrb[0].mxu0 %v2817
        %v3002 = vpop.f32.mrb[0].mxu0
        %v3003 = vadd.f32 %v2682, %v3002
        %v3004 = vpop.f32.mrb[0].mxu0
        %3005 = vmatprep.mubr.f32.mxu0 0.0
        %3006 = vmatmul.mubr.f32.gmra.mrb[0].mxu0 %v2820
        %v3007 = vpop.f32.mrb[0].mxu0
        %v3008 = vadd.f32 %v2687, %v3007
        %v3009 = vpop.f32.mrb[0].mxu0
        %3010 = vmatprep.mubr.f32.mxu0 0.0
        %3011 = vmatmul.mubr.f32.gmra.mrb[0].mxu0 %v2823
        %v3012 = vpop.f32.mrb[0].mxu0
        %v3013 = vadd.f32 %v2692, %v3012
        %v3014 = vpop.f32.mrb[0].mxu0
        %3015 = vmatprep.mubr.f32.mxu0 0.0
        %3016 = vmatmul.mubr.f32.gmra.mrb[0].mxu0 %v2826
        %v3017 = vpop.f32.mrb[0].mxu0
        %v3018 = vadd.f32 %v2697, %v3017
        %v3019 = vpop.f32.mrb[0].mxu0
        %3020 = vmatprep.mubr.f32.mxu0 0.0
        %3021 = vmatmul.mubr.f32.gmra.mrb[0].mxu0 %v2829
        %v3022 = vpop.f32.mrb[0].mxu0
        %v3023 = vadd.f32 %v2702, %v3022
        %v3024 = vpop.f32.mrb[0].mxu0
        %3025 = vmatprep.mubr.f32.mxu0 0.0
        %3026 = vmatmul.mubr.f32.gmra.mrb[0].mxu0 %v2832
        %v3027 = vpop.f32.mrb[0].mxu0
        %v3028 = vadd.f32 %v2707, %v3027
        %v3029 = vpop.f32.mrb[0].mxu0
        %3030 = vmatprep.mubr.f32.mxu0 0.0
        %3031 = vmatmul.mubr.f32.gmra.mrb[0].mxu0 %v2835
        %v3032 = vpop.f32.mrb[0].mxu0
        %v3033 = vadd.f32 %v2712, %v3032
        %v3034 = vpop.f32.mrb[0].mxu0
        %3035 = vmatprep.mubr.f32.mxu0 0.0
        %3036 = vmatmul.mubr.f32.gmra.mrb[0].mxu0 %v2838
        %v3037 = vpop.f32.mrb[0].mxu0
        %v3038 = vadd.f32 %v2717, %v3037
        %v3039 = vpop.f32.mrb[0].mxu0
        %3040 = vmatprep.mubr.f32.mxu0 0.0
        %3041 = vmatmul.mubr.f32.gmra.mrb[0].mxu0 %v2841
        %v3042 = vpop.f32.mrb[0].mxu0
        %v3043 = vadd.f32 %v2722, %v3042
        %v3044 = vpop.f32.mrb[0].mxu0
        %3045 = vmatprep.mubr.f32.mxu0 0.0
        %3046 = vmatmul.mubr.f32.gmra.mrb[0].mxu0 %v2844
        %v3047 = vpop.f32.mrb[0].mxu0
        %v3048 = vadd.f32 %v2727, %v3047
        %v3049 = vpop.f32.mrb[0].mxu0
        %3050 = vmatprep.mubr.f32.mxu0 0.0
        %3051 = vmatmul.mubr.f32.gmra.mrb[0].mxu0 %v2847
        %v3052 = vpop.f32.mrb[0].mxu0
        %v3053 = vadd.f32 %v2732, %v3052
        %v3054 = vpop.f32.mrb[0].mxu0
        %3055 = vmatprep.mubr.f32.mxu0 0.0
        %3056 = vmatmul.mubr.f32.gmra.mrb[0].mxu0 %v2850
        %v3057 = vpop.f32.mrb[0].mxu0
        %v3058 = vadd.f32 %v2737, %v3057
        %v3059 = vpop.f32.mrb[0].mxu0
        %3060 = vmatprep.mubr.f32.mxu0 0.0
        %3061 = vmatmul.mubr.f32.gmra.mrb[0].mxu0 %v2853
        %v3062 = vpop.f32.mrb[0].mxu0
        %v3063 = vadd.f32 %v2742, %v3062
        %v3064 = vpop.f32.mrb[0].mxu0
        %3065 = vmatprep.mubr.f32.mxu0 0.0
        %3066 = vmatmul.mubr.f32.gmra.mrb[0].mxu0 %v2856
        %v3067 = vpop.f32.mrb[0].mxu0
        %v3068 = vadd.f32 %v2747, %v3067
        %v3069 = vpop.f32.mrb[0].mxu0
        %3070 = vmatprep.mubr.f32.mxu0 0.0
        %3071 = vmatmul.mubr.f32.gmra.mrb[0].mxu0 %v2859
        %v3072 = vpop.f32.mrb[0].mxu0
        %v3073 = vadd.f32 %v2752, %v3072
        %v3074 = vpop.f32.mrb[0].mxu0
        %3075 = vmatprep.mubr.f32.mxu0 0.0
        %3076 = vmatmul.mubr.f32.gmra.mrb[0].mxu0 %v2862
        %v3077 = vpop.f32.mrb[0].mxu0
        %v3078 = vadd.f32 %v2757, %v3077
        %v3079 = vpop.f32.mrb[0].mxu0
        %3080 = vmatprep.mubr.f32.mxu0 0.0
        %3081 = vmatmul.mubr.f32.gmra.mrb[0].mxu0 %v2865
        %v3082 = vpop.f32.mrb[0].mxu0
        %v3083 = vadd.f32 %v2762, %v3082
        %v3084 = vpop.f32.mrb[0].mxu0
        %3085 = vmatprep.mubr.f32.mxu0 0.0
        %3086 = vmatmul.mubr.f32.gmra.mrb[0].mxu0 %v2868
        %v3087 = vpop.f32.mrb[0].mxu0
        %v3088 = vadd.f32 %v2767, %v3087
        %v3089 = vpop.f32.mrb[0].mxu0
        %3090 = vmatprep.mubr.f32.mxu0 0.0
        %3091 = vmatmul.mubr.f32.gmra.mrb[0].mxu0 %v2871
        %v3092 = vpop.f32.mrb[0].mxu0
        %v3093 = vadd.f32 %v2772, %v3092
        %v3094 = vpop.f32.mrb[0].mxu0
        %3095 = vmatprep.mubr.f32.mxu0 0.0
        %3096 = vmatmul.mubr.f32.gmra.mrb[0].mxu0 %v2874
        %v3097 = vpop.f32.mrb[0].mxu0
        %v3098 = vadd.f32 %v2777, %v3097
        %v3099 = vpop.f32.mrb[0].mxu0
        %3100 = vdwg.mxu0
        %v3101 = vld [vmem:[%s1548 + $0x8] sm:$0xff]
        %v3102 = vld [vmem:[%s1548 + $0x10] sm:$0xff]
        %v3103 = vld [vmem:[%s1548 + $0x28] sm:$0xff]
        %v3104 = vld [vmem:[%s1548 + $0x30] sm:$0xff]
        %v3105 = vld [vmem:[%s1548 + $0x48] sm:$0xff]
        %v3106 = vld [vmem:[%s1548 + $0x50] sm:$0xff]
        %v3107 = vld [vmem:[%s1548 + $0x68] sm:$0xff]
        %v3108 = vld [vmem:[%s1548 + $0x70] sm:$0xff]
        %v3109 = vld [vmem:[%s1548 + $0x88] sm:$0xff]
        %v3110 = vld [vmem:[%s1548 + $0x90] sm:$0xff]
        %v3111 = vld [vmem:[%s1548 + $0xa8] sm:$0xff]
        %v3112 = vld [vmem:[%s1548 + $0xb0] sm:$0xff]
        %v3113 = vld [vmem:[%s1548 + $0xc8] sm:$0xff]
        %v3114 = vld [vmem:[%s1548 + $0xd0] sm:$0xff]
        %v3115 = vld [vmem:[%s1548 + $0xe8] sm:$0xff]
        %v3116 = vld [vmem:[%s1548 + $0xf0] sm:$0xff]
        %v3117 = vld [vmem:[%s1548 + $0x108] sm:$0xff]
        %v3118 = vld [vmem:[%s1548 + $0x110] sm:$0xff]
        %v3119 = vld [vmem:[%s1548 + $0x128] sm:$0xff]
        %v3120 = vld [vmem:[%s1548 + $0x130] sm:$0xff]
        %v3121 = vld [vmem:[%s1548 + $0x148] sm:$0xff]
        %v3122 = vld [vmem:[%s1548 + $0x150] sm:$0xff]
        %v3123 = vld [vmem:[%s1548 + $0x168] sm:$0xff]
        %v3124 = vld [vmem:[%s1548 + $0x170] sm:$0xff]
        %v3125 = vld [vmem:[%s1548 + $0x188] sm:$0xff]
        %v3126 = vld [vmem:[%s1548 + $0x190] sm:$0xff]
        %v3127 = vld [vmem:[%s1548 + $0x1a8] sm:$0xff]
        %v3128 = vld [vmem:[%s1548 + $0x1b0] sm:$0xff]
        %v3129 = vld [vmem:[%s1548 + $0x1c8] sm:$0xff]
        %v3130 = vld [vmem:[%s1548 + $0x1d0] sm:$0xff]
        %v3131 = vld [vmem:[%s1548 + $0x1e8] sm:$0xff]
        %v3132 = vld [vmem:[%s1548 + $0x1f0] sm:$0xff]
        %s3133 = scalar_lea.vmem %s3, 192
        %v3134 = vld [vmem:[%s3133] sm:$0xff]
        %v3135 = vld [vmem:[%s3133 + $0x8] sm:$0xff]
        %v3136 = vld [vmem:[%s3133 + $0x10] sm:$0xff]
        %v3137 = vld [vmem:[%s3133 + $0x18] sm:$0xff]
        %v3138 = vld [vmem:[%s3133 + $0x20] sm:$0xff]
        %v3139 = vld [vmem:[%s3133 + $0x28] sm:$0xff]
        %v3140 = vld [vmem:[%s3133 + $0x30] sm:$0xff]
        %v3141 = vld [vmem:[%s3133 + $0x38] sm:$0xff]
        %v3142 = vld [vmem:[%s3133 + $0x40] sm:$0xff]
        %v3143 = vld [vmem:[%s3133 + $0x48] sm:$0xff]
        %v3144 = vld [vmem:[%s3133 + $0x50] sm:$0xff]
        %v3145 = vld [vmem:[%s3133 + $0x58] sm:$0xff]
        %v3147 = vsel %vm385, %v3101, 0
        %v3150 = vsel %vm385, %v3102, 0
        %v3153 = vsel %vm385, %v3103, 0
        %v3156 = vsel %vm385, %v3104, 0
        %v3159 = vsel %vm385, %v3105, 0
        %v3162 = vsel %vm385, %v3106, 0
        %v3165 = vsel %vm385, %v3107, 0
        %v3168 = vsel %vm385, %v3108, 0
        %v3171 = vsel %vm385, %v3109, 0
        %v3174 = vsel %vm385, %v3110, 0
        %v3177 = vsel %vm385, %v3111, 0
        %v3180 = vsel %vm385, %v3112, 0
        %v3183 = vsel %vm385, %v3113, 0
        %v3186 = vsel %vm385, %v3114, 0
        %v3189 = vsel %vm385, %v3115, 0
        %v3192 = vsel %vm385, %v3116, 0
        %v3195 = vsel %vm385, %v3117, 0
        %v3198 = vsel %vm385, %v3118, 0
        %v3201 = vsel %vm385, %v3119, 0
        %v3204 = vsel %vm385, %v3120, 0
        %v3207 = vsel %vm385, %v3121, 0
        %v3210 = vsel %vm385, %v3122, 0
        %v3213 = vsel %vm385, %v3123, 0
        %v3216 = vsel %vm385, %v3124, 0
        %v3219 = vsel %vm385, %v3125, 0
        %v3222 = vsel %vm385, %v3126, 0
        %v3225 = vsel %vm385, %v3127, 0
        %v3228 = vsel %vm385, %v3128, 0
        %v3231 = vsel %vm385, %v3129, 0
        %v3234 = vsel %vm385, %v3130, 0
        %v3237 = vsel %vm385, %v3131, 0
        %v3240 = vsel %vm385, %v3132, 0
        %3242 = vmatprep.subr.mxu0 0.0
        %3243 = vmatpush1.msra.mxu0 %v3134
        %3244 = vmatprep.subr.mxu0 0.0
        %3245 = vmatpush1.msra.mxu0 %v3135
        %3246 = vmatprep.subr.mxu0 0.0
        %3247 = vmatpush1.msra.mxu0 %v3136
        %3248 = vmatprep.subr.mxu0 0.0
        %3249 = vmatpush1.msra.mxu0 %v3137
        %3250 = vmatprep.subr.mxu0 0.0
        %3251 = vmatpush1.msra.mxu0 %v3138
        %3252 = vmatprep.subr.mxu0 0.0
        %3253 = vmatpush1.msra.mxu0 %v3139
        %3254 = vmatprep.subr.mxu0 0.0
        %3255 = vmatpush1.msra.mxu0 %v3140
        %3256 = vmatprep.subr.mxu0 0.0
        %3257 = vmatpush1.msra.mxu0 %v3141
        %3258 = vmatprep.subr.mxu0 0.0
        %3259 = vmatpush1.msra.mxu0 %v3142
        %3260 = vmatprep.subr.mxu0 0.0
        %3261 = vmatpush1.msra.mxu0 %v3143
        %3262 = vmatprep.subr.mxu0 0.0
        %3263 = vmatpush1.msra.mxu0 %v3144
        %3264 = vmatprep.subr.mxu0 0.0
        %3265 = vmatpush1.msra.mxu0 %v3145
        %3266 = vmatprep.subr.mxu0 0.0
        %3267 = vmatpush1.msra.mxu0 0.0
        %3268 = vmatprep.subr.mxu0 0.0
        %3269 = vmatpush1.msra.mxu0 0.0
        %3270 = vmatprep.subr.mxu0 0.0
        %3271 = vmatpush1.msra.mxu0 0.0
        %3272 = vmatprep.subr.mxu0 0.0
        %3273 = vmatpush1.msra.mxu0 0.0
        %3274 = vmatprep.subr.mxu0 0.0
        %3275 = vmatpush1.msra.mxu0 0.0
        %3276 = vmatprep.subr.mxu0 0.0
        %3277 = vmatpush1.msra.mxu0 0.0
        %3278 = vmatprep.subr.mxu0 0.0
        %3279 = vmatpush1.msra.mxu0 0.0
        %3280 = vmatprep.subr.mxu0 0.0
        %3281 = vmatpush1.msra.mxu0 0.0
        %3282 = vmatprep.subr.mxu0 0.0
        %3283 = vmatpush1.msra.mxu0 0.0
        %3284 = vmatprep.subr.mxu0 0.0
        %3285 = vmatpush1.msra.mxu0 0.0
        %3286 = vmatprep.subr.mxu0 0.0
        %3287 = vmatpush1.msra.mxu0 0.0
        %3288 = vmatprep.subr.mxu0 0.0
        %3289 = vmatpush1.msra.mxu0 0.0
        %3290 = vmatprep.subr.mxu0 0.0
        %3291 = vmatpush1.msra.mxu0 0.0
        %3292 = vmatprep.subr.mxu0 0.0
        %3293 = vmatpush1.msra.mxu0 0.0
        %3294 = vmatprep.subr.mxu0 0.0
        %3295 = vmatpush1.msra.mxu0 0.0
        %3296 = vmatprep.subr.mxu0 0.0
        %3297 = vmatpush1.msra.mxu0 0.0
        %3298 = vmatprep.subr.mxu0 0.0
        %3299 = vmatpush1.msra.mxu0 0.0
        %3300 = vmatprep.subr.mxu0 0.0
        %3301 = vmatpush1.msra.mxu0 0.0
        %3302 = vmatprep.subr.mxu0 0.0
        %3303 = vmatpush1.msra.mxu0 0.0
        %3304 = vmatprep.subr.mxu0 0.0
        %3305 = vmatpush1.msra.mxu0 0.0
        %3306 = vmatprep.mubr.f32.mxu0 0.0
        %3307 = vmatmul.mubr.f32.gmra.mrb[0].mxu0 %v3147
        %v3308 = vpop.f32.mrb[0].mxu0
        %v3309 = vadd.f32 0.0, %v3308
        %v3310 = vpop.f32.mrb[0].mxu0
        %3311 = vmatprep.mubr.f32.mxu0 0.0
        %3312 = vmatmul.mubr.f32.gmra.mrb[0].mxu0 %v3150
        %v3313 = vpop.f32.mrb[0].mxu0
        %v3314 = vadd.f32 0.0, %v3313
        %v3315 = vpop.f32.mrb[0].mxu0
        %3316 = vmatprep.mubr.f32.mxu0 0.0
        %3317 = vmatmul.mubr.f32.gmra.mrb[0].mxu0 %v3153
        %v3318 = vpop.f32.mrb[0].mxu0
        %v3319 = vadd.f32 0.0, %v3318
        %v3320 = vpop.f32.mrb[0].mxu0
        %3321 = vmatprep.mubr.f32.mxu0 0.0
        %3322 = vmatmul.mubr.f32.gmra.mrb[0].mxu0 %v3156
        %v3323 = vpop.f32.mrb[0].mxu0
        %v3324 = vadd.f32 0.0, %v3323
        %v3325 = vpop.f32.mrb[0].mxu0
        %3326 = vmatprep.mubr.f32.mxu0 0.0
        %3327 = vmatmul.mubr.f32.gmra.mrb[0].mxu0 %v3159
        %v3328 = vpop.f32.mrb[0].mxu0
        %v3329 = vadd.f32 0.0, %v3328
        %v3330 = vpop.f32.mrb[0].mxu0
        %3331 = vmatprep.mubr.f32.mxu0 0.0
        %3332 = vmatmul.mubr.f32.gmra.mrb[0].mxu0 %v3162
        %v3333 = vpop.f32.mrb[0].mxu0
        %v3334 = vadd.f32 0.0, %v3333
        %v3335 = vpop.f32.mrb[0].mxu0
        %3336 = vmatprep.mubr.f32.mxu0 0.0
        %3337 = vmatmul.mubr.f32.gmra.mrb[0].mxu0 %v3165
        %v3338 = vpop.f32.mrb[0].mxu0
        %v3339 = vadd.f32 0.0, %v3338
        %v3340 = vpop.f32.mrb[0].mxu0
        %3341 = vmatprep.mubr.f32.mxu0 0.0
        %3342 = vmatmul.mubr.f32.gmra.mrb[0].mxu0 %v3168
        %v3343 = vpop.f32.mrb[0].mxu0
        %v3344 = vadd.f32 0.0, %v3343
        %v3345 = vpop.f32.mrb[0].mxu0
        %3346 = vmatprep.mubr.f32.mxu0 0.0
        %3347 = vmatmul.mubr.f32.gmra.mrb[0].mxu0 %v3171
        %v3348 = vpop.f32.mrb[0].mxu0
        %v3349 = vadd.f32 0.0, %v3348
        %v3350 = vpop.f32.mrb[0].mxu0
        %3351 = vmatprep.mubr.f32.mxu0 0.0
        %3352 = vmatmul.mubr.f32.gmra.mrb[0].mxu0 %v3174
        %v3353 = vpop.f32.mrb[0].mxu0
        %v3354 = vadd.f32 0.0, %v3353
        %v3355 = vpop.f32.mrb[0].mxu0
        %3356 = vmatprep.mubr.f32.mxu0 0.0
        %3357 = vmatmul.mubr.f32.gmra.mrb[0].mxu0 %v3177
        %v3358 = vpop.f32.mrb[0].mxu0
        %v3359 = vadd.f32 0.0, %v3358
        %v3360 = vpop.f32.mrb[0].mxu0
        %3361 = vmatprep.mubr.f32.mxu0 0.0
        %3362 = vmatmul.mubr.f32.gmra.mrb[0].mxu0 %v3180
        %v3363 = vpop.f32.mrb[0].mxu0
        %v3364 = vadd.f32 0.0, %v3363
        %v3365 = vpop.f32.mrb[0].mxu0
        %3366 = vmatprep.mubr.f32.mxu0 0.0
        %3367 = vmatmul.mubr.f32.gmra.mrb[0].mxu0 %v3183
        %v3368 = vpop.f32.mrb[0].mxu0
        %v3369 = vadd.f32 0.0, %v3368
        %v3370 = vpop.f32.mrb[0].mxu0
        %3371 = vmatprep.mubr.f32.mxu0 0.0
        %3372 = vmatmul.mubr.f32.gmra.mrb[0].mxu0 %v3186
        %v3373 = vpop.f32.mrb[0].mxu0
        %v3374 = vadd.f32 0.0, %v3373
        %v3375 = vpop.f32.mrb[0].mxu0
        %3376 = vmatprep.mubr.f32.mxu0 0.0
        %3377 = vmatmul.mubr.f32.gmra.mrb[0].mxu0 %v3189
        %v3378 = vpop.f32.mrb[0].mxu0
        %v3379 = vadd.f32 0.0, %v3378
        %v3380 = vpop.f32.mrb[0].mxu0
        %3381 = vmatprep.mubr.f32.mxu0 0.0
        %3382 = vmatmul.mubr.f32.gmra.mrb[0].mxu0 %v3192
        %v3383 = vpop.f32.mrb[0].mxu0
        %v3384 = vadd.f32 0.0, %v3383
        %v3385 = vpop.f32.mrb[0].mxu0
        %3386 = vmatprep.mubr.f32.mxu0 0.0
        %3387 = vmatmul.mubr.f32.gmra.mrb[0].mxu0 %v3195
        %v3388 = vpop.f32.mrb[0].mxu0
        %v3389 = vadd.f32 0.0, %v3388
        %v3390 = vpop.f32.mrb[0].mxu0
        %3391 = vmatprep.mubr.f32.mxu0 0.0
        %3392 = vmatmul.mubr.f32.gmra.mrb[0].mxu0 %v3198
        %v3393 = vpop.f32.mrb[0].mxu0
        %v3394 = vadd.f32 0.0, %v3393
        %v3395 = vpop.f32.mrb[0].mxu0
        %3396 = vmatprep.mubr.f32.mxu0 0.0
        %3397 = vmatmul.mubr.f32.gmra.mrb[0].mxu0 %v3201
        %v3398 = vpop.f32.mrb[0].mxu0
        %v3399 = vadd.f32 0.0, %v3398
        %v3400 = vpop.f32.mrb[0].mxu0
        %3401 = vmatprep.mubr.f32.mxu0 0.0
        %3402 = vmatmul.mubr.f32.gmra.mrb[0].mxu0 %v3204
        %v3403 = vpop.f32.mrb[0].mxu0
        %v3404 = vadd.f32 0.0, %v3403
        %v3405 = vpop.f32.mrb[0].mxu0
        %3406 = vmatprep.mubr.f32.mxu0 0.0
        %3407 = vmatmul.mubr.f32.gmra.mrb[0].mxu0 %v3207
        %v3408 = vpop.f32.mrb[0].mxu0
        %v3409 = vadd.f32 0.0, %v3408
        %v3410 = vpop.f32.mrb[0].mxu0
        %3411 = vmatprep.mubr.f32.mxu0 0.0
        %3412 = vmatmul.mubr.f32.gmra.mrb[0].mxu0 %v3210
        %v3413 = vpop.f32.mrb[0].mxu0
        %v3414 = vadd.f32 0.0, %v3413
        %v3415 = vpop.f32.mrb[0].mxu0
        %3416 = vmatprep.mubr.f32.mxu0 0.0
        %3417 = vmatmul.mubr.f32.gmra.mrb[0].mxu0 %v3213
        %v3418 = vpop.f32.mrb[0].mxu0
        %v3419 = vadd.f32 0.0, %v3418
        %v3420 = vpop.f32.mrb[0].mxu0
        %3421 = vmatprep.mubr.f32.mxu0 0.0
        %3422 = vmatmul.mubr.f32.gmra.mrb[0].mxu0 %v3216
        %v3423 = vpop.f32.mrb[0].mxu0
        %v3424 = vadd.f32 0.0, %v3423
        %v3425 = vpop.f32.mrb[0].mxu0
        %3426 = vmatprep.mubr.f32.mxu0 0.0
        %3427 = vmatmul.mubr.f32.gmra.mrb[0].mxu0 %v3219
        %v3428 = vpop.f32.mrb[0].mxu0
        %v3429 = vadd.f32 0.0, %v3428
        %v3430 = vpop.f32.mrb[0].mxu0
        %3431 = vmatprep.mubr.f32.mxu0 0.0
        %3432 = vmatmul.mubr.f32.gmra.mrb[0].mxu0 %v3222
        %v3433 = vpop.f32.mrb[0].mxu0
        %v3434 = vadd.f32 0.0, %v3433
        %v3435 = vpop.f32.mrb[0].mxu0
        %3436 = vmatprep.mubr.f32.mxu0 0.0
        %3437 = vmatmul.mubr.f32.gmra.mrb[0].mxu0 %v3225
        %v3438 = vpop.f32.mrb[0].mxu0
        %v3439 = vadd.f32 0.0, %v3438
        %v3440 = vpop.f32.mrb[0].mxu0
        %3441 = vmatprep.mubr.f32.mxu0 0.0
        %3442 = vmatmul.mubr.f32.gmra.mrb[0].mxu0 %v3228
        %v3443 = vpop.f32.mrb[0].mxu0
        %v3444 = vadd.f32 0.0, %v3443
        %v3445 = vpop.f32.mrb[0].mxu0
        %3446 = vmatprep.mubr.f32.mxu0 0.0
        %3447 = vmatmul.mubr.f32.gmra.mrb[0].mxu0 %v3231
        %v3448 = vpop.f32.mrb[0].mxu0
        %v3449 = vadd.f32 0.0, %v3448
        %v3450 = vpop.f32.mrb[0].mxu0
        %3451 = vmatprep.mubr.f32.mxu0 0.0
        %3452 = vmatmul.mubr.f32.gmra.mrb[0].mxu0 %v3234
        %v3453 = vpop.f32.mrb[0].mxu0
        %v3454 = vadd.f32 0.0, %v3453
        %v3455 = vpop.f32.mrb[0].mxu0
        %3456 = vmatprep.mubr.f32.mxu0 0.0
        %3457 = vmatmul.mubr.f32.gmra.mrb[0].mxu0 %v3237
        %v3458 = vpop.f32.mrb[0].mxu0
        %v3459 = vadd.f32 0.0, %v3458
        %v3460 = vpop.f32.mrb[0].mxu0
        %3461 = vmatprep.mubr.f32.mxu0 0.0
        %3462 = vmatmul.mubr.f32.gmra.mrb[0].mxu0 %v3240
        %v3463 = vpop.f32.mrb[0].mxu0
        %v3464 = vadd.f32 0.0, %v3463
        %v3465 = vpop.f32.mrb[0].mxu0
        %3466 = vdwg.mxu0
        %v3467 = vadd.f32 %v2943, %v3309
        %v3468 = vadd.f32 %v2948, %v3314
        %v3469 = vadd.f32 %v2953, %v3319
        %v3470 = vadd.f32 %v2958, %v3324
        %v3471 = vadd.f32 %v2963, %v3329
        %v3472 = vadd.f32 %v2968, %v3334
        %v3473 = vadd.f32 %v2973, %v3339
        %v3474 = vadd.f32 %v2978, %v3344
        %v3475 = vadd.f32 %v2983, %v3349
        %v3476 = vadd.f32 %v2988, %v3354
        %v3477 = vadd.f32 %v2993, %v3359
        %v3478 = vadd.f32 %v2998, %v3364
        %v3479 = vadd.f32 %v3003, %v3369
        %v3480 = vadd.f32 %v3008, %v3374
        %v3481 = vadd.f32 %v3013, %v3379
        %v3482 = vadd.f32 %v3018, %v3384
        %v3483 = vadd.f32 %v3023, %v3389
        %v3484 = vadd.f32 %v3028, %v3394
        %v3485 = vadd.f32 %v3033, %v3399
        %v3486 = vadd.f32 %v3038, %v3404
        %v3487 = vadd.f32 %v3043, %v3409
        %v3488 = vadd.f32 %v3048, %v3414
        %v3489 = vadd.f32 %v3053, %v3419
        %v3490 = vadd.f32 %v3058, %v3424
        %v3491 = vadd.f32 %v3063, %v3429
        %v3492 = vadd.f32 %v3068, %v3434
        %v3493 = vadd.f32 %v3073, %v3439
        %v3494 = vadd.f32 %v3078, %v3444
        %v3495 = vadd.f32 %v3083, %v3449
        %v3496 = vadd.f32 %v3088, %v3454
        %v3497 = vadd.f32 %v3093, %v3459
        %v3498 = vadd.f32 %v3098, %v3464
        %v3499 = vld [vmem:[%s4] sm:$0x1]
        %v3501 = vlaneseq
        %v3502 = vshrl.u32 %v3501, 7
        %v3503 = vsub.s32 0, %v3502
        %v3504 = vrot.slane %v3499, %v3503
        %v3506 = vadd.f32 %v3467, %v3504
        %v3507 = vadd.f32 %v3468, %v3504
        %v3508 = vadd.f32 %v3469, %v3504
        %v3509 = vadd.f32 %v3470, %v3504
        %v3510 = vadd.f32 %v3471, %v3504
        %v3511 = vadd.f32 %v3472, %v3504
        %v3512 = vadd.f32 %v3473, %v3504
        %v3513 = vadd.f32 %v3474, %v3504
        %v3514 = vadd.f32 %v3475, %v3504
        %v3515 = vadd.f32 %v3476, %v3504
        %v3516 = vadd.f32 %v3477, %v3504
        %v3517 = vadd.f32 %v3478, %v3504
        %v3518 = vadd.f32 %v3479, %v3504
        %v3519 = vadd.f32 %v3480, %v3504
        %v3520 = vadd.f32 %v3481, %v3504
        %v3521 = vadd.f32 %v3482, %v3504
        %v3522 = vadd.f32 %v3483, %v3504
        %v3523 = vadd.f32 %v3484, %v3504
        %v3524 = vadd.f32 %v3485, %v3504
        %v3525 = vadd.f32 %v3486, %v3504
        %v3526 = vadd.f32 %v3487, %v3504
        %v3527 = vadd.f32 %v3488, %v3504
        %v3528 = vadd.f32 %v3489, %v3504
        %v3529 = vadd.f32 %v3490, %v3504
        %v3530 = vadd.f32 %v3491, %v3504
        %v3531 = vadd.f32 %v3492, %v3504
        %v3532 = vadd.f32 %v3493, %v3504
        %v3533 = vadd.f32 %v3494, %v3504
        %v3534 = vadd.f32 %v3495, %v3504
        %v3535 = vadd.f32 %v3496, %v3504
        %v3536 = vadd.f32 %v3497, %v3504
        %v3537 = vadd.f32 %v3498, %v3504
        %v3538 = vmax.f32 %v3506, 0.0
        %v3539 = vmax.f32 %v3507, 0.0
        %v3540 = vmax.f32 %v3508, 0.0
        %v3541 = vmax.f32 %v3509, 0.0
        %v3542 = vmax.f32 %v3510, 0.0
        %v3543 = vmax.f32 %v3511, 0.0
        %v3544 = vmax.f32 %v3512, 0.0
        %v3545 = vmax.f32 %v3513, 0.0
        %v3546 = vmax.f32 %v3514, 0.0
        %v3547 = vmax.f32 %v3515, 0.0
        %v3548 = vmax.f32 %v3516, 0.0
        %v3549 = vmax.f32 %v3517, 0.0
        %v3550 = vmax.f32 %v3518, 0.0
        %v3551 = vmax.f32 %v3519, 0.0
        %v3552 = vmax.f32 %v3520, 0.0
        %v3553 = vmax.f32 %v3521, 0.0
        %v3554 = vmax.f32 %v3522, 0.0
        %v3555 = vmax.f32 %v3523, 0.0
        %v3556 = vmax.f32 %v3524, 0.0
        %v3557 = vmax.f32 %v3525, 0.0
        %v3558 = vmax.f32 %v3526, 0.0
        %v3559 = vmax.f32 %v3527, 0.0
        %v3560 = vmax.f32 %v3528, 0.0
        %v3561 = vmax.f32 %v3529, 0.0
        %v3562 = vmax.f32 %v3530, 0.0
        %v3563 = vmax.f32 %v3531, 0.0
        %v3564 = vmax.f32 %v3532, 0.0
        %v3565 = vmax.f32 %v3533, 0.0
        %v3566 = vmax.f32 %v3534, 0.0
        %v3567 = vmax.f32 %v3535, 0.0
        %v3568 = vmax.f32 %v3536, 0.0
        %v3569 = vmax.f32 %v3537, 0.0
        %3602 = vrot.lane.b32.xlu0 %v3538, 32
        %v3603 = vpop.permute.xlu0 %3602
        %3604 = vrot.lane.b32.xlu0 %v3539, 32
        %v3605 = vpop.permute.xlu0 %3604
        %3606 = vrot.lane.b32.xlu0 %v3540, 32
        %v3607 = vpop.permute.xlu0 %3606
        %3608 = vrot.lane.b32.xlu0 %v3541, 32
        %v3609 = vpop.permute.xlu0 %3608
        %3610 = vrot.lane.b32.xlu0 %v3542, 32
        %v3611 = vpop.permute.xlu0 %3610
        %3612 = vrot.lane.b32.xlu0 %v3543, 32
        %v3613 = vpop.permute.xlu0 %3612
        %3614 = vrot.lane.b32.xlu0 %v3544, 32
        %v3615 = vpop.permute.xlu0 %3614
        %3616 = vrot.lane.b32.xlu0 %v3545, 32
        %v3617 = vpop.permute.xlu0 %3616
        %3618 = vrot.lane.b32.xlu0 %v3546, 32
        %v3619 = vpop.permute.xlu0 %3618
        %3620 = vrot.lane.b32.xlu0 %v3547, 32
        %v3621 = vpop.permute.xlu0 %3620
        %3622 = vrot.lane.b32.xlu0 %v3548, 32
        %v3623 = vpop.permute.xlu0 %3622
        %3624 = vrot.lane.b32.xlu0 %v3549, 32
        %v3625 = vpop.permute.xlu0 %3624
        %3626 = vrot.lane.b32.xlu0 %v3550, 32
        %v3627 = vpop.permute.xlu0 %3626
        %3628 = vrot.lane.b32.xlu0 %v3551, 32
        %v3629 = vpop.permute.xlu0 %3628
        %3630 = vrot.lane.b32.xlu0 %v3552, 32
        %v3631 = vpop.permute.xlu0 %3630
        %3632 = vrot.lane.b32.xlu0 %v3553, 32
        %v3633 = vpop.permute.xlu0 %3632
        %3634 = vrot.lane.b32.xlu0 %v3554, 32
        %v3635 = vpop.permute.xlu0 %3634
        %3636 = vrot.lane.b32.xlu0 %v3555, 32
        %v3637 = vpop.permute.xlu0 %3636
        %3638 = vrot.lane.b32.xlu0 %v3556, 32
        %v3639 = vpop.permute.xlu0 %3638
        %3640 = vrot.lane.b32.xlu0 %v3557, 32
        %v3641 = vpop.permute.xlu0 %3640
        %3642 = vrot.lane.b32.xlu0 %v3558, 32
        %v3643 = vpop.permute.xlu0 %3642
        %3644 = vrot.lane.b32.xlu0 %v3559, 32
        %v3645 = vpop.permute.xlu0 %3644
        %3646 = vrot.lane.b32.xlu0 %v3560, 32
        %v3647 = vpop.permute.xlu0 %3646
        %3648 = vrot.lane.b32.xlu0 %v3561, 32
        %v3649 = vpop.permute.xlu0 %3648
        %3650 = vrot.lane.b32.xlu0 %v3562, 32
        %v3651 = vpop.permute.xlu0 %3650
        %3652 = vrot.lane.b32.xlu0 %v3563, 32
        %v3653 = vpop.permute.xlu0 %3652
        %3654 = vrot.lane.b32.xlu0 %v3564, 32
        %v3655 = vpop.permute.xlu0 %3654
        %3656 = vrot.lane.b32.xlu0 %v3565, 32
        %v3657 = vpop.permute.xlu0 %3656
        %3658 = vrot.lane.b32.xlu0 %v3566, 32
        %v3659 = vpop.permute.xlu0 %3658
        %3660 = vrot.lane.b32.xlu0 %v3567, 32
        %v3661 = vpop.permute.xlu0 %3660
        %3662 = vrot.lane.b32.xlu0 %v3568, 32
        %v3663 = vpop.permute.xlu0 %3662
        %3664 = vrot.lane.b32.xlu0 %v3569, 32
        %v3665 = vpop.permute.xlu0 %3664
        %3698 = vst.msk [vmem:[#allocation3] sm:$0xff] %vm655, %v3603
        %3699 = vst.msk [vmem:[#allocation3 + $0x8] sm:$0xff] %vm655, %v3605
        %3700 = vst.msk [vmem:[#allocation3 + $0x10] sm:$0xff] %vm655, %v3607
        %3701 = vst.msk [vmem:[#allocation3 + $0x18] sm:$0xff] %vm655, %v3609
        %3702 = vst.msk [vmem:[#allocation3 + $0x20] sm:$0xff] %vm655, %v3611
        %3703 = vst.msk [vmem:[#allocation3 + $0x28] sm:$0xff] %vm655, %v3613
        %3704 = vst.msk [vmem:[#allocation3 + $0x30] sm:$0xff] %vm655, %v3615
        %3705 = vst.msk [vmem:[#allocation3 + $0x38] sm:$0xff] %vm655, %v3617
        %3706 = vst.msk [vmem:[#allocation3 + $0x40] sm:$0xff] %vm655, %v3619
        %3707 = vst.msk [vmem:[#allocation3 + $0x48] sm:$0xff] %vm655, %v3621
        %3708 = vst.msk [vmem:[#allocation3 + $0x50] sm:$0xff] %vm655, %v3623
        %3709 = vst.msk [vmem:[#allocation3 + $0x58] sm:$0xff] %vm655, %v3625
        %3710 = vst.msk [vmem:[#allocation3 + $0x60] sm:$0xff] %vm655, %v3627
        %3711 = vst.msk [vmem:[#allocation3 + $0x68] sm:$0xff] %vm655, %v3629
        %3712 = vst.msk [vmem:[#allocation3 + $0x70] sm:$0xff] %vm655, %v3631
        %3713 = vst.msk [vmem:[#allocation3 + $0x78] sm:$0xff] %vm655, %v3633
        %3714 = vst.msk [vmem:[#allocation3 + $0x80] sm:$0xff] %vm655, %v3635
        %3715 = vst.msk [vmem:[#allocation3 + $0x88] sm:$0xff] %vm655, %v3637
        %3716 = vst.msk [vmem:[#allocation3 + $0x90] sm:$0xff] %vm655, %v3639
        %3717 = vst.msk [vmem:[#allocation3 + $0x98] sm:$0xff] %vm655, %v3641
        %3718 = vst.msk [vmem:[#allocation3 + $0xa0] sm:$0xff] %vm655, %v3643
        %3719 = vst.msk [vmem:[#allocation3 + $0xa8] sm:$0xff] %vm655, %v3645
        %3720 = vst.msk [vmem:[#allocation3 + $0xb0] sm:$0xff] %vm655, %v3647
        %3721 = vst.msk [vmem:[#allocation3 + $0xb8] sm:$0xff] %vm655, %v3649
        %3722 = vst.msk [vmem:[#allocation3 + $0xc0] sm:$0xff] %vm655, %v3651
        %3723 = vst.msk [vmem:[#allocation3 + $0xc8] sm:$0xff] %vm655, %v3653
        %3724 = vst.msk [vmem:[#allocation3 + $0xd0] sm:$0xff] %vm655, %v3655
        %3725 = vst.msk [vmem:[#allocation3 + $0xd8] sm:$0xff] %vm655, %v3657
        %3726 = vst.msk [vmem:[#allocation3 + $0xe0] sm:$0xff] %vm655, %v3659
        %3727 = vst.msk [vmem:[#allocation3 + $0xe8] sm:$0xff] %vm655, %v3661
        %3728 = vst.msk [vmem:[#allocation3 + $0xf0] sm:$0xff] %vm655, %v3663
        %3729 = vst.msk [vmem:[#allocation3 + $0xf8] sm:$0xff] %vm655, %v3665
        %3730 = vst.msk [vmem:[%s395 + $0x9] sm:$0xff] %vm494, %v3538
        %3731 = vst.msk [vmem:[%s395 + $0x11] sm:$0xff] %vm494, %v3539
        %3732 = vst.msk [vmem:[%s395 + $0x29] sm:$0xff] %vm494, %v3540
        %3733 = vst.msk [vmem:[%s395 + $0x31] sm:$0xff] %vm494, %v3541
        %3734 = vst.msk [vmem:[%s395 + $0x49] sm:$0xff] %vm494, %v3542
        %3735 = vst.msk [vmem:[%s395 + $0x51] sm:$0xff] %vm494, %v3543
        %3736 = vst.msk [vmem:[%s395 + $0x69] sm:$0xff] %vm494, %v3544
        %3737 = vst.msk [vmem:[%s395 + $0x71] sm:$0xff] %vm494, %v3545
        %3738 = vst.msk [vmem:[%s395 + $0x89] sm:$0xff] %vm494, %v3546
        %3739 = vst.msk [vmem:[%s395 + $0x91] sm:$0xff] %vm494, %v3547
        %3740 = vst.msk [vmem:[%s395 + $0xa9] sm:$0xff] %vm494, %v3548
        %3741 = vst.msk [vmem:[%s395 + $0xb1] sm:$0xff] %vm494, %v3549
        %3742 = vst.msk [vmem:[%s395 + $0xc9] sm:$0xff] %vm494, %v3550
        %3743 = vst.msk [vmem:[%s395 + $0xd1] sm:$0xff] %vm494, %v3551
        %3744 = vst.msk [vmem:[%s395 + $0xe9] sm:$0xff] %vm494, %v3552
        %3745 = vst.msk [vmem:[%s395 + $0xf1] sm:$0xff] %vm494, %v3553
        %3746 = vst.msk [vmem:[%s395 + $0x109] sm:$0xff] %vm494, %v3554
        %3747 = vst.msk [vmem:[%s395 + $0x111] sm:$0xff] %vm494, %v3555
        %3748 = vst.msk [vmem:[%s395 + $0x129] sm:$0xff] %vm494, %v3556
        %3749 = vst.msk [vmem:[%s395 + $0x131] sm:$0xff] %vm494, %v3557
        %3750 = vst.msk [vmem:[%s395 + $0x149] sm:$0xff] %vm494, %v3558
        %3751 = vst.msk [vmem:[%s395 + $0x151] sm:$0xff] %vm494, %v3559
        %3752 = vst.msk [vmem:[%s395 + $0x169] sm:$0xff] %vm494, %v3560
        %3753 = vst.msk [vmem:[%s395 + $0x171] sm:$0xff] %vm494, %v3561
        %3754 = vst.msk [vmem:[%s395 + $0x189] sm:$0xff] %vm494, %v3562
        %3755 = vst.msk [vmem:[%s395 + $0x191] sm:$0xff] %vm494, %v3563
        %3756 = vst.msk [vmem:[%s395 + $0x1a9] sm:$0xff] %vm494, %v3564
        %3757 = vst.msk [vmem:[%s395 + $0x1b1] sm:$0xff] %vm494, %v3565
        %3758 = vst.msk [vmem:[%s395 + $0x1c9] sm:$0xff] %vm494, %v3566
        %3759 = vst.msk [vmem:[%s395 + $0x1d1] sm:$0xff] %vm494, %v3567
        %3760 = vst.msk [vmem:[%s395 + $0x1e9] sm:$0xff] %vm494, %v3568
        %3761 = vst.msk [vmem:[%s395 + $0x1f1] sm:$0xff] %vm494, %v3569
        %3762 = vst.msk [vmem:[%s395 + $0x8] sm:$0xff] %vm655, %v3603
        %3763 = vst.msk [vmem:[%s395 + $0x10] sm:$0xff] %vm655, %v3605
        %3764 = vst.msk [vmem:[%s395 + $0x28] sm:$0xff] %vm655, %v3607
        %3765 = vst.msk [vmem:[%s395 + $0x30] sm:$0xff] %vm655, %v3609
        %3766 = vst.msk [vmem:[%s395 + $0x48] sm:$0xff] %vm655, %v3611
        %3767 = vst.msk [vmem:[%s395 + $0x50] sm:$0xff] %vm655, %v3613
        %3768 = vst.msk [vmem:[%s395 + $0x68] sm:$0xff] %vm655, %v3615
        %3769 = vst.msk [vmem:[%s395 + $0x70] sm:$0xff] %vm655, %v3617
        %3770 = vst.msk [vmem:[%s395 + $0x88] sm:$0xff] %vm655, %v3619
        %3771 = vst.msk [vmem:[%s395 + $0x90] sm:$0xff] %vm655, %v3621
        %3772 = vst.msk [vmem:[%s395 + $0xa8] sm:$0xff] %vm655, %v3623
        %3773 = vst.msk [vmem:[%s395 + $0xb0] sm:$0xff] %vm655, %v3625
        %3774 = vst.msk [vmem:[%s395 + $0xc8] sm:$0xff] %vm655, %v3627
        %3775 = vst.msk [vmem:[%s395 + $0xd0] sm:$0xff] %vm655, %v3629
        %3776 = vst.msk [vmem:[%s395 + $0xe8] sm:$0xff] %vm655, %v3631
        %3777 = vst.msk [vmem:[%s395 + $0xf0] sm:$0xff] %vm655, %v3633
        %3778 = vst.msk [vmem:[%s395 + $0x108] sm:$0xff] %vm655, %v3635
        %3779 = vst.msk [vmem:[%s395 + $0x110] sm:$0xff] %vm655, %v3637
        %3780 = vst.msk [vmem:[%s395 + $0x128] sm:$0xff] %vm655, %v3639
        %3781 = vst.msk [vmem:[%s395 + $0x130] sm:$0xff] %vm655, %v3641
        %3782 = vst.msk [vmem:[%s395 + $0x148] sm:$0xff] %vm655, %v3643
        %3783 = vst.msk [vmem:[%s395 + $0x150] sm:$0xff] %vm655, %v3645
        %3784 = vst.msk [vmem:[%s395 + $0x168] sm:$0xff] %vm655, %v3647
        %3785 = vst.msk [vmem:[%s395 + $0x170] sm:$0xff] %vm655, %v3649
        %3786 = vst.msk [vmem:[%s395 + $0x188] sm:$0xff] %vm655, %v3651
        %3787 = vst.msk [vmem:[%s395 + $0x190] sm:$0xff] %vm655, %v3653
        %3788 = vst.msk [vmem:[%s395 + $0x1a8] sm:$0xff] %vm655, %v3655
        %3789 = vst.msk [vmem:[%s395 + $0x1b0] sm:$0xff] %vm655, %v3657
        %3790 = vst.msk [vmem:[%s395 + $0x1c8] sm:$0xff] %vm655, %v3659
        %3791 = vst.msk [vmem:[%s395 + $0x1d0] sm:$0xff] %vm655, %v3661
        %3792 = vst.msk [vmem:[%s395 + $0x1e8] sm:$0xff] %vm655, %v3663
        %3793 = vst.msk [vmem:[%s395 + $0x1f0] sm:$0xff] %vm655, %v3665
        %3794 = vrot.lane.b32.xlu0 %v3538, 64
        %v3795 = vpop.permute.xlu0 %3794
        %3796 = vrot.lane.b32.xlu0 %v3539, 64
        %v3797 = vpop.permute.xlu0 %3796
        %3798 = vrot.lane.b32.xlu0 %v3540, 64
        %v3799 = vpop.permute.xlu0 %3798
        %3800 = vrot.lane.b32.xlu0 %v3541, 64
        %v3801 = vpop.permute.xlu0 %3800
        %3802 = vrot.lane.b32.xlu0 %v3542, 64
        %v3803 = vpop.permute.xlu0 %3802
        %3804 = vrot.lane.b32.xlu0 %v3543, 64
        %v3805 = vpop.permute.xlu0 %3804
        %3806 = vrot.lane.b32.xlu0 %v3544, 64
        %v3807 = vpop.permute.xlu0 %3806
        %3808 = vrot.lane.b32.xlu0 %v3545, 64
        %v3809 = vpop.permute.xlu0 %3808
        %3810 = vrot.lane.b32.xlu0 %v3546, 64
        %v3811 = vpop.permute.xlu0 %3810
        %3812 = vrot.lane.b32.xlu0 %v3547, 64
        %v3813 = vpop.permute.xlu0 %3812
        %3814 = vrot.lane.b32.xlu0 %v3548, 64
        %v3815 = vpop.permute.xlu0 %3814
        %3816 = vrot.lane.b32.xlu0 %v3549, 64
        %v3817 = vpop.permute.xlu0 %3816
        %3818 = vrot.lane.b32.xlu0 %v3550, 64
        %v3819 = vpop.permute.xlu0 %3818
        %3820 = vrot.lane.b32.xlu0 %v3551, 64
        %v3821 = vpop.permute.xlu0 %3820
        %3822 = vrot.lane.b32.xlu0 %v3552, 64
        %v3823 = vpop.permute.xlu0 %3822
        %3824 = vrot.lane.b32.xlu0 %v3553, 64
        %v3825 = vpop.permute.xlu0 %3824
        %3826 = vrot.lane.b32.xlu0 %v3554, 64
        %v3827 = vpop.permute.xlu0 %3826
        %3828 = vrot.lane.b32.xlu0 %v3555, 64
        %v3829 = vpop.permute.xlu0 %3828
        %3830 = vrot.lane.b32.xlu0 %v3556, 64
        %v3831 = vpop.permute.xlu0 %3830
        %3832 = vrot.lane.b32.xlu0 %v3557, 64
        %v3833 = vpop.permute.xlu0 %3832
        %3834 = vrot.lane.b32.xlu0 %v3558, 64
        %v3835 = vpop.permute.xlu0 %3834
        %3836 = vrot.lane.b32.xlu0 %v3559, 64
        %v3837 = vpop.permute.xlu0 %3836
        %3838 = vrot.lane.b32.xlu0 %v3560, 64
        %v3839 = vpop.permute.xlu0 %3838
        %3840 = vrot.lane.b32.xlu0 %v3561, 64
        %v3841 = vpop.permute.xlu0 %3840
        %3842 = vrot.lane.b32.xlu0 %v3562, 64
        %v3843 = vpop.permute.xlu0 %3842
        %3844 = vrot.lane.b32.xlu0 %v3563, 64
        %v3845 = vpop.permute.xlu0 %3844
        %3846 = vrot.lane.b32.xlu0 %v3564, 64
        %v3847 = vpop.permute.xlu0 %3846
        %3848 = vrot.lane.b32.xlu0 %v3565, 64
        %v3849 = vpop.permute.xlu0 %3848
        %3850 = vrot.lane.b32.xlu0 %v3566, 64
        %v3851 = vpop.permute.xlu0 %3850
        %3852 = vrot.lane.b32.xlu0 %v3567, 64
        %v3853 = vpop.permute.xlu0 %3852
        %3854 = vrot.lane.b32.xlu0 %v3568, 64
        %v3855 = vpop.permute.xlu0 %3854
        %3856 = vrot.lane.b32.xlu0 %v3569, 64
        %v3857 = vpop.permute.xlu0 %3856
        %3890 = vst.msk [vmem:[%s395 + $0x7] sm:$0xff] %vm784, %v3795
        %3891 = vst.msk [vmem:[%s395 + $0xf] sm:$0xff] %vm784, %v3797
        %3892 = vst.msk [vmem:[%s395 + $0x27] sm:$0xff] %vm784, %v3799
        %3893 = vst.msk [vmem:[%s395 + $0x2f] sm:$0xff] %vm784, %v3801
        %3894 = vst.msk [vmem:[%s395 + $0x47] sm:$0xff] %vm784, %v3803
        %3895 = vst.msk [vmem:[%s395 + $0x4f] sm:$0xff] %vm784, %v3805
        %3896 = vst.msk [vmem:[%s395 + $0x67] sm:$0xff] %vm784, %v3807
        %3897 = vst.msk [vmem:[%s395 + $0x6f] sm:$0xff] %vm784, %v3809
        %3898 = vst.msk [vmem:[%s395 + $0x87] sm:$0xff] %vm784, %v3811
        %3899 = vst.msk [vmem:[%s395 + $0x8f] sm:$0xff] %vm784, %v3813
        %3900 = vst.msk [vmem:[%s395 + $0xa7] sm:$0xff] %vm784, %v3815
        %3901 = vst.msk [vmem:[%s395 + $0xaf] sm:$0xff] %vm784, %v3817
        %3902 = vst.msk [vmem:[%s395 + $0xc7] sm:$0xff] %vm784, %v3819
        %3903 = vst.msk [vmem:[%s395 + $0xcf] sm:$0xff] %vm784, %v3821
        %3904 = vst.msk [vmem:[%s395 + $0xe7] sm:$0xff] %vm784, %v3823
        %3905 = vst.msk [vmem:[%s395 + $0xef] sm:$0xff] %vm784, %v3825
        %3906 = vst.msk [vmem:[%s395 + $0x107] sm:$0xff] %vm784, %v3827
        %3907 = vst.msk [vmem:[%s395 + $0x10f] sm:$0xff] %vm784, %v3829
        %3908 = vst.msk [vmem:[%s395 + $0x127] sm:$0xff] %vm784, %v3831
        %3909 = vst.msk [vmem:[%s395 + $0x12f] sm:$0xff] %vm784, %v3833
        %3910 = vst.msk [vmem:[%s395 + $0x147] sm:$0xff] %vm784, %v3835
        %3911 = vst.msk [vmem:[%s395 + $0x14f] sm:$0xff] %vm784, %v3837
        %3912 = vst.msk [vmem:[%s395 + $0x167] sm:$0xff] %vm784, %v3839
        %3913 = vst.msk [vmem:[%s395 + $0x16f] sm:$0xff] %vm784, %v3841
        %3914 = vst.msk [vmem:[%s395 + $0x187] sm:$0xff] %vm784, %v3843
        %3915 = vst.msk [vmem:[%s395 + $0x18f] sm:$0xff] %vm784, %v3845
        %3916 = vst.msk [vmem:[%s395 + $0x1a7] sm:$0xff] %vm784, %v3847
        %3917 = vst.msk [vmem:[%s395 + $0x1af] sm:$0xff] %vm784, %v3849
        %3918 = vst.msk [vmem:[%s395 + $0x1c7] sm:$0xff] %vm784, %v3851
        %3919 = vst.msk [vmem:[%s395 + $0x1cf] sm:$0xff] %vm784, %v3853
        %3920 = vst.msk [vmem:[%s395 + $0x1e7] sm:$0xff] %vm784, %v3855
        %3921 = vst.msk [vmem:[%s395 + $0x1ef] sm:$0xff] %vm784, %v3857
        %v3922 = vld [vmem:[#allocation2 + $0x8] sm:$0xff]
        %v3923 = vld [vmem:[#allocation2 + $0x10] sm:$0xff]
        %v3924 = vld [vmem:[#allocation2 + $0x28] sm:$0xff]
        %v3925 = vld [vmem:[#allocation2 + $0x30] sm:$0xff]
        %v3926 = vld [vmem:[#allocation2 + $0x48] sm:$0xff]
        %v3927 = vld [vmem:[#allocation2 + $0x50] sm:$0xff]
        %v3928 = vld [vmem:[#allocation2 + $0x68] sm:$0xff]
        %v3929 = vld [vmem:[#allocation2 + $0x70] sm:$0xff]
        %v3930 = vld [vmem:[#allocation2 + $0x88] sm:$0xff]
        %v3931 = vld [vmem:[#allocation2 + $0x90] sm:$0xff]
        %v3932 = vld [vmem:[#allocation2 + $0xa8] sm:$0xff]
        %v3933 = vld [vmem:[#allocation2 + $0xb0] sm:$0xff]
        %v3934 = vld [vmem:[#allocation2 + $0xc8] sm:$0xff]
        %v3935 = vld [vmem:[#allocation2 + $0xd0] sm:$0xff]
        %v3936 = vld [vmem:[#allocation2 + $0xe8] sm:$0xff]
        %v3937 = vld [vmem:[#allocation2 + $0xf0] sm:$0xff]
        %v3938 = vld [vmem:[#allocation2 + $0x108] sm:$0xff]
        %v3939 = vld [vmem:[#allocation2 + $0x110] sm:$0xff]
        %v3940 = vld [vmem:[#allocation2 + $0x128] sm:$0xff]
        %v3941 = vld [vmem:[#allocation2 + $0x130] sm:$0xff]
        %v3942 = vld [vmem:[#allocation2 + $0x148] sm:$0xff]
        %v3943 = vld [vmem:[#allocation2 + $0x150] sm:$0xff]
        %v3944 = vld [vmem:[#allocation2 + $0x168] sm:$0xff]
        %v3945 = vld [vmem:[#allocation2 + $0x170] sm:$0xff]
        %v3946 = vld [vmem:[#allocation2 + $0x188] sm:$0xff]
        %v3947 = vld [vmem:[#allocation2 + $0x190] sm:$0xff]
        %v3948 = vld [vmem:[#allocation2 + $0x1a8] sm:$0xff]
        %v3949 = vld [vmem:[#allocation2 + $0x1b0] sm:$0xff]
        %v3950 = vld [vmem:[#allocation2 + $0x1c8] sm:$0xff]
        %v3951 = vld [vmem:[#allocation2 + $0x1d0] sm:$0xff]
        %v3952 = vld [vmem:[#allocation2 + $0x1e8] sm:$0xff]
        %v3953 = vld [vmem:[#allocation2 + $0x1f0] sm:$0xff]
        %v3954 = vld [vmem:[%s5] sm:$0xff]
        %v3955 = vld [vmem:[%s5 + $0x8] sm:$0xff]
        %v3956 = vld [vmem:[%s5 + $0x10] sm:$0xff]
        %v3957 = vld [vmem:[%s5 + $0x18] sm:$0xff]
        %v3958 = vld [vmem:[%s5 + $0x20] sm:$0xff]
        %v3959 = vld [vmem:[%s5 + $0x28] sm:$0xff]
        %v3960 = vld [vmem:[%s5 + $0x30] sm:$0xff]
        %v3961 = vld [vmem:[%s5 + $0x38] sm:$0xff]
        %v3962 = vld [vmem:[%s5 + $0x40] sm:$0xff]
        %v3963 = vld [vmem:[%s5 + $0x48] sm:$0xff]
        %v3964 = vld [vmem:[%s5 + $0x50] sm:$0xff]
        %v3965 = vld [vmem:[%s5 + $0x58] sm:$0xff]
        %v3966 = vld [vmem:[%s395 + $0x8] sm:$0xff]
        %v3967 = vld [vmem:[%s395 + $0x10] sm:$0xff]
        %v3968 = vld [vmem:[%s395 + $0x28] sm:$0xff]
        %v3969 = vld [vmem:[%s395 + $0x30] sm:$0xff]
        %v3970 = vld [vmem:[%s395 + $0x48] sm:$0xff]
        %v3971 = vld [vmem:[%s395 + $0x50] sm:$0xff]
        %v3972 = vld [vmem:[%s395 + $0x68] sm:$0xff]
        %v3973 = vld [vmem:[%s395 + $0x70] sm:$0xff]
        %v3974 = vld [vmem:[%s395 + $0x88] sm:$0xff]
        %v3975 = vld [vmem:[%s395 + $0x90] sm:$0xff]
        %v3976 = vld [vmem:[%s395 + $0xa8] sm:$0xff]
        %v3977 = vld [vmem:[%s395 + $0xb0] sm:$0xff]
        %v3978 = vld [vmem:[%s395 + $0xc8] sm:$0xff]
        %v3979 = vld [vmem:[%s395 + $0xd0] sm:$0xff]
        %v3980 = vld [vmem:[%s395 + $0xe8] sm:$0xff]
        %v3981 = vld [vmem:[%s395 + $0xf0] sm:$0xff]
        %v3982 = vld [vmem:[%s395 + $0x108] sm:$0xff]
        %v3983 = vld [vmem:[%s395 + $0x110] sm:$0xff]
        %v3984 = vld [vmem:[%s395 + $0x128] sm:$0xff]
        %v3985 = vld [vmem:[%s395 + $0x130] sm:$0xff]
        %v3986 = vld [vmem:[%s395 + $0x148] sm:$0xff]
        %v3987 = vld [vmem:[%s395 + $0x150] sm:$0xff]
        %v3988 = vld [vmem:[%s395 + $0x168] sm:$0xff]
        %v3989 = vld [vmem:[%s395 + $0x170] sm:$0xff]
        %v3990 = vld [vmem:[%s395 + $0x188] sm:$0xff]
        %v3991 = vld [vmem:[%s395 + $0x190] sm:$0xff]
        %v3992 = vld [vmem:[%s395 + $0x1a8] sm:$0xff]
        %v3993 = vld [vmem:[%s395 + $0x1b0] sm:$0xff]
        %v3994 = vld [vmem:[%s395 + $0x1c8] sm:$0xff]
        %v3995 = vld [vmem:[%s395 + $0x1d0] sm:$0xff]
        %v3996 = vld [vmem:[%s395 + $0x1e8] sm:$0xff]
        %v3997 = vld [vmem:[%s395 + $0x1f0] sm:$0xff]
        %s3998 = scalar_lea.vmem %s5, 96
        %v3999 = vld [vmem:[%s3998] sm:$0xff]
        %v4000 = vld [vmem:[%s3998 + $0x8] sm:$0xff]
        %v4001 = vld [vmem:[%s3998 + $0x10] sm:$0xff]
        %v4002 = vld [vmem:[%s3998 + $0x18] sm:$0xff]
        %v4003 = vld [vmem:[%s3998 + $0x20] sm:$0xff]
        %v4004 = vld [vmem:[%s3998 + $0x28] sm:$0xff]
        %v4005 = vld [vmem:[%s3998 + $0x30] sm:$0xff]
        %v4006 = vld [vmem:[%s3998 + $0x38] sm:$0xff]
        %v4007 = vld [vmem:[%s3998 + $0x40] sm:$0xff]
        %v4008 = vld [vmem:[%s3998 + $0x48] sm:$0xff]
        %v4009 = vld [vmem:[%s3998 + $0x50] sm:$0xff]
        %v4010 = vld [vmem:[%s3998 + $0x58] sm:$0xff]
        %v4012 = vsel %vm385, %v3966, 0
        %v4015 = vsel %vm385, %v3967, 0
        %v4018 = vsel %vm385, %v3968, 0
        %v4021 = vsel %vm385, %v3969, 0
        %v4024 = vsel %vm385, %v3970, 0
        %v4027 = vsel %vm385, %v3971, 0
        %v4030 = vsel %vm385, %v3972, 0
        %v4033 = vsel %vm385, %v3973, 0
        %v4036 = vsel %vm385, %v3974, 0
        %v4039 = vsel %vm385, %v3975, 0
        %v4042 = vsel %vm385, %v3976, 0
        %v4045 = vsel %vm385, %v3977, 0
        %v4048 = vsel %vm385, %v3978, 0
        %v4051 = vsel %vm385, %v3979, 0
        %v4054 = vsel %vm385, %v3980, 0
        %v4057 = vsel %vm385, %v3981, 0
        %v4060 = vsel %vm385, %v3982, 0
        %v4063 = vsel %vm385, %v3983, 0
        %v4066 = vsel %vm385, %v3984, 0
        %v4069 = vsel %vm385, %v3985, 0
        %v4072 = vsel %vm385, %v3986, 0
        %v4075 = vsel %vm385, %v3987, 0
        %v4078 = vsel %vm385, %v3988, 0
        %v4081 = vsel %vm385, %v3989, 0
        %v4084 = vsel %vm385, %v3990, 0
        %v4087 = vsel %vm385, %v3991, 0
        %v4090 = vsel %vm385, %v3992, 0
        %v4093 = vsel %vm385, %v3993, 0
        %v4096 = vsel %vm385, %v3994, 0
        %v4099 = vsel %vm385, %v3995, 0
        %v4102 = vsel %vm385, %v3996, 0
        %v4105 = vsel %vm385, %v3997, 0
        %4107 = vmatprep.subr.mxu0 0.0
        %4108 = vmatpush1.msra.mxu0 %v3999
        %4109 = vmatprep.subr.mxu0 0.0
        %4110 = vmatpush1.msra.mxu0 %v4000
        %4111 = vmatprep.subr.mxu0 0.0
        %4112 = vmatpush1.msra.mxu0 %v4001
        %4113 = vmatprep.subr.mxu0 0.0
        %4114 = vmatpush1.msra.mxu0 %v4002
        %4115 = vmatprep.subr.mxu0 0.0
        %4116 = vmatpush1.msra.mxu0 %v4003
        %4117 = vmatprep.subr.mxu0 0.0
        %4118 = vmatpush1.msra.mxu0 %v4004
        %4119 = vmatprep.subr.mxu0 0.0
        %4120 = vmatpush1.msra.mxu0 %v4005
        %4121 = vmatprep.subr.mxu0 0.0
        %4122 = vmatpush1.msra.mxu0 %v4006
        %4123 = vmatprep.subr.mxu0 0.0
        %4124 = vmatpush1.msra.mxu0 %v4007
        %4125 = vmatprep.subr.mxu0 0.0
        %4126 = vmatpush1.msra.mxu0 %v4008
        %4127 = vmatprep.subr.mxu0 0.0
        %4128 = vmatpush1.msra.mxu0 %v4009
        %4129 = vmatprep.subr.mxu0 0.0
        %4130 = vmatpush1.msra.mxu0 %v4010
        %4131 = vmatprep.subr.mxu0 0.0
        %4132 = vmatpush1.msra.mxu0 0.0
        %4133 = vmatprep.subr.mxu0 0.0
        %4134 = vmatpush1.msra.mxu0 0.0
        %4135 = vmatprep.subr.mxu0 0.0
        %4136 = vmatpush1.msra.mxu0 0.0
        %4137 = vmatprep.subr.mxu0 0.0
        %4138 = vmatpush1.msra.mxu0 0.0
        %4139 = vmatprep.subr.mxu0 0.0
        %4140 = vmatpush1.msra.mxu0 0.0
        %4141 = vmatprep.subr.mxu0 0.0
        %4142 = vmatpush1.msra.mxu0 0.0
        %4143 = vmatprep.subr.mxu0 0.0
        %4144 = vmatpush1.msra.mxu0 0.0
        %4145 = vmatprep.subr.mxu0 0.0
        %4146 = vmatpush1.msra.mxu0 0.0
        %4147 = vmatprep.subr.mxu0 0.0
        %4148 = vmatpush1.msra.mxu0 0.0
        %4149 = vmatprep.subr.mxu0 0.0
        %4150 = vmatpush1.msra.mxu0 0.0
        %4151 = vmatprep.subr.mxu0 0.0
        %4152 = vmatpush1.msra.mxu0 0.0
        %4153 = vmatprep.subr.mxu0 0.0
        %4154 = vmatpush1.msra.mxu0 0.0
        %4155 = vmatprep.subr.mxu0 0.0
        %4156 = vmatpush1.msra.mxu0 0.0
        %4157 = vmatprep.subr.mxu0 0.0
        %4158 = vmatpush1.msra.mxu0 0.0
        %4159 = vmatprep.subr.mxu0 0.0
        %4160 = vmatpush1.msra.mxu0 0.0
        %4161 = vmatprep.subr.mxu0 0.0
        %4162 = vmatpush1.msra.mxu0 0.0
        %4163 = vmatprep.subr.mxu0 0.0
        %4164 = vmatpush1.msra.mxu0 0.0
        %4165 = vmatprep.subr.mxu0 0.0
        %4166 = vmatpush1.msra.mxu0 0.0
        %4167 = vmatprep.subr.mxu0 0.0
        %4168 = vmatpush1.msra.mxu0 0.0
        %4169 = vmatprep.subr.mxu0 0.0
        %4170 = vmatpush1.msra.mxu0 0.0
        %4171 = vmatprep.mubr.f32.mxu0 0.0
        %4172 = vmatmul.mubr.f32.gmra.mrb[0].mxu0 %v4012
        %v4173 = vpop.f32.mrb[0].mxu0
        %v4174 = vadd.f32 0.0, %v4173
        %v4175 = vpop.f32.mrb[0].mxu0
        %4176 = vmatprep.mubr.f32.mxu0 0.0
        %4177 = vmatmul.mubr.f32.gmra.mrb[0].mxu0 %v4015
        %v4178 = vpop.f32.mrb[0].mxu0
        %v4179 = vadd.f32 0.0, %v4178
        %v4180 = vpop.f32.mrb[0].mxu0
        %4181 = vmatprep.mubr.f32.mxu0 0.0
        %4182 = vmatmul.mubr.f32.gmra.mrb[0].mxu0 %v4018
        %v4183 = vpop.f32.mrb[0].mxu0
        %v4184 = vadd.f32 0.0, %v4183
        %v4185 = vpop.f32.mrb[0].mxu0
        %4186 = vmatprep.mubr.f32.mxu0 0.0
        %4187 = vmatmul.mubr.f32.gmra.mrb[0].mxu0 %v4021
        %v4188 = vpop.f32.mrb[0].mxu0
        %v4189 = vadd.f32 0.0, %v4188
        %v4190 = vpop.f32.mrb[0].mxu0
        %4191 = vmatprep.mubr.f32.mxu0 0.0
        %4192 = vmatmul.mubr.f32.gmra.mrb[0].mxu0 %v4024
        %v4193 = vpop.f32.mrb[0].mxu0
        %v4194 = vadd.f32 0.0, %v4193
        %v4195 = vpop.f32.mrb[0].mxu0
        %4196 = vmatprep.mubr.f32.mxu0 0.0
        %4197 = vmatmul.mubr.f32.gmra.mrb[0].mxu0 %v4027
        %v4198 = vpop.f32.mrb[0].mxu0
        %v4199 = vadd.f32 0.0, %v4198
        %v4200 = vpop.f32.mrb[0].mxu0
        %4201 = vmatprep.mubr.f32.mxu0 0.0
        %4202 = vmatmul.mubr.f32.gmra.mrb[0].mxu0 %v4030
        %v4203 = vpop.f32.mrb[0].mxu0
        %v4204 = vadd.f32 0.0, %v4203
        %v4205 = vpop.f32.mrb[0].mxu0
        %4206 = vmatprep.mubr.f32.mxu0 0.0
        %4207 = vmatmul.mubr.f32.gmra.mrb[0].mxu0 %v4033
        %v4208 = vpop.f32.mrb[0].mxu0
        %v4209 = vadd.f32 0.0, %v4208
        %v4210 = vpop.f32.mrb[0].mxu0
        %4211 = vmatprep.mubr.f32.mxu0 0.0
        %4212 = vmatmul.mubr.f32.gmra.mrb[0].mxu0 %v4036
        %v4213 = vpop.f32.mrb[0].mxu0
        %v4214 = vadd.f32 0.0, %v4213
        %v4215 = vpop.f32.mrb[0].mxu0
        %4216 = vmatprep.mubr.f32.mxu0 0.0
        %4217 = vmatmul.mubr.f32.gmra.mrb[0].mxu0 %v4039
        %v4218 = vpop.f32.mrb[0].mxu0
        %v4219 = vadd.f32 0.0, %v4218
        %v4220 = vpop.f32.mrb[0].mxu0
        %4221 = vmatprep.mubr.f32.mxu0 0.0
        %4222 = vmatmul.mubr.f32.gmra.mrb[0].mxu0 %v4042
        %v4223 = vpop.f32.mrb[0].mxu0
        %v4224 = vadd.f32 0.0, %v4223
        %v4225 = vpop.f32.mrb[0].mxu0
        %4226 = vmatprep.mubr.f32.mxu0 0.0
        %4227 = vmatmul.mubr.f32.gmra.mrb[0].mxu0 %v4045
        %v4228 = vpop.f32.mrb[0].mxu0
        %v4229 = vadd.f32 0.0, %v4228
        %v4230 = vpop.f32.mrb[0].mxu0
        %4231 = vmatprep.mubr.f32.mxu0 0.0
        %4232 = vmatmul.mubr.f32.gmra.mrb[0].mxu0 %v4048
        %v4233 = vpop.f32.mrb[0].mxu0
        %v4234 = vadd.f32 0.0, %v4233
        %v4235 = vpop.f32.mrb[0].mxu0
        %4236 = vmatprep.mubr.f32.mxu0 0.0
        %4237 = vmatmul.mubr.f32.gmra.mrb[0].mxu0 %v4051
        %v4238 = vpop.f32.mrb[0].mxu0
        %v4239 = vadd.f32 0.0, %v4238
        %v4240 = vpop.f32.mrb[0].mxu0
        %4241 = vmatprep.mubr.f32.mxu0 0.0
        %4242 = vmatmul.mubr.f32.gmra.mrb[0].mxu0 %v4054
        %v4243 = vpop.f32.mrb[0].mxu0
        %v4244 = vadd.f32 0.0, %v4243
        %v4245 = vpop.f32.mrb[0].mxu0
        %4246 = vmatprep.mubr.f32.mxu0 0.0
        %4247 = vmatmul.mubr.f32.gmra.mrb[0].mxu0 %v4057
        %v4248 = vpop.f32.mrb[0].mxu0
        %v4249 = vadd.f32 0.0, %v4248
        %v4250 = vpop.f32.mrb[0].mxu0
        %4251 = vmatprep.mubr.f32.mxu0 0.0
        %4252 = vmatmul.mubr.f32.gmra.mrb[0].mxu0 %v4060
        %v4253 = vpop.f32.mrb[0].mxu0
        %v4254 = vadd.f32 0.0, %v4253
        %v4255 = vpop.f32.mrb[0].mxu0
        %4256 = vmatprep.mubr.f32.mxu0 0.0
        %4257 = vmatmul.mubr.f32.gmra.mrb[0].mxu0 %v4063
        %v4258 = vpop.f32.mrb[0].mxu0
        %v4259 = vadd.f32 0.0, %v4258
        %v4260 = vpop.f32.mrb[0].mxu0
        %4261 = vmatprep.mubr.f32.mxu0 0.0
        %4262 = vmatmul.mubr.f32.gmra.mrb[0].mxu0 %v4066
        %v4263 = vpop.f32.mrb[0].mxu0
        %v4264 = vadd.f32 0.0, %v4263
        %v4265 = vpop.f32.mrb[0].mxu0
        %4266 = vmatprep.mubr.f32.mxu0 0.0
        %4267 = vmatmul.mubr.f32.gmra.mrb[0].mxu0 %v4069
        %v4268 = vpop.f32.mrb[0].mxu0
        %v4269 = vadd.f32 0.0, %v4268
        %v4270 = vpop.f32.mrb[0].mxu0
        %4271 = vmatprep.mubr.f32.mxu0 0.0
        %4272 = vmatmul.mubr.f32.gmra.mrb[0].mxu0 %v4072
        %v4273 = vpop.f32.mrb[0].mxu0
        %v4274 = vadd.f32 0.0, %v4273
        %v4275 = vpop.f32.mrb[0].mxu0
        %4276 = vmatprep.mubr.f32.mxu0 0.0
        %4277 = vmatmul.mubr.f32.gmra.mrb[0].mxu0 %v4075
        %v4278 = vpop.f32.mrb[0].mxu0
        %v4279 = vadd.f32 0.0, %v4278
        %v4280 = vpop.f32.mrb[0].mxu0
        %4281 = vmatprep.mubr.f32.mxu0 0.0
        %4282 = vmatmul.mubr.f32.gmra.mrb[0].mxu0 %v4078
        %v4283 = vpop.f32.mrb[0].mxu0
        %v4284 = vadd.f32 0.0, %v4283
        %v4285 = vpop.f32.mrb[0].mxu0
        %4286 = vmatprep.mubr.f32.mxu0 0.0
        %4287 = vmatmul.mubr.f32.gmra.mrb[0].mxu0 %v4081
        %v4288 = vpop.f32.mrb[0].mxu0
        %v4289 = vadd.f32 0.0, %v4288
        %v4290 = vpop.f32.mrb[0].mxu0
        %4291 = vmatprep.mubr.f32.mxu0 0.0
        %4292 = vmatmul.mubr.f32.gmra.mrb[0].mxu0 %v4084
        %v4293 = vpop.f32.mrb[0].mxu0
        %v4294 = vadd.f32 0.0, %v4293
        %v4295 = vpop.f32.mrb[0].mxu0
        %4296 = vmatprep.mubr.f32.mxu0 0.0
        %4297 = vmatmul.mubr.f32.gmra.mrb[0].mxu0 %v4087
        %v4298 = vpop.f32.mrb[0].mxu0
        %v4299 = vadd.f32 0.0, %v4298
        %v4300 = vpop.f32.mrb[0].mxu0
        %4301 = vmatprep.mubr.f32.mxu0 0.0
        %4302 = vmatmul.mubr.f32.gmra.mrb[0].mxu0 %v4090
        %v4303 = vpop.f32.mrb[0].mxu0
        %v4304 = vadd.f32 0.0, %v4303
        %v4305 = vpop.f32.mrb[0].mxu0
        %4306 = vmatprep.mubr.f32.mxu0 0.0
        %4307 = vmatmul.mubr.f32.gmra.mrb[0].mxu0 %v4093
        %v4308 = vpop.f32.mrb[0].mxu0
        %v4309 = vadd.f32 0.0, %v4308
        %v4310 = vpop.f32.mrb[0].mxu0
        %4311 = vmatprep.mubr.f32.mxu0 0.0
        %4312 = vmatmul.mubr.f32.gmra.mrb[0].mxu0 %v4096
        %v4313 = vpop.f32.mrb[0].mxu0
        %v4314 = vadd.f32 0.0, %v4313
        %v4315 = vpop.f32.mrb[0].mxu0
        %4316 = vmatprep.mubr.f32.mxu0 0.0
        %4317 = vmatmul.mubr.f32.gmra.mrb[0].mxu0 %v4099
        %v4318 = vpop.f32.mrb[0].mxu0
        %v4319 = vadd.f32 0.0, %v4318
        %v4320 = vpop.f32.mrb[0].mxu0
        %4321 = vmatprep.mubr.f32.mxu0 0.0
        %4322 = vmatmul.mubr.f32.gmra.mrb[0].mxu0 %v4102
        %v4323 = vpop.f32.mrb[0].mxu0
        %v4324 = vadd.f32 0.0, %v4323
        %v4325 = vpop.f32.mrb[0].mxu0
        %4326 = vmatprep.mubr.f32.mxu0 0.0
        %4327 = vmatmul.mubr.f32.gmra.mrb[0].mxu0 %v4105
        %v4328 = vpop.f32.mrb[0].mxu0
        %v4329 = vadd.f32 0.0, %v4328
        %v4330 = vpop.f32.mrb[0].mxu0
        %4331 = vdwg.mxu0
        %v4333 = vsel %vm385, %v3922, 0
        %v4336 = vsel %vm385, %v3923, 0
        %v4339 = vsel %vm385, %v3924, 0
        %v4342 = vsel %vm385, %v3925, 0
        %v4345 = vsel %vm385, %v3926, 0
        %v4348 = vsel %vm385, %v3927, 0
        %v4351 = vsel %vm385, %v3928, 0
        %v4354 = vsel %vm385, %v3929, 0
        %v4357 = vsel %vm385, %v3930, 0
        %v4360 = vsel %vm385, %v3931, 0
        %v4363 = vsel %vm385, %v3932, 0
        %v4366 = vsel %vm385, %v3933, 0
        %v4369 = vsel %vm385, %v3934, 0
        %v4372 = vsel %vm385, %v3935, 0
        %v4375 = vsel %vm385, %v3936, 0
        %v4378 = vsel %vm385, %v3937, 0
        %v4381 = vsel %vm385, %v3938, 0
        %v4384 = vsel %vm385, %v3939, 0
        %v4387 = vsel %vm385, %v3940, 0
        %v4390 = vsel %vm385, %v3941, 0
        %v4393 = vsel %vm385, %v3942, 0
        %v4396 = vsel %vm385, %v3943, 0
        %v4399 = vsel %vm385, %v3944, 0
        %v4402 = vsel %vm385, %v3945, 0
        %v4405 = vsel %vm385, %v3946, 0
        %v4408 = vsel %vm385, %v3947, 0
        %v4411 = vsel %vm385, %v3948, 0
        %v4414 = vsel %vm385, %v3949, 0
        %v4417 = vsel %vm385, %v3950, 0
        %v4420 = vsel %vm385, %v3951, 0
        %v4423 = vsel %vm385, %v3952, 0
        %v4426 = vsel %vm385, %v3953, 0
        %4428 = vmatprep.subr.mxu0 0.0
        %4429 = vmatpush1.msra.mxu0 %v3954
        %4430 = vmatprep.subr.mxu0 0.0
        %4431 = vmatpush1.msra.mxu0 %v3955
        %4432 = vmatprep.subr.mxu0 0.0
        %4433 = vmatpush1.msra.mxu0 %v3956
        %4434 = vmatprep.subr.mxu0 0.0
        %4435 = vmatpush1.msra.mxu0 %v3957
        %4436 = vmatprep.subr.mxu0 0.0
        %4437 = vmatpush1.msra.mxu0 %v3958
        %4438 = vmatprep.subr.mxu0 0.0
        %4439 = vmatpush1.msra.mxu0 %v3959
        %4440 = vmatprep.subr.mxu0 0.0
        %4441 = vmatpush1.msra.mxu0 %v3960
        %4442 = vmatprep.subr.mxu0 0.0
        %4443 = vmatpush1.msra.mxu0 %v3961
        %4444 = vmatprep.subr.mxu0 0.0
        %4445 = vmatpush1.msra.mxu0 %v3962
        %4446 = vmatprep.subr.mxu0 0.0
        %4447 = vmatpush1.msra.mxu0 %v3963
        %4448 = vmatprep.subr.mxu0 0.0
        %4449 = vmatpush1.msra.mxu0 %v3964
        %4450 = vmatprep.subr.mxu0 0.0
        %4451 = vmatpush1.msra.mxu0 %v3965
        %4452 = vmatprep.subr.mxu0 0.0
        %4453 = vmatpush1.msra.mxu0 0.0
        %4454 = vmatprep.subr.mxu0 0.0
        %4455 = vmatpush1.msra.mxu0 0.0
        %4456 = vmatprep.subr.mxu0 0.0
        %4457 = vmatpush1.msra.mxu0 0.0
        %4458 = vmatprep.subr.mxu0 0.0
        %4459 = vmatpush1.msra.mxu0 0.0
        %4460 = vmatprep.subr.mxu0 0.0
        %4461 = vmatpush1.msra.mxu0 0.0
        %4462 = vmatprep.subr.mxu0 0.0
        %4463 = vmatpush1.msra.mxu0 0.0
        %4464 = vmatprep.subr.mxu0 0.0
        %4465 = vmatpush1.msra.mxu0 0.0
        %4466 = vmatprep.subr.mxu0 0.0
        %4467 = vmatpush1.msra.mxu0 0.0
        %4468 = vmatprep.subr.mxu0 0.0
        %4469 = vmatpush1.msra.mxu0 0.0
        %4470 = vmatprep.subr.mxu0 0.0
        %4471 = vmatpush1.msra.mxu0 0.0
        %4472 = vmatprep.subr.mxu0 0.0
        %4473 = vmatpush1.msra.mxu0 0.0
        %4474 = vmatprep.subr.mxu0 0.0
        %4475 = vmatpush1.msra.mxu0 0.0
        %4476 = vmatprep.subr.mxu0 0.0
        %4477 = vmatpush1.msra.mxu0 0.0
        %4478 = vmatprep.subr.mxu0 0.0
        %4479 = vmatpush1.msra.mxu0 0.0
        %4480 = vmatprep.subr.mxu0 0.0
        %4481 = vmatpush1.msra.mxu0 0.0
        %4482 = vmatprep.subr.mxu0 0.0
        %4483 = vmatpush1.msra.mxu0 0.0
        %4484 = vmatprep.subr.mxu0 0.0
        %4485 = vmatpush1.msra.mxu0 0.0
        %4486 = vmatprep.subr.mxu0 0.0
        %4487 = vmatpush1.msra.mxu0 0.0
        %4488 = vmatprep.subr.mxu0 0.0
        %4489 = vmatpush1.msra.mxu0 0.0
        %4490 = vmatprep.subr.mxu0 0.0
        %4491 = vmatpush1.msra.mxu0 0.0
        %4492 = vmatprep.mubr.f32.mxu0 0.0
        %4493 = vmatmul.mubr.f32.gmra.mrb[0].mxu0 %v4333
        %v4494 = vpop.f32.mrb[0].mxu0
        %v4495 = vadd.f32 %v4174, %v4494
        %v4496 = vpop.f32.mrb[0].mxu0
        %4497 = vmatprep.mubr.f32.mxu0 0.0
        %4498 = vmatmul.mubr.f32.gmra.mrb[0].mxu0 %v4336
        %v4499 = vpop.f32.mrb[0].mxu0
        %v4500 = vadd.f32 %v4179, %v4499
        %v4501 = vpop.f32.mrb[0].mxu0
        %4502 = vmatprep.mubr.f32.mxu0 0.0
        %4503 = vmatmul.mubr.f32.gmra.mrb[0].mxu0 %v4339
        %v4504 = vpop.f32.mrb[0].mxu0
        %v4505 = vadd.f32 %v4184, %v4504
        %v4506 = vpop.f32.mrb[0].mxu0
        %4507 = vmatprep.mubr.f32.mxu0 0.0
        %4508 = vmatmul.mubr.f32.gmra.mrb[0].mxu0 %v4342
        %v4509 = vpop.f32.mrb[0].mxu0
        %v4510 = vadd.f32 %v4189, %v4509
        %v4511 = vpop.f32.mrb[0].mxu0
        %4512 = vmatprep.mubr.f32.mxu0 0.0
        %4513 = vmatmul.mubr.f32.gmra.mrb[0].mxu0 %v4345
        %v4514 = vpop.f32.mrb[0].mxu0
        %v4515 = vadd.f32 %v4194, %v4514
        %v4516 = vpop.f32.mrb[0].mxu0
        %4517 = vmatprep.mubr.f32.mxu0 0.0
        %4518 = vmatmul.mubr.f32.gmra.mrb[0].mxu0 %v4348
        %v4519 = vpop.f32.mrb[0].mxu0
        %v4520 = vadd.f32 %v4199, %v4519
        %v4521 = vpop.f32.mrb[0].mxu0
        %4522 = vmatprep.mubr.f32.mxu0 0.0
        %4523 = vmatmul.mubr.f32.gmra.mrb[0].mxu0 %v4351
        %v4524 = vpop.f32.mrb[0].mxu0
        %v4525 = vadd.f32 %v4204, %v4524
        %v4526 = vpop.f32.mrb[0].mxu0
        %4527 = vmatprep.mubr.f32.mxu0 0.0
        %4528 = vmatmul.mubr.f32.gmra.mrb[0].mxu0 %v4354
        %v4529 = vpop.f32.mrb[0].mxu0
        %v4530 = vadd.f32 %v4209, %v4529
        %v4531 = vpop.f32.mrb[0].mxu0
        %4532 = vmatprep.mubr.f32.mxu0 0.0
        %4533 = vmatmul.mubr.f32.gmra.mrb[0].mxu0 %v4357
        %v4534 = vpop.f32.mrb[0].mxu0
        %v4535 = vadd.f32 %v4214, %v4534
        %v4536 = vpop.f32.mrb[0].mxu0
        %4537 = vmatprep.mubr.f32.mxu0 0.0
        %4538 = vmatmul.mubr.f32.gmra.mrb[0].mxu0 %v4360
        %v4539 = vpop.f32.mrb[0].mxu0
        %v4540 = vadd.f32 %v4219, %v4539
        %v4541 = vpop.f32.mrb[0].mxu0
        %4542 = vmatprep.mubr.f32.mxu0 0.0
        %4543 = vmatmul.mubr.f32.gmra.mrb[0].mxu0 %v4363
        %v4544 = vpop.f32.mrb[0].mxu0
        %v4545 = vadd.f32 %v4224, %v4544
        %v4546 = vpop.f32.mrb[0].mxu0
        %4547 = vmatprep.mubr.f32.mxu0 0.0
        %4548 = vmatmul.mubr.f32.gmra.mrb[0].mxu0 %v4366
        %v4549 = vpop.f32.mrb[0].mxu0
        %v4550 = vadd.f32 %v4229, %v4549
        %v4551 = vpop.f32.mrb[0].mxu0
        %4552 = vmatprep.mubr.f32.mxu0 0.0
        %4553 = vmatmul.mubr.f32.gmra.mrb[0].mxu0 %v4369
        %v4554 = vpop.f32.mrb[0].mxu0
        %v4555 = vadd.f32 %v4234, %v4554
        %v4556 = vpop.f32.mrb[0].mxu0
        %4557 = vmatprep.mubr.f32.mxu0 0.0
        %4558 = vmatmul.mubr.f32.gmra.mrb[0].mxu0 %v4372
        %v4559 = vpop.f32.mrb[0].mxu0
        %v4560 = vadd.f32 %v4239, %v4559
        %v4561 = vpop.f32.mrb[0].mxu0
        %4562 = vmatprep.mubr.f32.mxu0 0.0
        %4563 = vmatmul.mubr.f32.gmra.mrb[0].mxu0 %v4375
        %v4564 = vpop.f32.mrb[0].mxu0
        %v4565 = vadd.f32 %v4244, %v4564
        %v4566 = vpop.f32.mrb[0].mxu0
        %4567 = vmatprep.mubr.f32.mxu0 0.0
        %4568 = vmatmul.mubr.f32.gmra.mrb[0].mxu0 %v4378
        %v4569 = vpop.f32.mrb[0].mxu0
        %v4570 = vadd.f32 %v4249, %v4569
        %v4571 = vpop.f32.mrb[0].mxu0
        %4572 = vmatprep.mubr.f32.mxu0 0.0
        %4573 = vmatmul.mubr.f32.gmra.mrb[0].mxu0 %v4381
        %v4574 = vpop.f32.mrb[0].mxu0
        %v4575 = vadd.f32 %v4254, %v4574
        %v4576 = vpop.f32.mrb[0].mxu0
        %4577 = vmatprep.mubr.f32.mxu0 0.0
        %4578 = vmatmul.mubr.f32.gmra.mrb[0].mxu0 %v4384
        %v4579 = vpop.f32.mrb[0].mxu0
        %v4580 = vadd.f32 %v4259, %v4579
        %v4581 = vpop.f32.mrb[0].mxu0
        %4582 = vmatprep.mubr.f32.mxu0 0.0
        %4583 = vmatmul.mubr.f32.gmra.mrb[0].mxu0 %v4387
        %v4584 = vpop.f32.mrb[0].mxu0
        %v4585 = vadd.f32 %v4264, %v4584
        %v4586 = vpop.f32.mrb[0].mxu0
        %4587 = vmatprep.mubr.f32.mxu0 0.0
        %4588 = vmatmul.mubr.f32.gmra.mrb[0].mxu0 %v4390
        %v4589 = vpop.f32.mrb[0].mxu0
        %v4590 = vadd.f32 %v4269, %v4589
        %v4591 = vpop.f32.mrb[0].mxu0
        %4592 = vmatprep.mubr.f32.mxu0 0.0
        %4593 = vmatmul.mubr.f32.gmra.mrb[0].mxu0 %v4393
        %v4594 = vpop.f32.mrb[0].mxu0
        %v4595 = vadd.f32 %v4274, %v4594
        %v4596 = vpop.f32.mrb[0].mxu0
        %4597 = vmatprep.mubr.f32.mxu0 0.0
        %4598 = vmatmul.mubr.f32.gmra.mrb[0].mxu0 %v4396
        %v4599 = vpop.f32.mrb[0].mxu0
        %v4600 = vadd.f32 %v4279, %v4599
        %v4601 = vpop.f32.mrb[0].mxu0
        %4602 = vmatprep.mubr.f32.mxu0 0.0
        %4603 = vmatmul.mubr.f32.gmra.mrb[0].mxu0 %v4399
        %v4604 = vpop.f32.mrb[0].mxu0
        %v4605 = vadd.f32 %v4284, %v4604
        %v4606 = vpop.f32.mrb[0].mxu0
        %4607 = vmatprep.mubr.f32.mxu0 0.0
        %4608 = vmatmul.mubr.f32.gmra.mrb[0].mxu0 %v4402
        %v4609 = vpop.f32.mrb[0].mxu0
        %v4610 = vadd.f32 %v4289, %v4609
        %v4611 = vpop.f32.mrb[0].mxu0
        %4612 = vmatprep.mubr.f32.mxu0 0.0
        %4613 = vmatmul.mubr.f32.gmra.mrb[0].mxu0 %v4405
        %v4614 = vpop.f32.mrb[0].mxu0
        %v4615 = vadd.f32 %v4294, %v4614
        %v4616 = vpop.f32.mrb[0].mxu0
        %4617 = vmatprep.mubr.f32.mxu0 0.0
        %4618 = vmatmul.mubr.f32.gmra.mrb[0].mxu0 %v4408
        %v4619 = vpop.f32.mrb[0].mxu0
        %v4620 = vadd.f32 %v4299, %v4619
        %v4621 = vpop.f32.mrb[0].mxu0
        %4622 = vmatprep.mubr.f32.mxu0 0.0
        %4623 = vmatmul.mubr.f32.gmra.mrb[0].mxu0 %v4411
        %v4624 = vpop.f32.mrb[0].mxu0
        %v4625 = vadd.f32 %v4304, %v4624
        %v4626 = vpop.f32.mrb[0].mxu0
        %4627 = vmatprep.mubr.f32.mxu0 0.0
        %4628 = vmatmul.mubr.f32.gmra.mrb[0].mxu0 %v4414
        %v4629 = vpop.f32.mrb[0].mxu0
        %v4630 = vadd.f32 %v4309, %v4629
        %v4631 = vpop.f32.mrb[0].mxu0
        %4632 = vmatprep.mubr.f32.mxu0 0.0
        %4633 = vmatmul.mubr.f32.gmra.mrb[0].mxu0 %v4417
        %v4634 = vpop.f32.mrb[0].mxu0
        %v4635 = vadd.f32 %v4314, %v4634
        %v4636 = vpop.f32.mrb[0].mxu0
        %4637 = vmatprep.mubr.f32.mxu0 0.0
        %4638 = vmatmul.mubr.f32.gmra.mrb[0].mxu0 %v4420
        %v4639 = vpop.f32.mrb[0].mxu0
        %v4640 = vadd.f32 %v4319, %v4639
        %v4641 = vpop.f32.mrb[0].mxu0
        %4642 = vmatprep.mubr.f32.mxu0 0.0
        %4643 = vmatmul.mubr.f32.gmra.mrb[0].mxu0 %v4423
        %v4644 = vpop.f32.mrb[0].mxu0
        %v4645 = vadd.f32 %v4324, %v4644
        %v4646 = vpop.f32.mrb[0].mxu0
        %4647 = vmatprep.mubr.f32.mxu0 0.0
        %4648 = vmatmul.mubr.f32.gmra.mrb[0].mxu0 %v4426
        %v4649 = vpop.f32.mrb[0].mxu0
        %v4650 = vadd.f32 %v4329, %v4649
        %v4651 = vpop.f32.mrb[0].mxu0
        %4652 = vdwg.mxu0
        %v4653 = vld [vmem:[%s1548 + $0x8] sm:$0xff]
        %v4654 = vld [vmem:[%s1548 + $0x10] sm:$0xff]
        %v4655 = vld [vmem:[%s1548 + $0x28] sm:$0xff]
        %v4656 = vld [vmem:[%s1548 + $0x30] sm:$0xff]
        %v4657 = vld [vmem:[%s1548 + $0x48] sm:$0xff]
        %v4658 = vld [vmem:[%s1548 + $0x50] sm:$0xff]
        %v4659 = vld [vmem:[%s1548 + $0x68] sm:$0xff]
        %v4660 = vld [vmem:[%s1548 + $0x70] sm:$0xff]
        %v4661 = vld [vmem:[%s1548 + $0x88] sm:$0xff]
        %v4662 = vld [vmem:[%s1548 + $0x90] sm:$0xff]
        %v4663 = vld [vmem:[%s1548 + $0xa8] sm:$0xff]
        %v4664 = vld [vmem:[%s1548 + $0xb0] sm:$0xff]
        %v4665 = vld [vmem:[%s1548 + $0xc8] sm:$0xff]
        %v4666 = vld [vmem:[%s1548 + $0xd0] sm:$0xff]
        %v4667 = vld [vmem:[%s1548 + $0xe8] sm:$0xff]
        %v4668 = vld [vmem:[%s1548 + $0xf0] sm:$0xff]
        %v4669 = vld [vmem:[%s1548 + $0x108] sm:$0xff]
        %v4670 = vld [vmem:[%s1548 + $0x110] sm:$0xff]
        %v4671 = vld [vmem:[%s1548 + $0x128] sm:$0xff]
        %v4672 = vld [vmem:[%s1548 + $0x130] sm:$0xff]
        %v4673 = vld [vmem:[%s1548 + $0x148] sm:$0xff]
        %v4674 = vld [vmem:[%s1548 + $0x150] sm:$0xff]
        %v4675 = vld [vmem:[%s1548 + $0x168] sm:$0xff]
        %v4676 = vld [vmem:[%s1548 + $0x170] sm:$0xff]
        %v4677 = vld [vmem:[%s1548 + $0x188] sm:$0xff]
        %v4678 = vld [vmem:[%s1548 + $0x190] sm:$0xff]
        %v4679 = vld [vmem:[%s1548 + $0x1a8] sm:$0xff]
        %v4680 = vld [vmem:[%s1548 + $0x1b0] sm:$0xff]
        %v4681 = vld [vmem:[%s1548 + $0x1c8] sm:$0xff]
        %v4682 = vld [vmem:[%s1548 + $0x1d0] sm:$0xff]
        %v4683 = vld [vmem:[%s1548 + $0x1e8] sm:$0xff]
        %v4684 = vld [vmem:[%s1548 + $0x1f0] sm:$0xff]
        %s4685 = scalar_lea.vmem %s5, 192
        %v4686 = vld [vmem:[%s4685] sm:$0xff]
        %v4687 = vld [vmem:[%s4685 + $0x8] sm:$0xff]
        %v4688 = vld [vmem:[%s4685 + $0x10] sm:$0xff]
        %v4689 = vld [vmem:[%s4685 + $0x18] sm:$0xff]
        %v4690 = vld [vmem:[%s4685 + $0x20] sm:$0xff]
        %v4691 = vld [vmem:[%s4685 + $0x28] sm:$0xff]
        %v4692 = vld [vmem:[%s4685 + $0x30] sm:$0xff]
        %v4693 = vld [vmem:[%s4685 + $0x38] sm:$0xff]
        %v4694 = vld [vmem:[%s4685 + $0x40] sm:$0xff]
        %v4695 = vld [vmem:[%s4685 + $0x48] sm:$0xff]
        %v4696 = vld [vmem:[%s4685 + $0x50] sm:$0xff]
        %v4697 = vld [vmem:[%s4685 + $0x58] sm:$0xff]
        %v4699 = vsel %vm385, %v4653, 0
        %v4702 = vsel %vm385, %v4654, 0
        %v4705 = vsel %vm385, %v4655, 0
        %v4708 = vsel %vm385, %v4656, 0
        %v4711 = vsel %vm385, %v4657, 0
        %v4714 = vsel %vm385, %v4658, 0
        %v4717 = vsel %vm385, %v4659, 0
        %v4720 = vsel %vm385, %v4660, 0
        %v4723 = vsel %vm385, %v4661, 0
        %v4726 = vsel %vm385, %v4662, 0
        %v4729 = vsel %vm385, %v4663, 0
        %v4732 = vsel %vm385, %v4664, 0
        %v4735 = vsel %vm385, %v4665, 0
        %v4738 = vsel %vm385, %v4666, 0
        %v4741 = vsel %vm385, %v4667, 0
        %v4744 = vsel %vm385, %v4668, 0
        %v4747 = vsel %vm385, %v4669, 0
        %v4750 = vsel %vm385, %v4670, 0
        %v4753 = vsel %vm385, %v4671, 0
        %v4756 = vsel %vm385, %v4672, 0
        %v4759 = vsel %vm385, %v4673, 0
        %v4762 = vsel %vm385, %v4674, 0
        %v4765 = vsel %vm385, %v4675, 0
        %v4768 = vsel %vm385, %v4676, 0
        %v4771 = vsel %vm385, %v4677, 0
        %v4774 = vsel %vm385, %v4678, 0
        %v4777 = vsel %vm385, %v4679, 0
        %v4780 = vsel %vm385, %v4680, 0
        %v4783 = vsel %vm385, %v4681, 0
        %v4786 = vsel %vm385, %v4682, 0
        %v4789 = vsel %vm385, %v4683, 0
        %v4792 = vsel %vm385, %v4684, 0
        %4794 = vmatprep.subr.mxu0 0.0
        %4795 = vmatpush1.msra.mxu0 %v4686
        %4796 = vmatprep.subr.mxu0 0.0
        %4797 = vmatpush1.msra.mxu0 %v4687
        %4798 = vmatprep.subr.mxu0 0.0
        %4799 = vmatpush1.msra.mxu0 %v4688
        %4800 = vmatprep.subr.mxu0 0.0
        %4801 = vmatpush1.msra.mxu0 %v4689
        %4802 = vmatprep.subr.mxu0 0.0
        %4803 = vmatpush1.msra.mxu0 %v4690
        %4804 = vmatprep.subr.mxu0 0.0
        %4805 = vmatpush1.msra.mxu0 %v4691
        %4806 = vmatprep.subr.mxu0 0.0
        %4807 = vmatpush1.msra.mxu0 %v4692
        %4808 = vmatprep.subr.mxu0 0.0
        %4809 = vmatpush1.msra.mxu0 %v4693
        %4810 = vmatprep.subr.mxu0 0.0
        %4811 = vmatpush1.msra.mxu0 %v4694
        %4812 = vmatprep.subr.mxu0 0.0
        %4813 = vmatpush1.msra.mxu0 %v4695
        %4814 = vmatprep.subr.mxu0 0.0
        %4815 = vmatpush1.msra.mxu0 %v4696
        %4816 = vmatprep.subr.mxu0 0.0
        %4817 = vmatpush1.msra.mxu0 %v4697
        %4818 = vmatprep.subr.mxu0 0.0
        %4819 = vmatpush1.msra.mxu0 0.0
        %4820 = vmatprep.subr.mxu0 0.0
        %4821 = vmatpush1.msra.mxu0 0.0
        %4822 = vmatprep.subr.mxu0 0.0
        %4823 = vmatpush1.msra.mxu0 0.0
        %4824 = vmatprep.subr.mxu0 0.0
        %4825 = vmatpush1.msra.mxu0 0.0
        %4826 = vmatprep.subr.mxu0 0.0
        %4827 = vmatpush1.msra.mxu0 0.0
        %4828 = vmatprep.subr.mxu0 0.0
        %4829 = vmatpush1.msra.mxu0 0.0
        %4830 = vmatprep.subr.mxu0 0.0
        %4831 = vmatpush1.msra.mxu0 0.0
        %4832 = vmatprep.subr.mxu0 0.0
        %4833 = vmatpush1.msra.mxu0 0.0
        %4834 = vmatprep.subr.mxu0 0.0
        %4835 = vmatpush1.msra.mxu0 0.0
        %4836 = vmatprep.subr.mxu0 0.0
        %4837 = vmatpush1.msra.mxu0 0.0
        %4838 = vmatprep.subr.mxu0 0.0
        %4839 = vmatpush1.msra.mxu0 0.0
        %4840 = vmatprep.subr.mxu0 0.0
        %4841 = vmatpush1.msra.mxu0 0.0
        %4842 = vmatprep.subr.mxu0 0.0
        %4843 = vmatpush1.msra.mxu0 0.0
        %4844 = vmatprep.subr.mxu0 0.0
        %4845 = vmatpush1.msra.mxu0 0.0
        %4846 = vmatprep.subr.mxu0 0.0
        %4847 = vmatpush1.msra.mxu0 0.0
        %4848 = vmatprep.subr.mxu0 0.0
        %4849 = vmatpush1.msra.mxu0 0.0
        %4850 = vmatprep.subr.mxu0 0.0
        %4851 = vmatpush1.msra.mxu0 0.0
        %4852 = vmatprep.subr.mxu0 0.0
        %4853 = vmatpush1.msra.mxu0 0.0
        %4854 = vmatprep.subr.mxu0 0.0
        %4855 = vmatpush1.msra.mxu0 0.0
        %4856 = vmatprep.subr.mxu0 0.0
        %4857 = vmatpush1.msra.mxu0 0.0
        %4858 = vmatprep.mubr.f32.mxu0 0.0
        %4859 = vmatmul.mubr.f32.gmra.mrb[0].mxu0 %v4699
        %v4860 = vpop.f32.mrb[0].mxu0
        %v4861 = vadd.f32 0.0, %v4860
        %v4862 = vpop.f32.mrb[0].mxu0
        %4863 = vmatprep.mubr.f32.mxu0 0.0
        %4864 = vmatmul.mubr.f32.gmra.mrb[0].mxu0 %v4702
        %v4865 = vpop.f32.mrb[0].mxu0
        %v4866 = vadd.f32 0.0, %v4865
        %v4867 = vpop.f32.mrb[0].mxu0
        %4868 = vmatprep.mubr.f32.mxu0 0.0
        %4869 = vmatmul.mubr.f32.gmra.mrb[0].mxu0 %v4705
        %v4870 = vpop.f32.mrb[0].mxu0
        %v4871 = vadd.f32 0.0, %v4870
        %v4872 = vpop.f32.mrb[0].mxu0
        %4873 = vmatprep.mubr.f32.mxu0 0.0
        %4874 = vmatmul.mubr.f32.gmra.mrb[0].mxu0 %v4708
        %v4875 = vpop.f32.mrb[0].mxu0
        %v4876 = vadd.f32 0.0, %v4875
        %v4877 = vpop.f32.mrb[0].mxu0
        %4878 = vmatprep.mubr.f32.mxu0 0.0
        %4879 = vmatmul.mubr.f32.gmra.mrb[0].mxu0 %v4711
        %v4880 = vpop.f32.mrb[0].mxu0
        %v4881 = vadd.f32 0.0, %v4880
        %v4882 = vpop.f32.mrb[0].mxu0
        %4883 = vmatprep.mubr.f32.mxu0 0.0
        %4884 = vmatmul.mubr.f32.gmra.mrb[0].mxu0 %v4714
        %v4885 = vpop.f32.mrb[0].mxu0
        %v4886 = vadd.f32 0.0, %v4885
        %v4887 = vpop.f32.mrb[0].mxu0
        %4888 = vmatprep.mubr.f32.mxu0 0.0
        %4889 = vmatmul.mubr.f32.gmra.mrb[0].mxu0 %v4717
        %v4890 = vpop.f32.mrb[0].mxu0
        %v4891 = vadd.f32 0.0, %v4890
        %v4892 = vpop.f32.mrb[0].mxu0
        %4893 = vmatprep.mubr.f32.mxu0 0.0
        %4894 = vmatmul.mubr.f32.gmra.mrb[0].mxu0 %v4720
        %v4895 = vpop.f32.mrb[0].mxu0
        %v4896 = vadd.f32 0.0, %v4895
        %v4897 = vpop.f32.mrb[0].mxu0
        %4898 = vmatprep.mubr.f32.mxu0 0.0
        %4899 = vmatmul.mubr.f32.gmra.mrb[0].mxu0 %v4723
        %v4900 = vpop.f32.mrb[0].mxu0
        %v4901 = vadd.f32 0.0, %v4900
        %v4902 = vpop.f32.mrb[0].mxu0
        %4903 = vmatprep.mubr.f32.mxu0 0.0
        %4904 = vmatmul.mubr.f32.gmra.mrb[0].mxu0 %v4726
        %v4905 = vpop.f32.mrb[0].mxu0
        %v4906 = vadd.f32 0.0, %v4905
        %v4907 = vpop.f32.mrb[0].mxu0
        %4908 = vmatprep.mubr.f32.mxu0 0.0
        %4909 = vmatmul.mubr.f32.gmra.mrb[0].mxu0 %v4729
        %v4910 = vpop.f32.mrb[0].mxu0
        %v4911 = vadd.f32 0.0, %v4910
        %v4912 = vpop.f32.mrb[0].mxu0
        %4913 = vmatprep.mubr.f32.mxu0 0.0
        %4914 = vmatmul.mubr.f32.gmra.mrb[0].mxu0 %v4732
        %v4915 = vpop.f32.mrb[0].mxu0
        %v4916 = vadd.f32 0.0, %v4915
        %v4917 = vpop.f32.mrb[0].mxu0
        %4918 = vmatprep.mubr.f32.mxu0 0.0
        %4919 = vmatmul.mubr.f32.gmra.mrb[0].mxu0 %v4735
        %v4920 = vpop.f32.mrb[0].mxu0
        %v4921 = vadd.f32 0.0, %v4920
        %v4922 = vpop.f32.mrb[0].mxu0
        %4923 = vmatprep.mubr.f32.mxu0 0.0
        %4924 = vmatmul.mubr.f32.gmra.mrb[0].mxu0 %v4738
        %v4925 = vpop.f32.mrb[0].mxu0
        %v4926 = vadd.f32 0.0, %v4925
        %v4927 = vpop.f32.mrb[0].mxu0
        %4928 = vmatprep.mubr.f32.mxu0 0.0
        %4929 = vmatmul.mubr.f32.gmra.mrb[0].mxu0 %v4741
        %v4930 = vpop.f32.mrb[0].mxu0
        %v4931 = vadd.f32 0.0, %v4930
        %v4932 = vpop.f32.mrb[0].mxu0
        %4933 = vmatprep.mubr.f32.mxu0 0.0
        %4934 = vmatmul.mubr.f32.gmra.mrb[0].mxu0 %v4744
        %v4935 = vpop.f32.mrb[0].mxu0
        %v4936 = vadd.f32 0.0, %v4935
        %v4937 = vpop.f32.mrb[0].mxu0
        %4938 = vmatprep.mubr.f32.mxu0 0.0
        %4939 = vmatmul.mubr.f32.gmra.mrb[0].mxu0 %v4747
        %v4940 = vpop.f32.mrb[0].mxu0
        %v4941 = vadd.f32 0.0, %v4940
        %v4942 = vpop.f32.mrb[0].mxu0
        %4943 = vmatprep.mubr.f32.mxu0 0.0
        %4944 = vmatmul.mubr.f32.gmra.mrb[0].mxu0 %v4750
        %v4945 = vpop.f32.mrb[0].mxu0
        %v4946 = vadd.f32 0.0, %v4945
        %v4947 = vpop.f32.mrb[0].mxu0
        %4948 = vmatprep.mubr.f32.mxu0 0.0
        %4949 = vmatmul.mubr.f32.gmra.mrb[0].mxu0 %v4753
        %v4950 = vpop.f32.mrb[0].mxu0
        %v4951 = vadd.f32 0.0, %v4950
        %v4952 = vpop.f32.mrb[0].mxu0
        %4953 = vmatprep.mubr.f32.mxu0 0.0
        %4954 = vmatmul.mubr.f32.gmra.mrb[0].mxu0 %v4756
        %v4955 = vpop.f32.mrb[0].mxu0
        %v4956 = vadd.f32 0.0, %v4955
        %v4957 = vpop.f32.mrb[0].mxu0
        %4958 = vmatprep.mubr.f32.mxu0 0.0
        %4959 = vmatmul.mubr.f32.gmra.mrb[0].mxu0 %v4759
        %v4960 = vpop.f32.mrb[0].mxu0
        %v4961 = vadd.f32 0.0, %v4960
        %v4962 = vpop.f32.mrb[0].mxu0
        %4963 = vmatprep.mubr.f32.mxu0 0.0
        %4964 = vmatmul.mubr.f32.gmra.mrb[0].mxu0 %v4762
        %v4965 = vpop.f32.mrb[0].mxu0
        %v4966 = vadd.f32 0.0, %v4965
        %v4967 = vpop.f32.mrb[0].mxu0
        %4968 = vmatprep.mubr.f32.mxu0 0.0
        %4969 = vmatmul.mubr.f32.gmra.mrb[0].mxu0 %v4765
        %v4970 = vpop.f32.mrb[0].mxu0
        %v4971 = vadd.f32 0.0, %v4970
        %v4972 = vpop.f32.mrb[0].mxu0
        %4973 = vmatprep.mubr.f32.mxu0 0.0
        %4974 = vmatmul.mubr.f32.gmra.mrb[0].mxu0 %v4768
        %v4975 = vpop.f32.mrb[0].mxu0
        %v4976 = vadd.f32 0.0, %v4975
        %v4977 = vpop.f32.mrb[0].mxu0
        %4978 = vmatprep.mubr.f32.mxu0 0.0
        %4979 = vmatmul.mubr.f32.gmra.mrb[0].mxu0 %v4771
        %v4980 = vpop.f32.mrb[0].mxu0
        %v4981 = vadd.f32 0.0, %v4980
        %v4982 = vpop.f32.mrb[0].mxu0
        %4983 = vmatprep.mubr.f32.mxu0 0.0
        %4984 = vmatmul.mubr.f32.gmra.mrb[0].mxu0 %v4774
        %v4985 = vpop.f32.mrb[0].mxu0
        %v4986 = vadd.f32 0.0, %v4985
        %v4987 = vpop.f32.mrb[0].mxu0
        %4988 = vmatprep.mubr.f32.mxu0 0.0
        %4989 = vmatmul.mubr.f32.gmra.mrb[0].mxu0 %v4777
        %v4990 = vpop.f32.mrb[0].mxu0
        %v4991 = vadd.f32 0.0, %v4990
        %v4992 = vpop.f32.mrb[0].mxu0
        %4993 = vmatprep.mubr.f32.mxu0 0.0
        %4994 = vmatmul.mubr.f32.gmra.mrb[0].mxu0 %v4780
        %v4995 = vpop.f32.mrb[0].mxu0
        %v4996 = vadd.f32 0.0, %v4995
        %v4997 = vpop.f32.mrb[0].mxu0
        %4998 = vmatprep.mubr.f32.mxu0 0.0
        %4999 = vmatmul.mubr.f32.gmra.mrb[0].mxu0 %v4783
        %v5000 = vpop.f32.mrb[0].mxu0
        %v5001 = vadd.f32 0.0, %v5000
        %v5002 = vpop.f32.mrb[0].mxu0
        %5003 = vmatprep.mubr.f32.mxu0 0.0
        %5004 = vmatmul.mubr.f32.gmra.mrb[0].mxu0 %v4786
        %v5005 = vpop.f32.mrb[0].mxu0
        %v5006 = vadd.f32 0.0, %v5005
        %v5007 = vpop.f32.mrb[0].mxu0
        %5008 = vmatprep.mubr.f32.mxu0 0.0
        %5009 = vmatmul.mubr.f32.gmra.mrb[0].mxu0 %v4789
        %v5010 = vpop.f32.mrb[0].mxu0
        %v5011 = vadd.f32 0.0, %v5010
        %v5012 = vpop.f32.mrb[0].mxu0
        %5013 = vmatprep.mubr.f32.mxu0 0.0
        %5014 = vmatmul.mubr.f32.gmra.mrb[0].mxu0 %v4792
        %v5015 = vpop.f32.mrb[0].mxu0
        %v5016 = vadd.f32 0.0, %v5015
        %v5017 = vpop.f32.mrb[0].mxu0
        %5018 = vdwg.mxu0
        %v5019 = vadd.f32 %v4495, %v4861
        %v5020 = vadd.f32 %v4500, %v4866
        %v5021 = vadd.f32 %v4505, %v4871
        %v5022 = vadd.f32 %v4510, %v4876
        %v5023 = vadd.f32 %v4515, %v4881
        %v5024 = vadd.f32 %v4520, %v4886
        %v5025 = vadd.f32 %v4525, %v4891
        %v5026 = vadd.f32 %v4530, %v4896
        %v5027 = vadd.f32 %v4535, %v4901
        %v5028 = vadd.f32 %v4540, %v4906
        %v5029 = vadd.f32 %v4545, %v4911
        %v5030 = vadd.f32 %v4550, %v4916
        %v5031 = vadd.f32 %v4555, %v4921
        %v5032 = vadd.f32 %v4560, %v4926
        %v5033 = vadd.f32 %v4565, %v4931
        %v5034 = vadd.f32 %v4570, %v4936
        %v5035 = vadd.f32 %v4575, %v4941
        %v5036 = vadd.f32 %v4580, %v4946
        %v5037 = vadd.f32 %v4585, %v4951
        %v5038 = vadd.f32 %v4590, %v4956
        %v5039 = vadd.f32 %v4595, %v4961
        %v5040 = vadd.f32 %v4600, %v4966
        %v5041 = vadd.f32 %v4605, %v4971
        %v5042 = vadd.f32 %v4610, %v4976
        %v5043 = vadd.f32 %v4615, %v4981
        %v5044 = vadd.f32 %v4620, %v4986
        %v5045 = vadd.f32 %v4625, %v4991
        %v5046 = vadd.f32 %v4630, %v4996
        %v5047 = vadd.f32 %v4635, %v5001
        %v5048 = vadd.f32 %v4640, %v5006
        %v5049 = vadd.f32 %v4645, %v5011
        %v5050 = vadd.f32 %v4650, %v5016
        %v5051 = vld [vmem:[%s6] sm:$0x1]
        %v5053 = vlaneseq
        %v5054 = vshrl.u32 %v5053, 7
        %v5055 = vsub.s32 0, %v5054
        %v5056 = vrot.slane %v5051, %v5055
        %v5058 = vadd.f32 %v5019, %v5056
        %v5059 = vadd.f32 %v5020, %v5056
        %v5060 = vadd.f32 %v5021, %v5056
        %v5061 = vadd.f32 %v5022, %v5056
        %v5062 = vadd.f32 %v5023, %v5056
        %v5063 = vadd.f32 %v5024, %v5056
        %v5064 = vadd.f32 %v5025, %v5056
        %v5065 = vadd.f32 %v5026, %v5056
        %v5066 = vadd.f32 %v5027, %v5056
        %v5067 = vadd.f32 %v5028, %v5056
        %v5068 = vadd.f32 %v5029, %v5056
        %v5069 = vadd.f32 %v5030, %v5056
        %v5070 = vadd.f32 %v5031, %v5056
        %v5071 = vadd.f32 %v5032, %v5056
        %v5072 = vadd.f32 %v5033, %v5056
        %v5073 = vadd.f32 %v5034, %v5056
        %v5074 = vadd.f32 %v5035, %v5056
        %v5075 = vadd.f32 %v5036, %v5056
        %v5076 = vadd.f32 %v5037, %v5056
        %v5077 = vadd.f32 %v5038, %v5056
        %v5078 = vadd.f32 %v5039, %v5056
        %v5079 = vadd.f32 %v5040, %v5056
        %v5080 = vadd.f32 %v5041, %v5056
        %v5081 = vadd.f32 %v5042, %v5056
        %v5082 = vadd.f32 %v5043, %v5056
        %v5083 = vadd.f32 %v5044, %v5056
        %v5084 = vadd.f32 %v5045, %v5056
        %v5085 = vadd.f32 %v5046, %v5056
        %v5086 = vadd.f32 %v5047, %v5056
        %v5087 = vadd.f32 %v5048, %v5056
        %v5088 = vadd.f32 %v5049, %v5056
        %v5089 = vadd.f32 %v5050, %v5056
        %v5090 = vmax.f32 %v5058, 0.0
        %v5091 = vmax.f32 %v5059, 0.0
        %v5092 = vmax.f32 %v5060, 0.0
        %v5093 = vmax.f32 %v5061, 0.0
        %v5094 = vmax.f32 %v5062, 0.0
        %v5095 = vmax.f32 %v5063, 0.0
        %v5096 = vmax.f32 %v5064, 0.0
        %v5097 = vmax.f32 %v5065, 0.0
        %v5098 = vmax.f32 %v5066, 0.0
        %v5099 = vmax.f32 %v5067, 0.0
        %v5100 = vmax.f32 %v5068, 0.0
        %v5101 = vmax.f32 %v5069, 0.0
        %v5102 = vmax.f32 %v5070, 0.0
        %v5103 = vmax.f32 %v5071, 0.0
        %v5104 = vmax.f32 %v5072, 0.0
        %v5105 = vmax.f32 %v5073, 0.0
        %v5106 = vmax.f32 %v5074, 0.0
        %v5107 = vmax.f32 %v5075, 0.0
        %v5108 = vmax.f32 %v5076, 0.0
        %v5109 = vmax.f32 %v5077, 0.0
        %v5110 = vmax.f32 %v5078, 0.0
        %v5111 = vmax.f32 %v5079, 0.0
        %v5112 = vmax.f32 %v5080, 0.0
        %v5113 = vmax.f32 %v5081, 0.0
        %v5114 = vmax.f32 %v5082, 0.0
        %v5115 = vmax.f32 %v5083, 0.0
        %v5116 = vmax.f32 %v5084, 0.0
        %v5117 = vmax.f32 %v5085, 0.0
        %v5118 = vmax.f32 %v5086, 0.0
        %v5119 = vmax.f32 %v5087, 0.0
        %v5120 = vmax.f32 %v5088, 0.0
        %v5121 = vmax.f32 %v5089, 0.0
        %5154 = vrot.lane.b32.xlu0 %v5090, 64
        %v5155 = vpop.permute.xlu0 %5154
        %5156 = vrot.lane.b32.xlu0 %v5091, 64
        %v5157 = vpop.permute.xlu0 %5156
        %5158 = vrot.lane.b32.xlu0 %v5092, 64
        %v5159 = vpop.permute.xlu0 %5158
        %5160 = vrot.lane.b32.xlu0 %v5093, 64
        %v5161 = vpop.permute.xlu0 %5160
        %5162 = vrot.lane.b32.xlu0 %v5094, 64
        %v5163 = vpop.permute.xlu0 %5162
        %5164 = vrot.lane.b32.xlu0 %v5095, 64
        %v5165 = vpop.permute.xlu0 %5164
        %5166 = vrot.lane.b32.xlu0 %v5096, 64
        %v5167 = vpop.permute.xlu0 %5166
        %5168 = vrot.lane.b32.xlu0 %v5097, 64
        %v5169 = vpop.permute.xlu0 %5168
        %5170 = vrot.lane.b32.xlu0 %v5098, 64
        %v5171 = vpop.permute.xlu0 %5170
        %5172 = vrot.lane.b32.xlu0 %v5099, 64
        %v5173 = vpop.permute.xlu0 %5172
        %5174 = vrot.lane.b32.xlu0 %v5100, 64
        %v5175 = vpop.permute.xlu0 %5174
        %5176 = vrot.lane.b32.xlu0 %v5101, 64
        %v5177 = vpop.permute.xlu0 %5176
        %5178 = vrot.lane.b32.xlu0 %v5102, 64
        %v5179 = vpop.permute.xlu0 %5178
        %5180 = vrot.lane.b32.xlu0 %v5103, 64
        %v5181 = vpop.permute.xlu0 %5180
        %5182 = vrot.lane.b32.xlu0 %v5104, 64
        %v5183 = vpop.permute.xlu0 %5182
        %5184 = vrot.lane.b32.xlu0 %v5105, 64
        %v5185 = vpop.permute.xlu0 %5184
        %5186 = vrot.lane.b32.xlu0 %v5106, 64
        %v5187 = vpop.permute.xlu0 %5186
        %5188 = vrot.lane.b32.xlu0 %v5107, 64
        %v5189 = vpop.permute.xlu0 %5188
        %5190 = vrot.lane.b32.xlu0 %v5108, 64
        %v5191 = vpop.permute.xlu0 %5190
        %5192 = vrot.lane.b32.xlu0 %v5109, 64
        %v5193 = vpop.permute.xlu0 %5192
        %5194 = vrot.lane.b32.xlu0 %v5110, 64
        %v5195 = vpop.permute.xlu0 %5194
        %5196 = vrot.lane.b32.xlu0 %v5111, 64
        %v5197 = vpop.permute.xlu0 %5196
        %5198 = vrot.lane.b32.xlu0 %v5112, 64
        %v5199 = vpop.permute.xlu0 %5198
        %5200 = vrot.lane.b32.xlu0 %v5113, 64
        %v5201 = vpop.permute.xlu0 %5200
        %5202 = vrot.lane.b32.xlu0 %v5114, 64
        %v5203 = vpop.permute.xlu0 %5202
        %5204 = vrot.lane.b32.xlu0 %v5115, 64
        %v5205 = vpop.permute.xlu0 %5204
        %5206 = vrot.lane.b32.xlu0 %v5116, 64
        %v5207 = vpop.permute.xlu0 %5206
        %5208 = vrot.lane.b32.xlu0 %v5117, 64
        %v5209 = vpop.permute.xlu0 %5208
        %5210 = vrot.lane.b32.xlu0 %v5118, 64
        %v5211 = vpop.permute.xlu0 %5210
        %5212 = vrot.lane.b32.xlu0 %v5119, 64
        %v5213 = vpop.permute.xlu0 %5212
        %5214 = vrot.lane.b32.xlu0 %v5120, 64
        %v5215 = vpop.permute.xlu0 %5214
        %5216 = vrot.lane.b32.xlu0 %v5121, 64
        %v5217 = vpop.permute.xlu0 %5216
        %5250 = vst.msk [vmem:[#allocation3] sm:$0xff] %vm784, %v5155
        %5251 = vst.msk [vmem:[#allocation3 + $0x8] sm:$0xff] %vm784, %v5157
        %5252 = vst.msk [vmem:[#allocation3 + $0x10] sm:$0xff] %vm784, %v5159
        %5253 = vst.msk [vmem:[#allocation3 + $0x18] sm:$0xff] %vm784, %v5161
        %5254 = vst.msk [vmem:[#allocation3 + $0x20] sm:$0xff] %vm784, %v5163
        %5255 = vst.msk [vmem:[#allocation3 + $0x28] sm:$0xff] %vm784, %v5165
        %5256 = vst.msk [vmem:[#allocation3 + $0x30] sm:$0xff] %vm784, %v5167
        %5257 = vst.msk [vmem:[#allocation3 + $0x38] sm:$0xff] %vm784, %v5169
        %5258 = vst.msk [vmem:[#allocation3 + $0x40] sm:$0xff] %vm784, %v5171
        %5259 = vst.msk [vmem:[#allocation3 + $0x48] sm:$0xff] %vm784, %v5173
        %5260 = vst.msk [vmem:[#allocation3 + $0x50] sm:$0xff] %vm784, %v5175
        %5261 = vst.msk [vmem:[#allocation3 + $0x58] sm:$0xff] %vm784, %v5177
        %5262 = vst.msk [vmem:[#allocation3 + $0x60] sm:$0xff] %vm784, %v5179
        %5263 = vst.msk [vmem:[#allocation3 + $0x68] sm:$0xff] %vm784, %v5181
        %5264 = vst.msk [vmem:[#allocation3 + $0x70] sm:$0xff] %vm784, %v5183
        %5265 = vst.msk [vmem:[#allocation3 + $0x78] sm:$0xff] %vm784, %v5185
        %5266 = vst.msk [vmem:[#allocation3 + $0x80] sm:$0xff] %vm784, %v5187
        %5267 = vst.msk [vmem:[#allocation3 + $0x88] sm:$0xff] %vm784, %v5189
        %5268 = vst.msk [vmem:[#allocation3 + $0x90] sm:$0xff] %vm784, %v5191
        %5269 = vst.msk [vmem:[#allocation3 + $0x98] sm:$0xff] %vm784, %v5193
        %5270 = vst.msk [vmem:[#allocation3 + $0xa0] sm:$0xff] %vm784, %v5195
        %5271 = vst.msk [vmem:[#allocation3 + $0xa8] sm:$0xff] %vm784, %v5197
        %5272 = vst.msk [vmem:[#allocation3 + $0xb0] sm:$0xff] %vm784, %v5199
        %5273 = vst.msk [vmem:[#allocation3 + $0xb8] sm:$0xff] %vm784, %v5201
        %5274 = vst.msk [vmem:[#allocation3 + $0xc0] sm:$0xff] %vm784, %v5203
        %5275 = vst.msk [vmem:[#allocation3 + $0xc8] sm:$0xff] %vm784, %v5205
        %5276 = vst.msk [vmem:[#allocation3 + $0xd0] sm:$0xff] %vm784, %v5207
        %5277 = vst.msk [vmem:[#allocation3 + $0xd8] sm:$0xff] %vm784, %v5209
        %5278 = vst.msk [vmem:[#allocation3 + $0xe0] sm:$0xff] %vm784, %v5211
        %5279 = vst.msk [vmem:[#allocation3 + $0xe8] sm:$0xff] %vm784, %v5213
        %5280 = vst.msk [vmem:[#allocation3 + $0xf0] sm:$0xff] %vm784, %v5215
        %5281 = vst.msk [vmem:[#allocation3 + $0xf8] sm:$0xff] %vm784, %v5217
        %5282 = vst.msk [vmem:[%s395 + $0x9] sm:$0xff] %vm494, %v5090
        %5283 = vst.msk [vmem:[%s395 + $0x11] sm:$0xff] %vm494, %v5091
        %5284 = vst.msk [vmem:[%s395 + $0x29] sm:$0xff] %vm494, %v5092
        %5285 = vst.msk [vmem:[%s395 + $0x31] sm:$0xff] %vm494, %v5093
        %5286 = vst.msk [vmem:[%s395 + $0x49] sm:$0xff] %vm494, %v5094
        %5287 = vst.msk [vmem:[%s395 + $0x51] sm:$0xff] %vm494, %v5095
        %5288 = vst.msk [vmem:[%s395 + $0x69] sm:$0xff] %vm494, %v5096
        %5289 = vst.msk [vmem:[%s395 + $0x71] sm:$0xff] %vm494, %v5097
        %5290 = vst.msk [vmem:[%s395 + $0x89] sm:$0xff] %vm494, %v5098
        %5291 = vst.msk [vmem:[%s395 + $0x91] sm:$0xff] %vm494, %v5099
        %5292 = vst.msk [vmem:[%s395 + $0xa9] sm:$0xff] %vm494, %v5100
        %5293 = vst.msk [vmem:[%s395 + $0xb1] sm:$0xff] %vm494, %v5101
        %5294 = vst.msk [vmem:[%s395 + $0xc9] sm:$0xff] %vm494, %v5102
        %5295 = vst.msk [vmem:[%s395 + $0xd1] sm:$0xff] %vm494, %v5103
        %5296 = vst.msk [vmem:[%s395 + $0xe9] sm:$0xff] %vm494, %v5104
        %5297 = vst.msk [vmem:[%s395 + $0xf1] sm:$0xff] %vm494, %v5105
        %5298 = vst.msk [vmem:[%s395 + $0x109] sm:$0xff] %vm494, %v5106
        %5299 = vst.msk [vmem:[%s395 + $0x111] sm:$0xff] %vm494, %v5107
        %5300 = vst.msk [vmem:[%s395 + $0x129] sm:$0xff] %vm494, %v5108
        %5301 = vst.msk [vmem:[%s395 + $0x131] sm:$0xff] %vm494, %v5109
        %5302 = vst.msk [vmem:[%s395 + $0x149] sm:$0xff] %vm494, %v5110
        %5303 = vst.msk [vmem:[%s395 + $0x151] sm:$0xff] %vm494, %v5111
        %5304 = vst.msk [vmem:[%s395 + $0x169] sm:$0xff] %vm494, %v5112
        %5305 = vst.msk [vmem:[%s395 + $0x171] sm:$0xff] %vm494, %v5113
        %5306 = vst.msk [vmem:[%s395 + $0x189] sm:$0xff] %vm494, %v5114
        %5307 = vst.msk [vmem:[%s395 + $0x191] sm:$0xff] %vm494, %v5115
        %5308 = vst.msk [vmem:[%s395 + $0x1a9] sm:$0xff] %vm494, %v5116
        %5309 = vst.msk [vmem:[%s395 + $0x1b1] sm:$0xff] %vm494, %v5117
        %5310 = vst.msk [vmem:[%s395 + $0x1c9] sm:$0xff] %vm494, %v5118
        %5311 = vst.msk [vmem:[%s395 + $0x1d1] sm:$0xff] %vm494, %v5119
        %5312 = vst.msk [vmem:[%s395 + $0x1e9] sm:$0xff] %vm494, %v5120
        %5313 = vst.msk [vmem:[%s395 + $0x1f1] sm:$0xff] %vm494, %v5121
        %5314 = vrot.lane.b32.xlu0 %v5090, 32
        %v5315 = vpop.permute.xlu0 %5314
        %5316 = vrot.lane.b32.xlu0 %v5091, 32
        %v5317 = vpop.permute.xlu0 %5316
        %5318 = vrot.lane.b32.xlu0 %v5092, 32
        %v5319 = vpop.permute.xlu0 %5318
        %5320 = vrot.lane.b32.xlu0 %v5093, 32
        %v5321 = vpop.permute.xlu0 %5320
        %5322 = vrot.lane.b32.xlu0 %v5094, 32
        %v5323 = vpop.permute.xlu0 %5322
        %5324 = vrot.lane.b32.xlu0 %v5095, 32
        %v5325 = vpop.permute.xlu0 %5324
        %5326 = vrot.lane.b32.xlu0 %v5096, 32
        %v5327 = vpop.permute.xlu0 %5326
        %5328 = vrot.lane.b32.xlu0 %v5097, 32
        %v5329 = vpop.permute.xlu0 %5328
        %5330 = vrot.lane.b32.xlu0 %v5098, 32
        %v5331 = vpop.permute.xlu0 %5330
        %5332 = vrot.lane.b32.xlu0 %v5099, 32
        %v5333 = vpop.permute.xlu0 %5332
        %5334 = vrot.lane.b32.xlu0 %v5100, 32
        %v5335 = vpop.permute.xlu0 %5334
        %5336 = vrot.lane.b32.xlu0 %v5101, 32
        %v5337 = vpop.permute.xlu0 %5336
        %5338 = vrot.lane.b32.xlu0 %v5102, 32
        %v5339 = vpop.permute.xlu0 %5338
        %5340 = vrot.lane.b32.xlu0 %v5103, 32
        %v5341 = vpop.permute.xlu0 %5340
        %5342 = vrot.lane.b32.xlu0 %v5104, 32
        %v5343 = vpop.permute.xlu0 %5342
        %5344 = vrot.lane.b32.xlu0 %v5105, 32
        %v5345 = vpop.permute.xlu0 %5344
        %5346 = vrot.lane.b32.xlu0 %v5106, 32
        %v5347 = vpop.permute.xlu0 %5346
        %5348 = vrot.lane.b32.xlu0 %v5107, 32
        %v5349 = vpop.permute.xlu0 %5348
        %5350 = vrot.lane.b32.xlu0 %v5108, 32
        %v5351 = vpop.permute.xlu0 %5350
        %5352 = vrot.lane.b32.xlu0 %v5109, 32
        %v5353 = vpop.permute.xlu0 %5352
        %5354 = vrot.lane.b32.xlu0 %v5110, 32
        %v5355 = vpop.permute.xlu0 %5354
        %5356 = vrot.lane.b32.xlu0 %v5111, 32
        %v5357 = vpop.permute.xlu0 %5356
        %5358 = vrot.lane.b32.xlu0 %v5112, 32
        %v5359 = vpop.permute.xlu0 %5358
        %5360 = vrot.lane.b32.xlu0 %v5113, 32
        %v5361 = vpop.permute.xlu0 %5360
        %5362 = vrot.lane.b32.xlu0 %v5114, 32
        %v5363 = vpop.permute.xlu0 %5362
        %5364 = vrot.lane.b32.xlu0 %v5115, 32
        %v5365 = vpop.permute.xlu0 %5364
        %5366 = vrot.lane.b32.xlu0 %v5116, 32
        %v5367 = vpop.permute.xlu0 %5366
        %5368 = vrot.lane.b32.xlu0 %v5117, 32
        %v5369 = vpop.permute.xlu0 %5368
        %5370 = vrot.lane.b32.xlu0 %v5118, 32
        %v5371 = vpop.permute.xlu0 %5370
        %5372 = vrot.lane.b32.xlu0 %v5119, 32
        %v5373 = vpop.permute.xlu0 %5372
        %5374 = vrot.lane.b32.xlu0 %v5120, 32
        %v5375 = vpop.permute.xlu0 %5374
        %5376 = vrot.lane.b32.xlu0 %v5121, 32
        %v5377 = vpop.permute.xlu0 %5376
        %5410 = vst.msk [vmem:[%s395 + $0x8] sm:$0xff] %vm655, %v5315
        %5411 = vst.msk [vmem:[%s395 + $0x10] sm:$0xff] %vm655, %v5317
        %5412 = vst.msk [vmem:[%s395 + $0x28] sm:$0xff] %vm655, %v5319
        %5413 = vst.msk [vmem:[%s395 + $0x30] sm:$0xff] %vm655, %v5321
        %5414 = vst.msk [vmem:[%s395 + $0x48] sm:$0xff] %vm655, %v5323
        %5415 = vst.msk [vmem:[%s395 + $0x50] sm:$0xff] %vm655, %v5325
        %5416 = vst.msk [vmem:[%s395 + $0x68] sm:$0xff] %vm655, %v5327
        %5417 = vst.msk [vmem:[%s395 + $0x70] sm:$0xff] %vm655, %v5329
        %5418 = vst.msk [vmem:[%s395 + $0x88] sm:$0xff] %vm655, %v5331
        %5419 = vst.msk [vmem:[%s395 + $0x90] sm:$0xff] %vm655, %v5333
        %5420 = vst.msk [vmem:[%s395 + $0xa8] sm:$0xff] %vm655, %v5335
        %5421 = vst.msk [vmem:[%s395 + $0xb0] sm:$0xff] %vm655, %v5337
        %5422 = vst.msk [vmem:[%s395 + $0xc8] sm:$0xff] %vm655, %v5339
        %5423 = vst.msk [vmem:[%s395 + $0xd0] sm:$0xff] %vm655, %v5341
        %5424 = vst.msk [vmem:[%s395 + $0xe8] sm:$0xff] %vm655, %v5343
        %5425 = vst.msk [vmem:[%s395 + $0xf0] sm:$0xff] %vm655, %v5345
        %5426 = vst.msk [vmem:[%s395 + $0x108] sm:$0xff] %vm655, %v5347
        %5427 = vst.msk [vmem:[%s395 + $0x110] sm:$0xff] %vm655, %v5349
        %5428 = vst.msk [vmem:[%s395 + $0x128] sm:$0xff] %vm655, %v5351
        %5429 = vst.msk [vmem:[%s395 + $0x130] sm:$0xff] %vm655, %v5353
        %5430 = vst.msk [vmem:[%s395 + $0x148] sm:$0xff] %vm655, %v5355
        %5431 = vst.msk [vmem:[%s395 + $0x150] sm:$0xff] %vm655, %v5357
        %5432 = vst.msk [vmem:[%s395 + $0x168] sm:$0xff] %vm655, %v5359
        %5433 = vst.msk [vmem:[%s395 + $0x170] sm:$0xff] %vm655, %v5361
        %5434 = vst.msk [vmem:[%s395 + $0x188] sm:$0xff] %vm655, %v5363
        %5435 = vst.msk [vmem:[%s395 + $0x190] sm:$0xff] %vm655, %v5365
        %5436 = vst.msk [vmem:[%s395 + $0x1a8] sm:$0xff] %vm655, %v5367
        %5437 = vst.msk [vmem:[%s395 + $0x1b0] sm:$0xff] %vm655, %v5369
        %5438 = vst.msk [vmem:[%s395 + $0x1c8] sm:$0xff] %vm655, %v5371
        %5439 = vst.msk [vmem:[%s395 + $0x1d0] sm:$0xff] %vm655, %v5373
        %5440 = vst.msk [vmem:[%s395 + $0x1e8] sm:$0xff] %vm655, %v5375
        %5441 = vst.msk [vmem:[%s395 + $0x1f0] sm:$0xff] %vm655, %v5377
        %5442 = vst.msk [vmem:[%s395 + $0x7] sm:$0xff] %vm784, %v5155
        %5443 = vst.msk [vmem:[%s395 + $0xf] sm:$0xff] %vm784, %v5157
        %5444 = vst.msk [vmem:[%s395 + $0x27] sm:$0xff] %vm784, %v5159
        %5445 = vst.msk [vmem:[%s395 + $0x2f] sm:$0xff] %vm784, %v5161
        %5446 = vst.msk [vmem:[%s395 + $0x47] sm:$0xff] %vm784, %v5163
        %5447 = vst.msk [vmem:[%s395 + $0x4f] sm:$0xff] %vm784, %v5165
        %5448 = vst.msk [vmem:[%s395 + $0x67] sm:$0xff] %vm784, %v5167
        %5449 = vst.msk [vmem:[%s395 + $0x6f] sm:$0xff] %vm784, %v5169
        %5450 = vst.msk [vmem:[%s395 + $0x87] sm:$0xff] %vm784, %v5171
        %5451 = vst.msk [vmem:[%s395 + $0x8f] sm:$0xff] %vm784, %v5173
        %5452 = vst.msk [vmem:[%s395 + $0xa7] sm:$0xff] %vm784, %v5175
        %5453 = vst.msk [vmem:[%s395 + $0xaf] sm:$0xff] %vm784, %v5177
        %5454 = vst.msk [vmem:[%s395 + $0xc7] sm:$0xff] %vm784, %v5179
        %5455 = vst.msk [vmem:[%s395 + $0xcf] sm:$0xff] %vm784, %v5181
        %5456 = vst.msk [vmem:[%s395 + $0xe7] sm:$0xff] %vm784, %v5183
        %5457 = vst.msk [vmem:[%s395 + $0xef] sm:$0xff] %vm784, %v5185
        %5458 = vst.msk [vmem:[%s395 + $0x107] sm:$0xff] %vm784, %v5187
        %5459 = vst.msk [vmem:[%s395 + $0x10f] sm:$0xff] %vm784, %v5189
        %5460 = vst.msk [vmem:[%s395 + $0x127] sm:$0xff] %vm784, %v5191
        %5461 = vst.msk [vmem:[%s395 + $0x12f] sm:$0xff] %vm784, %v5193
        %5462 = vst.msk [vmem:[%s395 + $0x147] sm:$0xff] %vm784, %v5195
        %5463 = vst.msk [vmem:[%s395 + $0x14f] sm:$0xff] %vm784, %v5197
        %5464 = vst.msk [vmem:[%s395 + $0x167] sm:$0xff] %vm784, %v5199
        %5465 = vst.msk [vmem:[%s395 + $0x16f] sm:$0xff] %vm784, %v5201
        %5466 = vst.msk [vmem:[%s395 + $0x187] sm:$0xff] %vm784, %v5203
        %5467 = vst.msk [vmem:[%s395 + $0x18f] sm:$0xff] %vm784, %v5205
        %5468 = vst.msk [vmem:[%s395 + $0x1a7] sm:$0xff] %vm784, %v5207
        %5469 = vst.msk [vmem:[%s395 + $0x1af] sm:$0xff] %vm784, %v5209
        %5470 = vst.msk [vmem:[%s395 + $0x1c7] sm:$0xff] %vm784, %v5211
        %5471 = vst.msk [vmem:[%s395 + $0x1cf] sm:$0xff] %vm784, %v5213
        %5472 = vst.msk [vmem:[%s395 + $0x1e7] sm:$0xff] %vm784, %v5215
        %5473 = vst.msk [vmem:[%s395 + $0x1ef] sm:$0xff] %vm784, %v5217
        %v5474 = vld [vmem:[#allocation2 + $0x8] sm:$0xff]
        %v5475 = vld [vmem:[#allocation2 + $0x10] sm:$0xff]
        %v5476 = vld [vmem:[#allocation2 + $0x28] sm:$0xff]
        %v5477 = vld [vmem:[#allocation2 + $0x30] sm:$0xff]
        %v5478 = vld [vmem:[#allocation2 + $0x48] sm:$0xff]
        %v5479 = vld [vmem:[#allocation2 + $0x50] sm:$0xff]
        %v5480 = vld [vmem:[#allocation2 + $0x68] sm:$0xff]
        %v5481 = vld [vmem:[#allocation2 + $0x70] sm:$0xff]
        %v5482 = vld [vmem:[#allocation2 + $0x88] sm:$0xff]
        %v5483 = vld [vmem:[#allocation2 + $0x90] sm:$0xff]
        %v5484 = vld [vmem:[#allocation2 + $0xa8] sm:$0xff]
        %v5485 = vld [vmem:[#allocation2 + $0xb0] sm:$0xff]
        %v5486 = vld [vmem:[#allocation2 + $0xc8] sm:$0xff]
        %v5487 = vld [vmem:[#allocation2 + $0xd0] sm:$0xff]
        %v5488 = vld [vmem:[#allocation2 + $0xe8] sm:$0xff]
        %v5489 = vld [vmem:[#allocation2 + $0xf0] sm:$0xff]
        %v5490 = vld [vmem:[#allocation2 + $0x108] sm:$0xff]
        %v5491 = vld [vmem:[#allocation2 + $0x110] sm:$0xff]
        %v5492 = vld [vmem:[#allocation2 + $0x128] sm:$0xff]
        %v5493 = vld [vmem:[#allocation2 + $0x130] sm:$0xff]
        %v5494 = vld [vmem:[#allocation2 + $0x148] sm:$0xff]
        %v5495 = vld [vmem:[#allocation2 + $0x150] sm:$0xff]
        %v5496 = vld [vmem:[#allocation2 + $0x168] sm:$0xff]
        %v5497 = vld [vmem:[#allocation2 + $0x170] sm:$0xff]
        %v5498 = vld [vmem:[#allocation2 + $0x188] sm:$0xff]
        %v5499 = vld [vmem:[#allocation2 + $0x190] sm:$0xff]
        %v5500 = vld [vmem:[#allocation2 + $0x1a8] sm:$0xff]
        %v5501 = vld [vmem:[#allocation2 + $0x1b0] sm:$0xff]
        %v5502 = vld [vmem:[#allocation2 + $0x1c8] sm:$0xff]
        %v5503 = vld [vmem:[#allocation2 + $0x1d0] sm:$0xff]
        %v5504 = vld [vmem:[#allocation2 + $0x1e8] sm:$0xff]
        %v5505 = vld [vmem:[#allocation2 + $0x1f0] sm:$0xff]
        %v5506 = vld [vmem:[%s7] sm:$0xff]
        %v5507 = vld [vmem:[%s7 + $0x8] sm:$0xff]
        %v5508 = vld [vmem:[%s7 + $0x10] sm:$0xff]
        %v5509 = vld [vmem:[%s7 + $0x18] sm:$0xff]
        %v5510 = vld [vmem:[%s7 + $0x20] sm:$0xff]
        %v5511 = vld [vmem:[%s7 + $0x28] sm:$0xff]
        %v5512 = vld [vmem:[%s7 + $0x30] sm:$0xff]
        %v5513 = vld [vmem:[%s7 + $0x38] sm:$0xff]
        %v5514 = vld [vmem:[%s7 + $0x40] sm:$0xff]
        %v5515 = vld [vmem:[%s7 + $0x48] sm:$0xff]
        %v5516 = vld [vmem:[%s7 + $0x50] sm:$0xff]
        %v5517 = vld [vmem:[%s7 + $0x58] sm:$0xff]
        %v5518 = vld [vmem:[%s395 + $0x8] sm:$0xff]
        %v5519 = vld [vmem:[%s395 + $0x10] sm:$0xff]
        %v5520 = vld [vmem:[%s395 + $0x28] sm:$0xff]
        %v5521 = vld [vmem:[%s395 + $0x30] sm:$0xff]
        %v5522 = vld [vmem:[%s395 + $0x48] sm:$0xff]
        %v5523 = vld [vmem:[%s395 + $0x50] sm:$0xff]
        %v5524 = vld [vmem:[%s395 + $0x68] sm:$0xff]
        %v5525 = vld [vmem:[%s395 + $0x70] sm:$0xff]
        %v5526 = vld [vmem:[%s395 + $0x88] sm:$0xff]
        %v5527 = vld [vmem:[%s395 + $0x90] sm:$0xff]
        %v5528 = vld [vmem:[%s395 + $0xa8] sm:$0xff]
        %v5529 = vld [vmem:[%s395 + $0xb0] sm:$0xff]
        %v5530 = vld [vmem:[%s395 + $0xc8] sm:$0xff]
        %v5531 = vld [vmem:[%s395 + $0xd0] sm:$0xff]
        %v5532 = vld [vmem:[%s395 + $0xe8] sm:$0xff]
        %v5533 = vld [vmem:[%s395 + $0xf0] sm:$0xff]
        %v5534 = vld [vmem:[%s395 + $0x108] sm:$0xff]
        %v5535 = vld [vmem:[%s395 + $0x110] sm:$0xff]
        %v5536 = vld [vmem:[%s395 + $0x128] sm:$0xff]
        %v5537 = vld [vmem:[%s395 + $0x130] sm:$0xff]
        %v5538 = vld [vmem:[%s395 + $0x148] sm:$0xff]
        %v5539 = vld [vmem:[%s395 + $0x150] sm:$0xff]
        %v5540 = vld [vmem:[%s395 + $0x168] sm:$0xff]
        %v5541 = vld [vmem:[%s395 + $0x170] sm:$0xff]
        %v5542 = vld [vmem:[%s395 + $0x188] sm:$0xff]
        %v5543 = vld [vmem:[%s395 + $0x190] sm:$0xff]
        %v5544 = vld [vmem:[%s395 + $0x1a8] sm:$0xff]
        %v5545 = vld [vmem:[%s395 + $0x1b0] sm:$0xff]
        %v5546 = vld [vmem:[%s395 + $0x1c8] sm:$0xff]
        %v5547 = vld [vmem:[%s395 + $0x1d0] sm:$0xff]
        %v5548 = vld [vmem:[%s395 + $0x1e8] sm:$0xff]
        %v5549 = vld [vmem:[%s395 + $0x1f0] sm:$0xff]
        %s5550 = scalar_lea.vmem %s7, 96
        %v5551 = vld [vmem:[%s5550] sm:$0xff]
        %v5552 = vld [vmem:[%s5550 + $0x8] sm:$0xff]
        %v5553 = vld [vmem:[%s5550 + $0x10] sm:$0xff]
        %v5554 = vld [vmem:[%s5550 + $0x18] sm:$0xff]
        %v5555 = vld [vmem:[%s5550 + $0x20] sm:$0xff]
        %v5556 = vld [vmem:[%s5550 + $0x28] sm:$0xff]
        %v5557 = vld [vmem:[%s5550 + $0x30] sm:$0xff]
        %v5558 = vld [vmem:[%s5550 + $0x38] sm:$0xff]
        %v5559 = vld [vmem:[%s5550 + $0x40] sm:$0xff]
        %v5560 = vld [vmem:[%s5550 + $0x48] sm:$0xff]
        %v5561 = vld [vmem:[%s5550 + $0x50] sm:$0xff]
        %v5562 = vld [vmem:[%s5550 + $0x58] sm:$0xff]
        %v5564 = vsel %vm385, %v5518, 0
        %v5567 = vsel %vm385, %v5519, 0
        %v5570 = vsel %vm385, %v5520, 0
        %v5573 = vsel %vm385, %v5521, 0
        %v5576 = vsel %vm385, %v5522, 0
        %v5579 = vsel %vm385, %v5523, 0
        %v5582 = vsel %vm385, %v5524, 0
        %v5585 = vsel %vm385, %v5525, 0
        %v5588 = vsel %vm385, %v5526, 0
        %v5591 = vsel %vm385, %v5527, 0
        %v5594 = vsel %vm385, %v5528, 0
        %v5597 = vsel %vm385, %v5529, 0
        %v5600 = vsel %vm385, %v5530, 0
        %v5603 = vsel %vm385, %v5531, 0
        %v5606 = vsel %vm385, %v5532, 0
        %v5609 = vsel %vm385, %v5533, 0
        %v5612 = vsel %vm385, %v5534, 0
        %v5615 = vsel %vm385, %v5535, 0
        %v5618 = vsel %vm385, %v5536, 0
        %v5621 = vsel %vm385, %v5537, 0
        %v5624 = vsel %vm385, %v5538, 0
        %v5627 = vsel %vm385, %v5539, 0
        %v5630 = vsel %vm385, %v5540, 0
        %v5633 = vsel %vm385, %v5541, 0
        %v5636 = vsel %vm385, %v5542, 0
        %v5639 = vsel %vm385, %v5543, 0
        %v5642 = vsel %vm385, %v5544, 0
        %v5645 = vsel %vm385, %v5545, 0
        %v5648 = vsel %vm385, %v5546, 0
        %v5651 = vsel %vm385, %v5547, 0
        %v5654 = vsel %vm385, %v5548, 0
        %v5657 = vsel %vm385, %v5549, 0
        %5659 = vmatprep.subr.mxu0 0.0
        %5660 = vmatpush1.msra.mxu0 %v5551
        %5661 = vmatprep.subr.mxu0 0.0
        %5662 = vmatpush1.msra.mxu0 %v5552
        %5663 = vmatprep.subr.mxu0 0.0
        %5664 = vmatpush1.msra.mxu0 %v5553
        %5665 = vmatprep.subr.mxu0 0.0
        %5666 = vmatpush1.msra.mxu0 %v5554
        %5667 = vmatprep.subr.mxu0 0.0
        %5668 = vmatpush1.msra.mxu0 %v5555
        %5669 = vmatprep.subr.mxu0 0.0
        %5670 = vmatpush1.msra.mxu0 %v5556
        %5671 = vmatprep.subr.mxu0 0.0
        %5672 = vmatpush1.msra.mxu0 %v5557
        %5673 = vmatprep.subr.mxu0 0.0
        %5674 = vmatpush1.msra.mxu0 %v5558
        %5675 = vmatprep.subr.mxu0 0.0
        %5676 = vmatpush1.msra.mxu0 %v5559
        %5677 = vmatprep.subr.mxu0 0.0
        %5678 = vmatpush1.msra.mxu0 %v5560
        %5679 = vmatprep.subr.mxu0 0.0
        %5680 = vmatpush1.msra.mxu0 %v5561
        %5681 = vmatprep.subr.mxu0 0.0
        %5682 = vmatpush1.msra.mxu0 %v5562
        %5683 = vmatprep.subr.mxu0 0.0
        %5684 = vmatpush1.msra.mxu0 0.0
        %5685 = vmatprep.subr.mxu0 0.0
        %5686 = vmatpush1.msra.mxu0 0.0
        %5687 = vmatprep.subr.mxu0 0.0
        %5688 = vmatpush1.msra.mxu0 0.0
        %5689 = vmatprep.subr.mxu0 0.0
        %5690 = vmatpush1.msra.mxu0 0.0
        %5691 = vmatprep.subr.mxu0 0.0
        %5692 = vmatpush1.msra.mxu0 0.0
        %5693 = vmatprep.subr.mxu0 0.0
        %5694 = vmatpush1.msra.mxu0 0.0
        %5695 = vmatprep.subr.mxu0 0.0
        %5696 = vmatpush1.msra.mxu0 0.0
        %5697 = vmatprep.subr.mxu0 0.0
        %5698 = vmatpush1.msra.mxu0 0.0
        %5699 = vmatprep.subr.mxu0 0.0
        %5700 = vmatpush1.msra.mxu0 0.0
        %5701 = vmatprep.subr.mxu0 0.0
        %5702 = vmatpush1.msra.mxu0 0.0
        %5703 = vmatprep.subr.mxu0 0.0
        %5704 = vmatpush1.msra.mxu0 0.0
        %5705 = vmatprep.subr.mxu0 0.0
        %5706 = vmatpush1.msra.mxu0 0.0
        %5707 = vmatprep.subr.mxu0 0.0
        %5708 = vmatpush1.msra.mxu0 0.0
        %5709 = vmatprep.subr.mxu0 0.0
        %5710 = vmatpush1.msra.mxu0 0.0
        %5711 = vmatprep.subr.mxu0 0.0
        %5712 = vmatpush1.msra.mxu0 0.0
        %5713 = vmatprep.subr.mxu0 0.0
        %5714 = vmatpush1.msra.mxu0 0.0
        %5715 = vmatprep.subr.mxu0 0.0
        %5716 = vmatpush1.msra.mxu0 0.0
        %5717 = vmatprep.subr.mxu0 0.0
        %5718 = vmatpush1.msra.mxu0 0.0
        %5719 = vmatprep.subr.mxu0 0.0
        %5720 = vmatpush1.msra.mxu0 0.0
        %5721 = vmatprep.subr.mxu0 0.0
        %5722 = vmatpush1.msra.mxu0 0.0
        %5723 = vmatprep.mubr.f32.mxu0 0.0
        %5724 = vmatmul.mubr.f32.gmra.mrb[0].mxu0 %v5564
        %v5725 = vpop.f32.mrb[0].mxu0
        %v5726 = vadd.f32 0.0, %v5725
        %v5727 = vpop.f32.mrb[0].mxu0
        %5728 = vmatprep.mubr.f32.mxu0 0.0
        %5729 = vmatmul.mubr.f32.gmra.mrb[0].mxu0 %v5567
        %v5730 = vpop.f32.mrb[0].mxu0
        %v5731 = vadd.f32 0.0, %v5730
        %v5732 = vpop.f32.mrb[0].mxu0
        %5733 = vmatprep.mubr.f32.mxu0 0.0
        %5734 = vmatmul.mubr.f32.gmra.mrb[0].mxu0 %v5570
        %v5735 = vpop.f32.mrb[0].mxu0
        %v5736 = vadd.f32 0.0, %v5735
        %v5737 = vpop.f32.mrb[0].mxu0
        %5738 = vmatprep.mubr.f32.mxu0 0.0
        %5739 = vmatmul.mubr.f32.gmra.mrb[0].mxu0 %v5573
        %v5740 = vpop.f32.mrb[0].mxu0
        %v5741 = vadd.f32 0.0, %v5740
        %v5742 = vpop.f32.mrb[0].mxu0
        %5743 = vmatprep.mubr.f32.mxu0 0.0
        %5744 = vmatmul.mubr.f32.gmra.mrb[0].mxu0 %v5576
        %v5745 = vpop.f32.mrb[0].mxu0
        %v5746 = vadd.f32 0.0, %v5745
        %v5747 = vpop.f32.mrb[0].mxu0
        %5748 = vmatprep.mubr.f32.mxu0 0.0
        %5749 = vmatmul.mubr.f32.gmra.mrb[0].mxu0 %v5579
        %v5750 = vpop.f32.mrb[0].mxu0
        %v5751 = vadd.f32 0.0, %v5750
        %v5752 = vpop.f32.mrb[0].mxu0
        %5753 = vmatprep.mubr.f32.mxu0 0.0
        %5754 = vmatmul.mubr.f32.gmra.mrb[0].mxu0 %v5582
        %v5755 = vpop.f32.mrb[0].mxu0
        %v5756 = vadd.f32 0.0, %v5755
        %v5757 = vpop.f32.mrb[0].mxu0
        %5758 = vmatprep.mubr.f32.mxu0 0.0
        %5759 = vmatmul.mubr.f32.gmra.mrb[0].mxu0 %v5585
        %v5760 = vpop.f32.mrb[0].mxu0
        %v5761 = vadd.f32 0.0, %v5760
        %v5762 = vpop.f32.mrb[0].mxu0
        %5763 = vmatprep.mubr.f32.mxu0 0.0
        %5764 = vmatmul.mubr.f32.gmra.mrb[0].mxu0 %v5588
        %v5765 = vpop.f32.mrb[0].mxu0
        %v5766 = vadd.f32 0.0, %v5765
        %v5767 = vpop.f32.mrb[0].mxu0
        %5768 = vmatprep.mubr.f32.mxu0 0.0
        %5769 = vmatmul.mubr.f32.gmra.mrb[0].mxu0 %v5591
        %v5770 = vpop.f32.mrb[0].mxu0
        %v5771 = vadd.f32 0.0, %v5770
        %v5772 = vpop.f32.mrb[0].mxu0
        %5773 = vmatprep.mubr.f32.mxu0 0.0
        %5774 = vmatmul.mubr.f32.gmra.mrb[0].mxu0 %v5594
        %v5775 = vpop.f32.mrb[0].mxu0
        %v5776 = vadd.f32 0.0, %v5775
        %v5777 = vpop.f32.mrb[0].mxu0
        %5778 = vmatprep.mubr.f32.mxu0 0.0
        %5779 = vmatmul.mubr.f32.gmra.mrb[0].mxu0 %v5597
        %v5780 = vpop.f32.mrb[0].mxu0
        %v5781 = vadd.f32 0.0, %v5780
        %v5782 = vpop.f32.mrb[0].mxu0
        %5783 = vmatprep.mubr.f32.mxu0 0.0
        %5784 = vmatmul.mubr.f32.gmra.mrb[0].mxu0 %v5600
        %v5785 = vpop.f32.mrb[0].mxu0
        %v5786 = vadd.f32 0.0, %v5785
        %v5787 = vpop.f32.mrb[0].mxu0
        %5788 = vmatprep.mubr.f32.mxu0 0.0
        %5789 = vmatmul.mubr.f32.gmra.mrb[0].mxu0 %v5603
        %v5790 = vpop.f32.mrb[0].mxu0
        %v5791 = vadd.f32 0.0, %v5790
        %v5792 = vpop.f32.mrb[0].mxu0
        %5793 = vmatprep.mubr.f32.mxu0 0.0
        %5794 = vmatmul.mubr.f32.gmra.mrb[0].mxu0 %v5606
        %v5795 = vpop.f32.mrb[0].mxu0
        %v5796 = vadd.f32 0.0, %v5795
        %v5797 = vpop.f32.mrb[0].mxu0
        %5798 = vmatprep.mubr.f32.mxu0 0.0
        %5799 = vmatmul.mubr.f32.gmra.mrb[0].mxu0 %v5609
        %v5800 = vpop.f32.mrb[0].mxu0
        %v5801 = vadd.f32 0.0, %v5800
        %v5802 = vpop.f32.mrb[0].mxu0
        %5803 = vmatprep.mubr.f32.mxu0 0.0
        %5804 = vmatmul.mubr.f32.gmra.mrb[0].mxu0 %v5612
        %v5805 = vpop.f32.mrb[0].mxu0
        %v5806 = vadd.f32 0.0, %v5805
        %v5807 = vpop.f32.mrb[0].mxu0
        %5808 = vmatprep.mubr.f32.mxu0 0.0
        %5809 = vmatmul.mubr.f32.gmra.mrb[0].mxu0 %v5615
        %v5810 = vpop.f32.mrb[0].mxu0
        %v5811 = vadd.f32 0.0, %v5810
        %v5812 = vpop.f32.mrb[0].mxu0
        %5813 = vmatprep.mubr.f32.mxu0 0.0
        %5814 = vmatmul.mubr.f32.gmra.mrb[0].mxu0 %v5618
        %v5815 = vpop.f32.mrb[0].mxu0
        %v5816 = vadd.f32 0.0, %v5815
        %v5817 = vpop.f32.mrb[0].mxu0
        %5818 = vmatprep.mubr.f32.mxu0 0.0
        %5819 = vmatmul.mubr.f32.gmra.mrb[0].mxu0 %v5621
        %v5820 = vpop.f32.mrb[0].mxu0
        %v5821 = vadd.f32 0.0, %v5820
        %v5822 = vpop.f32.mrb[0].mxu0
        %5823 = vmatprep.mubr.f32.mxu0 0.0
        %5824 = vmatmul.mubr.f32.gmra.mrb[0].mxu0 %v5624
        %v5825 = vpop.f32.mrb[0].mxu0
        %v5826 = vadd.f32 0.0, %v5825
        %v5827 = vpop.f32.mrb[0].mxu0
        %5828 = vmatprep.mubr.f32.mxu0 0.0
        %5829 = vmatmul.mubr.f32.gmra.mrb[0].mxu0 %v5627
        %v5830 = vpop.f32.mrb[0].mxu0
        %v5831 = vadd.f32 0.0, %v5830
        %v5832 = vpop.f32.mrb[0].mxu0
        %5833 = vmatprep.mubr.f32.mxu0 0.0
        %5834 = vmatmul.mubr.f32.gmra.mrb[0].mxu0 %v5630
        %v5835 = vpop.f32.mrb[0].mxu0
        %v5836 = vadd.f32 0.0, %v5835
        %v5837 = vpop.f32.mrb[0].mxu0
        %5838 = vmatprep.mubr.f32.mxu0 0.0
        %5839 = vmatmul.mubr.f32.gmra.mrb[0].mxu0 %v5633
        %v5840 = vpop.f32.mrb[0].mxu0
        %v5841 = vadd.f32 0.0, %v5840
        %v5842 = vpop.f32.mrb[0].mxu0
        %5843 = vmatprep.mubr.f32.mxu0 0.0
        %5844 = vmatmul.mubr.f32.gmra.mrb[0].mxu0 %v5636
        %v5845 = vpop.f32.mrb[0].mxu0
        %v5846 = vadd.f32 0.0, %v5845
        %v5847 = vpop.f32.mrb[0].mxu0
        %5848 = vmatprep.mubr.f32.mxu0 0.0
        %5849 = vmatmul.mubr.f32.gmra.mrb[0].mxu0 %v5639
        %v5850 = vpop.f32.mrb[0].mxu0
        %v5851 = vadd.f32 0.0, %v5850
        %v5852 = vpop.f32.mrb[0].mxu0
        %5853 = vmatprep.mubr.f32.mxu0 0.0
        %5854 = vmatmul.mubr.f32.gmra.mrb[0].mxu0 %v5642
        %v5855 = vpop.f32.mrb[0].mxu0
        %v5856 = vadd.f32 0.0, %v5855
        %v5857 = vpop.f32.mrb[0].mxu0
        %5858 = vmatprep.mubr.f32.mxu0 0.0
        %5859 = vmatmul.mubr.f32.gmra.mrb[0].mxu0 %v5645
        %v5860 = vpop.f32.mrb[0].mxu0
        %v5861 = vadd.f32 0.0, %v5860
        %v5862 = vpop.f32.mrb[0].mxu0
        %5863 = vmatprep.mubr.f32.mxu0 0.0
        %5864 = vmatmul.mubr.f32.gmra.mrb[0].mxu0 %v5648
        %v5865 = vpop.f32.mrb[0].mxu0
        %v5866 = vadd.f32 0.0, %v5865
        %v5867 = vpop.f32.mrb[0].mxu0
        %5868 = vmatprep.mubr.f32.mxu0 0.0
        %5869 = vmatmul.mubr.f32.gmra.mrb[0].mxu0 %v5651
        %v5870 = vpop.f32.mrb[0].mxu0
        %v5871 = vadd.f32 0.0, %v5870
        %v5872 = vpop.f32.mrb[0].mxu0
        %5873 = vmatprep.mubr.f32.mxu0 0.0
        %5874 = vmatmul.mubr.f32.gmra.mrb[0].mxu0 %v5654
        %v5875 = vpop.f32.mrb[0].mxu0
        %v5876 = vadd.f32 0.0, %v5875
        %v5877 = vpop.f32.mrb[0].mxu0
        %5878 = vmatprep.mubr.f32.mxu0 0.0
        %5879 = vmatmul.mubr.f32.gmra.mrb[0].mxu0 %v5657
        %v5880 = vpop.f32.mrb[0].mxu0
        %v5881 = vadd.f32 0.0, %v5880
        %v5882 = vpop.f32.mrb[0].mxu0
        %5883 = vdwg.mxu0
        %v5885 = vsel %vm385, %v5474, 0
        %v5888 = vsel %vm385, %v5475, 0
        %v5891 = vsel %vm385, %v5476, 0
        %v5894 = vsel %vm385, %v5477, 0
        %v5897 = vsel %vm385, %v5478, 0
        %v5900 = vsel %vm385, %v5479, 0
        %v5903 = vsel %vm385, %v5480, 0
        %v5906 = vsel %vm385, %v5481, 0
        %v5909 = vsel %vm385, %v5482, 0
        %v5912 = vsel %vm385, %v5483, 0
        %v5915 = vsel %vm385, %v5484, 0
        %v5918 = vsel %vm385, %v5485, 0
        %v5921 = vsel %vm385, %v5486, 0
        %v5924 = vsel %vm385, %v5487, 0
        %v5927 = vsel %vm385, %v5488, 0
        %v5930 = vsel %vm385, %v5489, 0
        %v5933 = vsel %vm385, %v5490, 0
        %v5936 = vsel %vm385, %v5491, 0
        %v5939 = vsel %vm385, %v5492, 0
        %v5942 = vsel %vm385, %v5493, 0
        %v5945 = vsel %vm385, %v5494, 0
        %v5948 = vsel %vm385, %v5495, 0
        %v5951 = vsel %vm385, %v5496, 0
        %v5954 = vsel %vm385, %v5497, 0
        %v5957 = vsel %vm385, %v5498, 0
        %v5960 = vsel %vm385, %v5499, 0
        %v5963 = vsel %vm385, %v5500, 0
        %v5966 = vsel %vm385, %v5501, 0
        %v5969 = vsel %vm385, %v5502, 0
        %v5972 = vsel %vm385, %v5503, 0
        %v5975 = vsel %vm385, %v5504, 0
        %v5978 = vsel %vm385, %v5505, 0
        %5980 = vmatprep.subr.mxu0 0.0
        %5981 = vmatpush1.msra.mxu0 %v5506
        %5982 = vmatprep.subr.mxu0 0.0
        %5983 = vmatpush1.msra.mxu0 %v5507
        %5984 = vmatprep.subr.mxu0 0.0
        %5985 = vmatpush1.msra.mxu0 %v5508
        %5986 = vmatprep.subr.mxu0 0.0
        %5987 = vmatpush1.msra.mxu0 %v5509
        %5988 = vmatprep.subr.mxu0 0.0
        %5989 = vmatpush1.msra.mxu0 %v5510
        %5990 = vmatprep.subr.mxu0 0.0
        %5991 = vmatpush1.msra.mxu0 %v5511
        %5992 = vmatprep.subr.mxu0 0.0
        %5993 = vmatpush1.msra.mxu0 %v5512
        %5994 = vmatprep.subr.mxu0 0.0
        %5995 = vmatpush1.msra.mxu0 %v5513
        %5996 = vmatprep.subr.mxu0 0.0
        %5997 = vmatpush1.msra.mxu0 %v5514
        %5998 = vmatprep.subr.mxu0 0.0
        %5999 = vmatpush1.msra.mxu0 %v5515
        %6000 = vmatprep.subr.mxu0 0.0
        %6001 = vmatpush1.msra.mxu0 %v5516
        %6002 = vmatprep.subr.mxu0 0.0
        %6003 = vmatpush1.msra.mxu0 %v5517
        %6004 = vmatprep.subr.mxu0 0.0
        %6005 = vmatpush1.msra.mxu0 0.0
        %6006 = vmatprep.subr.mxu0 0.0
        %6007 = vmatpush1.msra.mxu0 0.0
        %6008 = vmatprep.subr.mxu0 0.0
        %6009 = vmatpush1.msra.mxu0 0.0
        %6010 = vmatprep.subr.mxu0 0.0
        %6011 = vmatpush1.msra.mxu0 0.0
        %6012 = vmatprep.subr.mxu0 0.0
        %6013 = vmatpush1.msra.mxu0 0.0
        %6014 = vmatprep.subr.mxu0 0.0
        %6015 = vmatpush1.msra.mxu0 0.0
        %6016 = vmatprep.subr.mxu0 0.0
        %6017 = vmatpush1.msra.mxu0 0.0
        %6018 = vmatprep.subr.mxu0 0.0
        %6019 = vmatpush1.msra.mxu0 0.0
        %6020 = vmatprep.subr.mxu0 0.0
        %6021 = vmatpush1.msra.mxu0 0.0
        %6022 = vmatprep.subr.mxu0 0.0
        %6023 = vmatpush1.msra.mxu0 0.0
        %6024 = vmatprep.subr.mxu0 0.0
        %6025 = vmatpush1.msra.mxu0 0.0
        %6026 = vmatprep.subr.mxu0 0.0
        %6027 = vmatpush1.msra.mxu0 0.0
        %6028 = vmatprep.subr.mxu0 0.0
        %6029 = vmatpush1.msra.mxu0 0.0
        %6030 = vmatprep.subr.mxu0 0.0
        %6031 = vmatpush1.msra.mxu0 0.0
        %6032 = vmatprep.subr.mxu0 0.0
        %6033 = vmatpush1.msra.mxu0 0.0
        %6034 = vmatprep.subr.mxu0 0.0
        %6035 = vmatpush1.msra.mxu0 0.0
        %6036 = vmatprep.subr.mxu0 0.0
        %6037 = vmatpush1.msra.mxu0 0.0
        %6038 = vmatprep.subr.mxu0 0.0
        %6039 = vmatpush1.msra.mxu0 0.0
        %6040 = vmatprep.subr.mxu0 0.0
        %6041 = vmatpush1.msra.mxu0 0.0
        %6042 = vmatprep.subr.mxu0 0.0
        %6043 = vmatpush1.msra.mxu0 0.0
        %6044 = vmatprep.mubr.f32.mxu0 0.0
        %6045 = vmatmul.mubr.f32.gmra.mrb[0].mxu0 %v5885
        %v6046 = vpop.f32.mrb[0].mxu0
        %v6047 = vadd.f32 %v5726, %v6046
        %v6048 = vpop.f32.mrb[0].mxu0
        %6049 = vmatprep.mubr.f32.mxu0 0.0
        %6050 = vmatmul.mubr.f32.gmra.mrb[0].mxu0 %v5888
        %v6051 = vpop.f32.mrb[0].mxu0
        %v6052 = vadd.f32 %v5731, %v6051
        %v6053 = vpop.f32.mrb[0].mxu0
        %6054 = vmatprep.mubr.f32.mxu0 0.0
        %6055 = vmatmul.mubr.f32.gmra.mrb[0].mxu0 %v5891
        %v6056 = vpop.f32.mrb[0].mxu0
        %v6057 = vadd.f32 %v5736, %v6056
        %v6058 = vpop.f32.mrb[0].mxu0
        %6059 = vmatprep.mubr.f32.mxu0 0.0
        %6060 = vmatmul.mubr.f32.gmra.mrb[0].mxu0 %v5894
        %v6061 = vpop.f32.mrb[0].mxu0
        %v6062 = vadd.f32 %v5741, %v6061
        %v6063 = vpop.f32.mrb[0].mxu0
        %6064 = vmatprep.mubr.f32.mxu0 0.0
        %6065 = vmatmul.mubr.f32.gmra.mrb[0].mxu0 %v5897
        %v6066 = vpop.f32.mrb[0].mxu0
        %v6067 = vadd.f32 %v5746, %v6066
        %v6068 = vpop.f32.mrb[0].mxu0
        %6069 = vmatprep.mubr.f32.mxu0 0.0
        %6070 = vmatmul.mubr.f32.gmra.mrb[0].mxu0 %v5900
        %v6071 = vpop.f32.mrb[0].mxu0
        %v6072 = vadd.f32 %v5751, %v6071
        %v6073 = vpop.f32.mrb[0].mxu0
        %6074 = vmatprep.mubr.f32.mxu0 0.0
        %6075 = vmatmul.mubr.f32.gmra.mrb[0].mxu0 %v5903
        %v6076 = vpop.f32.mrb[0].mxu0
        %v6077 = vadd.f32 %v5756, %v6076
        %v6078 = vpop.f32.mrb[0].mxu0
        %6079 = vmatprep.mubr.f32.mxu0 0.0
        %6080 = vmatmul.mubr.f32.gmra.mrb[0].mxu0 %v5906
        %v6081 = vpop.f32.mrb[0].mxu0
        %v6082 = vadd.f32 %v5761, %v6081
        %v6083 = vpop.f32.mrb[0].mxu0
        %6084 = vmatprep.mubr.f32.mxu0 0.0
        %6085 = vmatmul.mubr.f32.gmra.mrb[0].mxu0 %v5909
        %v6086 = vpop.f32.mrb[0].mxu0
        %v6087 = vadd.f32 %v5766, %v6086
        %v6088 = vpop.f32.mrb[0].mxu0
        %6089 = vmatprep.mubr.f32.mxu0 0.0
        %6090 = vmatmul.mubr.f32.gmra.mrb[0].mxu0 %v5912
        %v6091 = vpop.f32.mrb[0].mxu0
        %v6092 = vadd.f32 %v5771, %v6091
        %v6093 = vpop.f32.mrb[0].mxu0
        %6094 = vmatprep.mubr.f32.mxu0 0.0
        %6095 = vmatmul.mubr.f32.gmra.mrb[0].mxu0 %v5915
        %v6096 = vpop.f32.mrb[0].mxu0
        %v6097 = vadd.f32 %v5776, %v6096
        %v6098 = vpop.f32.mrb[0].mxu0
        %6099 = vmatprep.mubr.f32.mxu0 0.0
        %6100 = vmatmul.mubr.f32.gmra.mrb[0].mxu0 %v5918
        %v6101 = vpop.f32.mrb[0].mxu0
        %v6102 = vadd.f32 %v5781, %v6101
        %v6103 = vpop.f32.mrb[0].mxu0
        %6104 = vmatprep.mubr.f32.mxu0 0.0
        %6105 = vmatmul.mubr.f32.gmra.mrb[0].mxu0 %v5921
        %v6106 = vpop.f32.mrb[0].mxu0
        %v6107 = vadd.f32 %v5786, %v6106
        %v6108 = vpop.f32.mrb[0].mxu0
        %6109 = vmatprep.mubr.f32.mxu0 0.0
        %6110 = vmatmul.mubr.f32.gmra.mrb[0].mxu0 %v5924
        %v6111 = vpop.f32.mrb[0].mxu0
        %v6112 = vadd.f32 %v5791, %v6111
        %v6113 = vpop.f32.mrb[0].mxu0
        %6114 = vmatprep.mubr.f32.mxu0 0.0
        %6115 = vmatmul.mubr.f32.gmra.mrb[0].mxu0 %v5927
        %v6116 = vpop.f32.mrb[0].mxu0
        %v6117 = vadd.f32 %v5796, %v6116
        %v6118 = vpop.f32.mrb[0].mxu0
        %6119 = vmatprep.mubr.f32.mxu0 0.0
        %6120 = vmatmul.mubr.f32.gmra.mrb[0].mxu0 %v5930
        %v6121 = vpop.f32.mrb[0].mxu0
        %v6122 = vadd.f32 %v5801, %v6121
        %v6123 = vpop.f32.mrb[0].mxu0
        %6124 = vmatprep.mubr.f32.mxu0 0.0
        %6125 = vmatmul.mubr.f32.gmra.mrb[0].mxu0 %v5933
        %v6126 = vpop.f32.mrb[0].mxu0
        %v6127 = vadd.f32 %v5806, %v6126
        %v6128 = vpop.f32.mrb[0].mxu0
        %6129 = vmatprep.mubr.f32.mxu0 0.0
        %6130 = vmatmul.mubr.f32.gmra.mrb[0].mxu0 %v5936
        %v6131 = vpop.f32.mrb[0].mxu0
        %v6132 = vadd.f32 %v5811, %v6131
        %v6133 = vpop.f32.mrb[0].mxu0
        %6134 = vmatprep.mubr.f32.mxu0 0.0
        %6135 = vmatmul.mubr.f32.gmra.mrb[0].mxu0 %v5939
        %v6136 = vpop.f32.mrb[0].mxu0
        %v6137 = vadd.f32 %v5816, %v6136
        %v6138 = vpop.f32.mrb[0].mxu0
        %6139 = vmatprep.mubr.f32.mxu0 0.0
        %6140 = vmatmul.mubr.f32.gmra.mrb[0].mxu0 %v5942
        %v6141 = vpop.f32.mrb[0].mxu0
        %v6142 = vadd.f32 %v5821, %v6141
        %v6143 = vpop.f32.mrb[0].mxu0
        %6144 = vmatprep.mubr.f32.mxu0 0.0
        %6145 = vmatmul.mubr.f32.gmra.mrb[0].mxu0 %v5945
        %v6146 = vpop.f32.mrb[0].mxu0
        %v6147 = vadd.f32 %v5826, %v6146
        %v6148 = vpop.f32.mrb[0].mxu0
        %6149 = vmatprep.mubr.f32.mxu0 0.0
        %6150 = vmatmul.mubr.f32.gmra.mrb[0].mxu0 %v5948
        %v6151 = vpop.f32.mrb[0].mxu0
        %v6152 = vadd.f32 %v5831, %v6151
        %v6153 = vpop.f32.mrb[0].mxu0
        %6154 = vmatprep.mubr.f32.mxu0 0.0
        %6155 = vmatmul.mubr.f32.gmra.mrb[0].mxu0 %v5951
        %v6156 = vpop.f32.mrb[0].mxu0
        %v6157 = vadd.f32 %v5836, %v6156
        %v6158 = vpop.f32.mrb[0].mxu0
        %6159 = vmatprep.mubr.f32.mxu0 0.0
        %6160 = vmatmul.mubr.f32.gmra.mrb[0].mxu0 %v5954
        %v6161 = vpop.f32.mrb[0].mxu0
        %v6162 = vadd.f32 %v5841, %v6161
        %v6163 = vpop.f32.mrb[0].mxu0
        %6164 = vmatprep.mubr.f32.mxu0 0.0
        %6165 = vmatmul.mubr.f32.gmra.mrb[0].mxu0 %v5957
        %v6166 = vpop.f32.mrb[0].mxu0
        %v6167 = vadd.f32 %v5846, %v6166
        %v6168 = vpop.f32.mrb[0].mxu0
        %6169 = vmatprep.mubr.f32.mxu0 0.0
        %6170 = vmatmul.mubr.f32.gmra.mrb[0].mxu0 %v5960
        %v6171 = vpop.f32.mrb[0].mxu0
        %v6172 = vadd.f32 %v5851, %v6171
        %v6173 = vpop.f32.mrb[0].mxu0
        %6174 = vmatprep.mubr.f32.mxu0 0.0
        %6175 = vmatmul.mubr.f32.gmra.mrb[0].mxu0 %v5963
        %v6176 = vpop.f32.mrb[0].mxu0
        %v6177 = vadd.f32 %v5856, %v6176
        %v6178 = vpop.f32.mrb[0].mxu0
        %6179 = vmatprep.mubr.f32.mxu0 0.0
        %6180 = vmatmul.mubr.f32.gmra.mrb[0].mxu0 %v5966
        %v6181 = vpop.f32.mrb[0].mxu0
        %v6182 = vadd.f32 %v5861, %v6181
        %v6183 = vpop.f32.mrb[0].mxu0
        %6184 = vmatprep.mubr.f32.mxu0 0.0
        %6185 = vmatmul.mubr.f32.gmra.mrb[0].mxu0 %v5969
        %v6186 = vpop.f32.mrb[0].mxu0
        %v6187 = vadd.f32 %v5866, %v6186
        %v6188 = vpop.f32.mrb[0].mxu0
        %6189 = vmatprep.mubr.f32.mxu0 0.0
        %6190 = vmatmul.mubr.f32.gmra.mrb[0].mxu0 %v5972
        %v6191 = vpop.f32.mrb[0].mxu0
        %v6192 = vadd.f32 %v5871, %v6191
        %v6193 = vpop.f32.mrb[0].mxu0
        %6194 = vmatprep.mubr.f32.mxu0 0.0
        %6195 = vmatmul.mubr.f32.gmra.mrb[0].mxu0 %v5975
        %v6196 = vpop.f32.mrb[0].mxu0
        %v6197 = vadd.f32 %v5876, %v6196
        %v6198 = vpop.f32.mrb[0].mxu0
        %6199 = vmatprep.mubr.f32.mxu0 0.0
        %6200 = vmatmul.mubr.f32.gmra.mrb[0].mxu0 %v5978
        %v6201 = vpop.f32.mrb[0].mxu0
        %v6202 = vadd.f32 %v5881, %v6201
        %v6203 = vpop.f32.mrb[0].mxu0
        %6204 = vdwg.mxu0
        %v6205 = vld [vmem:[%s1548 + $0x8] sm:$0xff]
        %v6206 = vld [vmem:[%s1548 + $0x10] sm:$0xff]
        %v6207 = vld [vmem:[%s1548 + $0x28] sm:$0xff]
        %v6208 = vld [vmem:[%s1548 + $0x30] sm:$0xff]
        %v6209 = vld [vmem:[%s1548 + $0x48] sm:$0xff]
        %v6210 = vld [vmem:[%s1548 + $0x50] sm:$0xff]
        %v6211 = vld [vmem:[%s1548 + $0x68] sm:$0xff]
        %v6212 = vld [vmem:[%s1548 + $0x70] sm:$0xff]
        %v6213 = vld [vmem:[%s1548 + $0x88] sm:$0xff]
        %v6214 = vld [vmem:[%s1548 + $0x90] sm:$0xff]
        %v6215 = vld [vmem:[%s1548 + $0xa8] sm:$0xff]
        %v6216 = vld [vmem:[%s1548 + $0xb0] sm:$0xff]
        %v6217 = vld [vmem:[%s1548 + $0xc8] sm:$0xff]
        %v6218 = vld [vmem:[%s1548 + $0xd0] sm:$0xff]
        %v6219 = vld [vmem:[%s1548 + $0xe8] sm:$0xff]
        %v6220 = vld [vmem:[%s1548 + $0xf0] sm:$0xff]
        %v6221 = vld [vmem:[%s1548 + $0x108] sm:$0xff]
        %v6222 = vld [vmem:[%s1548 + $0x110] sm:$0xff]
        %v6223 = vld [vmem:[%s1548 + $0x128] sm:$0xff]
        %v6224 = vld [vmem:[%s1548 + $0x130] sm:$0xff]
        %v6225 = vld [vmem:[%s1548 + $0x148] sm:$0xff]
        %v6226 = vld [vmem:[%s1548 + $0x150] sm:$0xff]
        %v6227 = vld [vmem:[%s1548 + $0x168] sm:$0xff]
        %v6228 = vld [vmem:[%s1548 + $0x170] sm:$0xff]
        %v6229 = vld [vmem:[%s1548 + $0x188] sm:$0xff]
        %v6230 = vld [vmem:[%s1548 + $0x190] sm:$0xff]
        %v6231 = vld [vmem:[%s1548 + $0x1a8] sm:$0xff]
        %v6232 = vld [vmem:[%s1548 + $0x1b0] sm:$0xff]
        %v6233 = vld [vmem:[%s1548 + $0x1c8] sm:$0xff]
        %v6234 = vld [vmem:[%s1548 + $0x1d0] sm:$0xff]
        %v6235 = vld [vmem:[%s1548 + $0x1e8] sm:$0xff]
        %v6236 = vld [vmem:[%s1548 + $0x1f0] sm:$0xff]
        %s6237 = scalar_lea.vmem %s7, 192
        %v6238 = vld [vmem:[%s6237] sm:$0xff]
        %v6239 = vld [vmem:[%s6237 + $0x8] sm:$0xff]
        %v6240 = vld [vmem:[%s6237 + $0x10] sm:$0xff]
        %v6241 = vld [vmem:[%s6237 + $0x18] sm:$0xff]
        %v6242 = vld [vmem:[%s6237 + $0x20] sm:$0xff]
        %v6243 = vld [vmem:[%s6237 + $0x28] sm:$0xff]
        %v6244 = vld [vmem:[%s6237 + $0x30] sm:$0xff]
        %v6245 = vld [vmem:[%s6237 + $0x38] sm:$0xff]
        %v6246 = vld [vmem:[%s6237 + $0x40] sm:$0xff]
        %v6247 = vld [vmem:[%s6237 + $0x48] sm:$0xff]
        %v6248 = vld [vmem:[%s6237 + $0x50] sm:$0xff]
        %v6249 = vld [vmem:[%s6237 + $0x58] sm:$0xff]
        %v6251 = vsel %vm385, %v6205, 0
        %v6254 = vsel %vm385, %v6206, 0
        %v6257 = vsel %vm385, %v6207, 0
        %v6260 = vsel %vm385, %v6208, 0
        %v6263 = vsel %vm385, %v6209, 0
        %v6266 = vsel %vm385, %v6210, 0
        %v6269 = vsel %vm385, %v6211, 0
        %v6272 = vsel %vm385, %v6212, 0
        %v6275 = vsel %vm385, %v6213, 0
        %v6278 = vsel %vm385, %v6214, 0
        %v6281 = vsel %vm385, %v6215, 0
        %v6284 = vsel %vm385, %v6216, 0
        %v6287 = vsel %vm385, %v6217, 0
        %v6290 = vsel %vm385, %v6218, 0
        %v6293 = vsel %vm385, %v6219, 0
        %v6296 = vsel %vm385, %v6220, 0
        %v6299 = vsel %vm385, %v6221, 0
        %v6302 = vsel %vm385, %v6222, 0
        %v6305 = vsel %vm385, %v6223, 0
        %v6308 = vsel %vm385, %v6224, 0
        %v6311 = vsel %vm385, %v6225, 0
        %v6314 = vsel %vm385, %v6226, 0
        %v6317 = vsel %vm385, %v6227, 0
        %v6320 = vsel %vm385, %v6228, 0
        %v6323 = vsel %vm385, %v6229, 0
        %v6326 = vsel %vm385, %v6230, 0
        %v6329 = vsel %vm385, %v6231, 0
        %v6332 = vsel %vm385, %v6232, 0
        %v6335 = vsel %vm385, %v6233, 0
        %v6338 = vsel %vm385, %v6234, 0
        %v6341 = vsel %vm385, %v6235, 0
        %v6344 = vsel %vm385, %v6236, 0
        %6346 = vmatprep.subr.mxu0 0.0
        %6347 = vmatpush1.msra.mxu0 %v6238
        %6348 = vmatprep.subr.mxu0 0.0
        %6349 = vmatpush1.msra.mxu0 %v6239
        %6350 = vmatprep.subr.mxu0 0.0
        %6351 = vmatpush1.msra.mxu0 %v6240
        %6352 = vmatprep.subr.mxu0 0.0
        %6353 = vmatpush1.msra.mxu0 %v6241
        %6354 = vmatprep.subr.mxu0 0.0
        %6355 = vmatpush1.msra.mxu0 %v6242
        %6356 = vmatprep.subr.mxu0 0.0
        %6357 = vmatpush1.msra.mxu0 %v6243
        %6358 = vmatprep.subr.mxu0 0.0
        %6359 = vmatpush1.msra.mxu0 %v6244
        %6360 = vmatprep.subr.mxu0 0.0
        %6361 = vmatpush1.msra.mxu0 %v6245
        %6362 = vmatprep.subr.mxu0 0.0
        %6363 = vmatpush1.msra.mxu0 %v6246
        %6364 = vmatprep.subr.mxu0 0.0
        %6365 = vmatpush1.msra.mxu0 %v6247
        %6366 = vmatprep.subr.mxu0 0.0
        %6367 = vmatpush1.msra.mxu0 %v6248
        %6368 = vmatprep.subr.mxu0 0.0
        %6369 = vmatpush1.msra.mxu0 %v6249
        %6370 = vmatprep.subr.mxu0 0.0
        %6371 = vmatpush1.msra.mxu0 0.0
        %6372 = vmatprep.subr.mxu0 0.0
        %6373 = vmatpush1.msra.mxu0 0.0
        %6374 = vmatprep.subr.mxu0 0.0
        %6375 = vmatpush1.msra.mxu0 0.0
        %6376 = vmatprep.subr.mxu0 0.0
        %6377 = vmatpush1.msra.mxu0 0.0
        %6378 = vmatprep.subr.mxu0 0.0
        %6379 = vmatpush1.msra.mxu0 0.0
        %6380 = vmatprep.subr.mxu0 0.0
        %6381 = vmatpush1.msra.mxu0 0.0
        %6382 = vmatprep.subr.mxu0 0.0
        %6383 = vmatpush1.msra.mxu0 0.0
        %6384 = vmatprep.subr.mxu0 0.0
        %6385 = vmatpush1.msra.mxu0 0.0
        %6386 = vmatprep.subr.mxu0 0.0
        %6387 = vmatpush1.msra.mxu0 0.0
        %6388 = vmatprep.subr.mxu0 0.0
        %6389 = vmatpush1.msra.mxu0 0.0
        %6390 = vmatprep.subr.mxu0 0.0
        %6391 = vmatpush1.msra.mxu0 0.0
        %6392 = vmatprep.subr.mxu0 0.0
        %6393 = vmatpush1.msra.mxu0 0.0
        %6394 = vmatprep.subr.mxu0 0.0
        %6395 = vmatpush1.msra.mxu0 0.0
        %6396 = vmatprep.subr.mxu0 0.0
        %6397 = vmatpush1.msra.mxu0 0.0
        %6398 = vmatprep.subr.mxu0 0.0
        %6399 = vmatpush1.msra.mxu0 0.0
        %6400 = vmatprep.subr.mxu0 0.0
        %6401 = vmatpush1.msra.mxu0 0.0
        %6402 = vmatprep.subr.mxu0 0.0
        %6403 = vmatpush1.msra.mxu0 0.0
        %6404 = vmatprep.subr.mxu0 0.0
        %6405 = vmatpush1.msra.mxu0 0.0
        %6406 = vmatprep.subr.mxu0 0.0
        %6407 = vmatpush1.msra.mxu0 0.0
        %6408 = vmatprep.subr.mxu0 0.0
        %6409 = vmatpush1.msra.mxu0 0.0
        %6410 = vmatprep.mubr.f32.mxu0 0.0
        %6411 = vmatmul.mubr.f32.gmra.mrb[0].mxu0 %v6251
        %v6412 = vpop.f32.mrb[0].mxu0
        %v6413 = vadd.f32 0.0, %v6412
        %v6414 = vpop.f32.mrb[0].mxu0
        %6415 = vmatprep.mubr.f32.mxu0 0.0
        %6416 = vmatmul.mubr.f32.gmra.mrb[0].mxu0 %v6254
        %v6417 = vpop.f32.mrb[0].mxu0
        %v6418 = vadd.f32 0.0, %v6417
        %v6419 = vpop.f32.mrb[0].mxu0
        %6420 = vmatprep.mubr.f32.mxu0 0.0
        %6421 = vmatmul.mubr.f32.gmra.mrb[0].mxu0 %v6257
        %v6422 = vpop.f32.mrb[0].mxu0
        %v6423 = vadd.f32 0.0, %v6422
        %v6424 = vpop.f32.mrb[0].mxu0
        %6425 = vmatprep.mubr.f32.mxu0 0.0
        %6426 = vmatmul.mubr.f32.gmra.mrb[0].mxu0 %v6260
        %v6427 = vpop.f32.mrb[0].mxu0
        %v6428 = vadd.f32 0.0, %v6427
        %v6429 = vpop.f32.mrb[0].mxu0
        %6430 = vmatprep.mubr.f32.mxu0 0.0
        %6431 = vmatmul.mubr.f32.gmra.mrb[0].mxu0 %v6263
        %v6432 = vpop.f32.mrb[0].mxu0
        %v6433 = vadd.f32 0.0, %v6432
        %v6434 = vpop.f32.mrb[0].mxu0
        %6435 = vmatprep.mubr.f32.mxu0 0.0
        %6436 = vmatmul.mubr.f32.gmra.mrb[0].mxu0 %v6266
        %v6437 = vpop.f32.mrb[0].mxu0
        %v6438 = vadd.f32 0.0, %v6437
        %v6439 = vpop.f32.mrb[0].mxu0
        %6440 = vmatprep.mubr.f32.mxu0 0.0
        %6441 = vmatmul.mubr.f32.gmra.mrb[0].mxu0 %v6269
        %v6442 = vpop.f32.mrb[0].mxu0
        %v6443 = vadd.f32 0.0, %v6442
        %v6444 = vpop.f32.mrb[0].mxu0
        %6445 = vmatprep.mubr.f32.mxu0 0.0
        %6446 = vmatmul.mubr.f32.gmra.mrb[0].mxu0 %v6272
        %v6447 = vpop.f32.mrb[0].mxu0
        %v6448 = vadd.f32 0.0, %v6447
        %v6449 = vpop.f32.mrb[0].mxu0
        %6450 = vmatprep.mubr.f32.mxu0 0.0
        %6451 = vmatmul.mubr.f32.gmra.mrb[0].mxu0 %v6275
        %v6452 = vpop.f32.mrb[0].mxu0
        %v6453 = vadd.f32 0.0, %v6452
        %v6454 = vpop.f32.mrb[0].mxu0
        %6455 = vmatprep.mubr.f32.mxu0 0.0
        %6456 = vmatmul.mubr.f32.gmra.mrb[0].mxu0 %v6278
        %v6457 = vpop.f32.mrb[0].mxu0
        %v6458 = vadd.f32 0.0, %v6457
        %v6459 = vpop.f32.mrb[0].mxu0
        %6460 = vmatprep.mubr.f32.mxu0 0.0
        %6461 = vmatmul.mubr.f32.gmra.mrb[0].mxu0 %v6281
        %v6462 = vpop.f32.mrb[0].mxu0
        %v6463 = vadd.f32 0.0, %v6462
        %v6464 = vpop.f32.mrb[0].mxu0
        %6465 = vmatprep.mubr.f32.mxu0 0.0
        %6466 = vmatmul.mubr.f32.gmra.mrb[0].mxu0 %v6284
        %v6467 = vpop.f32.mrb[0].mxu0
        %v6468 = vadd.f32 0.0, %v6467
        %v6469 = vpop.f32.mrb[0].mxu0
        %6470 = vmatprep.mubr.f32.mxu0 0.0
        %6471 = vmatmul.mubr.f32.gmra.mrb[0].mxu0 %v6287
        %v6472 = vpop.f32.mrb[0].mxu0
        %v6473 = vadd.f32 0.0, %v6472
        %v6474 = vpop.f32.mrb[0].mxu0
        %6475 = vmatprep.mubr.f32.mxu0 0.0
        %6476 = vmatmul.mubr.f32.gmra.mrb[0].mxu0 %v6290
        %v6477 = vpop.f32.mrb[0].mxu0
        %v6478 = vadd.f32 0.0, %v6477
        %v6479 = vpop.f32.mrb[0].mxu0
        %6480 = vmatprep.mubr.f32.mxu0 0.0
        %6481 = vmatmul.mubr.f32.gmra.mrb[0].mxu0 %v6293
        %v6482 = vpop.f32.mrb[0].mxu0
        %v6483 = vadd.f32 0.0, %v6482
        %v6484 = vpop.f32.mrb[0].mxu0
        %6485 = vmatprep.mubr.f32.mxu0 0.0
        %6486 = vmatmul.mubr.f32.gmra.mrb[0].mxu0 %v6296
        %v6487 = vpop.f32.mrb[0].mxu0
        %v6488 = vadd.f32 0.0, %v6487
        %v6489 = vpop.f32.mrb[0].mxu0
        %6490 = vmatprep.mubr.f32.mxu0 0.0
        %6491 = vmatmul.mubr.f32.gmra.mrb[0].mxu0 %v6299
        %v6492 = vpop.f32.mrb[0].mxu0
        %v6493 = vadd.f32 0.0, %v6492
        %v6494 = vpop.f32.mrb[0].mxu0
        %6495 = vmatprep.mubr.f32.mxu0 0.0
        %6496 = vmatmul.mubr.f32.gmra.mrb[0].mxu0 %v6302
        %v6497 = vpop.f32.mrb[0].mxu0
        %v6498 = vadd.f32 0.0, %v6497
        %v6499 = vpop.f32.mrb[0].mxu0
        %6500 = vmatprep.mubr.f32.mxu0 0.0
        %6501 = vmatmul.mubr.f32.gmra.mrb[0].mxu0 %v6305
        %v6502 = vpop.f32.mrb[0].mxu0
        %v6503 = vadd.f32 0.0, %v6502
        %v6504 = vpop.f32.mrb[0].mxu0
        %6505 = vmatprep.mubr.f32.mxu0 0.0
        %6506 = vmatmul.mubr.f32.gmra.mrb[0].mxu0 %v6308
        %v6507 = vpop.f32.mrb[0].mxu0
        %v6508 = vadd.f32 0.0, %v6507
        %v6509 = vpop.f32.mrb[0].mxu0
        %6510 = vmatprep.mubr.f32.mxu0 0.0
        %6511 = vmatmul.mubr.f32.gmra.mrb[0].mxu0 %v6311
        %v6512 = vpop.f32.mrb[0].mxu0
        %v6513 = vadd.f32 0.0, %v6512
        %v6514 = vpop.f32.mrb[0].mxu0
        %6515 = vmatprep.mubr.f32.mxu0 0.0
        %6516 = vmatmul.mubr.f32.gmra.mrb[0].mxu0 %v6314
        %v6517 = vpop.f32.mrb[0].mxu0
        %v6518 = vadd.f32 0.0, %v6517
        %v6519 = vpop.f32.mrb[0].mxu0
        %6520 = vmatprep.mubr.f32.mxu0 0.0
        %6521 = vmatmul.mubr.f32.gmra.mrb[0].mxu0 %v6317
        %v6522 = vpop.f32.mrb[0].mxu0
        %v6523 = vadd.f32 0.0, %v6522
        %v6524 = vpop.f32.mrb[0].mxu0
        %6525 = vmatprep.mubr.f32.mxu0 0.0
        %6526 = vmatmul.mubr.f32.gmra.mrb[0].mxu0 %v6320
        %v6527 = vpop.f32.mrb[0].mxu0
        %v6528 = vadd.f32 0.0, %v6527
        %v6529 = vpop.f32.mrb[0].mxu0
        %6530 = vmatprep.mubr.f32.mxu0 0.0
        %6531 = vmatmul.mubr.f32.gmra.mrb[0].mxu0 %v6323
        %v6532 = vpop.f32.mrb[0].mxu0
        %v6533 = vadd.f32 0.0, %v6532
        %v6534 = vpop.f32.mrb[0].mxu0
        %6535 = vmatprep.mubr.f32.mxu0 0.0
        %6536 = vmatmul.mubr.f32.gmra.mrb[0].mxu0 %v6326
        %v6537 = vpop.f32.mrb[0].mxu0
        %v6538 = vadd.f32 0.0, %v6537
        %v6539 = vpop.f32.mrb[0].mxu0
        %6540 = vmatprep.mubr.f32.mxu0 0.0
        %6541 = vmatmul.mubr.f32.gmra.mrb[0].mxu0 %v6329
        %v6542 = vpop.f32.mrb[0].mxu0
        %v6543 = vadd.f32 0.0, %v6542
        %v6544 = vpop.f32.mrb[0].mxu0
        %6545 = vmatprep.mubr.f32.mxu0 0.0
        %6546 = vmatmul.mubr.f32.gmra.mrb[0].mxu0 %v6332
        %v6547 = vpop.f32.mrb[0].mxu0
        %v6548 = vadd.f32 0.0, %v6547
        %v6549 = vpop.f32.mrb[0].mxu0
        %6550 = vmatprep.mubr.f32.mxu0 0.0
        %6551 = vmatmul.mubr.f32.gmra.mrb[0].mxu0 %v6335
        %v6552 = vpop.f32.mrb[0].mxu0
        %v6553 = vadd.f32 0.0, %v6552
        %v6554 = vpop.f32.mrb[0].mxu0
        %6555 = vmatprep.mubr.f32.mxu0 0.0
        %6556 = vmatmul.mubr.f32.gmra.mrb[0].mxu0 %v6338
        %v6557 = vpop.f32.mrb[0].mxu0
        %v6558 = vadd.f32 0.0, %v6557
        %v6559 = vpop.f32.mrb[0].mxu0
        %6560 = vmatprep.mubr.f32.mxu0 0.0
        %6561 = vmatmul.mubr.f32.gmra.mrb[0].mxu0 %v6341
        %v6562 = vpop.f32.mrb[0].mxu0
        %v6563 = vadd.f32 0.0, %v6562
        %v6564 = vpop.f32.mrb[0].mxu0
        %6565 = vmatprep.mubr.f32.mxu0 0.0
        %6566 = vmatmul.mubr.f32.gmra.mrb[0].mxu0 %v6344
        %v6567 = vpop.f32.mrb[0].mxu0
        %v6568 = vadd.f32 0.0, %v6567
        %v6569 = vpop.f32.mrb[0].mxu0
        %6570 = vdwg.mxu0
        %v6571 = vadd.f32 %v6047, %v6413
        %v6572 = vadd.f32 %v6052, %v6418
        %v6573 = vadd.f32 %v6057, %v6423
        %v6574 = vadd.f32 %v6062, %v6428
        %v6575 = vadd.f32 %v6067, %v6433
        %v6576 = vadd.f32 %v6072, %v6438
        %v6577 = vadd.f32 %v6077, %v6443
        %v6578 = vadd.f32 %v6082, %v6448
        %v6579 = vadd.f32 %v6087, %v6453
        %v6580 = vadd.f32 %v6092, %v6458
        %v6581 = vadd.f32 %v6097, %v6463
        %v6582 = vadd.f32 %v6102, %v6468
        %v6583 = vadd.f32 %v6107, %v6473
        %v6584 = vadd.f32 %v6112, %v6478
        %v6585 = vadd.f32 %v6117, %v6483
        %v6586 = vadd.f32 %v6122, %v6488
        %v6587 = vadd.f32 %v6127, %v6493
        %v6588 = vadd.f32 %v6132, %v6498
        %v6589 = vadd.f32 %v6137, %v6503
        %v6590 = vadd.f32 %v6142, %v6508
        %v6591 = vadd.f32 %v6147, %v6513
        %v6592 = vadd.f32 %v6152, %v6518
        %v6593 = vadd.f32 %v6157, %v6523
        %v6594 = vadd.f32 %v6162, %v6528
        %v6595 = vadd.f32 %v6167, %v6533
        %v6596 = vadd.f32 %v6172, %v6538
        %v6597 = vadd.f32 %v6177, %v6543
        %v6598 = vadd.f32 %v6182, %v6548
        %v6599 = vadd.f32 %v6187, %v6553
        %v6600 = vadd.f32 %v6192, %v6558
        %v6601 = vadd.f32 %v6197, %v6563
        %v6602 = vadd.f32 %v6202, %v6568
        %v6603 = vld [vmem:[%s8] sm:$0x1]
        %v6605 = vlaneseq
        %v6606 = vshrl.u32 %v6605, 7
        %v6607 = vsub.s32 0, %v6606
        %v6608 = vrot.slane %v6603, %v6607
        %v6610 = vadd.f32 %v6571, %v6608
        %v6611 = vadd.f32 %v6572, %v6608
        %v6612 = vadd.f32 %v6573, %v6608
        %v6613 = vadd.f32 %v6574, %v6608
        %v6614 = vadd.f32 %v6575, %v6608
        %v6615 = vadd.f32 %v6576, %v6608
        %v6616 = vadd.f32 %v6577, %v6608
        %v6617 = vadd.f32 %v6578, %v6608
        %v6618 = vadd.f32 %v6579, %v6608
        %v6619 = vadd.f32 %v6580, %v6608
        %v6620 = vadd.f32 %v6581, %v6608
        %v6621 = vadd.f32 %v6582, %v6608
        %v6622 = vadd.f32 %v6583, %v6608
        %v6623 = vadd.f32 %v6584, %v6608
        %v6624 = vadd.f32 %v6585, %v6608
        %v6625 = vadd.f32 %v6586, %v6608
        %v6626 = vadd.f32 %v6587, %v6608
        %v6627 = vadd.f32 %v6588, %v6608
        %v6628 = vadd.f32 %v6589, %v6608
        %v6629 = vadd.f32 %v6590, %v6608
        %v6630 = vadd.f32 %v6591, %v6608
        %v6631 = vadd.f32 %v6592, %v6608
        %v6632 = vadd.f32 %v6593, %v6608
        %v6633 = vadd.f32 %v6594, %v6608
        %v6634 = vadd.f32 %v6595, %v6608
        %v6635 = vadd.f32 %v6596, %v6608
        %v6636 = vadd.f32 %v6597, %v6608
        %v6637 = vadd.f32 %v6598, %v6608
        %v6638 = vadd.f32 %v6599, %v6608
        %v6639 = vadd.f32 %v6600, %v6608
        %v6640 = vadd.f32 %v6601, %v6608
        %v6641 = vadd.f32 %v6602, %v6608
        %v6642 = vmax.f32 %v6610, 0.0
        %v6643 = vmax.f32 %v6611, 0.0
        %v6644 = vmax.f32 %v6612, 0.0
        %v6645 = vmax.f32 %v6613, 0.0
        %v6646 = vmax.f32 %v6614, 0.0
        %v6647 = vmax.f32 %v6615, 0.0
        %v6648 = vmax.f32 %v6616, 0.0
        %v6649 = vmax.f32 %v6617, 0.0
        %v6650 = vmax.f32 %v6618, 0.0
        %v6651 = vmax.f32 %v6619, 0.0
        %v6652 = vmax.f32 %v6620, 0.0
        %v6653 = vmax.f32 %v6621, 0.0
        %v6654 = vmax.f32 %v6622, 0.0
        %v6655 = vmax.f32 %v6623, 0.0
        %v6656 = vmax.f32 %v6624, 0.0
        %v6657 = vmax.f32 %v6625, 0.0
        %v6658 = vmax.f32 %v6626, 0.0
        %v6659 = vmax.f32 %v6627, 0.0
        %v6660 = vmax.f32 %v6628, 0.0
        %v6661 = vmax.f32 %v6629, 0.0
        %v6662 = vmax.f32 %v6630, 0.0
        %v6663 = vmax.f32 %v6631, 0.0
        %v6664 = vmax.f32 %v6632, 0.0
        %v6665 = vmax.f32 %v6633, 0.0
        %v6666 = vmax.f32 %v6634, 0.0
        %v6667 = vmax.f32 %v6635, 0.0
        %v6668 = vmax.f32 %v6636, 0.0
        %v6669 = vmax.f32 %v6637, 0.0
        %v6670 = vmax.f32 %v6638, 0.0
        %v6671 = vmax.f32 %v6639, 0.0
        %v6672 = vmax.f32 %v6640, 0.0
        %v6673 = vmax.f32 %v6641, 0.0
        %6706 = vrot.lane.b32.xlu0 %v6642, 96
        %v6707 = vpop.permute.xlu0 %6706
        %6708 = vrot.lane.b32.xlu0 %v6643, 96
        %v6709 = vpop.permute.xlu0 %6708
        %6710 = vrot.lane.b32.xlu0 %v6644, 96
        %v6711 = vpop.permute.xlu0 %6710
        %6712 = vrot.lane.b32.xlu0 %v6645, 96
        %v6713 = vpop.permute.xlu0 %6712
        %6714 = vrot.lane.b32.xlu0 %v6646, 96
        %v6715 = vpop.permute.xlu0 %6714
        %6716 = vrot.lane.b32.xlu0 %v6647, 96
        %v6717 = vpop.permute.xlu0 %6716
        %6718 = vrot.lane.b32.xlu0 %v6648, 96
        %v6719 = vpop.permute.xlu0 %6718
        %6720 = vrot.lane.b32.xlu0 %v6649, 96
        %v6721 = vpop.permute.xlu0 %6720
        %6722 = vrot.lane.b32.xlu0 %v6650, 96
        %v6723 = vpop.permute.xlu0 %6722
        %6724 = vrot.lane.b32.xlu0 %v6651, 96
        %v6725 = vpop.permute.xlu0 %6724
        %6726 = vrot.lane.b32.xlu0 %v6652, 96
        %v6727 = vpop.permute.xlu0 %6726
        %6728 = vrot.lane.b32.xlu0 %v6653, 96
        %v6729 = vpop.permute.xlu0 %6728
        %6730 = vrot.lane.b32.xlu0 %v6654, 96
        %v6731 = vpop.permute.xlu0 %6730
        %6732 = vrot.lane.b32.xlu0 %v6655, 96
        %v6733 = vpop.permute.xlu0 %6732
        %6734 = vrot.lane.b32.xlu0 %v6656, 96
        %v6735 = vpop.permute.xlu0 %6734
        %6736 = vrot.lane.b32.xlu0 %v6657, 96
        %v6737 = vpop.permute.xlu0 %6736
        %6738 = vrot.lane.b32.xlu0 %v6658, 96
        %v6739 = vpop.permute.xlu0 %6738
        %6740 = vrot.lane.b32.xlu0 %v6659, 96
        %v6741 = vpop.permute.xlu0 %6740
        %6742 = vrot.lane.b32.xlu0 %v6660, 96
        %v6743 = vpop.permute.xlu0 %6742
        %6744 = vrot.lane.b32.xlu0 %v6661, 96
        %v6745 = vpop.permute.xlu0 %6744
        %6746 = vrot.lane.b32.xlu0 %v6662, 96
        %v6747 = vpop.permute.xlu0 %6746
        %6748 = vrot.lane.b32.xlu0 %v6663, 96
        %v6749 = vpop.permute.xlu0 %6748
        %6750 = vrot.lane.b32.xlu0 %v6664, 96
        %v6751 = vpop.permute.xlu0 %6750
        %6752 = vrot.lane.b32.xlu0 %v6665, 96
        %v6753 = vpop.permute.xlu0 %6752
        %6754 = vrot.lane.b32.xlu0 %v6666, 96
        %v6755 = vpop.permute.xlu0 %6754
        %6756 = vrot.lane.b32.xlu0 %v6667, 96
        %v6757 = vpop.permute.xlu0 %6756
        %6758 = vrot.lane.b32.xlu0 %v6668, 96
        %v6759 = vpop.permute.xlu0 %6758
        %6760 = vrot.lane.b32.xlu0 %v6669, 96
        %v6761 = vpop.permute.xlu0 %6760
        %6762 = vrot.lane.b32.xlu0 %v6670, 96
        %v6763 = vpop.permute.xlu0 %6762
        %6764 = vrot.lane.b32.xlu0 %v6671, 96
        %v6765 = vpop.permute.xlu0 %6764
        %6766 = vrot.lane.b32.xlu0 %v6672, 96
        %v6767 = vpop.permute.xlu0 %6766
        %6768 = vrot.lane.b32.xlu0 %v6673, 96
        %v6769 = vpop.permute.xlu0 %6768
        %vm6802 = vcmask 1048320
        %6803 = vst.msk [vmem:[#allocation3] sm:$0xff] %vm6802, %v6707
        %6804 = vst.msk [vmem:[#allocation3 + $0x8] sm:$0xff] %vm6802, %v6709
        %6805 = vst.msk [vmem:[#allocation3 + $0x10] sm:$0xff] %vm6802, %v6711
        %6806 = vst.msk [vmem:[#allocation3 + $0x18] sm:$0xff] %vm6802, %v6713
        %6807 = vst.msk [vmem:[#allocation3 + $0x20] sm:$0xff] %vm6802, %v6715
        %6808 = vst.msk [vmem:[#allocation3 + $0x28] sm:$0xff] %vm6802, %v6717
        %6809 = vst.msk [vmem:[#allocation3 + $0x30] sm:$0xff] %vm6802, %v6719
        %6810 = vst.msk [vmem:[#allocation3 + $0x38] sm:$0xff] %vm6802, %v6721
        %6811 = vst.msk [vmem:[#allocation3 + $0x40] sm:$0xff] %vm6802, %v6723
        %6812 = vst.msk [vmem:[#allocation3 + $0x48] sm:$0xff] %vm6802, %v6725
        %6813 = vst.msk [vmem:[#allocation3 + $0x50] sm:$0xff] %vm6802, %v6727
        %6814 = vst.msk [vmem:[#allocation3 + $0x58] sm:$0xff] %vm6802, %v6729
        %6815 = vst.msk [vmem:[#allocation3 + $0x60] sm:$0xff] %vm6802, %v6731
        %6816 = vst.msk [vmem:[#allocation3 + $0x68] sm:$0xff] %vm6802, %v6733
        %6817 = vst.msk [vmem:[#allocation3 + $0x70] sm:$0xff] %vm6802, %v6735
        %6818 = vst.msk [vmem:[#allocation3 + $0x78] sm:$0xff] %vm6802, %v6737
        %6819 = vst.msk [vmem:[#allocation3 + $0x80] sm:$0xff] %vm6802, %v6739
        %6820 = vst.msk [vmem:[#allocation3 + $0x88] sm:$0xff] %vm6802, %v6741
        %6821 = vst.msk [vmem:[#allocation3 + $0x90] sm:$0xff] %vm6802, %v6743
        %6822 = vst.msk [vmem:[#allocation3 + $0x98] sm:$0xff] %vm6802, %v6745
        %6823 = vst.msk [vmem:[#allocation3 + $0xa0] sm:$0xff] %vm6802, %v6747
        %6824 = vst.msk [vmem:[#allocation3 + $0xa8] sm:$0xff] %vm6802, %v6749
        %6825 = vst.msk [vmem:[#allocation3 + $0xb0] sm:$0xff] %vm6802, %v6751
        %6826 = vst.msk [vmem:[#allocation3 + $0xb8] sm:$0xff] %vm6802, %v6753
        %6827 = vst.msk [vmem:[#allocation3 + $0xc0] sm:$0xff] %vm6802, %v6755
        %6828 = vst.msk [vmem:[#allocation3 + $0xc8] sm:$0xff] %vm6802, %v6757
        %6829 = vst.msk [vmem:[#allocation3 + $0xd0] sm:$0xff] %vm6802, %v6759
        %6830 = vst.msk [vmem:[#allocation3 + $0xd8] sm:$0xff] %vm6802, %v6761
        %6831 = vst.msk [vmem:[#allocation3 + $0xe0] sm:$0xff] %vm6802, %v6763
        %6832 = vst.msk [vmem:[#allocation3 + $0xe8] sm:$0xff] %vm6802, %v6765
        %6833 = vst.msk [vmem:[#allocation3 + $0xf0] sm:$0xff] %vm6802, %v6767
        %6834 = vst.msk [vmem:[#allocation3 + $0xf8] sm:$0xff] %vm6802, %v6769
        %v6835 = vld [vmem:[#allocation3] sm:$0xff]
        %v6836 = vld [vmem:[#allocation3 + $0x8] sm:$0xff]
        %v6837 = vld [vmem:[#allocation3 + $0x10] sm:$0xff]
        %v6838 = vld [vmem:[#allocation3 + $0x18] sm:$0xff]
        %v6839 = vld [vmem:[#allocation3 + $0x20] sm:$0xff]
        %v6840 = vld [vmem:[#allocation3 + $0x28] sm:$0xff]
        %v6841 = vld [vmem:[#allocation3 + $0x30] sm:$0xff]
        %v6842 = vld [vmem:[#allocation3 + $0x38] sm:$0xff]
        %v6843 = vld [vmem:[#allocation3 + $0x40] sm:$0xff]
        %v6844 = vld [vmem:[#allocation3 + $0x48] sm:$0xff]
        %v6845 = vld [vmem:[#allocation3 + $0x50] sm:$0xff]
        %v6846 = vld [vmem:[#allocation3 + $0x58] sm:$0xff]
        %v6847 = vld [vmem:[#allocation3 + $0x60] sm:$0xff]
        %v6848 = vld [vmem:[#allocation3 + $0x68] sm:$0xff]
        %v6849 = vld [vmem:[#allocation3 + $0x70] sm:$0xff]
        %v6850 = vld [vmem:[#allocation3 + $0x78] sm:$0xff]
        %v6851 = vld [vmem:[#allocation3 + $0x80] sm:$0xff]
        %v6852 = vld [vmem:[#allocation3 + $0x88] sm:$0xff]
        %v6853 = vld [vmem:[#allocation3 + $0x90] sm:$0xff]
        %v6854 = vld [vmem:[#allocation3 + $0x98] sm:$0xff]
        %v6855 = vld [vmem:[#allocation3 + $0xa0] sm:$0xff]
        %v6856 = vld [vmem:[#allocation3 + $0xa8] sm:$0xff]
        %v6857 = vld [vmem:[#allocation3 + $0xb0] sm:$0xff]
        %v6858 = vld [vmem:[#allocation3 + $0xb8] sm:$0xff]
        %v6859 = vld [vmem:[#allocation3 + $0xc0] sm:$0xff]
        %v6860 = vld [vmem:[#allocation3 + $0xc8] sm:$0xff]
        %v6861 = vld [vmem:[#allocation3 + $0xd0] sm:$0xff]
        %v6862 = vld [vmem:[#allocation3 + $0xd8] sm:$0xff]
        %v6863 = vld [vmem:[#allocation3 + $0xe0] sm:$0xff]
        %v6864 = vld [vmem:[#allocation3 + $0xe8] sm:$0xff]
        %v6865 = vld [vmem:[#allocation3 + $0xf0] sm:$0xff]
        %v6866 = vld [vmem:[#allocation3 + $0xf8] sm:$0xff]
        %v6867 = vld [vmem:[%s9] sm:$0xff]
        %v6868 = vld [vmem:[%s9 + $0x8] sm:$0xff]
        %v6869 = vld [vmem:[%s9 + $0x10] sm:$0xff]
        %v6870 = vld [vmem:[%s9 + $0x18] sm:$0xff]
        %v6871 = vld [vmem:[%s9 + $0x20] sm:$0xff]
        %v6872 = vld [vmem:[%s9 + $0x28] sm:$0xff]
        %v6873 = vld [vmem:[%s9 + $0x30] sm:$0xff]
        %v6874 = vld [vmem:[%s9 + $0x38] sm:$0xff]
        %v6875 = vld [vmem:[%s9 + $0x40] sm:$0xff]
        %v6876 = vld [vmem:[%s9 + $0x48] sm:$0xff]
        %v6877 = vld [vmem:[%s9 + $0x50] sm:$0xff]
        %v6878 = vld [vmem:[%s9 + $0x58] sm:$0xff]
        %v6879 = vld [vmem:[%s9 + $0x60] sm:$0xff]
        %v6880 = vld [vmem:[%s9 + $0x68] sm:$0xff]
        %v6881 = vld [vmem:[%s9 + $0x70] sm:$0xff]
        %v6882 = vld [vmem:[%s9 + $0x78] sm:$0xff]
        %v6883 = vld [vmem:[%s10] sm:$0x1]
        %v6885 = vlaneseq
        %v6886 = vshrl.u32 %v6885, 7
        %v6887 = vsub.s32 0, %v6886
        %v6888 = vrot.slane %v6883, %v6887
        %6890 = vmatprep.subr.mxu0 0.0
        %6891 = vmatpush1.msra.mxu0 %v6867
        %6892 = vmatprep.subr.mxu0 0.0
        %6893 = vmatpush1.msra.mxu0 %v6868
        %6894 = vmatprep.subr.mxu0 0.0
        %6895 = vmatpush1.msra.mxu0 %v6869
        %6896 = vmatprep.subr.mxu0 0.0
        %6897 = vmatpush1.msra.mxu0 %v6870
        %6898 = vmatprep.subr.mxu0 0.0
        %6899 = vmatpush1.msra.mxu0 %v6871
        %6900 = vmatprep.subr.mxu0 0.0
        %6901 = vmatpush1.msra.mxu0 %v6872
        %6902 = vmatprep.subr.mxu0 0.0
        %6903 = vmatpush1.msra.mxu0 %v6873
        %6904 = vmatprep.subr.mxu0 0.0
        %6905 = vmatpush1.msra.mxu0 %v6874
        %6906 = vmatprep.subr.mxu0 0.0
        %6907 = vmatpush1.msra.mxu0 %v6875
        %6908 = vmatprep.subr.mxu0 0.0
        %6909 = vmatpush1.msra.mxu0 %v6876
        %6910 = vmatprep.subr.mxu0 0.0
        %6911 = vmatpush1.msra.mxu0 %v6877
        %6912 = vmatprep.subr.mxu0 0.0
        %6913 = vmatpush1.msra.mxu0 %v6878
        %6914 = vmatprep.subr.mxu0 0.0
        %6915 = vmatpush1.msra.mxu0 %v6879
        %6916 = vmatprep.subr.mxu0 0.0
        %6917 = vmatpush1.msra.mxu0 %v6880
        %6918 = vmatprep.subr.mxu0 0.0
        %6919 = vmatpush1.msra.mxu0 %v6881
        %6920 = vmatprep.subr.mxu0 0.0
        %6921 = vmatpush1.msra.mxu0 %v6882
        %6922 = vmatprep.subr.mxu0 0.0
        %6923 = vmatpush1.msra.mxu0 0.0
        %6924 = vmatprep.subr.mxu0 0.0
        %6925 = vmatpush1.msra.mxu0 0.0
        %6926 = vmatprep.subr.mxu0 0.0
        %6927 = vmatpush1.msra.mxu0 0.0
        %6928 = vmatprep.subr.mxu0 0.0
        %6929 = vmatpush1.msra.mxu0 0.0
        %6930 = vmatprep.subr.mxu0 0.0
        %6931 = vmatpush1.msra.mxu0 0.0
        %6932 = vmatprep.subr.mxu0 0.0
        %6933 = vmatpush1.msra.mxu0 0.0
        %6934 = vmatprep.subr.mxu0 0.0
        %6935 = vmatpush1.msra.mxu0 0.0
        %6936 = vmatprep.subr.mxu0 0.0
        %6937 = vmatpush1.msra.mxu0 0.0
        %6938 = vmatprep.subr.mxu0 0.0
        %6939 = vmatpush1.msra.mxu0 0.0
        %6940 = vmatprep.subr.mxu0 0.0
        %6941 = vmatpush1.msra.mxu0 0.0
        %6942 = vmatprep.subr.mxu0 0.0
        %6943 = vmatpush1.msra.mxu0 0.0
        %6944 = vmatprep.subr.mxu0 0.0
        %6945 = vmatpush1.msra.mxu0 0.0
        %6946 = vmatprep.subr.mxu0 0.0
        %6947 = vmatpush1.msra.mxu0 0.0
        %6948 = vmatprep.subr.mxu0 0.0
        %6949 = vmatpush1.msra.mxu0 0.0
        %6950 = vmatprep.subr.mxu0 0.0
        %6951 = vmatpush1.msra.mxu0 0.0
        %6952 = vmatprep.subr.mxu0 0.0
        %6953 = vmatpush1.msra.mxu0 0.0
        %6954 = vmatprep.mubr.f32.mxu0 0.0
        %6955 = vmatmul.mubr.f32.gmra.mrb[0].mxu0 %v6835
        %v6956 = vpop.f32.mrb[0].mxu0
        %v6957 = vadd.f32 %v6888, %v6956
        %v6958 = vpop.f32.mrb[0].mxu0
        %6959 = vmatprep.mubr.f32.mxu0 0.0
        %6960 = vmatmul.mubr.f32.gmra.mrb[0].mxu0 %v6836
        %v6961 = vpop.f32.mrb[0].mxu0
        %v6962 = vadd.f32 %v6888, %v6961
        %v6963 = vpop.f32.mrb[0].mxu0
        %6964 = vmatprep.mubr.f32.mxu0 0.0
        %6965 = vmatmul.mubr.f32.gmra.mrb[0].mxu0 %v6837
        %v6966 = vpop.f32.mrb[0].mxu0
        %v6967 = vadd.f32 %v6888, %v6966
        %v6968 = vpop.f32.mrb[0].mxu0
        %6969 = vmatprep.mubr.f32.mxu0 0.0
        %6970 = vmatmul.mubr.f32.gmra.mrb[0].mxu0 %v6838
        %v6971 = vpop.f32.mrb[0].mxu0
        %v6972 = vadd.f32 %v6888, %v6971
        %v6973 = vpop.f32.mrb[0].mxu0
        %6974 = vmatprep.mubr.f32.mxu0 0.0
        %6975 = vmatmul.mubr.f32.gmra.mrb[0].mxu0 %v6839
        %v6976 = vpop.f32.mrb[0].mxu0
        %v6977 = vadd.f32 %v6888, %v6976
        %v6978 = vpop.f32.mrb[0].mxu0
        %6979 = vmatprep.mubr.f32.mxu0 0.0
        %6980 = vmatmul.mubr.f32.gmra.mrb[0].mxu0 %v6840
        %v6981 = vpop.f32.mrb[0].mxu0
        %v6982 = vadd.f32 %v6888, %v6981
        %v6983 = vpop.f32.mrb[0].mxu0
        %6984 = vmatprep.mubr.f32.mxu0 0.0
        %6985 = vmatmul.mubr.f32.gmra.mrb[0].mxu0 %v6841
        %v6986 = vpop.f32.mrb[0].mxu0
        %v6987 = vadd.f32 %v6888, %v6986
        %v6988 = vpop.f32.mrb[0].mxu0
        %6989 = vmatprep.mubr.f32.mxu0 0.0
        %6990 = vmatmul.mubr.f32.gmra.mrb[0].mxu0 %v6842
        %v6991 = vpop.f32.mrb[0].mxu0
        %v6992 = vadd.f32 %v6888, %v6991
        %v6993 = vpop.f32.mrb[0].mxu0
        %6994 = vmatprep.mubr.f32.mxu0 0.0
        %6995 = vmatmul.mubr.f32.gmra.mrb[0].mxu0 %v6843
        %v6996 = vpop.f32.mrb[0].mxu0
        %v6997 = vadd.f32 %v6888, %v6996
        %v6998 = vpop.f32.mrb[0].mxu0
        %6999 = vmatprep.mubr.f32.mxu0 0.0
        %7000 = vmatmul.mubr.f32.gmra.mrb[0].mxu0 %v6844
        %v7001 = vpop.f32.mrb[0].mxu0
        %v7002 = vadd.f32 %v6888, %v7001
        %v7003 = vpop.f32.mrb[0].mxu0
        %7004 = vmatprep.mubr.f32.mxu0 0.0
        %7005 = vmatmul.mubr.f32.gmra.mrb[0].mxu0 %v6845
        %v7006 = vpop.f32.mrb[0].mxu0
        %v7007 = vadd.f32 %v6888, %v7006
        %v7008 = vpop.f32.mrb[0].mxu0
        %7009 = vmatprep.mubr.f32.mxu0 0.0
        %7010 = vmatmul.mubr.f32.gmra.mrb[0].mxu0 %v6846
        %v7011 = vpop.f32.mrb[0].mxu0
        %v7012 = vadd.f32 %v6888, %v7011
        %v7013 = vpop.f32.mrb[0].mxu0
        %7014 = vmatprep.mubr.f32.mxu0 0.0
        %7015 = vmatmul.mubr.f32.gmra.mrb[0].mxu0 %v6847
        %v7016 = vpop.f32.mrb[0].mxu0
        %v7017 = vadd.f32 %v6888, %v7016
        %v7018 = vpop.f32.mrb[0].mxu0
        %7019 = vmatprep.mubr.f32.mxu0 0.0
        %7020 = vmatmul.mubr.f32.gmra.mrb[0].mxu0 %v6848
        %v7021 = vpop.f32.mrb[0].mxu0
        %v7022 = vadd.f32 %v6888, %v7021
        %v7023 = vpop.f32.mrb[0].mxu0
        %7024 = vmatprep.mubr.f32.mxu0 0.0
        %7025 = vmatmul.mubr.f32.gmra.mrb[0].mxu0 %v6849
        %v7026 = vpop.f32.mrb[0].mxu0
        %v7027 = vadd.f32 %v6888, %v7026
        %v7028 = vpop.f32.mrb[0].mxu0
        %7029 = vmatprep.mubr.f32.mxu0 0.0
        %7030 = vmatmul.mubr.f32.gmra.mrb[0].mxu0 %v6850
        %v7031 = vpop.f32.mrb[0].mxu0
        %v7032 = vadd.f32 %v6888, %v7031
        %v7033 = vpop.f32.mrb[0].mxu0
        %7034 = vmatprep.mubr.f32.mxu0 0.0
        %7035 = vmatmul.mubr.f32.gmra.mrb[0].mxu0 %v6851
        %v7036 = vpop.f32.mrb[0].mxu0
        %v7037 = vadd.f32 %v6888, %v7036
        %v7038 = vpop.f32.mrb[0].mxu0
        %7039 = vmatprep.mubr.f32.mxu0 0.0
        %7040 = vmatmul.mubr.f32.gmra.mrb[0].mxu0 %v6852
        %v7041 = vpop.f32.mrb[0].mxu0
        %v7042 = vadd.f32 %v6888, %v7041
        %v7043 = vpop.f32.mrb[0].mxu0
        %7044 = vmatprep.mubr.f32.mxu0 0.0
        %7045 = vmatmul.mubr.f32.gmra.mrb[0].mxu0 %v6853
        %v7046 = vpop.f32.mrb[0].mxu0
        %v7047 = vadd.f32 %v6888, %v7046
        %v7048 = vpop.f32.mrb[0].mxu0
        %7049 = vmatprep.mubr.f32.mxu0 0.0
        %7050 = vmatmul.mubr.f32.gmra.mrb[0].mxu0 %v6854
        %v7051 = vpop.f32.mrb[0].mxu0
        %v7052 = vadd.f32 %v6888, %v7051
        %v7053 = vpop.f32.mrb[0].mxu0
        %7054 = vmatprep.mubr.f32.mxu0 0.0
        %7055 = vmatmul.mubr.f32.gmra.mrb[0].mxu0 %v6855
        %v7056 = vpop.f32.mrb[0].mxu0
        %v7057 = vadd.f32 %v6888, %v7056
        %v7058 = vpop.f32.mrb[0].mxu0
        %7059 = vmatprep.mubr.f32.mxu0 0.0
        %7060 = vmatmul.mubr.f32.gmra.mrb[0].mxu0 %v6856
        %v7061 = vpop.f32.mrb[0].mxu0
        %v7062 = vadd.f32 %v6888, %v7061
        %v7063 = vpop.f32.mrb[0].mxu0
        %7064 = vmatprep.mubr.f32.mxu0 0.0
        %7065 = vmatmul.mubr.f32.gmra.mrb[0].mxu0 %v6857
        %v7066 = vpop.f32.mrb[0].mxu0
        %v7067 = vadd.f32 %v6888, %v7066
        %v7068 = vpop.f32.mrb[0].mxu0
        %7069 = vmatprep.mubr.f32.mxu0 0.0
        %7070 = vmatmul.mubr.f32.gmra.mrb[0].mxu0 %v6858
        %v7071 = vpop.f32.mrb[0].mxu0
        %v7072 = vadd.f32 %v6888, %v7071
        %v7073 = vpop.f32.mrb[0].mxu0
        %7074 = vmatprep.mubr.f32.mxu0 0.0
        %7075 = vmatmul.mubr.f32.gmra.mrb[0].mxu0 %v6859
        %v7076 = vpop.f32.mrb[0].mxu0
        %v7077 = vadd.f32 %v6888, %v7076
        %v7078 = vpop.f32.mrb[0].mxu0
        %7079 = vmatprep.mubr.f32.mxu0 0.0
        %7080 = vmatmul.mubr.f32.gmra.mrb[0].mxu0 %v6860
        %v7081 = vpop.f32.mrb[0].mxu0
        %v7082 = vadd.f32 %v6888, %v7081
        %v7083 = vpop.f32.mrb[0].mxu0
        %7084 = vmatprep.mubr.f32.mxu0 0.0
        %7085 = vmatmul.mubr.f32.gmra.mrb[0].mxu0 %v6861
        %v7086 = vpop.f32.mrb[0].mxu0
        %v7087 = vadd.f32 %v6888, %v7086
        %v7088 = vpop.f32.mrb[0].mxu0
        %7089 = vmatprep.mubr.f32.mxu0 0.0
        %7090 = vmatmul.mubr.f32.gmra.mrb[0].mxu0 %v6862
        %v7091 = vpop.f32.mrb[0].mxu0
        %v7092 = vadd.f32 %v6888, %v7091
        %v7093 = vpop.f32.mrb[0].mxu0
        %7094 = vmatprep.mubr.f32.mxu0 0.0
        %7095 = vmatmul.mubr.f32.gmra.mrb[0].mxu0 %v6863
        %v7096 = vpop.f32.mrb[0].mxu0
        %v7097 = vadd.f32 %v6888, %v7096
        %v7098 = vpop.f32.mrb[0].mxu0
        %7099 = vmatprep.mubr.f32.mxu0 0.0
        %7100 = vmatmul.mubr.f32.gmra.mrb[0].mxu0 %v6864
        %v7101 = vpop.f32.mrb[0].mxu0
        %v7102 = vadd.f32 %v6888, %v7101
        %v7103 = vpop.f32.mrb[0].mxu0
        %7104 = vmatprep.mubr.f32.mxu0 0.0
        %7105 = vmatmul.mubr.f32.gmra.mrb[0].mxu0 %v6865
        %v7106 = vpop.f32.mrb[0].mxu0
        %v7107 = vadd.f32 %v6888, %v7106
        %v7108 = vpop.f32.mrb[0].mxu0
        %7109 = vmatprep.mubr.f32.mxu0 0.0
        %7110 = vmatmul.mubr.f32.gmra.mrb[0].mxu0 %v6866
        %v7111 = vpop.f32.mrb[0].mxu0
        %v7112 = vadd.f32 %v6888, %v7111
        %v7113 = vpop.f32.mrb[0].mxu0
        %7114 = vdwg.mxu0
        %7115 = vst.msk [vmem:[%s379] sm:$0xff] %vm494, %v6957
        %7116 = vst.msk [vmem:[%s379 + $0x8] sm:$0xff] %vm494, %v6962
        %7117 = vst.msk [vmem:[%s379 + $0x10] sm:$0xff] %vm494, %v6967
        %7118 = vst.msk [vmem:[%s379 + $0x18] sm:$0xff] %vm494, %v6972
        %7119 = vst.msk [vmem:[%s379 + $0x20] sm:$0xff] %vm494, %v6977
        %7120 = vst.msk [vmem:[%s379 + $0x28] sm:$0xff] %vm494, %v6982
        %7121 = vst.msk [vmem:[%s379 + $0x30] sm:$0xff] %vm494, %v6987
        %7122 = vst.msk [vmem:[%s379 + $0x38] sm:$0xff] %vm494, %v6992
        %7123 = vst.msk [vmem:[%s379 + $0x40] sm:$0xff] %vm494, %v6997
        %7124 = vst.msk [vmem:[%s379 + $0x48] sm:$0xff] %vm494, %v7002
        %7125 = vst.msk [vmem:[%s379 + $0x50] sm:$0xff] %vm494, %v7007
        %7126 = vst.msk [vmem:[%s379 + $0x58] sm:$0xff] %vm494, %v7012
        %7127 = vst.msk [vmem:[%s379 + $0x60] sm:$0xff] %vm494, %v7017
        %7128 = vst.msk [vmem:[%s379 + $0x68] sm:$0xff] %vm494, %v7022
        %7129 = vst.msk [vmem:[%s379 + $0x70] sm:$0xff] %vm494, %v7027
        %7130 = vst.msk [vmem:[%s379 + $0x78] sm:$0xff] %vm494, %v7032
        %7131 = vst.msk [vmem:[%s379 + $0x80] sm:$0xff] %vm494, %v7037
        %7132 = vst.msk [vmem:[%s379 + $0x88] sm:$0xff] %vm494, %v7042
        %7133 = vst.msk [vmem:[%s379 + $0x90] sm:$0xff] %vm494, %v7047
        %7134 = vst.msk [vmem:[%s379 + $0x98] sm:$0xff] %vm494, %v7052
        %7135 = vst.msk [vmem:[%s379 + $0xa0] sm:$0xff] %vm494, %v7057
        %7136 = vst.msk [vmem:[%s379 + $0xa8] sm:$0xff] %vm494, %v7062
        %7137 = vst.msk [vmem:[%s379 + $0xb0] sm:$0xff] %vm494, %v7067
        %7138 = vst.msk [vmem:[%s379 + $0xb8] sm:$0xff] %vm494, %v7072
        %7139 = vst.msk [vmem:[%s379 + $0xc0] sm:$0xff] %vm494, %v7077
        %7140 = vst.msk [vmem:[%s379 + $0xc8] sm:$0xff] %vm494, %v7082
        %7141 = vst.msk [vmem:[%s379 + $0xd0] sm:$0xff] %vm494, %v7087
        %7142 = vst.msk [vmem:[%s379 + $0xd8] sm:$0xff] %vm494, %v7092
        %7143 = vst.msk [vmem:[%s379 + $0xe0] sm:$0xff] %vm494, %v7097
        %7144 = vst.msk [vmem:[%s379 + $0xe8] sm:$0xff] %vm494, %v7102
        %7145 = vst.msk [vmem:[%s379 + $0xf0] sm:$0xff] %vm494, %v7107
        %7146 = vst.msk [vmem:[%s379 + $0xf8] sm:$0xff] %vm494, %v7112
        %s7147 = sand.u32 %s269, 1
        %s7148 = scalar_lea.sflag [#allocation5], %s7147
        %s7149 = sand.u32 %s269, 1
        %s7150 = smul.addr %s7149, 256
        %s7151 = scalar_lea.vmem [#allocation4], %s7150
        // Predicated region
        $region65: #{tpu_custom_call.1} parent=63 // pred_check
          %p7152 = pneg %p279
        $region66: #{tpu_custom_call.1} parent=63 // pred_check_branch
          %7154 = sbr.rel (%p7152) target = $region68
        $region67: #{tpu_custom_call.1} parent=63 // pred_region
          %s7156 = ssub.s32 4096, 4096
          %7157 = vsyncadd %s7148, %s7156
          %s7158 = smul.addr %s25, 32
          %s7159 = smul.addr %s7158, 128
          %s7160 = scalar_lea.hbm %s11, %s7159
          %s7161 = sshll.u32 %s7151, 4
          %s7162 = int_to_ptr.vmem [resolvable:$true] %s7161
          %7167 = dma.vmem_to_hbm [thread:$0]  %s7162, 4096, %s7160, %s7148, 128, 128, 8
        $region68: #{tpu_custom_call.1} parent=63 // pred_fallthru
          _
      $region64: #{tpu_custom_call.1} parent=5 // pred_fallthru
        _
      %p7168 = scmp.le.s32.totalorder 2, %s20
      // Predicated region
      $region69: #{tpu_custom_call.1} parent=5 // pred_check
        %p7169 = pneg %p7168
      $region70: #{tpu_custom_call.1} parent=5 // pred_check_branch
        %7171 = sbr.rel (%p7169) target = $region72
      $region71: #{tpu_custom_call.1} parent=5 // pred_region
        %s7172 = ssub.s32 %s20, 2
        // Predicated region
        $region73: #{tpu_custom_call.1} parent=71 // pred_check
          %p7173 = pneg %p285
        $region74: #{tpu_custom_call.1} parent=71 // pred_check_branch
          %7175 = sbr.rel (%p7173) target = $region76
        $region75: #{tpu_custom_call.1} parent=71 // pred_region
          %s7176 = sand.u32 %s270, 1
          %s7177 = scalar_lea.sflag [#allocation5], %s7176
          %s7178 = sand.u32 %s270, 1
          %s7179 = smul.addr %s7178, 256
          %s7180 = scalar_lea.vmem [#allocation4], %s7179
          %7181 = dma.done %s7177, 4096
        $region76: #{tpu_custom_call.1} parent=71 // pred_fallthru
          _
      $region72: #{tpu_custom_call.1} parent=5 // pred_fallthru
        _
    $region6: #{tpu_custom_call.1} parent=1 // loop_footer
      %s24 = sadd.s32 1, %s20
    $region7: #{tpu_custom_call.1} parent=1 // loop_footer_branch
      %19 = sbr.rel target = $region3
    $region8: #{tpu_custom_call.1} parent=1 // loop_exit
      _
    %7182 = vsyncpa [#allocation5], 1
    %s7183 = scalar_lea.sflag [#allocation5], 1
    %7184 = vsyncpa %s7183, 1

</llo_original>
